<compile_context>
chip_gen: v6e
topology: v6e:2x2x1
jax: 0.10.0
libtpu: 0.0.40
codegen_flags: <defaults>
</compile_context>

<pallas_src>
import functools
import math

import jax
import jax.numpy as jnp
from jax import lax
from jax.experimental import pallas as pl
from jax.experimental.pallas import tpu as pltpu

_NEG_INF = -1e30              # large finite negative additive mask (NaN-safe)
_LN_EPS = 1e-5                # torch.nn.LayerNorm default
_VMEM_LIMIT = 32 * 1024 * 1024


def _row_tile(m):
    """Largest 8-multiple tile dividing m that still yields >= 2 grid steps
    (feeds both TensorCores on v7x); falls back to the full dim."""
    for t in (512, 256, 128, 64, 32, 16, 8):
        if 2 * t <= m and m % t == 0:
            return t
    return m


def _cparams(*sem):
    return pltpu.CompilerParams(dimension_semantics=sem,
                                vmem_limit_bytes=_VMEM_LIMIT)


# --------------------------- in-kernel math helpers --------------------------- #

def _layernorm_f32(x, g, b):
    mean = jnp.mean(x, axis=-1, keepdims=True)
    var = jnp.mean(jnp.square(x - mean), axis=-1, keepdims=True)
    return (x - mean) * lax.rsqrt(var + _LN_EPS) * g + b


def _mha_core(q, k, v, *, num_heads, causal):
    """Attention over all heads at once via two head-batched MXU dot_generals.

    q: (Tq, D) f32, k/v: (Tk, D) f32; the 1/sqrt(head_dim) scale is already folded
    into the Q projection. Returns the (Tq, D) f32 attention output (pre out-proj).
    Softmax math in f32; denominator via exact EUP reciprocal. Assumes no
    fully-masked row (true for the causal mask used here).
    """
    tq, d = q.shape
    tk = k.shape[0]
    dh = d // num_heads
    # (T, D) -> (H, T, dh): split/transpose in f32 (cheap relayout), cast for MXU.
    q3 = jnp.swapaxes(q.reshape(tq, num_heads, dh), 0, 1).astype(jnp.bfloat16)
    k3 = jnp.swapaxes(k.reshape(tk, num_heads, dh), 0, 1).astype(jnp.bfloat16)
    v3 = jnp.swapaxes(v.reshape(tk, num_heads, dh), 0, 1).astype(jnp.bfloat16)
    s = jnp.einsum("hqd,hkd->hqk", q3, k3, preferred_element_type=jnp.float32)
    if causal:
        # Causal mask generated in-kernel (no O(T^2) f32 HBM mask DMA per layer).
        row = lax.broadcasted_iota(jnp.int32, (tq, tk), 0)
        col = lax.broadcasted_iota(jnp.int32, (tq, tk), 1)
        s = jnp.where((row >= col)[None, :, :], s, _NEG_INF)
    s = s - jnp.max(s, axis=-1, keepdims=True)
    p = jnp.exp(s)
    p = p * pl.reciprocal(jnp.sum(p, axis=-1, keepdims=True))      # exact, EUP slot
    o3 = jnp.einsum("hqk,hkd->hqd", p.astype(jnp.bfloat16), v3,
                    preferred_element_type=jnp.float32)
    return jnp.swapaxes(o3, 0, 1).reshape(tq, d)


# ------------------------------ Pallas kernels ------------------------------ #

def self_attn_block_kernel(x_ref, wqkv_ref, bqkv_ref, wo_ref, bo_ref,
                           g_ref, beta_ref, o_ref, *, num_heads, causal):
    """Fused: QKV proj -> MHA -> out proj -> residual -> LayerNorm (one batch elem).
    TODO(synk): for long sequences, tile queries/keys flash-style instead of one block."""
    d = x_ref.shape[-1]
    x = x_ref[...]                                                   # bf16 (T, D)
    qkv = jnp.dot(x, wqkv_ref[...],
                  preferred_element_type=jnp.float32) + bqkv_ref[...]
    attn = _mha_core(qkv[:, :d], qkv[:, d:2 * d], qkv[:, 2 * d:],
                     num_heads=num_heads, causal=causal)             # (T, D) f32
    out = jnp.dot(attn.astype(jnp.bfloat16), wo_ref[...],
                  preferred_element_type=jnp.float32) + bo_ref[...]
    y = _layernorm_f32(x.astype(jnp.float32) + out, g_ref[...], beta_ref[...])
    o_ref[...] = y.astype(o_ref.dtype)


def cross_attn_block_kernel(x_ref, mem_ref, wq_ref, bq_ref, wkv_ref, bkv_ref,
                            wo_ref, bo_ref, g_ref, beta_ref, o_ref, *, num_heads):
    """Fused: Q proj + fused K|V proj -> MHA -> out proj -> residual -> LayerNorm."""
    d = x_ref.shape[-1]
    x = x_ref[...]
    mem = mem_ref[...]
    q = jnp.dot(x, wq_ref[...], preferred_element_type=jnp.float32) + bq_ref[...]
    kv = jnp.dot(mem, wkv_ref[...], preferred_element_type=jnp.float32) + bkv_ref[...]
    attn = _mha_core(q, kv[:, :d], kv[:, d:], num_heads=num_heads, causal=False)
    out = jnp.dot(attn.astype(jnp.bfloat16), wo_ref[...],
                  preferred_element_type=jnp.float32) + bo_ref[...]
    y = _layernorm_f32(x.astype(jnp.float32) + out, g_ref[...], beta_ref[...])
    o_ref[...] = y.astype(o_ref.dtype)


def ffn_block_kernel(x_ref, w1_ref, b1_ref, w2_ref, b2_ref, g_ref, beta_ref, o_ref):
    """Fused FFN: linear1 + ReLU + linear2 + residual + LayerNorm. The (tm, dff)
    hidden activation never leaves VMEM.
    TODO(synk): tile dff as an inner 'arbitrary' grid axis for large dff / d_model."""
    x = x_ref[...]                                                   # bf16 (tm, D)
    h = jnp.dot(x, w1_ref[...], preferred_element_type=jnp.float32) + b1_ref[...]
    h = jnp.maximum(h, 0.0).astype(jnp.bfloat16)
    y = jnp.dot(h, w2_ref[...], preferred_element_type=jnp.float32) + b2_ref[...]
    z = _layernorm_f32(x.astype(jnp.float32) + y, g_ref[...], beta_ref[...])
    o_ref[...] = z.astype(o_ref.dtype)


def layernorm_kernel(x_ref, g_ref, b_ref, o_ref):
    y = _layernorm_f32(x_ref[...].astype(jnp.float32), g_ref[...], b_ref[...])
    o_ref[...] = y.astype(o_ref.dtype)


def gen_softmax_kernel(x_ref, w_ref, b_ref, o_ref):
    """Fused generator linear + softmax over the (full) vocab axis; f32 math.
    TODO(synk): for large vocab / d_model, add K-accumulation and a vocab-tiled
    (two-pass / online) softmax."""
    logits = jnp.dot(x_ref[...], w_ref[...],
                     preferred_element_type=jnp.float32) + b_ref[...]
    logits = logits - jnp.max(logits, axis=-1, keepdims=True)
    e = jnp.exp(logits)
    p = e * pl.reciprocal(jnp.sum(e, axis=-1, keepdims=True))        # exact, EUP slot
    o_ref[...] = p.astype(o_ref.dtype)


# ------------------------------ kernel wrappers ------------------------------ #

def self_attn_block(x, p, norm, num_heads, causal):
    B, T, D = x.shape
    full = lambda b: (0, 0)
    return pl.pallas_call(
        functools.partial(self_attn_block_kernel, num_heads=num_heads, causal=causal),
        out_shape=jax.ShapeDtypeStruct((B, T, D), jnp.bfloat16),
        grid=(B,),
        in_specs=[
            pl.BlockSpec((None, T, D), lambda b: (b, 0, 0)),
            pl.BlockSpec((D, 3 * D), full),
            pl.BlockSpec((1, 3 * D), full),
            pl.BlockSpec((D, D), full),
            pl.BlockSpec((1, D), full),
            pl.BlockSpec((1, D), full),
            pl.BlockSpec((1, D), full),
        ],
        out_specs=pl.BlockSpec((None, T, D), lambda b: (b, 0, 0)),
        compiler_params=_cparams("parallel"),
    )(x, p["wqkv_t"], p["bqkv"], p["wo_t"], p["bo"], norm["g"], norm["b"])


def cross_attn_block(x, memory, p, norm, num_heads):
    B, Tq, D = x.shape
    Tk = memory.shape[1]
    full = lambda b: (0, 0)
    return pl.pallas_call(
        functools.partial(cross_attn_block_kernel, num_heads=num_heads),
        out_shape=jax.ShapeDtypeStruct((B, Tq, D), jnp.bfloat16),
        grid=(B,),
        in_specs=[
            pl.BlockSpec((None, Tq, D), lambda b: (b, 0, 0)),
            pl.BlockSpec((None, Tk, D), lambda b: (b, 0, 0)),
            pl.BlockSpec((D, D), full),
            pl.BlockSpec((1, D), full),
            pl.BlockSpec((D, 2 * D), full),
            pl.BlockSpec((1, 2 * D), full),
            pl.BlockSpec((D, D), full),
            pl.BlockSpec((1, D), full),
            pl.BlockSpec((1, D), full),
            pl.BlockSpec((1, D), full),
        ],
        out_specs=pl.BlockSpec((None, Tq, D), lambda b: (b, 0, 0)),
        compiler_params=_cparams("parallel"),
    )(x, memory, p["wq_t"], p["bq"], p["wkv_t"], p["bkv"], p["wo_t"], p["bo"],
      norm["g"], norm["b"])


def ffn_block(x, p, norm):
    B, T, D = x.shape
    M = B * T
    tm = _row_tile(M)
    dff = p["w1_t"].shape[1]
    row = pl.BlockSpec((tm, D), lambda i: (i, 0))
    full = lambda i: (0, 0)
    y = pl.pallas_call(
        ffn_block_kernel,
        out_shape=jax.ShapeDtypeStruct((M, D), jnp.bfloat16),
        grid=(M // tm,),
        in_specs=[
            row,
            pl.BlockSpec((D, dff), full),
            pl.BlockSpec((1, dff), full),
            pl.BlockSpec((dff, D), full),
            pl.BlockSpec((1, D), full),
            pl.BlockSpec((1, D), full),
            pl.BlockSpec((1, D), full),
        ],
        out_specs=row,
        compiler_params=_cparams("parallel"),
    )(x.reshape(M, D), p["w1_t"], p["b1"], p["w2_t"], p["b2"], norm["g"], norm["b"])
    return y.reshape(B, T, D)


def layernorm(x, p):
    B, T, D = x.shape
    M = B * T
    tm = _row_tile(M)
    row = pl.BlockSpec((tm, D), lambda i: (i, 0))
    full = lambda i: (0, 0)
    y = pl.pallas_call(
        layernorm_kernel,
        out_shape=jax.ShapeDtypeStruct((M, D), jnp.bfloat16),
        grid=(M // tm,),
        in_specs=[row, pl.BlockSpec((1, D), full), pl.BlockSpec((1, D), full)],
        out_specs=row,
        compiler_params=_cparams("parallel"),
    )(x.reshape(M, D), p["g"], p["b"])
    return y.reshape(B, T, D)


def generator_softmax(x2d, w_t, b):
    M, D = x2d.shape
    V = w_t.shape[1]
    tm = _row_tile(M)
    full = lambda i: (0, 0)
    return pl.pallas_call(
        gen_softmax_kernel,
        out_shape=jax.ShapeDtypeStruct((M, V), jnp.float32),
        grid=(M // tm,),
        in_specs=[pl.BlockSpec((tm, D), lambda i: (i, 0)),
                  pl.BlockSpec((D, V), full),
                  pl.BlockSpec((1, V), full)],
        out_specs=pl.BlockSpec((tm, V), lambda i: (i, 0)),
        compiler_params=_cparams("parallel"),
    )(x2d, w_t, b)


# --------------------------------- forward --------------------------------- #

def pe_table(d_model, max_len, base):
    position = jnp.arange(max_len, dtype=jnp.float32)[:, None]
    div_term = jnp.exp(jnp.arange(0, d_model, 2, dtype=jnp.float32)
                       * (-math.log(base) / d_model))
    ang = position * div_term
    pe = jnp.zeros((max_len, d_model), jnp.float32)
    pe = pe.at[:, 0::2].set(jnp.sin(ang))
    pe = pe.at[:, 1::2].set(jnp.cos(ang))
    return pe


def prooformer_forward(params, src_tokens, tgt_tokens, num_heads=8):
    emb = params["embedding"]            # (num_tokens, d_model) f32
    pe = params["pe"]                    # (max_len, d_model) f32
    max_len = pe.shape[0]

    # Embedding gather + PE add + bf16 cast: one-off XLA prologue.
    # TODO(synk): fold into the first attention kernel via scalar-prefetch row gather.
    src = jnp.take(emb, src_tokens, axis=0)     # (B, S, D)
    tgt = jnp.take(emb, tgt_tokens, axis=0)     # (B, T, D)
    S = min(max_len, src.shape[1]); src = (src[:, -S:] + pe[:S]).astype(jnp.bfloat16)
    T = min(max_len, tgt.shape[1]); tgt = (tgt[:, -T:] + pe[:T]).astype(jnp.bfloat16)
    B, _, D = tgt.shape

    memory = src
    for lyr in params["encoder_layers"]:
        memory = self_attn_block(memory, lyr["self_attn"], lyr["norm1"],
                                 num_heads, causal=False)
        memory = ffn_block(memory, lyr["ffn"], lyr["norm2"])
    memory = layernorm(memory, params["encoder_norm"])

    out = tgt
    for lyr in params["decoder_layers"]:
        out = self_attn_block(out, lyr["self_attn"], lyr["norm1"],
                              num_heads, causal=True)
        out = cross_attn_block(out, memory, lyr["cross_attn"], lyr["norm2"], num_heads)
        out = ffn_block(out, lyr["ffn"], lyr["norm3"])
    out = layernorm(out, params["decoder_norm"])

    probs = generator_softmax(out.reshape(B * T, D), params["gen_w_t"], params["gen_b"])
    return probs.reshape(B, T, -1)


# ------------------------------- parameter init ------------------------------ #

def init_params(key, d_model, max_len, num_layers, num_tokens, dff, num_heads):
    keys = iter(jax.random.split(key, 1024))
    q_scale = 1.0 / math.sqrt(d_model // num_heads)   # folded into the Q projection

    def w(k_dim, n_dim):   # pre-transposed (K, N) layout -> plain (M,K)x(K,N) MXU matmul
        return jax.random.normal(next(keys), (k_dim, n_dim), jnp.float32) * 0.02

    def bias(n_dim):
        return jnp.zeros((1, n_dim), jnp.float32)

    def ln():
        return {"g": jnp.ones((1, d_model), jnp.float32),
                "b": jnp.zeros((1, d_model), jnp.float32)}

    def self_attn_p():
        wqkv = w(d_model, 3 * d_model)
        wqkv = wqkv.at[:, :d_model].multiply(q_scale)          # fold attn scale into Wq
        bqkv = bias(3 * d_model).at[:, :d_model].multiply(q_scale)
        return {"wqkv_t": wqkv.astype(jnp.bfloat16), "bqkv": bqkv,
                "wo_t": w(d_model, d_model).astype(jnp.bfloat16), "bo": bias(d_model)}

    def cross_attn_p():
        return {"wq_t": (w(d_model, d_model) * q_scale).astype(jnp.bfloat16),
                "bq": bias(d_model) * q_scale,
                "wkv_t": w(d_model, 2 * d_model).astype(jnp.bfloat16),
                "bkv": bias(2 * d_model),
                "wo_t": w(d_model, d_model).astype(jnp.bfloat16), "bo": bias(d_model)}

    def ffn_p():
        return {"w1_t": w(d_model, dff).astype(jnp.bfloat16), "b1": bias(dff),
                "w2_t": w(dff, d_model).astype(jnp.bfloat16), "b2": bias(d_model)}

    def enc_layer():
        return {"self_attn": self_attn_p(), "norm1": ln(),
                "ffn": ffn_p(), "norm2": ln()}

    def dec_layer():
        return {"self_attn": self_attn_p(), "norm1": ln(),
                "cross_attn": cross_attn_p(), "norm2": ln(),
                "ffn": ffn_p(), "norm3": ln()}

    return {
        "embedding": jax.random.normal(next(keys), (num_tokens, d_model), jnp.float32) * 0.02,
        "pe": pe_table(d_model, max_len, 10000.0),
        "encoder_layers": [enc_layer() for _ in range(num_layers)],
        "decoder_layers": [dec_layer() for _ in range(num_layers)],
        "encoder_norm": ln(),
        "decoder_norm": ln(),
        "gen_w_t": w(d_model, num_tokens).astype(jnp.bfloat16),
        "gen_b": bias(num_tokens),
    }


# ------------------------------------ main ------------------------------------ #

if __name__ == "__main__":
    d_model, max_len, num_layers, num_tokens = 32, 16, 2, 64
    nhead, dff = 8, 2048        # torch.nn.Transformer defaults: nhead=8, dim_feedforward=2048
    B, S, T = 2, 8, 8

    key = jax.random.PRNGKey(0)
    pkey, skey, tkey = jax.random.split(key, 3)
    params = init_params(pkey, d_model, max_len, num_layers, num_tokens, dff, nhead)

    src = jax.random.randint(skey, (B, S), 0, num_tokens, dtype=jnp.int32)
    tgt = jax.random.randint(tkey, (B, T), 0, num_tokens, dtype=jnp.int32)

    fwd = jax.jit(functools.partial(prooformer_forward, num_heads=nhead))
    probs = fwd(params, src, tgt)
    jax.block_until_ready(probs)

    assert probs.shape == (B, T, num_tokens)
    assert bool(jnp.all(jnp.isfinite(probs)))
    # rows of the final softmax must sum to 1
    assert bool(jnp.allclose(jnp.sum(probs, axis=-1), 1.0, atol=1e-4))
    print("KERNEL_OK")
</pallas_src>

<mosaic_0001>
module attributes {stable_mosaic.version = 11 : i64} {
  func.func @ffn_block_kernel(%arg0: i32, %arg1: memref<8x32xbf16, #tpu.memory_space<vmem>>, %arg2: memref<32x2048xbf16, #tpu.memory_space<vmem>>, %arg3: memref<1x2048xf32, #tpu.memory_space<vmem>>, %arg4: memref<2048x32xbf16, #tpu.memory_space<vmem>>, %arg5: memref<1x32xf32, #tpu.memory_space<vmem>>, %arg6: memref<1x32xf32, #tpu.memory_space<vmem>>, %arg7: memref<1x32xf32, #tpu.memory_space<vmem>>, %arg8: memref<8x32xbf16, #tpu.memory_space<vmem>>) attributes {dimension_semantics = [#tpu.dimension_semantics<parallel>], iteration_bounds = array<i64: 2>, scalar_prefetch = 0 : i64, scratch_operands = 0 : i64, tpu.core_type = #tpu.core_type<tc>, window_params = [{transform_indices = @transform_0, window_bounds = array<i64: 8, 32>}, {pipeline_mode = #tpu.pipeline_mode<synchronous>, transform_indices = @transform_1, window_bounds = array<i64: 32, 2048>}, {pipeline_mode = #tpu.pipeline_mode<synchronous>, transform_indices = @transform_2, window_bounds = array<i64: 1, 2048>}, {pipeline_mode = #tpu.pipeline_mode<synchronous>, transform_indices = @transform_3, window_bounds = array<i64: 2048, 32>}, {pipeline_mode = #tpu.pipeline_mode<synchronous>, transform_indices = @transform_4, window_bounds = array<i64: 1, 32>}, {pipeline_mode = #tpu.pipeline_mode<synchronous>, transform_indices = @transform_5, window_bounds = array<i64: 1, 32>}, {pipeline_mode = #tpu.pipeline_mode<synchronous>, transform_indices = @transform_6, window_bounds = array<i64: 1, 32>}, {transform_indices = @transform_7, window_bounds = array<i64: 8, 32>}]} {
    %c0 = arith.constant 0 : index
    %c0_0 = arith.constant 0 : index
    %0 = vector.load %arg1[%c0, %c0_0] : memref<8x32xbf16, #tpu.memory_space<vmem>>, vector<8x32xbf16>
    %c0_1 = arith.constant 0 : index
    %c0_2 = arith.constant 0 : index
    %1 = vector.load %arg2[%c0_1, %c0_2] : memref<32x2048xbf16, #tpu.memory_space<vmem>>, vector<32x2048xbf16>
    %cst = arith.constant dense<0.000000e+00> : vector<8x2048xf32>
    %2 = tpu.matmul %0, %1, %cst {dimension_numbers = #tpu.dot_dimension_numbers<[1], [0], [0], [1], [0, 0, 1, 1], [], []>} : vector<8x32xbf16>, vector<32x2048xbf16>, vector<8x2048xf32> -> vector<8x2048xf32>
    %c0_3 = arith.constant 0 : index
    %c0_4 = arith.constant 0 : index
    %3 = vector.load %arg3[%c0_3, %c0_4] : memref<1x2048xf32, #tpu.memory_space<vmem>>, vector<1x2048xf32>
    %4 = vector.broadcast %3 : vector<1x2048xf32> to vector<8x2048xf32>
    %5 = arith.addf %2, %4 : vector<8x2048xf32>
    %cst_5 = arith.constant 0.000000e+00 : f32
    %6 = vector.broadcast %cst_5 : f32 to vector<8x2048xf32>
    %7 = arith.maximumf %5, %6 : vector<8x2048xf32>
    %8 = arith.truncf %7 : vector<8x2048xf32> to vector<8x2048xbf16>
    %c0_6 = arith.constant 0 : index
    %c0_7 = arith.constant 0 : index
    %9 = vector.load %arg4[%c0_6, %c0_7] : memref<2048x32xbf16, #tpu.memory_space<vmem>>, vector<2048x32xbf16>
    %cst_8 = arith.constant dense<0.000000e+00> : vector<8x32xf32>
    %10 = tpu.matmul %8, %9, %cst_8 {dimension_numbers = #tpu.dot_dimension_numbers<[1], [0], [0], [1], [0, 0, 1, 1], [], []>} : vector<8x2048xbf16>, vector<2048x32xbf16>, vector<8x32xf32> -> vector<8x32xf32>
    %c0_9 = arith.constant 0 : index
    %c0_10 = arith.constant 0 : index
    %11 = vector.load %arg5[%c0_9, %c0_10] : memref<1x32xf32, #tpu.memory_space<vmem>>, vector<1x32xf32>
    %12 = vector.broadcast %11 : vector<1x32xf32> to vector<8x32xf32>
    %13 = arith.addf %10, %12 : vector<8x32xf32>
    %14 = arith.extf %0 : vector<8x32xbf16> to vector<8x32xf32>
    %15 = arith.addf %14, %13 : vector<8x32xf32>
    %c0_11 = arith.constant 0 : index
    %c0_12 = arith.constant 0 : index
    %16 = vector.load %arg6[%c0_11, %c0_12] : memref<1x32xf32, #tpu.memory_space<vmem>>, vector<1x32xf32>
    %c0_13 = arith.constant 0 : index
    %c0_14 = arith.constant 0 : index
    %17 = vector.load %arg7[%c0_13, %c0_14] : memref<1x32xf32, #tpu.memory_space<vmem>>, vector<1x32xf32>
    %cst_15 = arith.constant dense<0.000000e+00> : vector<8xf32>
    %18 = vector.multi_reduction <add>, %15, %cst_15 [1] : vector<8x32xf32> to vector<8xf32>
    %19 = vector.shape_cast %18 : vector<8xf32> to vector<8x1xf32>
    %cst_16 = arith.constant 3.200000e+01 : f32
    %20 = vector.broadcast %cst_16 : f32 to vector<8x1xf32>
    %21 = arith.divf %19, %20 : vector<8x1xf32>
    %22 = vector.broadcast %21 : vector<8x1xf32> to vector<8x32xf32>
    %23 = arith.subf %15, %22 : vector<8x32xf32>
    %24 = arith.mulf %23, %23 : vector<8x32xf32>
    %cst_17 = arith.constant dense<0.000000e+00> : vector<8xf32>
    %25 = vector.multi_reduction <add>, %24, %cst_17 [1] : vector<8x32xf32> to vector<8xf32>
    %26 = vector.shape_cast %25 : vector<8xf32> to vector<8x1xf32>
    %cst_18 = arith.constant 3.200000e+01 : f32
    %27 = vector.broadcast %cst_18 : f32 to vector<8x1xf32>
    %28 = arith.divf %26, %27 : vector<8x1xf32>
    %29 = vector.broadcast %21 : vector<8x1xf32> to vector<8x32xf32>
    %30 = arith.subf %15, %29 : vector<8x32xf32>
    %cst_19 = arith.constant 9.99999974E-6 : f32
    %31 = vector.broadcast %cst_19 : f32 to vector<8x1xf32>
    %32 = arith.addf %28, %31 : vector<8x1xf32>
    %33 = math.rsqrt %32 : vector<8x1xf32>
    %34 = vector.broadcast %33 : vector<8x1xf32> to vector<8x32xf32>
    %35 = arith.mulf %30, %34 : vector<8x32xf32>
    %36 = vector.broadcast %16 : vector<1x32xf32> to vector<8x32xf32>
    %37 = arith.mulf %35, %36 : vector<8x32xf32>
    %38 = vector.broadcast %17 : vector<1x32xf32> to vector<8x32xf32>
    %39 = arith.addf %37, %38 : vector<8x32xf32>
    %40 = arith.truncf %39 : vector<8x32xf32> to vector<8x32xbf16>
    %c0_20 = arith.constant 0 : index
    %c0_21 = arith.constant 0 : index
    %41 = vector.load %arg8[%c0_20, %c0_21] : memref<8x32xbf16, #tpu.memory_space<vmem>>, vector<8x32xbf16>
    tpu.vector_store %arg8[%c0_20, %c0_21], %40 {strides = array<i32>} : memref<8x32xbf16, #tpu.memory_space<vmem>>, vector<8x32xbf16>,
    return
  }
  func.func @transform_0(%arg0: i32) -> (i32, i32) {
    %c0_i32 = arith.constant 0 : i32
    %c0_i32_0 = arith.constant 0 : i32
    return %arg0, %c0_i32 : i32, i32
  }
  func.func @transform_1(%arg0: i32) -> (i32, i32) {
    %c0_i32 = arith.constant 0 : i32
    %c0_i32_0 = arith.constant 0 : i32
    %c0_i32_1 = arith.constant 0 : i32
    return %c0_i32, %c0_i32_0 : i32, i32
  }
  func.func @transform_2(%arg0: i32) -> (i32, i32) {
    %c0_i32 = arith.constant 0 : i32
    %c0_i32_0 = arith.constant 0 : i32
    %c0_i32_1 = arith.constant 0 : i32
    return %c0_i32, %c0_i32_0 : i32, i32
  }
  func.func @transform_3(%arg0: i32) -> (i32, i32) {
    %c0_i32 = arith.constant 0 : i32
    %c0_i32_0 = arith.constant 0 : i32
    %c0_i32_1 = arith.constant 0 : i32
    return %c0_i32, %c0_i32_0 : i32, i32
  }
  func.func @transform_4(%arg0: i32) -> (i32, i32) {
    %c0_i32 = arith.constant 0 : i32
    %c0_i32_0 = arith.constant 0 : i32
    %c0_i32_1 = arith.constant 0 : i32
    return %c0_i32, %c0_i32_0 : i32, i32
  }
  func.func @transform_5(%arg0: i32) -> (i32, i32) {
    %c0_i32 = arith.constant 0 : i32
    %c0_i32_0 = arith.constant 0 : i32
    %c0_i32_1 = arith.constant 0 : i32
    return %c0_i32, %c0_i32_0 : i32, i32
  }
  func.func @transform_6(%arg0: i32) -> (i32, i32) {
    %c0_i32 = arith.constant 0 : i32
    %c0_i32_0 = arith.constant 0 : i32
    %c0_i32_1 = arith.constant 0 : i32
    return %c0_i32, %c0_i32_0 : i32, i32
  }
  func.func @transform_7(%arg0: i32) -> (i32, i32) {
    %c0_i32 = arith.constant 0 : i32
    %c0_i32_0 = arith.constant 0 : i32
    return %arg0, %c0_i32 : i32, i32
  }
}

module attributes {stable_mosaic.version = 11 : i64} {
  func.func @self_attn_block_kernel(%arg0: i32, %arg1: memref<1x8x32xbf16, #tpu.memory_space<vmem>>, %arg2: memref<32x96xbf16, #tpu.memory_space<vmem>>, %arg3: memref<1x96xf32, #tpu.memory_space<vmem>>, %arg4: memref<32x32xbf16, #tpu.memory_space<vmem>>, %arg5: memref<1x32xf32, #tpu.memory_space<vmem>>, %arg6: memref<1x32xf32, #tpu.memory_space<vmem>>, %arg7: memref<1x32xf32, #tpu.memory_space<vmem>>, %arg8: memref<1x8x32xbf16, #tpu.memory_space<vmem>>) attributes {dimension_semantics = [#tpu.dimension_semantics<parallel>], iteration_bounds = array<i64: 2>, scalar_prefetch = 0 : i64, scratch_operands = 0 : i64, tpu.core_type = #tpu.core_type<tc>, window_params = [{transform_indices = @transform_0, window_bounds = array<i64: 1, 8, 32>}, {pipeline_mode = #tpu.pipeline_mode<synchronous>, transform_indices = @transform_1, window_bounds = array<i64: 32, 96>}, {pipeline_mode = #tpu.pipeline_mode<synchronous>, transform_indices = @transform_2, window_bounds = array<i64: 1, 96>}, {pipeline_mode = #tpu.pipeline_mode<synchronous>, transform_indices = @transform_3, window_bounds = array<i64: 32, 32>}, {pipeline_mode = #tpu.pipeline_mode<synchronous>, transform_indices = @transform_4, window_bounds = array<i64: 1, 32>}, {pipeline_mode = #tpu.pipeline_mode<synchronous>, transform_indices = @transform_5, window_bounds = array<i64: 1, 32>}, {pipeline_mode = #tpu.pipeline_mode<synchronous>, transform_indices = @transform_6, window_bounds = array<i64: 1, 32>}, {transform_indices = @transform_7, window_bounds = array<i64: 1, 8, 32>}]} {
    %c0 = arith.constant 0 : index
    %c0_0 = arith.constant 0 : index
    %c0_1 = arith.constant 0 : index
    %0 = vector.load %arg1[%c0, %c0_0, %c0_1] : memref<1x8x32xbf16, #tpu.memory_space<vmem>>, vector<1x8x32xbf16>
    %1 = vector.shape_cast %0 : vector<1x8x32xbf16> to vector<8x32xbf16>
    %c0_2 = arith.constant 0 : index
    %c0_3 = arith.constant 0 : index
    %2 = vector.load %arg2[%c0_2, %c0_3] : memref<32x96xbf16, #tpu.memory_space<vmem>>, vector<32x96xbf16>
    %cst = arith.constant dense<0.000000e+00> : vector<8x96xf32>
    %3 = tpu.matmul %1, %2, %cst {dimension_numbers = #tpu.dot_dimension_numbers<[1], [0], [0], [1], [0, 0, 1, 1], [], []>} : vector<8x32xbf16>, vector<32x96xbf16>, vector<8x96xf32> -> vector<8x96xf32>
    %c0_4 = arith.constant 0 : index
    %c0_5 = arith.constant 0 : index
    %4 = vector.load %arg3[%c0_4, %c0_5] : memref<1x96xf32, #tpu.memory_space<vmem>>, vector<1x96xf32>
    %5 = vector.broadcast %4 : vector<1x96xf32> to vector<8x96xf32>
    %6 = arith.addf %3, %5 : vector<8x96xf32>
    %7 = vector.extract_strided_slice %6 {offsets = [0, 0], sizes = [8, 32], strides = [1, 1]} : vector<8x96xf32> to vector<8x32xf32>
    %8 = vector.extract_strided_slice %6 {offsets = [0, 32], sizes = [8, 32], strides = [1, 1]} : vector<8x96xf32> to vector<8x32xf32>
    %9 = vector.extract_strided_slice %6 {offsets = [0, 64], sizes = [8, 32], strides = [1, 1]} : vector<8x96xf32> to vector<8x32xf32>
    %10 = vector.shape_cast %7 : vector<8x32xf32> to vector<8x8x4xf32>
    %11 = tpu.transpose %10, [1, 0, 2] : vector<8x8x4xf32> -> vector<8x8x4xf32>
    %12 = arith.truncf %11 : vector<8x8x4xf32> to vector<8x8x4xbf16>
    %13 = vector.shape_cast %8 : vector<8x32xf32> to vector<8x8x4xf32>
    %14 = tpu.transpose %13, [1, 0, 2] : vector<8x8x4xf32> -> vector<8x8x4xf32>
    %15 = arith.truncf %14 : vector<8x8x4xf32> to vector<8x8x4xbf16>
    %16 = vector.shape_cast %9 : vector<8x32xf32> to vector<8x8x4xf32>
    %17 = tpu.transpose %16, [1, 0, 2] : vector<8x8x4xf32> -> vector<8x8x4xf32>
    %18 = arith.truncf %17 : vector<8x8x4xf32> to vector<8x8x4xbf16>
    "tpu.trace_start"() <{level = 10 : i32, message = "hqd,hkd->hqk"}> : () -> ()
    %cst_6 = arith.constant dense<0.000000e+00> : vector<8x8x8xf32>
    %19 = tpu.matmul %12, %15, %cst_6 {dimension_numbers = #tpu.dot_dimension_numbers<[2], [2], [1], [1], [0, 0, 0, 1, 1, 1], [0], [0]>} : vector<8x8x4xbf16>, vector<8x8x4xbf16>, vector<8x8x8xf32> -> vector<8x8x8xf32>
    "tpu.trace_stop"() : () -> ()
    %20 = tpu.iota {dimensions = array<i32: 0>} : vector<8x8xi32>
    %21 = tpu.iota {dimensions = array<i32: 1>} : vector<8x8xi32>
    %22 = arith.cmpi sge, %20, %21 : vector<8x8xi32>
    %23 = vector.shape_cast %22 : vector<8x8xi1> to vector<1x8x8xi1>
    %cst_7 = arith.constant -1.000000e+30 : f32
    %24 = vector.shape_cast %23 : vector<1x8x8xi1> to vector<1x8x8xi1>
    %25 = vector.broadcast %24 : vector<1x8x8xi1> to vector<8x8x8xi1>
    %26 = vector.broadcast %cst_7 : f32 to vector<8x8x8xf32>
    %27 = arith.select %25, %19, %26 : vector<8x8x8xi1>, vector<8x8x8xf32>
    %cst_8 = arith.constant dense<0xFF800000> : vector<8x8xf32>
    %28 = vector.multi_reduction <maximumf>, %27, %cst_8 [2] : vector<8x8x8xf32> to vector<8x8xf32>
    %29 = vector.shape_cast %28 : vector<8x8xf32> to vector<8x8x1xf32>
    %30 = vector.broadcast %29 : vector<8x8x1xf32> to vector<8x8x8xf32>
    %31 = arith.subf %27, %30 : vector<8x8x8xf32>
    %32 = math.exp %31 : vector<8x8x8xf32>
    %cst_9 = arith.constant dense<0.000000e+00> : vector<8x8xf32>
    %33 = vector.multi_reduction <add>, %32, %cst_9 [2] : vector<8x8x8xf32> to vector<8x8xf32>
    %34 = vector.shape_cast %33 : vector<8x8xf32> to vector<8x8x1xf32>
    %35 = tpu.reciprocal %34 : vector<8x8x1xf32> -> vector<8x8x1xf32>
    %36 = vector.broadcast %35 : vector<8x8x1xf32> to vector<8x8x8xf32>
    %37 = arith.mulf %32, %36 : vector<8x8x8xf32>
    %38 = arith.truncf %37 : vector<8x8x8xf32> to vector<8x8x8xbf16>
    "tpu.trace_start"() <{level = 10 : i32, message = "hqk,hkd->hqd"}> : () -> ()
    %cst_10 = arith.constant dense<0.000000e+00> : vector<8x8x4xf32>
    %39 = tpu.matmul %38, %18, %cst_10 {dimension_numbers = #tpu.dot_dimension_numbers<[2], [1], [1], [2], [0, 0, 0, 1, 1, 2], [0], [0]>} : vector<8x8x8xbf16>, vector<8x8x4xbf16>, vector<8x8x4xf32> -> vector<8x8x4xf32>
    "tpu.trace_stop"() : () -> ()
    %40 = tpu.transpose %39, [1, 0, 2] : vector<8x8x4xf32> -> vector<8x8x4xf32>
    %41 = vector.shape_cast %40 : vector<8x8x4xf32> to vector<8x32xf32>
    %42 = arith.truncf %41 : vector<8x32xf32> to vector<8x32xbf16>
    %c0_11 = arith.constant 0 : index
    %c0_12 = arith.constant 0 : index
    %43 = vector.load %arg4[%c0_11, %c0_12] : memref<32x32xbf16, #tpu.memory_space<vmem>>, vector<32x32xbf16>
    %cst_13 = arith.constant dense<0.000000e+00> : vector<8x32xf32>
    %44 = tpu.matmul %42, %43, %cst_13 {dimension_numbers = #tpu.dot_dimension_numbers<[1], [0], [0], [1], [0, 0, 1, 1], [], []>} : vector<8x32xbf16>, vector<32x32xbf16>, vector<8x32xf32> -> vector<8x32xf32>
    %c0_14 = arith.constant 0 : index
    %c0_15 = arith.constant 0 : index
    %45 = vector.load %arg5[%c0_14, %c0_15] : memref<1x32xf32, #tpu.memory_space<vmem>>, vector<1x32xf32>
    %46 = vector.broadcast %45 : vector<1x32xf32> to vector<8x32xf32>
    %47 = arith.addf %44, %46 : vector<8x32xf32>
    %48 = arith.extf %1 : vector<8x32xbf16> to vector<8x32xf32>
    %49 = arith.addf %48, %47 : vector<8x32xf32>
    %c0_16 = arith.constant 0 : index
    %c0_17 = arith.constant 0 : index
    %50 = vector.load %arg6[%c0_16, %c0_17] : memref<1x32xf32, #tpu.memory_space<vmem>>, vector<1x32xf32>
    %c0_18 = arith.constant 0 : index
    %c0_19 = arith.constant 0 : index
    %51 = vector.load %arg7[%c0_18, %c0_19] : memref<1x32xf32, #tpu.memory_space<vmem>>, vector<1x32xf32>
    %cst_20 = arith.constant dense<0.000000e+00> : vector<8xf32>
    %52 = vector.multi_reduction <add>, %49, %cst_20 [1] : vector<8x32xf32> to vector<8xf32>
    %53 = vector.shape_cast %52 : vector<8xf32> to vector<8x1xf32>
    %cst_21 = arith.constant 3.200000e+01 : f32
    %54 = vector.broadcast %cst_21 : f32 to vector<8x1xf32>
    %55 = arith.divf %53, %54 : vector<8x1xf32>
    %56 = vector.broadcast %55 : vector<8x1xf32> to vector<8x32xf32>
    %57 = arith.subf %49, %56 : vector<8x32xf32>
    %58 = arith.mulf %57, %57 : vector<8x32xf32>
    %cst_22 = arith.constant dense<0.000000e+00> : vector<8xf32>
    %59 = vector.multi_reduction <add>, %58, %cst_22 [1] : vector<8x32xf32> to vector<8xf32>
    %60 = vector.shape_cast %59 : vector<8xf32> to vector<8x1xf32>
    %cst_23 = arith.constant 3.200000e+01 : f32
    %61 = vector.broadcast %cst_23 : f32 to vector<8x1xf32>
    %62 = arith.divf %60, %61 : vector<8x1xf32>
    %63 = vector.broadcast %55 : vector<8x1xf32> to vector<8x32xf32>
    %64 = arith.subf %49, %63 : vector<8x32xf32>
    %cst_24 = arith.constant 9.99999974E-6 : f32
    %65 = vector.broadcast %cst_24 : f32 to vector<8x1xf32>
    %66 = arith.addf %62, %65 : vector<8x1xf32>
    %67 = math.rsqrt %66 : vector<8x1xf32>
    %68 = vector.broadcast %67 : vector<8x1xf32> to vector<8x32xf32>
    %69 = arith.mulf %64, %68 : vector<8x32xf32>
    %70 = vector.broadcast %50 : vector<1x32xf32> to vector<8x32xf32>
    %71 = arith.mulf %69, %70 : vector<8x32xf32>
    %72 = vector.broadcast %51 : vector<1x32xf32> to vector<8x32xf32>
    %73 = arith.addf %71, %72 : vector<8x32xf32>
    %74 = arith.truncf %73 : vector<8x32xf32> to vector<8x32xbf16>
    %c0_25 = arith.constant 0 : index
    %c0_26 = arith.constant 0 : index
    %c0_27 = arith.constant 0 : index
    %75 = vector.load %arg8[%c0_25, %c0_26, %c0_27] : memref<1x8x32xbf16, #tpu.memory_space<vmem>>, vector<1x8x32xbf16>
    %76 = vector.shape_cast %75 : vector<1x8x32xbf16> to vector<8x32xbf16>
    %77 = vector.shape_cast %74 : vector<8x32xbf16> to vector<1x8x32xbf16>
    tpu.vector_store %arg8[%c0_25, %c0_26, %c0_27], %77 {strides = array<i32>} : memref<1x8x32xbf16, #tpu.memory_space<vmem>>, vector<1x8x32xbf16>,
    return
  }
  func.func @transform_0(%arg0: i32) -> (i32, i32, i32) {
    %c0_i32 = arith.constant 0 : i32
    %c0_i32_0 = arith.constant 0 : i32
    %c0_i32_1 = arith.constant 0 : i32
    return %arg0, %c0_i32, %c0_i32_0 : i32, i32, i32
  }
  func.func @transform_1(%arg0: i32) -> (i32, i32) {
    %c0_i32 = arith.constant 0 : i32
    %c0_i32_0 = arith.constant 0 : i32
    %c0_i32_1 = arith.constant 0 : i32
    return %c0_i32, %c0_i32_0 : i32, i32
  }
  func.func @transform_2(%arg0: i32) -> (i32, i32) {
    %c0_i32 = arith.constant 0 : i32
    %c0_i32_0 = arith.constant 0 : i32
    %c0_i32_1 = arith.constant 0 : i32
    return %c0_i32, %c0_i32_0 : i32, i32
  }
  func.func @transform_3(%arg0: i32) -> (i32, i32) {
    %c0_i32 = arith.constant 0 : i32
    %c0_i32_0 = arith.constant 0 : i32
    %c0_i32_1 = arith.constant 0 : i32
    return %c0_i32, %c0_i32_0 : i32, i32
  }
  func.func @transform_4(%arg0: i32) -> (i32, i32) {
    %c0_i32 = arith.constant 0 : i32
    %c0_i32_0 = arith.constant 0 : i32
    %c0_i32_1 = arith.constant 0 : i32
    return %c0_i32, %c0_i32_0 : i32, i32
  }
  func.func @transform_5(%arg0: i32) -> (i32, i32) {
    %c0_i32 = arith.constant 0 : i32
    %c0_i32_0 = arith.constant 0 : i32
    %c0_i32_1 = arith.constant 0 : i32
    return %c0_i32, %c0_i32_0 : i32, i32
  }
  func.func @transform_6(%arg0: i32) -> (i32, i32) {
    %c0_i32 = arith.constant 0 : i32
    %c0_i32_0 = arith.constant 0 : i32
    %c0_i32_1 = arith.constant 0 : i32
    return %c0_i32, %c0_i32_0 : i32, i32
  }
  func.func @transform_7(%arg0: i32) -> (i32, i32, i32) {
    %c0_i32 = arith.constant 0 : i32
    %c0_i32_0 = arith.constant 0 : i32
    %c0_i32_1 = arith.constant 0 : i32
    return %arg0, %c0_i32, %c0_i32_0 : i32, i32, i32
  }
}

module attributes {stable_mosaic.version = 11 : i64} {
  func.func @self_attn_block_kernel(%arg0: i32, %arg1: memref<1x8x32xbf16, #tpu.memory_space<vmem>>, %arg2: memref<32x96xbf16, #tpu.memory_space<vmem>>, %arg3: memref<1x96xf32, #tpu.memory_space<vmem>>, %arg4: memref<32x32xbf16, #tpu.memory_space<vmem>>, %arg5: memref<1x32xf32, #tpu.memory_space<vmem>>, %arg6: memref<1x32xf32, #tpu.memory_space<vmem>>, %arg7: memref<1x32xf32, #tpu.memory_space<vmem>>, %arg8: memref<1x8x32xbf16, #tpu.memory_space<vmem>>) attributes {dimension_semantics = [#tpu.dimension_semantics<parallel>], iteration_bounds = array<i64: 2>, scalar_prefetch = 0 : i64, scratch_operands = 0 : i64, tpu.core_type = #tpu.core_type<tc>, window_params = [{transform_indices = @transform_0, window_bounds = array<i64: 1, 8, 32>}, {pipeline_mode = #tpu.pipeline_mode<synchronous>, transform_indices = @transform_1, window_bounds = array<i64: 32, 96>}, {pipeline_mode = #tpu.pipeline_mode<synchronous>, transform_indices = @transform_2, window_bounds = array<i64: 1, 96>}, {pipeline_mode = #tpu.pipeline_mode<synchronous>, transform_indices = @transform_3, window_bounds = array<i64: 32, 32>}, {pipeline_mode = #tpu.pipeline_mode<synchronous>, transform_indices = @transform_4, window_bounds = array<i64: 1, 32>}, {pipeline_mode = #tpu.pipeline_mode<synchronous>, transform_indices = @transform_5, window_bounds = array<i64: 1, 32>}, {pipeline_mode = #tpu.pipeline_mode<synchronous>, transform_indices = @transform_6, window_bounds = array<i64: 1, 32>}, {transform_indices = @transform_7, window_bounds = array<i64: 1, 8, 32>}]} {
    %c0 = arith.constant 0 : index
    %c0_0 = arith.constant 0 : index
    %c0_1 = arith.constant 0 : index
    %0 = vector.load %arg1[%c0, %c0_0, %c0_1] : memref<1x8x32xbf16, #tpu.memory_space<vmem>>, vector<1x8x32xbf16>
    %1 = vector.shape_cast %0 : vector<1x8x32xbf16> to vector<8x32xbf16>
    %c0_2 = arith.constant 0 : index
    %c0_3 = arith.constant 0 : index
    %2 = vector.load %arg2[%c0_2, %c0_3] : memref<32x96xbf16, #tpu.memory_space<vmem>>, vector<32x96xbf16>
    %cst = arith.constant dense<0.000000e+00> : vector<8x96xf32>
    %3 = tpu.matmul %1, %2, %cst {dimension_numbers = #tpu.dot_dimension_numbers<[1], [0], [0], [1], [0, 0, 1, 1], [], []>} : vector<8x32xbf16>, vector<32x96xbf16>, vector<8x96xf32> -> vector<8x96xf32>
    %c0_4 = arith.constant 0 : index
    %c0_5 = arith.constant 0 : index
    %4 = vector.load %arg3[%c0_4, %c0_5] : memref<1x96xf32, #tpu.memory_space<vmem>>, vector<1x96xf32>
    %5 = vector.broadcast %4 : vector<1x96xf32> to vector<8x96xf32>
    %6 = arith.addf %3, %5 : vector<8x96xf32>
    %7 = vector.extract_strided_slice %6 {offsets = [0, 0], sizes = [8, 32], strides = [1, 1]} : vector<8x96xf32> to vector<8x32xf32>
    %8 = vector.extract_strided_slice %6 {offsets = [0, 32], sizes = [8, 32], strides = [1, 1]} : vector<8x96xf32> to vector<8x32xf32>
    %9 = vector.extract_strided_slice %6 {offsets = [0, 64], sizes = [8, 32], strides = [1, 1]} : vector<8x96xf32> to vector<8x32xf32>
    %10 = vector.shape_cast %7 : vector<8x32xf32> to vector<8x8x4xf32>
    %11 = tpu.transpose %10, [1, 0, 2] : vector<8x8x4xf32> -> vector<8x8x4xf32>
    %12 = arith.truncf %11 : vector<8x8x4xf32> to vector<8x8x4xbf16>
    %13 = vector.shape_cast %8 : vector<8x32xf32> to vector<8x8x4xf32>
    %14 = tpu.transpose %13, [1, 0, 2] : vector<8x8x4xf32> -> vector<8x8x4xf32>
    %15 = arith.truncf %14 : vector<8x8x4xf32> to vector<8x8x4xbf16>
    %16 = vector.shape_cast %9 : vector<8x32xf32> to vector<8x8x4xf32>
    %17 = tpu.transpose %16, [1, 0, 2] : vector<8x8x4xf32> -> vector<8x8x4xf32>
    %18 = arith.truncf %17 : vector<8x8x4xf32> to vector<8x8x4xbf16>
    "tpu.trace_start"() <{level = 10 : i32, message = "hqd,hkd->hqk"}> : () -> ()
    %cst_6 = arith.constant dense<0.000000e+00> : vector<8x8x8xf32>
    %19 = tpu.matmul %12, %15, %cst_6 {dimension_numbers = #tpu.dot_dimension_numbers<[2], [2], [1], [1], [0, 0, 0, 1, 1, 1], [0], [0]>} : vector<8x8x4xbf16>, vector<8x8x4xbf16>, vector<8x8x8xf32> -> vector<8x8x8xf32>
    "tpu.trace_stop"() : () -> ()
    %cst_7 = arith.constant dense<0xFF800000> : vector<8x8xf32>
    %20 = vector.multi_reduction <maximumf>, %19, %cst_7 [2] : vector<8x8x8xf32> to vector<8x8xf32>
    %21 = vector.shape_cast %20 : vector<8x8xf32> to vector<8x8x1xf32>
    %22 = vector.broadcast %21 : vector<8x8x1xf32> to vector<8x8x8xf32>
    %23 = arith.subf %19, %22 : vector<8x8x8xf32>
    %24 = math.exp %23 : vector<8x8x8xf32>
    %cst_8 = arith.constant dense<0.000000e+00> : vector<8x8xf32>
    %25 = vector.multi_reduction <add>, %24, %cst_8 [2] : vector<8x8x8xf32> to vector<8x8xf32>
    %26 = vector.shape_cast %25 : vector<8x8xf32> to vector<8x8x1xf32>
    %27 = tpu.reciprocal %26 : vector<8x8x1xf32> -> vector<8x8x1xf32>
    %28 = vector.broadcast %27 : vector<8x8x1xf32> to vector<8x8x8xf32>
    %29 = arith.mulf %24, %28 : vector<8x8x8xf32>
    %30 = arith.truncf %29 : vector<8x8x8xf32> to vector<8x8x8xbf16>
    "tpu.trace_start"() <{level = 10 : i32, message = "hqk,hkd->hqd"}> : () -> ()
    %cst_9 = arith.constant dense<0.000000e+00> : vector<8x8x4xf32>
    %31 = tpu.matmul %30, %18, %cst_9 {dimension_numbers = #tpu.dot_dimension_numbers<[2], [1], [1], [2], [0, 0, 0, 1, 1, 2], [0], [0]>} : vector<8x8x8xbf16>, vector<8x8x4xbf16>, vector<8x8x4xf32> -> vector<8x8x4xf32>
    "tpu.trace_stop"() : () -> ()
    %32 = tpu.transpose %31, [1, 0, 2] : vector<8x8x4xf32> -> vector<8x8x4xf32>
    %33 = vector.shape_cast %32 : vector<8x8x4xf32> to vector<8x32xf32>
    %34 = arith.truncf %33 : vector<8x32xf32> to vector<8x32xbf16>
    %c0_10 = arith.constant 0 : index
    %c0_11 = arith.constant 0 : index
    %35 = vector.load %arg4[%c0_10, %c0_11] : memref<32x32xbf16, #tpu.memory_space<vmem>>, vector<32x32xbf16>
    %cst_12 = arith.constant dense<0.000000e+00> : vector<8x32xf32>
    %36 = tpu.matmul %34, %35, %cst_12 {dimension_numbers = #tpu.dot_dimension_numbers<[1], [0], [0], [1], [0, 0, 1, 1], [], []>} : vector<8x32xbf16>, vector<32x32xbf16>, vector<8x32xf32> -> vector<8x32xf32>
    %c0_13 = arith.constant 0 : index
    %c0_14 = arith.constant 0 : index
    %37 = vector.load %arg5[%c0_13, %c0_14] : memref<1x32xf32, #tpu.memory_space<vmem>>, vector<1x32xf32>
    %38 = vector.broadcast %37 : vector<1x32xf32> to vector<8x32xf32>
    %39 = arith.addf %36, %38 : vector<8x32xf32>
    %40 = arith.extf %1 : vector<8x32xbf16> to vector<8x32xf32>
    %41 = arith.addf %40, %39 : vector<8x32xf32>
    %c0_15 = arith.constant 0 : index
    %c0_16 = arith.constant 0 : index
    %42 = vector.load %arg6[%c0_15, %c0_16] : memref<1x32xf32, #tpu.memory_space<vmem>>, vector<1x32xf32>
    %c0_17 = arith.constant 0 : index
    %c0_18 = arith.constant 0 : index
    %43 = vector.load %arg7[%c0_17, %c0_18] : memref<1x32xf32, #tpu.memory_space<vmem>>, vector<1x32xf32>
    %cst_19 = arith.constant dense<0.000000e+00> : vector<8xf32>
    %44 = vector.multi_reduction <add>, %41, %cst_19 [1] : vector<8x32xf32> to vector<8xf32>
    %45 = vector.shape_cast %44 : vector<8xf32> to vector<8x1xf32>
    %cst_20 = arith.constant 3.200000e+01 : f32
    %46 = vector.broadcast %cst_20 : f32 to vector<8x1xf32>
    %47 = arith.divf %45, %46 : vector<8x1xf32>
    %48 = vector.broadcast %47 : vector<8x1xf32> to vector<8x32xf32>
    %49 = arith.subf %41, %48 : vector<8x32xf32>
    %50 = arith.mulf %49, %49 : vector<8x32xf32>
    %cst_21 = arith.constant dense<0.000000e+00> : vector<8xf32>
    %51 = vector.multi_reduction <add>, %50, %cst_21 [1] : vector<8x32xf32> to vector<8xf32>
    %52 = vector.shape_cast %51 : vector<8xf32> to vector<8x1xf32>
    %cst_22 = arith.constant 3.200000e+01 : f32
    %53 = vector.broadcast %cst_22 : f32 to vector<8x1xf32>
    %54 = arith.divf %52, %53 : vector<8x1xf32>
    %55 = vector.broadcast %47 : vector<8x1xf32> to vector<8x32xf32>
    %56 = arith.subf %41, %55 : vector<8x32xf32>
    %cst_23 = arith.constant 9.99999974E-6 : f32
    %57 = vector.broadcast %cst_23 : f32 to vector<8x1xf32>
    %58 = arith.addf %54, %57 : vector<8x1xf32>
    %59 = math.rsqrt %58 : vector<8x1xf32>
    %60 = vector.broadcast %59 : vector<8x1xf32> to vector<8x32xf32>
    %61 = arith.mulf %56, %60 : vector<8x32xf32>
    %62 = vector.broadcast %42 : vector<1x32xf32> to vector<8x32xf32>
    %63 = arith.mulf %61, %62 : vector<8x32xf32>
    %64 = vector.broadcast %43 : vector<1x32xf32> to vector<8x32xf32>
    %65 = arith.addf %63, %64 : vector<8x32xf32>
    %66 = arith.truncf %65 : vector<8x32xf32> to vector<8x32xbf16>
    %c0_24 = arith.constant 0 : index
    %c0_25 = arith.constant 0 : index
    %c0_26 = arith.constant 0 : index
    %67 = vector.load %arg8[%c0_24, %c0_25, %c0_26] : memref<1x8x32xbf16, #tpu.memory_space<vmem>>, vector<1x8x32xbf16>
    %68 = vector.shape_cast %67 : vector<1x8x32xbf16> to vector<8x32xbf16>
    %69 = vector.shape_cast %66 : vector<8x32xbf16> to vector<1x8x32xbf16>
    tpu.vector_store %arg8[%c0_24, %c0_25, %c0_26], %69 {strides = array<i32>} : memref<1x8x32xbf16, #tpu.memory_space<vmem>>, vector<1x8x32xbf16>,
    return
  }
  func.func @transform_0(%arg0: i32) -> (i32, i32, i32) {
    %c0_i32 = arith.constant 0 : i32
    %c0_i32_0 = arith.constant 0 : i32
    %c0_i32_1 = arith.constant 0 : i32
    return %arg0, %c0_i32, %c0_i32_0 : i32, i32, i32
  }
  func.func @transform_1(%arg0: i32) -> (i32, i32) {
    %c0_i32 = arith.constant 0 : i32
    %c0_i32_0 = arith.constant 0 : i32
    %c0_i32_1 = arith.constant 0 : i32
    return %c0_i32, %c0_i32_0 : i32, i32
  }
  func.func @transform_2(%arg0: i32) -> (i32, i32) {
    %c0_i32 = arith.constant 0 : i32
    %c0_i32_0 = arith.constant 0 : i32
    %c0_i32_1 = arith.constant 0 : i32
    return %c0_i32, %c0_i32_0 : i32, i32
  }
  func.func @transform_3(%arg0: i32) -> (i32, i32) {
    %c0_i32 = arith.constant 0 : i32
    %c0_i32_0 = arith.constant 0 : i32
    %c0_i32_1 = arith.constant 0 : i32
    return %c0_i32, %c0_i32_0 : i32, i32
  }
  func.func @transform_4(%arg0: i32) -> (i32, i32) {
    %c0_i32 = arith.constant 0 : i32
    %c0_i32_0 = arith.constant 0 : i32
    %c0_i32_1 = arith.constant 0 : i32
    return %c0_i32, %c0_i32_0 : i32, i32
  }
  func.func @transform_5(%arg0: i32) -> (i32, i32) {
    %c0_i32 = arith.constant 0 : i32
    %c0_i32_0 = arith.constant 0 : i32
    %c0_i32_1 = arith.constant 0 : i32
    return %c0_i32, %c0_i32_0 : i32, i32
  }
  func.func @transform_6(%arg0: i32) -> (i32, i32) {
    %c0_i32 = arith.constant 0 : i32
    %c0_i32_0 = arith.constant 0 : i32
    %c0_i32_1 = arith.constant 0 : i32
    return %c0_i32, %c0_i32_0 : i32, i32
  }
  func.func @transform_7(%arg0: i32) -> (i32, i32, i32) {
    %c0_i32 = arith.constant 0 : i32
    %c0_i32_0 = arith.constant 0 : i32
    %c0_i32_1 = arith.constant 0 : i32
    return %arg0, %c0_i32, %c0_i32_0 : i32, i32, i32
  }
}

module attributes {stable_mosaic.version = 11 : i64} {
  func.func @layernorm_kernel(%arg0: i32, %arg1: memref<8x32xbf16, #tpu.memory_space<vmem>>, %arg2: memref<1x32xf32, #tpu.memory_space<vmem>>, %arg3: memref<1x32xf32, #tpu.memory_space<vmem>>, %arg4: memref<8x32xbf16, #tpu.memory_space<vmem>>) attributes {dimension_semantics = [#tpu.dimension_semantics<parallel>], iteration_bounds = array<i64: 2>, scalar_prefetch = 0 : i64, scratch_operands = 0 : i64, tpu.core_type = #tpu.core_type<tc>, window_params = [{transform_indices = @transform_0, window_bounds = array<i64: 8, 32>}, {pipeline_mode = #tpu.pipeline_mode<synchronous>, transform_indices = @transform_1, window_bounds = array<i64: 1, 32>}, {pipeline_mode = #tpu.pipeline_mode<synchronous>, transform_indices = @transform_2, window_bounds = array<i64: 1, 32>}, {transform_indices = @transform_3, window_bounds = array<i64: 8, 32>}]} {
    %c0 = arith.constant 0 : index
    %c0_0 = arith.constant 0 : index
    %0 = vector.load %arg1[%c0, %c0_0] : memref<8x32xbf16, #tpu.memory_space<vmem>>, vector<8x32xbf16>
    %1 = arith.extf %0 : vector<8x32xbf16> to vector<8x32xf32>
    %c0_1 = arith.constant 0 : index
    %c0_2 = arith.constant 0 : index
    %2 = vector.load %arg2[%c0_1, %c0_2] : memref<1x32xf32, #tpu.memory_space<vmem>>, vector<1x32xf32>
    %c0_3 = arith.constant 0 : index
    %c0_4 = arith.constant 0 : index
    %3 = vector.load %arg3[%c0_3, %c0_4] : memref<1x32xf32, #tpu.memory_space<vmem>>, vector<1x32xf32>
    %cst = arith.constant dense<0.000000e+00> : vector<8xf32>
    %4 = vector.multi_reduction <add>, %1, %cst [1] : vector<8x32xf32> to vector<8xf32>
    %5 = vector.shape_cast %4 : vector<8xf32> to vector<8x1xf32>
    %cst_5 = arith.constant 3.200000e+01 : f32
    %6 = vector.broadcast %cst_5 : f32 to vector<8x1xf32>
    %7 = arith.divf %5, %6 : vector<8x1xf32>
    %8 = vector.broadcast %7 : vector<8x1xf32> to vector<8x32xf32>
    %9 = arith.subf %1, %8 : vector<8x32xf32>
    %10 = arith.mulf %9, %9 : vector<8x32xf32>
    %cst_6 = arith.constant dense<0.000000e+00> : vector<8xf32>
    %11 = vector.multi_reduction <add>, %10, %cst_6 [1] : vector<8x32xf32> to vector<8xf32>
    %12 = vector.shape_cast %11 : vector<8xf32> to vector<8x1xf32>
    %cst_7 = arith.constant 3.200000e+01 : f32
    %13 = vector.broadcast %cst_7 : f32 to vector<8x1xf32>
    %14 = arith.divf %12, %13 : vector<8x1xf32>
    %15 = vector.broadcast %7 : vector<8x1xf32> to vector<8x32xf32>
    %16 = arith.subf %1, %15 : vector<8x32xf32>
    %cst_8 = arith.constant 9.99999974E-6 : f32
    %17 = vector.broadcast %cst_8 : f32 to vector<8x1xf32>
    %18 = arith.addf %14, %17 : vector<8x1xf32>
    %19 = math.rsqrt %18 : vector<8x1xf32>
    %20 = vector.broadcast %19 : vector<8x1xf32> to vector<8x32xf32>
    %21 = arith.mulf %16, %20 : vector<8x32xf32>
    %22 = vector.broadcast %2 : vector<1x32xf32> to vector<8x32xf32>
    %23 = arith.mulf %21, %22 : vector<8x32xf32>
    %24 = vector.broadcast %3 : vector<1x32xf32> to vector<8x32xf32>
    %25 = arith.addf %23, %24 : vector<8x32xf32>
    %26 = arith.truncf %25 : vector<8x32xf32> to vector<8x32xbf16>
    %c0_9 = arith.constant 0 : index
    %c0_10 = arith.constant 0 : index
    %27 = vector.load %arg4[%c0_9, %c0_10] : memref<8x32xbf16, #tpu.memory_space<vmem>>, vector<8x32xbf16>
    tpu.vector_store %arg4[%c0_9, %c0_10], %26 {strides = array<i32>} : memref<8x32xbf16, #tpu.memory_space<vmem>>, vector<8x32xbf16>,
    return
  }
  func.func @transform_0(%arg0: i32) -> (i32, i32) {
    %c0_i32 = arith.constant 0 : i32
    %c0_i32_0 = arith.constant 0 : i32
    return %arg0, %c0_i32 : i32, i32
  }
  func.func @transform_1(%arg0: i32) -> (i32, i32) {
    %c0_i32 = arith.constant 0 : i32
    %c0_i32_0 = arith.constant 0 : i32
    %c0_i32_1 = arith.constant 0 : i32
    return %c0_i32, %c0_i32_0 : i32, i32
  }
  func.func @transform_2(%arg0: i32) -> (i32, i32) {
    %c0_i32 = arith.constant 0 : i32
    %c0_i32_0 = arith.constant 0 : i32
    %c0_i32_1 = arith.constant 0 : i32
    return %c0_i32, %c0_i32_0 : i32, i32
  }
  func.func @transform_3(%arg0: i32) -> (i32, i32) {
    %c0_i32 = arith.constant 0 : i32
    %c0_i32_0 = arith.constant 0 : i32
    return %arg0, %c0_i32 : i32, i32
  }
}

module attributes {stable_mosaic.version = 11 : i64} {
  func.func @gen_softmax_kernel(%arg0: i32, %arg1: memref<8x32xbf16, #tpu.memory_space<vmem>>, %arg2: memref<32x64xbf16, #tpu.memory_space<vmem>>, %arg3: memref<1x64xf32, #tpu.memory_space<vmem>>, %arg4: memref<8x64xf32, #tpu.memory_space<vmem>>) attributes {dimension_semantics = [#tpu.dimension_semantics<parallel>], iteration_bounds = array<i64: 2>, scalar_prefetch = 0 : i64, scratch_operands = 0 : i64, tpu.core_type = #tpu.core_type<tc>, window_params = [{transform_indices = @transform_0, window_bounds = array<i64: 8, 32>}, {pipeline_mode = #tpu.pipeline_mode<synchronous>, transform_indices = @transform_1, window_bounds = array<i64: 32, 64>}, {pipeline_mode = #tpu.pipeline_mode<synchronous>, transform_indices = @transform_2, window_bounds = array<i64: 1, 64>}, {transform_indices = @transform_3, window_bounds = array<i64: 8, 64>}]} {
    %c0 = arith.constant 0 : index
    %c0_0 = arith.constant 0 : index
    %0 = vector.load %arg1[%c0, %c0_0] : memref<8x32xbf16, #tpu.memory_space<vmem>>, vector<8x32xbf16>
    %c0_1 = arith.constant 0 : index
    %c0_2 = arith.constant 0 : index
    %1 = vector.load %arg2[%c0_1, %c0_2] : memref<32x64xbf16, #tpu.memory_space<vmem>>, vector<32x64xbf16>
    %cst = arith.constant dense<0.000000e+00> : vector<8x64xf32>
    %2 = tpu.matmul %0, %1, %cst {dimension_numbers = #tpu.dot_dimension_numbers<[1], [0], [0], [1], [0, 0, 1, 1], [], []>} : vector<8x32xbf16>, vector<32x64xbf16>, vector<8x64xf32> -> vector<8x64xf32>
    %c0_3 = arith.constant 0 : index
    %c0_4 = arith.constant 0 : index
    %3 = vector.load %arg3[%c0_3, %c0_4] : memref<1x64xf32, #tpu.memory_space<vmem>>, vector<1x64xf32>
    %4 = vector.broadcast %3 : vector<1x64xf32> to vector<8x64xf32>
    %5 = arith.addf %2, %4 : vector<8x64xf32>
    %cst_5 = arith.constant dense<0xFF800000> : vector<8xf32>
    %6 = vector.multi_reduction <maximumf>, %5, %cst_5 [1] : vector<8x64xf32> to vector<8xf32>
    %7 = vector.shape_cast %6 : vector<8xf32> to vector<8x1xf32>
    %8 = vector.broadcast %7 : vector<8x1xf32> to vector<8x64xf32>
    %9 = arith.subf %5, %8 : vector<8x64xf32>
    %10 = math.exp %9 : vector<8x64xf32>
    %cst_6 = arith.constant dense<0.000000e+00> : vector<8xf32>
    %11 = vector.multi_reduction <add>, %10, %cst_6 [1] : vector<8x64xf32> to vector<8xf32>
    %12 = vector.shape_cast %11 : vector<8xf32> to vector<8x1xf32>
    %13 = tpu.reciprocal %12 : vector<8x1xf32> -> vector<8x1xf32>
    %14 = vector.broadcast %13 : vector<8x1xf32> to vector<8x64xf32>
    %15 = arith.mulf %10, %14 : vector<8x64xf32>
    %c0_7 = arith.constant 0 : index
    %c0_8 = arith.constant 0 : index
    %16 = vector.load %arg4[%c0_7, %c0_8] : memref<8x64xf32, #tpu.memory_space<vmem>>, vector<8x64xf32>
    tpu.vector_store %arg4[%c0_7, %c0_8], %15 {strides = array<i32>} : memref<8x64xf32, #tpu.memory_space<vmem>>, vector<8x64xf32>,
    return
  }
  func.func @transform_0(%arg0: i32) -> (i32, i32) {
    %c0_i32 = arith.constant 0 : i32
    %c0_i32_0 = arith.constant 0 : i32
    return %arg0, %c0_i32 : i32, i32
  }
  func.func @transform_1(%arg0: i32) -> (i32, i32) {
    %c0_i32 = arith.constant 0 : i32
    %c0_i32_0 = arith.constant 0 : i32
    %c0_i32_1 = arith.constant 0 : i32
    return %c0_i32, %c0_i32_0 : i32, i32
  }
  func.func @transform_2(%arg0: i32) -> (i32, i32) {
    %c0_i32 = arith.constant 0 : i32
    %c0_i32_0 = arith.constant 0 : i32
    %c0_i32_1 = arith.constant 0 : i32
    return %c0_i32, %c0_i32_0 : i32, i32
  }
  func.func @transform_3(%arg0: i32) -> (i32, i32) {
    %c0_i32 = arith.constant 0 : i32
    %c0_i32_0 = arith.constant 0 : i32
    return %arg0, %c0_i32 : i32, i32
  }
}

module attributes {stable_mosaic.version = 11 : i64} {
  func.func @cross_attn_block_kernel(%arg0: i32, %arg1: memref<1x8x32xbf16, #tpu.memory_space<vmem>>, %arg2: memref<1x8x32xbf16, #tpu.memory_space<vmem>>, %arg3: memref<32x32xbf16, #tpu.memory_space<vmem>>, %arg4: memref<1x32xf32, #tpu.memory_space<vmem>>, %arg5: memref<32x64xbf16, #tpu.memory_space<vmem>>, %arg6: memref<1x64xf32, #tpu.memory_space<vmem>>, %arg7: memref<32x32xbf16, #tpu.memory_space<vmem>>, %arg8: memref<1x32xf32, #tpu.memory_space<vmem>>, %arg9: memref<1x32xf32, #tpu.memory_space<vmem>>, %arg10: memref<1x32xf32, #tpu.memory_space<vmem>>, %arg11: memref<1x8x32xbf16, #tpu.memory_space<vmem>>) attributes {dimension_semantics = [#tpu.dimension_semantics<parallel>], iteration_bounds = array<i64: 2>, scalar_prefetch = 0 : i64, scratch_operands = 0 : i64, tpu.core_type = #tpu.core_type<tc>, window_params = [{transform_indices = @transform_0, window_bounds = array<i64: 1, 8, 32>}, {transform_indices = @transform_1, window_bounds = array<i64: 1, 8, 32>}, {pipeline_mode = #tpu.pipeline_mode<synchronous>, transform_indices = @transform_2, window_bounds = array<i64: 32, 32>}, {pipeline_mode = #tpu.pipeline_mode<synchronous>, transform_indices = @transform_3, window_bounds = array<i64: 1, 32>}, {pipeline_mode = #tpu.pipeline_mode<synchronous>, transform_indices = @transform_4, window_bounds = array<i64: 32, 64>}, {pipeline_mode = #tpu.pipeline_mode<synchronous>, transform_indices = @transform_5, window_bounds = array<i64: 1, 64>}, {pipeline_mode = #tpu.pipeline_mode<synchronous>, transform_indices = @transform_6, window_bounds = array<i64: 32, 32>}, {pipeline_mode = #tpu.pipeline_mode<synchronous>, transform_indices = @transform_7, window_bounds = array<i64: 1, 32>}, {pipeline_mode = #tpu.pipeline_mode<synchronous>, transform_indices = @transform_8, window_bounds = array<i64: 1, 32>}, {pipeline_mode = #tpu.pipeline_mode<synchronous>, transform_indices = @transform_9, window_bounds = array<i64: 1, 32>}, {transform_indices = @transform_10, window_bounds = array<i64: 1, 8, 32>}]} {
    %c0 = arith.constant 0 : index
    %c0_0 = arith.constant 0 : index
    %c0_1 = arith.constant 0 : index
    %0 = vector.load %arg1[%c0, %c0_0, %c0_1] : memref<1x8x32xbf16, #tpu.memory_space<vmem>>, vector<1x8x32xbf16>
    %1 = vector.shape_cast %0 : vector<1x8x32xbf16> to vector<8x32xbf16>
    %c0_2 = arith.constant 0 : index
    %c0_3 = arith.constant 0 : index
    %c0_4 = arith.constant 0 : index
    %2 = vector.load %arg2[%c0_2, %c0_3, %c0_4] : memref<1x8x32xbf16, #tpu.memory_space<vmem>>, vector<1x8x32xbf16>
    %3 = vector.shape_cast %2 : vector<1x8x32xbf16> to vector<8x32xbf16>
    %c0_5 = arith.constant 0 : index
    %c0_6 = arith.constant 0 : index
    %4 = vector.load %arg3[%c0_5, %c0_6] : memref<32x32xbf16, #tpu.memory_space<vmem>>, vector<32x32xbf16>
    %cst = arith.constant dense<0.000000e+00> : vector<8x32xf32>
    %5 = tpu.matmul %1, %4, %cst {dimension_numbers = #tpu.dot_dimension_numbers<[1], [0], [0], [1], [0, 0, 1, 1], [], []>} : vector<8x32xbf16>, vector<32x32xbf16>, vector<8x32xf32> -> vector<8x32xf32>
    %c0_7 = arith.constant 0 : index
    %c0_8 = arith.constant 0 : index
    %6 = vector.load %arg4[%c0_7, %c0_8] : memref<1x32xf32, #tpu.memory_space<vmem>>, vector<1x32xf32>
    %7 = vector.broadcast %6 : vector<1x32xf32> to vector<8x32xf32>
    %8 = arith.addf %5, %7 : vector<8x32xf32>
    %c0_9 = arith.constant 0 : index
    %c0_10 = arith.constant 0 : index
    %9 = vector.load %arg5[%c0_9, %c0_10] : memref<32x64xbf16, #tpu.memory_space<vmem>>, vector<32x64xbf16>
    %cst_11 = arith.constant dense<0.000000e+00> : vector<8x64xf32>
    %10 = tpu.matmul %3, %9, %cst_11 {dimension_numbers = #tpu.dot_dimension_numbers<[1], [0], [0], [1], [0, 0, 1, 1], [], []>} : vector<8x32xbf16>, vector<32x64xbf16>, vector<8x64xf32> -> vector<8x64xf32>
    %c0_12 = arith.constant 0 : index
    %c0_13 = arith.constant 0 : index
    %11 = vector.load %arg6[%c0_12, %c0_13] : memref<1x64xf32, #tpu.memory_space<vmem>>, vector<1x64xf32>
    %12 = vector.broadcast %11 : vector<1x64xf32> to vector<8x64xf32>
    %13 = arith.addf %10, %12 : vector<8x64xf32>
    %14 = vector.extract_strided_slice %13 {offsets = [0, 0], sizes = [8, 32], strides = [1, 1]} : vector<8x64xf32> to vector<8x32xf32>
    %15 = vector.extract_strided_slice %13 {offsets = [0, 32], sizes = [8, 32], strides = [1, 1]} : vector<8x64xf32> to vector<8x32xf32>
    %16 = vector.shape_cast %8 : vector<8x32xf32> to vector<8x8x4xf32>
    %17 = tpu.transpose %16, [1, 0, 2] : vector<8x8x4xf32> -> vector<8x8x4xf32>
    %18 = arith.truncf %17 : vector<8x8x4xf32> to vector<8x8x4xbf16>
    %19 = vector.shape_cast %14 : vector<8x32xf32> to vector<8x8x4xf32>
    %20 = tpu.transpose %19, [1, 0, 2] : vector<8x8x4xf32> -> vector<8x8x4xf32>
    %21 = arith.truncf %20 : vector<8x8x4xf32> to vector<8x8x4xbf16>
    %22 = vector.shape_cast %15 : vector<8x32xf32> to vector<8x8x4xf32>
    %23 = tpu.transpose %22, [1, 0, 2] : vector<8x8x4xf32> -> vector<8x8x4xf32>
    %24 = arith.truncf %23 : vector<8x8x4xf32> to vector<8x8x4xbf16>
    "tpu.trace_start"() <{level = 10 : i32, message = "hqd,hkd->hqk"}> : () -> ()
    %cst_14 = arith.constant dense<0.000000e+00> : vector<8x8x8xf32>
    %25 = tpu.matmul %18, %21, %cst_14 {dimension_numbers = #tpu.dot_dimension_numbers<[2], [2], [1], [1], [0, 0, 0, 1, 1, 1], [0], [0]>} : vector<8x8x4xbf16>, vector<8x8x4xbf16>, vector<8x8x8xf32> -> vector<8x8x8xf32>
    "tpu.trace_stop"() : () -> ()
    %cst_15 = arith.constant dense<0xFF800000> : vector<8x8xf32>
    %26 = vector.multi_reduction <maximumf>, %25, %cst_15 [2] : vector<8x8x8xf32> to vector<8x8xf32>
    %27 = vector.shape_cast %26 : vector<8x8xf32> to vector<8x8x1xf32>
    %28 = vector.broadcast %27 : vector<8x8x1xf32> to vector<8x8x8xf32>
    %29 = arith.subf %25, %28 : vector<8x8x8xf32>
    %30 = math.exp %29 : vector<8x8x8xf32>
    %cst_16 = arith.constant dense<0.000000e+00> : vector<8x8xf32>
    %31 = vector.multi_reduction <add>, %30, %cst_16 [2] : vector<8x8x8xf32> to vector<8x8xf32>
    %32 = vector.shape_cast %31 : vector<8x8xf32> to vector<8x8x1xf32>
    %33 = tpu.reciprocal %32 : vector<8x8x1xf32> -> vector<8x8x1xf32>
    %34 = vector.broadcast %33 : vector<8x8x1xf32> to vector<8x8x8xf32>
    %35 = arith.mulf %30, %34 : vector<8x8x8xf32>
    %36 = arith.truncf %35 : vector<8x8x8xf32> to vector<8x8x8xbf16>
    "tpu.trace_start"() <{level = 10 : i32, message = "hqk,hkd->hqd"}> : () -> ()
    %cst_17 = arith.constant dense<0.000000e+00> : vector<8x8x4xf32>
    %37 = tpu.matmul %36, %24, %cst_17 {dimension_numbers = #tpu.dot_dimension_numbers<[2], [1], [1], [2], [0, 0, 0, 1, 1, 2], [0], [0]>} : vector<8x8x8xbf16>, vector<8x8x4xbf16>, vector<8x8x4xf32> -> vector<8x8x4xf32>
    "tpu.trace_stop"() : () -> ()
    %38 = tpu.transpose %37, [1, 0, 2] : vector<8x8x4xf32> -> vector<8x8x4xf32>
    %39 = vector.shape_cast %38 : vector<8x8x4xf32> to vector<8x32xf32>
    %40 = arith.truncf %39 : vector<8x32xf32> to vector<8x32xbf16>
    %c0_18 = arith.constant 0 : index
    %c0_19 = arith.constant 0 : index
    %41 = vector.load %arg7[%c0_18, %c0_19] : memref<32x32xbf16, #tpu.memory_space<vmem>>, vector<32x32xbf16>
    %cst_20 = arith.constant dense<0.000000e+00> : vector<8x32xf32>
    %42 = tpu.matmul %40, %41, %cst_20 {dimension_numbers = #tpu.dot_dimension_numbers<[1], [0], [0], [1], [0, 0, 1, 1], [], []>} : vector<8x32xbf16>, vector<32x32xbf16>, vector<8x32xf32> -> vector<8x32xf32>
    %c0_21 = arith.constant 0 : index
    %c0_22 = arith.constant 0 : index
    %43 = vector.load %arg8[%c0_21, %c0_22] : memref<1x32xf32, #tpu.memory_space<vmem>>, vector<1x32xf32>
    %44 = vector.broadcast %43 : vector<1x32xf32> to vector<8x32xf32>
    %45 = arith.addf %42, %44 : vector<8x32xf32>
    %46 = arith.extf %1 : vector<8x32xbf16> to vector<8x32xf32>
    %47 = arith.addf %46, %45 : vector<8x32xf32>
    %c0_23 = arith.constant 0 : index
    %c0_24 = arith.constant 0 : index
    %48 = vector.load %arg9[%c0_23, %c0_24] : memref<1x32xf32, #tpu.memory_space<vmem>>, vector<1x32xf32>
    %c0_25 = arith.constant 0 : index
    %c0_26 = arith.constant 0 : index
    %49 = vector.load %arg10[%c0_25, %c0_26] : memref<1x32xf32, #tpu.memory_space<vmem>>, vector<1x32xf32>
    %cst_27 = arith.constant dense<0.000000e+00> : vector<8xf32>
    %50 = vector.multi_reduction <add>, %47, %cst_27 [1] : vector<8x32xf32> to vector<8xf32>
    %51 = vector.shape_cast %50 : vector<8xf32> to vector<8x1xf32>
    %cst_28 = arith.constant 3.200000e+01 : f32
    %52 = vector.broadcast %cst_28 : f32 to vector<8x1xf32>
    %53 = arith.divf %51, %52 : vector<8x1xf32>
    %54 = vector.broadcast %53 : vector<8x1xf32> to vector<8x32xf32>
    %55 = arith.subf %47, %54 : vector<8x32xf32>
    %56 = arith.mulf %55, %55 : vector<8x32xf32>
    %cst_29 = arith.constant dense<0.000000e+00> : vector<8xf32>
    %57 = vector.multi_reduction <add>, %56, %cst_29 [1] : vector<8x32xf32> to vector<8xf32>
    %58 = vector.shape_cast %57 : vector<8xf32> to vector<8x1xf32>
    %cst_30 = arith.constant 3.200000e+01 : f32
    %59 = vector.broadcast %cst_30 : f32 to vector<8x1xf32>
    %60 = arith.divf %58, %59 : vector<8x1xf32>
    %61 = vector.broadcast %53 : vector<8x1xf32> to vector<8x32xf32>
    %62 = arith.subf %47, %61 : vector<8x32xf32>
    %cst_31 = arith.constant 9.99999974E-6 : f32
    %63 = vector.broadcast %cst_31 : f32 to vector<8x1xf32>
    %64 = arith.addf %60, %63 : vector<8x1xf32>
    %65 = math.rsqrt %64 : vector<8x1xf32>
    %66 = vector.broadcast %65 : vector<8x1xf32> to vector<8x32xf32>
    %67 = arith.mulf %62, %66 : vector<8x32xf32>
    %68 = vector.broadcast %48 : vector<1x32xf32> to vector<8x32xf32>
    %69 = arith.mulf %67, %68 : vector<8x32xf32>
    %70 = vector.broadcast %49 : vector<1x32xf32> to vector<8x32xf32>
    %71 = arith.addf %69, %70 : vector<8x32xf32>
    %72 = arith.truncf %71 : vector<8x32xf32> to vector<8x32xbf16>
    %c0_32 = arith.constant 0 : index
    %c0_33 = arith.constant 0 : index
    %c0_34 = arith.constant 0 : index
    %73 = vector.load %arg11[%c0_32, %c0_33, %c0_34] : memref<1x8x32xbf16, #tpu.memory_space<vmem>>, vector<1x8x32xbf16>
    %74 = vector.shape_cast %73 : vector<1x8x32xbf16> to vector<8x32xbf16>
    %75 = vector.shape_cast %72 : vector<8x32xbf16> to vector<1x8x32xbf16>
    tpu.vector_store %arg11[%c0_32, %c0_33, %c0_34], %75 {strides = array<i32>} : memref<1x8x32xbf16, #tpu.memory_space<vmem>>, vector<1x8x32xbf16>,
    return
  }
  func.func @transform_0(%arg0: i32) -> (i32, i32, i32) {
    %c0_i32 = arith.constant 0 : i32
    %c0_i32_0 = arith.constant 0 : i32
    %c0_i32_1 = arith.constant 0 : i32
    return %arg0, %c0_i32, %c0_i32_0 : i32, i32, i32
  }
  func.func @transform_1(%arg0: i32) -> (i32, i32, i32) {
    %c0_i32 = arith.constant 0 : i32
    %c0_i32_0 = arith.constant 0 : i32
    %c0_i32_1 = arith.constant 0 : i32
    return %arg0, %c0_i32, %c0_i32_0 : i32, i32, i32
  }
  func.func @transform_2(%arg0: i32) -> (i32, i32) {
    %c0_i32 = arith.constant 0 : i32
    %c0_i32_0 = arith.constant 0 : i32
    %c0_i32_1 = arith.constant 0 : i32
    return %c0_i32, %c0_i32_0 : i32, i32
  }
  func.func @transform_3(%arg0: i32) -> (i32, i32) {
    %c0_i32 = arith.constant 0 : i32
    %c0_i32_0 = arith.constant 0 : i32
    %c0_i32_1 = arith.constant 0 : i32
    return %c0_i32, %c0_i32_0 : i32, i32
  }
  func.func @transform_4(%arg0: i32) -> (i32, i32) {
    %c0_i32 = arith.constant 0 : i32
    %c0_i32_0 = arith.constant 0 : i32
    %c0_i32_1 = arith.constant 0 : i32
    return %c0_i32, %c0_i32_0 : i32, i32
  }
  func.func @transform_5(%arg0: i32) -> (i32, i32) {
    %c0_i32 = arith.constant 0 : i32
    %c0_i32_0 = arith.constant 0 : i32
    %c0_i32_1 = arith.constant 0 : i32
    return %c0_i32, %c0_i32_0 : i32, i32
  }
  func.func @transform_6(%arg0: i32) -> (i32, i32) {
    %c0_i32 = arith.constant 0 : i32
    %c0_i32_0 = arith.constant 0 : i32
    %c0_i32_1 = arith.constant 0 : i32
    return %c0_i32, %c0_i32_0 : i32, i32
  }
  func.func @transform_7(%arg0: i32) -> (i32, i32) {
    %c0_i32 = arith.constant 0 : i32
    %c0_i32_0 = arith.constant 0 : i32
    %c0_i32_1 = arith.constant 0 : i32
    return %c0_i32, %c0_i32_0 : i32, i32
  }
  func.func @transform_8(%arg0: i32) -> (i32, i32) {
    %c0_i32 = arith.constant 0 : i32
    %c0_i32_0 = arith.constant 0 : i32
    %c0_i32_1 = arith.constant 0 : i32
    return %c0_i32, %c0_i32_0 : i32, i32
  }
  func.func @transform_9(%arg0: i32) -> (i32, i32) {
    %c0_i32 = arith.constant 0 : i32
    %c0_i32_0 = arith.constant 0 : i32
    %c0_i32_1 = arith.constant 0 : i32
    return %c0_i32, %c0_i32_0 : i32, i32
  }
  func.func @transform_10(%arg0: i32) -> (i32, i32, i32) {
    %c0_i32 = arith.constant 0 : i32
    %c0_i32_0 = arith.constant 0 : i32
    %c0_i32_1 = arith.constant 0 : i32
    return %arg0, %c0_i32, %c0_i32_0 : i32, i32, i32
  }
}

</mosaic_0001>

<llo_original>
// kernel: prooformer_forward.18
$region0: #{prooformer_forward.18}
  #allocation0 [shape = 'u32[]', space=smem, size = 0x4, offset = 0x4, fixed_abs, tag = 'smem constant byte address 0x4 - core index']
  #allocation1 [shape = 'u32[144,128]{1,0:T(1,128)}', space=vmem, size = 0x12000, scoped, tag = 'internal scratch']
  %s0 = inlined_call_operand.vmem [shape: bf16[2,8,32], index: 0, kind: input, shape index: {}]
  %s1 = inlined_call_operand.vmem [shape: bf16[32,96], index: 1, kind: input, shape index: {}]
  %s2 = inlined_call_operand.vmem [shape: f32[1,96], index: 2, kind: input, shape index: {}]
  %s3 = inlined_call_operand.vmem [shape: bf16[32,32], index: 3, kind: input, shape index: {}]
  %s4 = inlined_call_operand.vmem [shape: f32[1,32], index: 4, kind: input, shape index: {}]
  %s5 = inlined_call_operand.vmem [shape: f32[1,32], index: 5, kind: input, shape index: {}]
  %s6 = inlined_call_operand.vmem [shape: f32[1,32], index: 6, kind: input, shape index: {}]
  %s7 = inlined_call_operand.vmem [shape: bf16[2,8,32], index: 7, kind: output, shape index: {}]
  %s8 = sld [smem:[#allocation0]]
  $region61: #{prooformer_forward.18} parent=0
    _
  %s10 = ssub.s32 1, %s8
  %s11 = scalar_select 0, %s10, %s8
  loop: start=0, step=1, limit=4
  $region2: #{prooformer_forward.18} parent=0 // loop_pre_header
    _
  $region3: #{prooformer_forward.18} parent=0 // loop_header
    %s13 = sphi 0, %s17
    %p14 = scmp.ge.s32.totalorder %s13, 4
    %s23 = sphi 0, %s25
    %s26 = sphi 0, %s23
    %s27 = sphi 0, %s26
    %s43 = sphi 0, %s27
    %s47 = sphi 0, %s47
    %s49 = sphi 0, %s47
    %s50 = sphi 0, %s49
    %s64 = sphi 0, %s50
    %s68 = sphi 0, %s68
    %s70 = sphi 0, %s68
    %s71 = sphi 0, %s70
    %s85 = sphi 0, %s71
    %s89 = sphi 0, %s89
    %s91 = sphi 0, %s89
    %s92 = sphi 0, %s91
    %s106 = sphi 0, %s92
    %s110 = sphi 0, %s110
    %s112 = sphi 0, %s110
    %s113 = sphi 0, %s112
    %s127 = sphi 0, %s113
    %s131 = sphi 0, %s131
    %s133 = sphi 0, %s131
    %s134 = sphi 0, %s133
    %s148 = sphi 0, %s134
    %s152 = sphi 0, %s152
    %s154 = sphi 0, %s152
    %s155 = sphi 0, %s154
    %s169 = sphi 0, %s155
    %s175 = sphi 0, %s177
    %s178 = sphi 0, %s175
    %s179 = sphi 0, %s178
    %s195 = sphi 0, %s179
  $region4: #{prooformer_forward.18} parent=0 // loop_header_branch
    %16 = sbr.rel (%p14) target = $region8
  $region5: #{prooformer_forward.18} parent=0 // loop_body
    %s18 = ssub.s32 %s13, 1
    %s19 = ssub.s32 %s13, 2
    %s20 = sadd.s32 %s13, 1
    %s21 = ssub.s32 %s13, %s20
    %p22 = scmp.eq.s32.totalorder %s21, 0
    %s24 = sadd.s32 %s23, 1
    %s25 = scalar_select %p22, %s23, %s24
    %p28 = pneg %p22
    %p29 = scmp.eq.s32.totalorder %s13, 1
    %p30 = por %p28, %p29
    %p31 = scmp.ne.s32.totalorder %s23, %s26
    %p32 = scmp.eq.s32.totalorder %s13, 0
    %p33 = por %p31, %p32
    %p34 = scmp.ne.s32.totalorder %s23, %s26
    %p35 = scmp.eq.s32.totalorder %s18, 1
    %p36 = por %p34, %p35
    %p37 = scmp.ne.s32.totalorder %s26, %s27
    %p38 = scmp.eq.s32.totalorder %s18, 0
    %p39 = por %p37, %p38
    %p40 = scmp.ne.s32.totalorder %s26, %s27
    %p41 = scmp.eq.s32.totalorder %s19, 1
    %p42 = por %p40, %p41
    %p44 = scmp.ne.s32.totalorder %s27, %s43
    %p45 = scmp.eq.s32.totalorder %s19, 0
    %p46 = por %p44, %p45
    %s48 = sadd.s32 %s47, 1
    %p51 = scmp.eq.s32.totalorder %s13, 1
    %p52 = scmp.ne.s32.totalorder %s47, %s49
    %p53 = scmp.eq.s32.totalorder %s13, 0
    %p54 = por %p52, %p53
    %p55 = scmp.ne.s32.totalorder %s47, %s49
    %p56 = scmp.eq.s32.totalorder %s18, 1
    %p57 = por %p55, %p56
    %p58 = scmp.ne.s32.totalorder %s49, %s50
    %p59 = scmp.eq.s32.totalorder %s18, 0
    %p60 = por %p58, %p59
    %p61 = scmp.ne.s32.totalorder %s49, %s50
    %p62 = scmp.eq.s32.totalorder %s19, 1
    %p63 = por %p61, %p62
    %p65 = scmp.ne.s32.totalorder %s50, %s64
    %p66 = scmp.eq.s32.totalorder %s19, 0
    %p67 = por %p65, %p66
    %s69 = sadd.s32 %s68, 1
    %p72 = scmp.eq.s32.totalorder %s13, 1
    %p73 = scmp.ne.s32.totalorder %s68, %s70
    %p74 = scmp.eq.s32.totalorder %s13, 0
    %p75 = por %p73, %p74
    %p76 = scmp.ne.s32.totalorder %s68, %s70
    %p77 = scmp.eq.s32.totalorder %s18, 1
    %p78 = por %p76, %p77
    %p79 = scmp.ne.s32.totalorder %s70, %s71
    %p80 = scmp.eq.s32.totalorder %s18, 0
    %p81 = por %p79, %p80
    %p82 = scmp.ne.s32.totalorder %s70, %s71
    %p83 = scmp.eq.s32.totalorder %s19, 1
    %p84 = por %p82, %p83
    %p86 = scmp.ne.s32.totalorder %s71, %s85
    %p87 = scmp.eq.s32.totalorder %s19, 0
    %p88 = por %p86, %p87
    %s90 = sadd.s32 %s89, 1
    %p93 = scmp.eq.s32.totalorder %s13, 1
    %p94 = scmp.ne.s32.totalorder %s89, %s91
    %p95 = scmp.eq.s32.totalorder %s13, 0
    %p96 = por %p94, %p95
    %p97 = scmp.ne.s32.totalorder %s89, %s91
    %p98 = scmp.eq.s32.totalorder %s18, 1
    %p99 = por %p97, %p98
    %p100 = scmp.ne.s32.totalorder %s91, %s92
    %p101 = scmp.eq.s32.totalorder %s18, 0
    %p102 = por %p100, %p101
    %p103 = scmp.ne.s32.totalorder %s91, %s92
    %p104 = scmp.eq.s32.totalorder %s19, 1
    %p105 = por %p103, %p104
    %p107 = scmp.ne.s32.totalorder %s92, %s106
    %p108 = scmp.eq.s32.totalorder %s19, 0
    %p109 = por %p107, %p108
    %s111 = sadd.s32 %s110, 1
    %p114 = scmp.eq.s32.totalorder %s13, 1
    %p115 = scmp.ne.s32.totalorder %s110, %s112
    %p116 = scmp.eq.s32.totalorder %s13, 0
    %p117 = por %p115, %p116
    %p118 = scmp.ne.s32.totalorder %s110, %s112
    %p119 = scmp.eq.s32.totalorder %s18, 1
    %p120 = por %p118, %p119
    %p121 = scmp.ne.s32.totalorder %s112, %s113
    %p122 = scmp.eq.s32.totalorder %s18, 0
    %p123 = por %p121, %p122
    %p124 = scmp.ne.s32.totalorder %s112, %s113
    %p125 = scmp.eq.s32.totalorder %s19, 1
    %p126 = por %p124, %p125
    %p128 = scmp.ne.s32.totalorder %s113, %s127
    %p129 = scmp.eq.s32.totalorder %s19, 0
    %p130 = por %p128, %p129
    %s132 = sadd.s32 %s131, 1
    %p135 = scmp.eq.s32.totalorder %s13, 1
    %p136 = scmp.ne.s32.totalorder %s131, %s133
    %p137 = scmp.eq.s32.totalorder %s13, 0
    %p138 = por %p136, %p137
    %p139 = scmp.ne.s32.totalorder %s131, %s133
    %p140 = scmp.eq.s32.totalorder %s18, 1
    %p141 = por %p139, %p140
    %p142 = scmp.ne.s32.totalorder %s133, %s134
    %p143 = scmp.eq.s32.totalorder %s18, 0
    %p144 = por %p142, %p143
    %p145 = scmp.ne.s32.totalorder %s133, %s134
    %p146 = scmp.eq.s32.totalorder %s19, 1
    %p147 = por %p145, %p146
    %p149 = scmp.ne.s32.totalorder %s134, %s148
    %p150 = scmp.eq.s32.totalorder %s19, 0
    %p151 = por %p149, %p150
    %s153 = sadd.s32 %s152, 1
    %p156 = scmp.eq.s32.totalorder %s13, 1
    %p157 = scmp.ne.s32.totalorder %s152, %s154
    %p158 = scmp.eq.s32.totalorder %s13, 0
    %p159 = por %p157, %p158
    %p160 = scmp.ne.s32.totalorder %s152, %s154
    %p161 = scmp.eq.s32.totalorder %s18, 1
    %p162 = por %p160, %p161
    %p163 = scmp.ne.s32.totalorder %s154, %s155
    %p164 = scmp.eq.s32.totalorder %s18, 0
    %p165 = por %p163, %p164
    %p166 = scmp.ne.s32.totalorder %s154, %s155
    %p167 = scmp.eq.s32.totalorder %s19, 1
    %p168 = por %p166, %p167
    %p170 = scmp.ne.s32.totalorder %s155, %s169
    %p171 = scmp.eq.s32.totalorder %s19, 0
    %p172 = por %p170, %p171
    %s173 = ssub.s32 %s13, %s20
    %p174 = scmp.eq.s32.totalorder %s173, 0
    %s176 = sadd.s32 %s175, 1
    %s177 = scalar_select %p174, %s175, %s176
    %p180 = pneg %p174
    %p181 = scmp.eq.s32.totalorder %s13, 1
    %p182 = por %p180, %p181
    %p183 = scmp.ne.s32.totalorder %s175, %s178
    %p184 = scmp.eq.s32.totalorder %s13, 0
    %p185 = por %p183, %p184
    %p186 = scmp.ne.s32.totalorder %s175, %s178
    %p187 = scmp.eq.s32.totalorder %s18, 1
    %p188 = por %p186, %p187
    %p189 = scmp.ne.s32.totalorder %s178, %s179
    %p190 = scmp.eq.s32.totalorder %s18, 0
    %p191 = por %p189, %p190
    %p192 = scmp.ne.s32.totalorder %s178, %s179
    %p193 = scmp.eq.s32.totalorder %s19, 1
    %p194 = por %p192, %p193
    %p196 = scmp.ne.s32.totalorder %s179, %s195
    %p197 = scmp.eq.s32.totalorder %s19, 0
    %p198 = por %p196, %p197
    %p199 = scmp.le.s32.totalorder 1, %s13
    %p200 = scmp.lt.s32.totalorder %s13, 3
    %p201 = pnand %p199, %p200
    %p202 = pneg %p201
    // Predicated region
    $region9: #{prooformer_forward.18} parent=5 // pred_check
      _
    $region10: #{prooformer_forward.18} parent=5 // pred_check_branch
      %204 = sbr.rel (%p201) target = $region12
    $region11: #{prooformer_forward.18} parent=5 // pred_region
      %s205 = ssub.s32 %s13, 1
      // Predicated region
      $region13: #{prooformer_forward.18} parent=11 // pred_check
        %p206 = pneg %p60
      $region14: #{prooformer_forward.18} parent=11 // pred_check_branch
        %208 = sbr.rel (%p206) target = $region16
      $region15: #{prooformer_forward.18} parent=11 // pred_region
        _
      $region16: #{prooformer_forward.18} parent=11 // pred_fallthru
        _
      // Predicated region
      $region17: #{prooformer_forward.18} parent=11 // pred_check
        %p209 = pneg %p81
      $region18: #{prooformer_forward.18} parent=11 // pred_check_branch
        %211 = sbr.rel (%p209) target = $region20
      $region19: #{prooformer_forward.18} parent=11 // pred_region
        _
      $region20: #{prooformer_forward.18} parent=11 // pred_fallthru
        _
      // Predicated region
      $region21: #{prooformer_forward.18} parent=11 // pred_check
        %p212 = pneg %p102
      $region22: #{prooformer_forward.18} parent=11 // pred_check_branch
        %214 = sbr.rel (%p212) target = $region24
      $region23: #{prooformer_forward.18} parent=11 // pred_region
        _
      $region24: #{prooformer_forward.18} parent=11 // pred_fallthru
        _
      // Predicated region
      $region25: #{prooformer_forward.18} parent=11 // pred_check
        %p215 = pneg %p123
      $region26: #{prooformer_forward.18} parent=11 // pred_check_branch
        %217 = sbr.rel (%p215) target = $region28
      $region27: #{prooformer_forward.18} parent=11 // pred_region
        _
      $region28: #{prooformer_forward.18} parent=11 // pred_fallthru
        _
      // Predicated region
      $region29: #{prooformer_forward.18} parent=11 // pred_check
        %p218 = pneg %p144
      $region30: #{prooformer_forward.18} parent=11 // pred_check_branch
        %220 = sbr.rel (%p218) target = $region32
      $region31: #{prooformer_forward.18} parent=11 // pred_region
        _
      $region32: #{prooformer_forward.18} parent=11 // pred_fallthru
        _
      // Predicated region
      $region33: #{prooformer_forward.18} parent=11 // pred_check
        %p221 = pneg %p165
      $region34: #{prooformer_forward.18} parent=11 // pred_check_branch
        %223 = sbr.rel (%p221) target = $region36
      $region35: #{prooformer_forward.18} parent=11 // pred_region
        _
      $region36: #{prooformer_forward.18} parent=11 // pred_fallthru
        _
    $region12: #{prooformer_forward.18} parent=5 // pred_fallthru
      _
    %p224 = scmp.lt.s32.totalorder %s13, 2
    // Predicated region
    $region37: #{prooformer_forward.18} parent=5 // pred_check
      %p225 = pneg %p224
    $region38: #{prooformer_forward.18} parent=5 // pred_check_branch
      %227 = sbr.rel (%p225) target = $region40
    $region39: #{prooformer_forward.18} parent=5 // pred_region
      // Predicated region
      $region41: #{prooformer_forward.18} parent=39 // pred_check
        %p228 = pneg %p33
      $region42: #{prooformer_forward.18} parent=39 // pred_check_branch
        %230 = sbr.rel (%p228) target = $region44
      $region43: #{prooformer_forward.18} parent=39 // pred_region
        %p231 = scmp.lt.s32.totalorder %s13, 1
        %s232 = scalar_select %p231, %s13, 1
        %s233 = smul.addr %s232, 4
        %s234 = scalar_lea.vmem %s0, %s233
      $region44: #{prooformer_forward.18} parent=39 // pred_fallthru
        _
    $region40: #{prooformer_forward.18} parent=5 // pred_fallthru
      _
    %p235 = scmp.le.s32.totalorder 1, %s13
    %p236 = scmp.lt.s32.totalorder %s13, 3
    %p237 = pnand %p235, %p236
    %p238 = pneg %p237
    // Predicated region
    $region45: #{prooformer_forward.18} parent=5 // pred_check
      _
    $region46: #{prooformer_forward.18} parent=5 // pred_check_branch
      %240 = sbr.rel (%p237) target = $region48
    $region47: #{prooformer_forward.18} parent=5 // pred_region
      %s241 = ssub.s32 %s13, 1
      %p242 = scmp.lt.s32.totalorder %s18, 1
      %s243 = scalar_select %p242, %s18, 1
      %s244 = smul.addr %s243, 4
      %s245 = scalar_lea.vmem %s0, %s244
      %p246 = pneg %p39
      %p247 = pneg %p36
      %p248 = pneg %p60
      %p249 = pneg %p57
      %p250 = pneg %p81
      %p251 = pneg %p78
      %p252 = pneg %p102
      %p253 = pneg %p99
      %p254 = pneg %p123
      %p255 = pneg %p120
      %p256 = pneg %p144
      %p257 = pneg %p141
      %p258 = pneg %p165
      %p259 = pneg %p162
      %p260 = pneg %p191
      %p261 = pneg %p188
      %p262 = scmp.lt.s32.totalorder %s18, 1
      %s263 = scalar_select %p262, %s18, 1
      %s264 = smul.addr %s263, 4
      %s265 = scalar_lea.vmem %s7, %s264
      %p266 = scmp.lt.s32.totalorder %s18, 1
      %s267 = scalar_select %p266, %s18, 1
      %s268 = smul.addr %s267, 4
      %s269 = scalar_lea.vmem %s0, %s268
      %p270 = scmp.lt.s32.totalorder %s18, 1
      %s271 = scalar_select %p270, %s18, 1
      %s272 = smul.addr %s271, 4
      %s273 = scalar_lea.vmem %s7, %s272
      %v275 = vld [vmem:[%s269] sm:$0xf]
      %v276 = vld [vmem:[%s1] sm:$0xf]
      %v277 = vld [vmem:[%s1 + $0x4] sm:$0xf]
      %v278 = vld [vmem:[%s1 + $0x8] sm:$0xf]
      %v279 = vld [vmem:[%s1 + $0xc] sm:$0xf]
      %v280 = vld [vmem:[%s2] sm:$0x1]
      %v282 = vlaneseq
      %v283 = vshrl.u32 %v282, 7
      %v284 = vsub.s32 0, %v283
      %v285 = vrot.slane %v280, %v284
      %v291 = vunpack.c.l.b16 %v276
      %v292 = vunpack.c.l.b16 %v277
      %v293 = vunpack.c.l.b16 %v278
      %v294 = vunpack.c.l.b16 %v279
      %v295 = vpack.c.b16 %v292, %v291
      %v296 = vpack.c.b16 %v294, %v293
      %vm299 = vcmask 261120
      %v301 = vsel %vm299, %v275, 0
      %303 = vmatprep.subr.bf16.mxu0 0
      %304 = vmatpush1.bf16.msra.mxu0 0
      %305 = vmatprep.subr.bf16.mxu0 0
      %306 = vmatpush1.bf16.msra.mxu0 0
      %307 = vmatprep.subr.bf16.mxu0 0
      %308 = vmatpush1.bf16.msra.mxu0 0
      %309 = vmatprep.subr.bf16.mxu0 0
      %310 = vmatpush1.bf16.msra.mxu0 0
      %311 = vmatprep.subr.bf16.mxu0 0
      %312 = vmatpush1.bf16.msra.mxu0 0
      %313 = vmatprep.subr.bf16.mxu0 0
      %314 = vmatpush1.bf16.msra.mxu0 0
      %315 = vmatprep.subr.bf16.mxu0 0
      %316 = vmatpush1.bf16.msra.mxu0 %v296
      %317 = vmatprep.subr.bf16.mxu0 0
      %318 = vmatpush1.bf16.msra.mxu0 %v295
      %319 = vmatprep.subr.bf16.mxu0 0
      %320 = vmatpush2.bf16.msra.mxu0 0
      %321 = vmatprep.subr.bf16.mxu0 0
      %322 = vmatpush2.bf16.msra.mxu0 0
      %323 = vmatprep.subr.bf16.mxu0 0
      %324 = vmatpush2.bf16.msra.mxu0 0
      %325 = vmatprep.subr.bf16.mxu0 0
      %326 = vmatpush2.bf16.msra.mxu0 0
      %327 = vmatprep.subr.bf16.mxu0 0
      %328 = vmatpush2.bf16.msra.mxu0 0
      %329 = vmatprep.subr.bf16.mxu0 0
      %330 = vmatpush2.bf16.msra.mxu0 0
      %331 = vmatprep.subr.bf16.mxu0 0
      %332 = vmatpush2.bf16.msra.mxu0 0
      %333 = vmatprep.subr.bf16.mxu0 0
      %334 = vmatpush2.bf16.msra.mxu0 0
      %335 = vmatprep.mubr.bf16.mxu0 0
      %336 = vmatmul.mubr.bf16.gmra.mxu0 %v301
      %v337 = vpop.f32.mrf.mxu0
      %v338 = vadd.f32 %v285, %v337
      %v339 = vpop.f32.mrf.mxu0
      %v340 = vpop.f32.mrf.mxu0
      %v341 = vpop.f32.mrf.mxu0
      %342 = vdwg.mxu0
      %344 = vrot.lane.b32.xlu0 %v338, 124
      %v345 = vpop.permute.xlu0 %344
      %347 = vrot.lane.b32.xlu0 %v338, 120
      %v348 = vpop.permute.xlu0 %347
      %350 = vrot.lane.b32.xlu0 %v338, 116
      %v351 = vpop.permute.xlu0 %350
      %353 = vrot.lane.b32.xlu0 %v338, 112
      %v354 = vpop.permute.xlu0 %353
      %356 = vrot.lane.b32.xlu0 %v338, 108
      %v357 = vpop.permute.xlu0 %356
      %359 = vrot.lane.b32.xlu0 %v338, 104
      %v360 = vpop.permute.xlu0 %359
      %362 = vrot.lane.b32.xlu0 %v338, 100
      %v363 = vpop.permute.xlu0 %362
      %v365 = vcombine.low %v338, %v348
      %v366 = vcombine.high %v338, %v348
      %v368 = vunpack.c.l.s4 1983009808
      %v369 = vunpack.c.0.s8 %v368
      %v370 = vlaneseq
      %v371 = vshrl.u32 %v370, 7
      %v372 = vsub.s32 %v369, %v371
      %v373 = vrot.slane %v365, %v372
      %v375 = vunpack.c.l.s4 1983009808
      %v376 = vunpack.c.0.s8 %v375
      %v377 = vlaneseq
      %v378 = vshrl.u32 %v377, 7
      %v379 = vsub.s32 %v376, %v378
      %v380 = vrot.slane %v366, %v379
      %v381 = vcombine.low %v345, %v351
      %v382 = vcombine.high %v345, %v351
      %v384 = vunpack.c.l.s4 1983009808
      %v385 = vunpack.c.0.s8 %v384
      %v386 = vlaneseq
      %v387 = vshrl.u32 %v386, 7
      %v388 = vsub.s32 %v385, %v387
      %v389 = vrot.slane %v381, %v388
      %v391 = vunpack.c.l.s4 1983009808
      %v392 = vunpack.c.0.s8 %v391
      %v393 = vlaneseq
      %v394 = vshrl.u32 %v393, 7
      %v395 = vsub.s32 %v392, %v394
      %v396 = vrot.slane %v382, %v395
      %v397 = vcombine.low %v354, %v360
      %v398 = vcombine.high %v354, %v360
      %v400 = vunpack.c.l.s4 1983009808
      %v401 = vunpack.c.0.s8 %v400
      %v402 = vlaneseq
      %v403 = vshrl.u32 %v402, 7
      %v404 = vsub.s32 %v401, %v403
      %v405 = vrot.slane %v397, %v404
      %v407 = vunpack.c.l.s4 1983009808
      %v408 = vunpack.c.0.s8 %v407
      %v409 = vlaneseq
      %v410 = vshrl.u32 %v409, 7
      %v411 = vsub.s32 %v408, %v410
      %v412 = vrot.slane %v398, %v411
      %v413 = vcombine.low %v357, %v363
      %v414 = vcombine.high %v357, %v363
      %v416 = vunpack.c.l.s4 1983009808
      %v417 = vunpack.c.0.s8 %v416
      %v418 = vlaneseq
      %v419 = vshrl.u32 %v418, 7
      %v420 = vsub.s32 %v417, %v419
      %v421 = vrot.slane %v413, %v420
      %v423 = vunpack.c.l.s4 1983009808
      %v424 = vunpack.c.0.s8 %v423
      %v425 = vlaneseq
      %v426 = vshrl.u32 %v425, 7
      %v427 = vsub.s32 %v424, %v426
      %v428 = vrot.slane %v414, %v427
      %v429 = vcombine.low %v373, %v389
      %v430 = vcombine.high %v373, %v389
      %v432 = vunpack.c.l.s4 1934713408
      %v433 = vunpack.c.0.s8 %v432
      %v434 = vlaneseq
      %v435 = vshrl.u32 %v434, 7
      %v436 = vsub.s32 %v433, %v435
      %v437 = vrot.slane %v429, %v436
      %v439 = vunpack.c.l.s4 1934713408
      %v440 = vunpack.c.0.s8 %v439
      %v441 = vlaneseq
      %v442 = vshrl.u32 %v441, 7
      %v443 = vsub.s32 %v440, %v442
      %v444 = vrot.slane %v430, %v443
      %v445 = vcombine.low %v380, %v396
      %v446 = vcombine.high %v380, %v396
      %v448 = vunpack.c.l.s4 1934713408
      %v449 = vunpack.c.0.s8 %v448
      %v450 = vlaneseq
      %v451 = vshrl.u32 %v450, 7
      %v452 = vsub.s32 %v449, %v451
      %v453 = vrot.slane %v445, %v452
      %v455 = vunpack.c.l.s4 1934713408
      %v456 = vunpack.c.0.s8 %v455
      %v457 = vlaneseq
      %v458 = vshrl.u32 %v457, 7
      %v459 = vsub.s32 %v456, %v458
      %v460 = vrot.slane %v446, %v459
      %v461 = vcombine.low %v405, %v421
      %v462 = vcombine.high %v405, %v421
      %v464 = vunpack.c.l.s4 1934713408
      %v465 = vunpack.c.0.s8 %v464
      %v466 = vlaneseq
      %v467 = vshrl.u32 %v466, 7
      %v468 = vsub.s32 %v465, %v467
      %v469 = vrot.slane %v461, %v468
      %v471 = vunpack.c.l.s4 1934713408
      %v472 = vunpack.c.0.s8 %v471
      %v473 = vlaneseq
      %v474 = vshrl.u32 %v473, 7
      %v475 = vsub.s32 %v472, %v474
      %v476 = vrot.slane %v462, %v475
      %v477 = vcombine.low %v412, %v428
      %v478 = vcombine.high %v412, %v428
      %v480 = vunpack.c.l.s4 1934713408
      %v481 = vunpack.c.0.s8 %v480
      %v482 = vlaneseq
      %v483 = vshrl.u32 %v482, 7
      %v484 = vsub.s32 %v481, %v483
      %v485 = vrot.slane %v477, %v484
      %v487 = vunpack.c.l.s4 1934713408
      %v488 = vunpack.c.0.s8 %v487
      %v489 = vlaneseq
      %v490 = vshrl.u32 %v489, 7
      %v491 = vsub.s32 %v488, %v490
      %v492 = vrot.slane %v478, %v491
      %v493 = vcombine.low %v437, %v469
      %v494 = vcombine.high %v437, %v469
      %v495 = vcombine.low %v444, %v476
      %v496 = vcombine.high %v444, %v476
      %v497 = vcombine.low %v453, %v485
      %v498 = vcombine.high %v453, %v485
      %v499 = vcombine.low %v460, %v492
      %v500 = vcombine.high %v460, %v492
      %v501 = vcombine.low %v493, %v495
      %v502 = vcombine.high %v493, %v495
      %v504 = vunpack.c.l.s4 1983009808
      %v505 = vunpack.c.0.s8 %v504
      %v506 = vlaneseq
      %v507 = vshrl.u32 %v506, 7
      %v508 = vsub.s32 %v505, %v507
      %v509 = vrot.slane %v501, %v508
      %v511 = vunpack.c.l.s4 1983009808
      %v512 = vunpack.c.0.s8 %v511
      %v513 = vlaneseq
      %v514 = vshrl.u32 %v513, 7
      %v515 = vsub.s32 %v512, %v514
      %v516 = vrot.slane %v502, %v515
      %v517 = vcombine.low %v494, %v496
      %v518 = vcombine.high %v494, %v496
      %v520 = vunpack.c.l.s4 1983009808
      %v521 = vunpack.c.0.s8 %v520
      %v522 = vlaneseq
      %v523 = vshrl.u32 %v522, 7
      %v524 = vsub.s32 %v521, %v523
      %v525 = vrot.slane %v517, %v524
      %v527 = vunpack.c.l.s4 1983009808
      %v528 = vunpack.c.0.s8 %v527
      %v529 = vlaneseq
      %v530 = vshrl.u32 %v529, 7
      %v531 = vsub.s32 %v528, %v530
      %v532 = vrot.slane %v518, %v531
      %v533 = vcombine.low %v497, %v499
      %v534 = vcombine.high %v497, %v499
      %v536 = vunpack.c.l.s4 1983009808
      %v537 = vunpack.c.0.s8 %v536
      %v538 = vlaneseq
      %v539 = vshrl.u32 %v538, 7
      %v540 = vsub.s32 %v537, %v539
      %v541 = vrot.slane %v533, %v540
      %v543 = vunpack.c.l.s4 1983009808
      %v544 = vunpack.c.0.s8 %v543
      %v545 = vlaneseq
      %v546 = vshrl.u32 %v545, 7
      %v547 = vsub.s32 %v544, %v546
      %v548 = vrot.slane %v534, %v547
      %v549 = vcombine.low %v498, %v500
      %v550 = vcombine.high %v498, %v500
      %v552 = vunpack.c.l.s4 1983009808
      %v553 = vunpack.c.0.s8 %v552
      %v554 = vlaneseq
      %v555 = vshrl.u32 %v554, 7
      %v556 = vsub.s32 %v553, %v555
      %v557 = vrot.slane %v549, %v556
      %v559 = vunpack.c.l.s4 1983009808
      %v560 = vunpack.c.0.s8 %v559
      %v561 = vlaneseq
      %v562 = vshrl.u32 %v561, 7
      %v563 = vsub.s32 %v560, %v562
      %v564 = vrot.slane %v550, %v563
      %v565 = vcombine.low %v509, %v525
      %v566 = vcombine.high %v509, %v525
      %v568 = vunpack.c.l.s4 1934713408
      %v569 = vunpack.c.0.s8 %v568
      %v570 = vlaneseq
      %v571 = vshrl.u32 %v570, 7
      %v572 = vsub.s32 %v569, %v571
      %v573 = vrot.slane %v565, %v572
      %v575 = vunpack.c.l.s4 1934713408
      %v576 = vunpack.c.0.s8 %v575
      %v577 = vlaneseq
      %v578 = vshrl.u32 %v577, 7
      %v579 = vsub.s32 %v576, %v578
      %v580 = vrot.slane %v566, %v579
      %v581 = vcombine.low %v516, %v532
      %v582 = vcombine.high %v516, %v532
      %v584 = vunpack.c.l.s4 1934713408
      %v585 = vunpack.c.0.s8 %v584
      %v586 = vlaneseq
      %v587 = vshrl.u32 %v586, 7
      %v588 = vsub.s32 %v585, %v587
      %v589 = vrot.slane %v581, %v588
      %v591 = vunpack.c.l.s4 1934713408
      %v592 = vunpack.c.0.s8 %v591
      %v593 = vlaneseq
      %v594 = vshrl.u32 %v593, 7
      %v595 = vsub.s32 %v592, %v594
      %v596 = vrot.slane %v582, %v595
      %v597 = vcombine.low %v541, %v557
      %v598 = vcombine.high %v541, %v557
      %v600 = vunpack.c.l.s4 1934713408
      %v601 = vunpack.c.0.s8 %v600
      %v602 = vlaneseq
      %v603 = vshrl.u32 %v602, 7
      %v604 = vsub.s32 %v601, %v603
      %v605 = vrot.slane %v597, %v604
      %v607 = vunpack.c.l.s4 1934713408
      %v608 = vunpack.c.0.s8 %v607
      %v609 = vlaneseq
      %v610 = vshrl.u32 %v609, 7
      %v611 = vsub.s32 %v608, %v610
      %v612 = vrot.slane %v598, %v611
      %v613 = vcombine.low %v548, %v564
      %v614 = vcombine.high %v548, %v564
      %v616 = vunpack.c.l.s4 1934713408
      %v617 = vunpack.c.0.s8 %v616
      %v618 = vlaneseq
      %v619 = vshrl.u32 %v618, 7
      %v620 = vsub.s32 %v617, %v619
      %v621 = vrot.slane %v613, %v620
      %v623 = vunpack.c.l.s4 1934713408
      %v624 = vunpack.c.0.s8 %v623
      %v625 = vlaneseq
      %v626 = vshrl.u32 %v625, 7
      %v627 = vsub.s32 %v624, %v626
      %v628 = vrot.slane %v614, %v627
      %v629 = vcombine.low %v573, %v605
      %v630 = vcombine.high %v573, %v605
      %v631 = vcombine.low %v580, %v612
      %v632 = vcombine.high %v580, %v612
      %v633 = vcombine.low %v589, %v621
      %v634 = vcombine.high %v589, %v621
      %v635 = vcombine.low %v596, %v628
      %v636 = vcombine.high %v596, %v628
      %v637 = vpack.c.bf16 %v629, %v629
      %v638 = vpack.c.bf16 %v630, %v630
      %v639 = vpack.c.bf16 %v631, %v631
      %v640 = vpack.c.bf16 %v632, %v632
      %v641 = vpack.c.bf16 %v633, %v633
      %v642 = vpack.c.bf16 %v634, %v634
      %v643 = vpack.c.bf16 %v635, %v635
      %v644 = vpack.c.bf16 %v636, %v636
      %645 = vrot.lane.b32.xlu0 %v338, 96
      %v646 = vpop.permute.xlu0 %645
      %647 = vrot.lane.b32.xlu0 %v345, 96
      %v648 = vpop.permute.xlu0 %647
      %649 = vrot.lane.b32.xlu0 %v348, 96
      %v650 = vpop.permute.xlu0 %649
      %651 = vrot.lane.b32.xlu0 %v351, 96
      %v652 = vpop.permute.xlu0 %651
      %653 = vrot.lane.b32.xlu0 %v354, 96
      %v654 = vpop.permute.xlu0 %653
      %655 = vrot.lane.b32.xlu0 %v357, 96
      %v656 = vpop.permute.xlu0 %655
      %657 = vrot.lane.b32.xlu0 %v360, 96
      %v658 = vpop.permute.xlu0 %657
      %659 = vrot.lane.b32.xlu0 %v363, 96
      %v660 = vpop.permute.xlu0 %659
      %v669 = vcombine.low %v646, %v650
      %v670 = vcombine.high %v646, %v650
      %v672 = vunpack.c.l.s4 1983009808
      %v673 = vunpack.c.0.s8 %v672
      %v674 = vlaneseq
      %v675 = vshrl.u32 %v674, 7
      %v676 = vsub.s32 %v673, %v675
      %v677 = vrot.slane %v669, %v676
      %v679 = vunpack.c.l.s4 1983009808
      %v680 = vunpack.c.0.s8 %v679
      %v681 = vlaneseq
      %v682 = vshrl.u32 %v681, 7
      %v683 = vsub.s32 %v680, %v682
      %v684 = vrot.slane %v670, %v683
      %v685 = vcombine.low %v648, %v652
      %v686 = vcombine.high %v648, %v652
      %v688 = vunpack.c.l.s4 1983009808
      %v689 = vunpack.c.0.s8 %v688
      %v690 = vlaneseq
      %v691 = vshrl.u32 %v690, 7
      %v692 = vsub.s32 %v689, %v691
      %v693 = vrot.slane %v685, %v692
      %v695 = vunpack.c.l.s4 1983009808
      %v696 = vunpack.c.0.s8 %v695
      %v697 = vlaneseq
      %v698 = vshrl.u32 %v697, 7
      %v699 = vsub.s32 %v696, %v698
      %v700 = vrot.slane %v686, %v699
      %v701 = vcombine.low %v654, %v658
      %v702 = vcombine.high %v654, %v658
      %v704 = vunpack.c.l.s4 1983009808
      %v705 = vunpack.c.0.s8 %v704
      %v706 = vlaneseq
      %v707 = vshrl.u32 %v706, 7
      %v708 = vsub.s32 %v705, %v707
      %v709 = vrot.slane %v701, %v708
      %v711 = vunpack.c.l.s4 1983009808
      %v712 = vunpack.c.0.s8 %v711
      %v713 = vlaneseq
      %v714 = vshrl.u32 %v713, 7
      %v715 = vsub.s32 %v712, %v714
      %v716 = vrot.slane %v702, %v715
      %v717 = vcombine.low %v656, %v660
      %v718 = vcombine.high %v656, %v660
      %v720 = vunpack.c.l.s4 1983009808
      %v721 = vunpack.c.0.s8 %v720
      %v722 = vlaneseq
      %v723 = vshrl.u32 %v722, 7
      %v724 = vsub.s32 %v721, %v723
      %v725 = vrot.slane %v717, %v724
      %v727 = vunpack.c.l.s4 1983009808
      %v728 = vunpack.c.0.s8 %v727
      %v729 = vlaneseq
      %v730 = vshrl.u32 %v729, 7
      %v731 = vsub.s32 %v728, %v730
      %v732 = vrot.slane %v718, %v731
      %v733 = vcombine.low %v677, %v693
      %v734 = vcombine.high %v677, %v693
      %v736 = vunpack.c.l.s4 1934713408
      %v737 = vunpack.c.0.s8 %v736
      %v738 = vlaneseq
      %v739 = vshrl.u32 %v738, 7
      %v740 = vsub.s32 %v737, %v739
      %v741 = vrot.slane %v733, %v740
      %v743 = vunpack.c.l.s4 1934713408
      %v744 = vunpack.c.0.s8 %v743
      %v745 = vlaneseq
      %v746 = vshrl.u32 %v745, 7
      %v747 = vsub.s32 %v744, %v746
      %v748 = vrot.slane %v734, %v747
      %v749 = vcombine.low %v684, %v700
      %v750 = vcombine.high %v684, %v700
      %v752 = vunpack.c.l.s4 1934713408
      %v753 = vunpack.c.0.s8 %v752
      %v754 = vlaneseq
      %v755 = vshrl.u32 %v754, 7
      %v756 = vsub.s32 %v753, %v755
      %v757 = vrot.slane %v749, %v756
      %v759 = vunpack.c.l.s4 1934713408
      %v760 = vunpack.c.0.s8 %v759
      %v761 = vlaneseq
      %v762 = vshrl.u32 %v761, 7
      %v763 = vsub.s32 %v760, %v762
      %v764 = vrot.slane %v750, %v763
      %v765 = vcombine.low %v709, %v725
      %v766 = vcombine.high %v709, %v725
      %v768 = vunpack.c.l.s4 1934713408
      %v769 = vunpack.c.0.s8 %v768
      %v770 = vlaneseq
      %v771 = vshrl.u32 %v770, 7
      %v772 = vsub.s32 %v769, %v771
      %v773 = vrot.slane %v765, %v772
      %v775 = vunpack.c.l.s4 1934713408
      %v776 = vunpack.c.0.s8 %v775
      %v777 = vlaneseq
      %v778 = vshrl.u32 %v777, 7
      %v779 = vsub.s32 %v776, %v778
      %v780 = vrot.slane %v766, %v779
      %v781 = vcombine.low %v716, %v732
      %v782 = vcombine.high %v716, %v732
      %v784 = vunpack.c.l.s4 1934713408
      %v785 = vunpack.c.0.s8 %v784
      %v786 = vlaneseq
      %v787 = vshrl.u32 %v786, 7
      %v788 = vsub.s32 %v785, %v787
      %v789 = vrot.slane %v781, %v788
      %v791 = vunpack.c.l.s4 1934713408
      %v792 = vunpack.c.0.s8 %v791
      %v793 = vlaneseq
      %v794 = vshrl.u32 %v793, 7
      %v795 = vsub.s32 %v792, %v794
      %v796 = vrot.slane %v782, %v795
      %v797 = vcombine.low %v741, %v773
      %v798 = vcombine.high %v741, %v773
      %v799 = vcombine.low %v748, %v780
      %v800 = vcombine.high %v748, %v780
      %v801 = vcombine.low %v757, %v789
      %v802 = vcombine.high %v757, %v789
      %v803 = vcombine.low %v764, %v796
      %v804 = vcombine.high %v764, %v796
      %v805 = vcombine.low %v797, %v799
      %v806 = vcombine.high %v797, %v799
      %v808 = vunpack.c.l.s4 1983009808
      %v809 = vunpack.c.0.s8 %v808
      %v810 = vlaneseq
      %v811 = vshrl.u32 %v810, 7
      %v812 = vsub.s32 %v809, %v811
      %v813 = vrot.slane %v805, %v812
      %v815 = vunpack.c.l.s4 1983009808
      %v816 = vunpack.c.0.s8 %v815
      %v817 = vlaneseq
      %v818 = vshrl.u32 %v817, 7
      %v819 = vsub.s32 %v816, %v818
      %v820 = vrot.slane %v806, %v819
      %v821 = vcombine.low %v798, %v800
      %v822 = vcombine.high %v798, %v800
      %v824 = vunpack.c.l.s4 1983009808
      %v825 = vunpack.c.0.s8 %v824
      %v826 = vlaneseq
      %v827 = vshrl.u32 %v826, 7
      %v828 = vsub.s32 %v825, %v827
      %v829 = vrot.slane %v821, %v828
      %v831 = vunpack.c.l.s4 1983009808
      %v832 = vunpack.c.0.s8 %v831
      %v833 = vlaneseq
      %v834 = vshrl.u32 %v833, 7
      %v835 = vsub.s32 %v832, %v834
      %v836 = vrot.slane %v822, %v835
      %v837 = vcombine.low %v801, %v803
      %v838 = vcombine.high %v801, %v803
      %v840 = vunpack.c.l.s4 1983009808
      %v841 = vunpack.c.0.s8 %v840
      %v842 = vlaneseq
      %v843 = vshrl.u32 %v842, 7
      %v844 = vsub.s32 %v841, %v843
      %v845 = vrot.slane %v837, %v844
      %v847 = vunpack.c.l.s4 1983009808
      %v848 = vunpack.c.0.s8 %v847
      %v849 = vlaneseq
      %v850 = vshrl.u32 %v849, 7
      %v851 = vsub.s32 %v848, %v850
      %v852 = vrot.slane %v838, %v851
      %v853 = vcombine.low %v802, %v804
      %v854 = vcombine.high %v802, %v804
      %v856 = vunpack.c.l.s4 1983009808
      %v857 = vunpack.c.0.s8 %v856
      %v858 = vlaneseq
      %v859 = vshrl.u32 %v858, 7
      %v860 = vsub.s32 %v857, %v859
      %v861 = vrot.slane %v853, %v860
      %v863 = vunpack.c.l.s4 1983009808
      %v864 = vunpack.c.0.s8 %v863
      %v865 = vlaneseq
      %v866 = vshrl.u32 %v865, 7
      %v867 = vsub.s32 %v864, %v866
      %v868 = vrot.slane %v854, %v867
      %v869 = vcombine.low %v813, %v829
      %v870 = vcombine.high %v813, %v829
      %v872 = vunpack.c.l.s4 1934713408
      %v873 = vunpack.c.0.s8 %v872
      %v874 = vlaneseq
      %v875 = vshrl.u32 %v874, 7
      %v876 = vsub.s32 %v873, %v875
      %v877 = vrot.slane %v869, %v876
      %v879 = vunpack.c.l.s4 1934713408
      %v880 = vunpack.c.0.s8 %v879
      %v881 = vlaneseq
      %v882 = vshrl.u32 %v881, 7
      %v883 = vsub.s32 %v880, %v882
      %v884 = vrot.slane %v870, %v883
      %v885 = vcombine.low %v820, %v836
      %v886 = vcombine.high %v820, %v836
      %v888 = vunpack.c.l.s4 1934713408
      %v889 = vunpack.c.0.s8 %v888
      %v890 = vlaneseq
      %v891 = vshrl.u32 %v890, 7
      %v892 = vsub.s32 %v889, %v891
      %v893 = vrot.slane %v885, %v892
      %v895 = vunpack.c.l.s4 1934713408
      %v896 = vunpack.c.0.s8 %v895
      %v897 = vlaneseq
      %v898 = vshrl.u32 %v897, 7
      %v899 = vsub.s32 %v896, %v898
      %v900 = vrot.slane %v886, %v899
      %v901 = vcombine.low %v845, %v861
      %v902 = vcombine.high %v845, %v861
      %v904 = vunpack.c.l.s4 1934713408
      %v905 = vunpack.c.0.s8 %v904
      %v906 = vlaneseq
      %v907 = vshrl.u32 %v906, 7
      %v908 = vsub.s32 %v905, %v907
      %v909 = vrot.slane %v901, %v908
      %v911 = vunpack.c.l.s4 1934713408
      %v912 = vunpack.c.0.s8 %v911
      %v913 = vlaneseq
      %v914 = vshrl.u32 %v913, 7
      %v915 = vsub.s32 %v912, %v914
      %v916 = vrot.slane %v902, %v915
      %v917 = vcombine.low %v852, %v868
      %v918 = vcombine.high %v852, %v868
      %v920 = vunpack.c.l.s4 1934713408
      %v921 = vunpack.c.0.s8 %v920
      %v922 = vlaneseq
      %v923 = vshrl.u32 %v922, 7
      %v924 = vsub.s32 %v921, %v923
      %v925 = vrot.slane %v917, %v924
      %v927 = vunpack.c.l.s4 1934713408
      %v928 = vunpack.c.0.s8 %v927
      %v929 = vlaneseq
      %v930 = vshrl.u32 %v929, 7
      %v931 = vsub.s32 %v928, %v930
      %v932 = vrot.slane %v918, %v931
      %v933 = vcombine.low %v877, %v909
      %v934 = vcombine.high %v877, %v909
      %v935 = vcombine.low %v884, %v916
      %v936 = vcombine.high %v884, %v916
      %v937 = vcombine.low %v893, %v925
      %v938 = vcombine.high %v893, %v925
      %v939 = vcombine.low %v900, %v932
      %v940 = vcombine.high %v900, %v932
      %v941 = vpack.c.bf16 %v933, %v933
      %v942 = vpack.c.bf16 %v934, %v934
      %v943 = vpack.c.bf16 %v935, %v935
      %v944 = vpack.c.bf16 %v936, %v936
      %v945 = vpack.c.bf16 %v937, %v937
      %v946 = vpack.c.bf16 %v938, %v938
      %v947 = vpack.c.bf16 %v939, %v939
      %v948 = vpack.c.bf16 %v940, %v940
      %949 = vrot.lane.b32.xlu0 %v338, 64
      %v950 = vpop.permute.xlu0 %949
      %951 = vrot.lane.b32.xlu0 %v345, 64
      %v952 = vpop.permute.xlu0 %951
      %953 = vrot.lane.b32.xlu0 %v348, 64
      %v954 = vpop.permute.xlu0 %953
      %955 = vrot.lane.b32.xlu0 %v351, 64
      %v956 = vpop.permute.xlu0 %955
      %957 = vrot.lane.b32.xlu0 %v354, 64
      %v958 = vpop.permute.xlu0 %957
      %959 = vrot.lane.b32.xlu0 %v357, 64
      %v960 = vpop.permute.xlu0 %959
      %961 = vrot.lane.b32.xlu0 %v360, 64
      %v962 = vpop.permute.xlu0 %961
      %963 = vrot.lane.b32.xlu0 %v363, 64
      %v964 = vpop.permute.xlu0 %963
      %v973 = vcombine.low %v950, %v954
      %v974 = vcombine.high %v950, %v954
      %v976 = vunpack.c.l.s4 1983009808
      %v977 = vunpack.c.0.s8 %v976
      %v978 = vlaneseq
      %v979 = vshrl.u32 %v978, 7
      %v980 = vsub.s32 %v977, %v979
      %v981 = vrot.slane %v973, %v980
      %v983 = vunpack.c.l.s4 1983009808
      %v984 = vunpack.c.0.s8 %v983
      %v985 = vlaneseq
      %v986 = vshrl.u32 %v985, 7
      %v987 = vsub.s32 %v984, %v986
      %v988 = vrot.slane %v974, %v987
      %v989 = vcombine.low %v952, %v956
      %v990 = vcombine.high %v952, %v956
      %v992 = vunpack.c.l.s4 1983009808
      %v993 = vunpack.c.0.s8 %v992
      %v994 = vlaneseq
      %v995 = vshrl.u32 %v994, 7
      %v996 = vsub.s32 %v993, %v995
      %v997 = vrot.slane %v989, %v996
      %v999 = vunpack.c.l.s4 1983009808
      %v1000 = vunpack.c.0.s8 %v999
      %v1001 = vlaneseq
      %v1002 = vshrl.u32 %v1001, 7
      %v1003 = vsub.s32 %v1000, %v1002
      %v1004 = vrot.slane %v990, %v1003
      %v1005 = vcombine.low %v958, %v962
      %v1006 = vcombine.high %v958, %v962
      %v1008 = vunpack.c.l.s4 1983009808
      %v1009 = vunpack.c.0.s8 %v1008
      %v1010 = vlaneseq
      %v1011 = vshrl.u32 %v1010, 7
      %v1012 = vsub.s32 %v1009, %v1011
      %v1013 = vrot.slane %v1005, %v1012
      %v1015 = vunpack.c.l.s4 1983009808
      %v1016 = vunpack.c.0.s8 %v1015
      %v1017 = vlaneseq
      %v1018 = vshrl.u32 %v1017, 7
      %v1019 = vsub.s32 %v1016, %v1018
      %v1020 = vrot.slane %v1006, %v1019
      %v1021 = vcombine.low %v960, %v964
      %v1022 = vcombine.high %v960, %v964
      %v1024 = vunpack.c.l.s4 1983009808
      %v1025 = vunpack.c.0.s8 %v1024
      %v1026 = vlaneseq
      %v1027 = vshrl.u32 %v1026, 7
      %v1028 = vsub.s32 %v1025, %v1027
      %v1029 = vrot.slane %v1021, %v1028
      %v1031 = vunpack.c.l.s4 1983009808
      %v1032 = vunpack.c.0.s8 %v1031
      %v1033 = vlaneseq
      %v1034 = vshrl.u32 %v1033, 7
      %v1035 = vsub.s32 %v1032, %v1034
      %v1036 = vrot.slane %v1022, %v1035
      %v1037 = vcombine.low %v981, %v997
      %v1038 = vcombine.high %v981, %v997
      %v1040 = vunpack.c.l.s4 1934713408
      %v1041 = vunpack.c.0.s8 %v1040
      %v1042 = vlaneseq
      %v1043 = vshrl.u32 %v1042, 7
      %v1044 = vsub.s32 %v1041, %v1043
      %v1045 = vrot.slane %v1037, %v1044
      %v1047 = vunpack.c.l.s4 1934713408
      %v1048 = vunpack.c.0.s8 %v1047
      %v1049 = vlaneseq
      %v1050 = vshrl.u32 %v1049, 7
      %v1051 = vsub.s32 %v1048, %v1050
      %v1052 = vrot.slane %v1038, %v1051
      %v1053 = vcombine.low %v988, %v1004
      %v1054 = vcombine.high %v988, %v1004
      %v1056 = vunpack.c.l.s4 1934713408
      %v1057 = vunpack.c.0.s8 %v1056
      %v1058 = vlaneseq
      %v1059 = vshrl.u32 %v1058, 7
      %v1060 = vsub.s32 %v1057, %v1059
      %v1061 = vrot.slane %v1053, %v1060
      %v1063 = vunpack.c.l.s4 1934713408
      %v1064 = vunpack.c.0.s8 %v1063
      %v1065 = vlaneseq
      %v1066 = vshrl.u32 %v1065, 7
      %v1067 = vsub.s32 %v1064, %v1066
      %v1068 = vrot.slane %v1054, %v1067
      %v1069 = vcombine.low %v1013, %v1029
      %v1070 = vcombine.high %v1013, %v1029
      %v1072 = vunpack.c.l.s4 1934713408
      %v1073 = vunpack.c.0.s8 %v1072
      %v1074 = vlaneseq
      %v1075 = vshrl.u32 %v1074, 7
      %v1076 = vsub.s32 %v1073, %v1075
      %v1077 = vrot.slane %v1069, %v1076
      %v1079 = vunpack.c.l.s4 1934713408
      %v1080 = vunpack.c.0.s8 %v1079
      %v1081 = vlaneseq
      %v1082 = vshrl.u32 %v1081, 7
      %v1083 = vsub.s32 %v1080, %v1082
      %v1084 = vrot.slane %v1070, %v1083
      %v1085 = vcombine.low %v1020, %v1036
      %v1086 = vcombine.high %v1020, %v1036
      %v1088 = vunpack.c.l.s4 1934713408
      %v1089 = vunpack.c.0.s8 %v1088
      %v1090 = vlaneseq
      %v1091 = vshrl.u32 %v1090, 7
      %v1092 = vsub.s32 %v1089, %v1091
      %v1093 = vrot.slane %v1085, %v1092
      %v1095 = vunpack.c.l.s4 1934713408
      %v1096 = vunpack.c.0.s8 %v1095
      %v1097 = vlaneseq
      %v1098 = vshrl.u32 %v1097, 7
      %v1099 = vsub.s32 %v1096, %v1098
      %v1100 = vrot.slane %v1086, %v1099
      %v1101 = vcombine.low %v1045, %v1077
      %v1102 = vcombine.high %v1045, %v1077
      %v1103 = vcombine.low %v1052, %v1084
      %v1104 = vcombine.high %v1052, %v1084
      %v1105 = vcombine.low %v1061, %v1093
      %v1106 = vcombine.high %v1061, %v1093
      %v1107 = vcombine.low %v1068, %v1100
      %v1108 = vcombine.high %v1068, %v1100
      %v1109 = vcombine.low %v1101, %v1103
      %v1110 = vcombine.high %v1101, %v1103
      %v1112 = vunpack.c.l.s4 1983009808
      %v1113 = vunpack.c.0.s8 %v1112
      %v1114 = vlaneseq
      %v1115 = vshrl.u32 %v1114, 7
      %v1116 = vsub.s32 %v1113, %v1115
      %v1117 = vrot.slane %v1109, %v1116
      %v1119 = vunpack.c.l.s4 1983009808
      %v1120 = vunpack.c.0.s8 %v1119
      %v1121 = vlaneseq
      %v1122 = vshrl.u32 %v1121, 7
      %v1123 = vsub.s32 %v1120, %v1122
      %v1124 = vrot.slane %v1110, %v1123
      %v1125 = vcombine.low %v1102, %v1104
      %v1126 = vcombine.high %v1102, %v1104
      %v1128 = vunpack.c.l.s4 1983009808
      %v1129 = vunpack.c.0.s8 %v1128
      %v1130 = vlaneseq
      %v1131 = vshrl.u32 %v1130, 7
      %v1132 = vsub.s32 %v1129, %v1131
      %v1133 = vrot.slane %v1125, %v1132
      %v1135 = vunpack.c.l.s4 1983009808
      %v1136 = vunpack.c.0.s8 %v1135
      %v1137 = vlaneseq
      %v1138 = vshrl.u32 %v1137, 7
      %v1139 = vsub.s32 %v1136, %v1138
      %v1140 = vrot.slane %v1126, %v1139
      %v1141 = vcombine.low %v1105, %v1107
      %v1142 = vcombine.high %v1105, %v1107
      %v1144 = vunpack.c.l.s4 1983009808
      %v1145 = vunpack.c.0.s8 %v1144
      %v1146 = vlaneseq
      %v1147 = vshrl.u32 %v1146, 7
      %v1148 = vsub.s32 %v1145, %v1147
      %v1149 = vrot.slane %v1141, %v1148
      %v1151 = vunpack.c.l.s4 1983009808
      %v1152 = vunpack.c.0.s8 %v1151
      %v1153 = vlaneseq
      %v1154 = vshrl.u32 %v1153, 7
      %v1155 = vsub.s32 %v1152, %v1154
      %v1156 = vrot.slane %v1142, %v1155
      %v1157 = vcombine.low %v1106, %v1108
      %v1158 = vcombine.high %v1106, %v1108
      %v1160 = vunpack.c.l.s4 1983009808
      %v1161 = vunpack.c.0.s8 %v1160
      %v1162 = vlaneseq
      %v1163 = vshrl.u32 %v1162, 7
      %v1164 = vsub.s32 %v1161, %v1163
      %v1165 = vrot.slane %v1157, %v1164
      %v1167 = vunpack.c.l.s4 1983009808
      %v1168 = vunpack.c.0.s8 %v1167
      %v1169 = vlaneseq
      %v1170 = vshrl.u32 %v1169, 7
      %v1171 = vsub.s32 %v1168, %v1170
      %v1172 = vrot.slane %v1158, %v1171
      %v1173 = vcombine.low %v1117, %v1133
      %v1174 = vcombine.high %v1117, %v1133
      %v1176 = vunpack.c.l.s4 1934713408
      %v1177 = vunpack.c.0.s8 %v1176
      %v1178 = vlaneseq
      %v1179 = vshrl.u32 %v1178, 7
      %v1180 = vsub.s32 %v1177, %v1179
      %v1181 = vrot.slane %v1173, %v1180
      %v1183 = vunpack.c.l.s4 1934713408
      %v1184 = vunpack.c.0.s8 %v1183
      %v1185 = vlaneseq
      %v1186 = vshrl.u32 %v1185, 7
      %v1187 = vsub.s32 %v1184, %v1186
      %v1188 = vrot.slane %v1174, %v1187
      %v1189 = vcombine.low %v1124, %v1140
      %v1190 = vcombine.high %v1124, %v1140
      %v1192 = vunpack.c.l.s4 1934713408
      %v1193 = vunpack.c.0.s8 %v1192
      %v1194 = vlaneseq
      %v1195 = vshrl.u32 %v1194, 7
      %v1196 = vsub.s32 %v1193, %v1195
      %v1197 = vrot.slane %v1189, %v1196
      %v1199 = vunpack.c.l.s4 1934713408
      %v1200 = vunpack.c.0.s8 %v1199
      %v1201 = vlaneseq
      %v1202 = vshrl.u32 %v1201, 7
      %v1203 = vsub.s32 %v1200, %v1202
      %v1204 = vrot.slane %v1190, %v1203
      %v1205 = vcombine.low %v1149, %v1165
      %v1206 = vcombine.high %v1149, %v1165
      %v1208 = vunpack.c.l.s4 1934713408
      %v1209 = vunpack.c.0.s8 %v1208
      %v1210 = vlaneseq
      %v1211 = vshrl.u32 %v1210, 7
      %v1212 = vsub.s32 %v1209, %v1211
      %v1213 = vrot.slane %v1205, %v1212
      %v1215 = vunpack.c.l.s4 1934713408
      %v1216 = vunpack.c.0.s8 %v1215
      %v1217 = vlaneseq
      %v1218 = vshrl.u32 %v1217, 7
      %v1219 = vsub.s32 %v1216, %v1218
      %v1220 = vrot.slane %v1206, %v1219
      %v1221 = vcombine.low %v1156, %v1172
      %v1222 = vcombine.high %v1156, %v1172
      %v1224 = vunpack.c.l.s4 1934713408
      %v1225 = vunpack.c.0.s8 %v1224
      %v1226 = vlaneseq
      %v1227 = vshrl.u32 %v1226, 7
      %v1228 = vsub.s32 %v1225, %v1227
      %v1229 = vrot.slane %v1221, %v1228
      %v1231 = vunpack.c.l.s4 1934713408
      %v1232 = vunpack.c.0.s8 %v1231
      %v1233 = vlaneseq
      %v1234 = vshrl.u32 %v1233, 7
      %v1235 = vsub.s32 %v1232, %v1234
      %v1236 = vrot.slane %v1222, %v1235
      %v1237 = vcombine.low %v1181, %v1213
      %v1238 = vcombine.high %v1181, %v1213
      %v1239 = vcombine.low %v1188, %v1220
      %v1240 = vcombine.high %v1188, %v1220
      %v1241 = vcombine.low %v1197, %v1229
      %v1242 = vcombine.high %v1197, %v1229
      %v1243 = vcombine.low %v1204, %v1236
      %v1244 = vcombine.high %v1204, %v1236
      %v1245 = vpack.c.bf16 %v1237, %v1237
      %v1246 = vpack.c.bf16 %v1238, %v1238
      %v1247 = vpack.c.bf16 %v1239, %v1239
      %v1248 = vpack.c.bf16 %v1240, %v1240
      %v1249 = vpack.c.bf16 %v1241, %v1241
      %v1250 = vpack.c.bf16 %v1242, %v1242
      %v1251 = vpack.c.bf16 %v1243, %v1243
      %v1252 = vpack.c.bf16 %v1244, %v1244
      %vm1253 = vcmask 31744
      %v1255 = vsel %vm1253, %v637, 0
      %v1258 = vsel %vm1253, %v941, 0
      %1260 = vmatprep.subr.bf16.mxu0 0
      %1261 = vmatpush1.bf16.xpose.msra.mxu0 0
      %1262 = vmatprep.subr.bf16.mxu0 0
      %1263 = vmatpush1.bf16.xpose.msra.mxu0 0
      %1264 = vmatprep.subr.bf16.mxu0 0
      %1265 = vmatpush1.bf16.xpose.msra.mxu0 0
      %1266 = vmatprep.subr.bf16.mxu0 0
      %1267 = vmatpush1.bf16.xpose.msra.mxu0 0
      %1268 = vmatprep.subr.bf16.mxu0 0
      %1269 = vmatpush1.bf16.xpose.msra.mxu0 0
      %1270 = vmatprep.subr.bf16.mxu0 0
      %1271 = vmatpush1.bf16.xpose.msra.mxu0 0
      %1272 = vmatprep.subr.bf16.mxu0 0
      %1273 = vmatpush1.bf16.xpose.msra.mxu0 0
      %1274 = vmatprep.subr.bf16.mxu0 0
      %1275 = vmatpush1.bf16.xpose.msra.mxu0 %v1258
      %1276 = vmatprep.subr.bf16.mxu0 0
      %1277 = vmatpush2.bf16.xpose.msra.mxu0 0
      %1278 = vmatprep.subr.bf16.mxu0 0
      %1279 = vmatpush2.bf16.xpose.msra.mxu0 0
      %1280 = vmatprep.subr.bf16.mxu0 0
      %1281 = vmatpush2.bf16.xpose.msra.mxu0 0
      %1282 = vmatprep.subr.bf16.mxu0 0
      %1283 = vmatpush2.bf16.xpose.msra.mxu0 0
      %1284 = vmatprep.subr.bf16.mxu0 0
      %1285 = vmatpush2.bf16.xpose.msra.mxu0 0
      %1286 = vmatprep.subr.bf16.mxu0 0
      %1287 = vmatpush2.bf16.xpose.msra.mxu0 0
      %1288 = vmatprep.subr.bf16.mxu0 0
      %1289 = vmatpush2.bf16.xpose.msra.mxu0 0
      %1290 = vmatprep.subr.bf16.mxu0 0
      %1291 = vmatpush2.bf16.xpose.msra.mxu0 0
      %1292 = vmatprep.mubr.bf16.mxu0 0
      %1293 = vmatmul.mubr.bf16.gmra.mxu0 %v1255
      %v1294 = vpop.f32.mrf.mxu0
      %v1295 = vadd.f32 0.0, %v1294
      %v1296 = vpop.f32.mrf.mxu0
      %v1297 = vpop.f32.mrf.mxu0
      %v1298 = vpop.f32.mrf.mxu0
      %1299 = vdwg.mxu0
      %v1301 = vsel %vm1253, %v638, 0
      %v1304 = vsel %vm1253, %v942, 0
      %1306 = vmatprep.subr.bf16.mxu0 0
      %1307 = vmatpush1.bf16.xpose.msra.mxu0 0
      %1308 = vmatprep.subr.bf16.mxu0 0
      %1309 = vmatpush1.bf16.xpose.msra.mxu0 0
      %1310 = vmatprep.subr.bf16.mxu0 0
      %1311 = vmatpush1.bf16.xpose.msra.mxu0 0
      %1312 = vmatprep.subr.bf16.mxu0 0
      %1313 = vmatpush1.bf16.xpose.msra.mxu0 0
      %1314 = vmatprep.subr.bf16.mxu0 0
      %1315 = vmatpush1.bf16.xpose.msra.mxu0 0
      %1316 = vmatprep.subr.bf16.mxu0 0
      %1317 = vmatpush1.bf16.xpose.msra.mxu0 0
      %1318 = vmatprep.subr.bf16.mxu0 0
      %1319 = vmatpush1.bf16.xpose.msra.mxu0 0
      %1320 = vmatprep.subr.bf16.mxu0 0
      %1321 = vmatpush1.bf16.xpose.msra.mxu0 %v1304
      %1322 = vmatprep.subr.bf16.mxu0 0
      %1323 = vmatpush2.bf16.xpose.msra.mxu0 0
      %1324 = vmatprep.subr.bf16.mxu0 0
      %1325 = vmatpush2.bf16.xpose.msra.mxu0 0
      %1326 = vmatprep.subr.bf16.mxu0 0
      %1327 = vmatpush2.bf16.xpose.msra.mxu0 0
      %1328 = vmatprep.subr.bf16.mxu0 0
      %1329 = vmatpush2.bf16.xpose.msra.mxu0 0
      %1330 = vmatprep.subr.bf16.mxu0 0
      %1331 = vmatpush2.bf16.xpose.msra.mxu0 0
      %1332 = vmatprep.subr.bf16.mxu0 0
      %1333 = vmatpush2.bf16.xpose.msra.mxu0 0
      %1334 = vmatprep.subr.bf16.mxu0 0
      %1335 = vmatpush2.bf16.xpose.msra.mxu0 0
      %1336 = vmatprep.subr.bf16.mxu0 0
      %1337 = vmatpush2.bf16.xpose.msra.mxu0 0
      %1338 = vmatprep.mubr.bf16.mxu0 0
      %1339 = vmatmul.mubr.bf16.gmra.mxu0 %v1301
      %v1340 = vpop.f32.mrf.mxu0
      %v1341 = vadd.f32 0.0, %v1340
      %v1342 = vpop.f32.mrf.mxu0
      %v1343 = vpop.f32.mrf.mxu0
      %v1344 = vpop.f32.mrf.mxu0
      %1345 = vdwg.mxu0
      %v1347 = vsel %vm1253, %v639, 0
      %v1350 = vsel %vm1253, %v943, 0
      %1352 = vmatprep.subr.bf16.mxu0 0
      %1353 = vmatpush1.bf16.xpose.msra.mxu0 0
      %1354 = vmatprep.subr.bf16.mxu0 0
      %1355 = vmatpush1.bf16.xpose.msra.mxu0 0
      %1356 = vmatprep.subr.bf16.mxu0 0
      %1357 = vmatpush1.bf16.xpose.msra.mxu0 0
      %1358 = vmatprep.subr.bf16.mxu0 0
      %1359 = vmatpush1.bf16.xpose.msra.mxu0 0
      %1360 = vmatprep.subr.bf16.mxu0 0
      %1361 = vmatpush1.bf16.xpose.msra.mxu0 0
      %1362 = vmatprep.subr.bf16.mxu0 0
      %1363 = vmatpush1.bf16.xpose.msra.mxu0 0
      %1364 = vmatprep.subr.bf16.mxu0 0
      %1365 = vmatpush1.bf16.xpose.msra.mxu0 0
      %1366 = vmatprep.subr.bf16.mxu0 0
      %1367 = vmatpush1.bf16.xpose.msra.mxu0 %v1350
      %1368 = vmatprep.subr.bf16.mxu0 0
      %1369 = vmatpush2.bf16.xpose.msra.mxu0 0
      %1370 = vmatprep.subr.bf16.mxu0 0
      %1371 = vmatpush2.bf16.xpose.msra.mxu0 0
      %1372 = vmatprep.subr.bf16.mxu0 0
      %1373 = vmatpush2.bf16.xpose.msra.mxu0 0
      %1374 = vmatprep.subr.bf16.mxu0 0
      %1375 = vmatpush2.bf16.xpose.msra.mxu0 0
      %1376 = vmatprep.subr.bf16.mxu0 0
      %1377 = vmatpush2.bf16.xpose.msra.mxu0 0
      %1378 = vmatprep.subr.bf16.mxu0 0
      %1379 = vmatpush2.bf16.xpose.msra.mxu0 0
      %1380 = vmatprep.subr.bf16.mxu0 0
      %1381 = vmatpush2.bf16.xpose.msra.mxu0 0
      %1382 = vmatprep.subr.bf16.mxu0 0
      %1383 = vmatpush2.bf16.xpose.msra.mxu0 0
      %1384 = vmatprep.mubr.bf16.mxu0 0
      %1385 = vmatmul.mubr.bf16.gmra.mxu0 %v1347
      %v1386 = vpop.f32.mrf.mxu0
      %v1387 = vadd.f32 0.0, %v1386
      %v1388 = vpop.f32.mrf.mxu0
      %v1389 = vpop.f32.mrf.mxu0
      %v1390 = vpop.f32.mrf.mxu0
      %1391 = vdwg.mxu0
      %v1393 = vsel %vm1253, %v640, 0
      %v1396 = vsel %vm1253, %v944, 0
      %1398 = vmatprep.subr.bf16.mxu0 0
      %1399 = vmatpush1.bf16.xpose.msra.mxu0 0
      %1400 = vmatprep.subr.bf16.mxu0 0
      %1401 = vmatpush1.bf16.xpose.msra.mxu0 0
      %1402 = vmatprep.subr.bf16.mxu0 0
      %1403 = vmatpush1.bf16.xpose.msra.mxu0 0
      %1404 = vmatprep.subr.bf16.mxu0 0
      %1405 = vmatpush1.bf16.xpose.msra.mxu0 0
      %1406 = vmatprep.subr.bf16.mxu0 0
      %1407 = vmatpush1.bf16.xpose.msra.mxu0 0
      %1408 = vmatprep.subr.bf16.mxu0 0
      %1409 = vmatpush1.bf16.xpose.msra.mxu0 0
      %1410 = vmatprep.subr.bf16.mxu0 0
      %1411 = vmatpush1.bf16.xpose.msra.mxu0 0
      %1412 = vmatprep.subr.bf16.mxu0 0
      %1413 = vmatpush1.bf16.xpose.msra.mxu0 %v1396
      %1414 = vmatprep.subr.bf16.mxu0 0
      %1415 = vmatpush2.bf16.xpose.msra.mxu0 0
      %1416 = vmatprep.subr.bf16.mxu0 0
      %1417 = vmatpush2.bf16.xpose.msra.mxu0 0
      %1418 = vmatprep.subr.bf16.mxu0 0
      %1419 = vmatpush2.bf16.xpose.msra.mxu0 0
      %1420 = vmatprep.subr.bf16.mxu0 0
      %1421 = vmatpush2.bf16.xpose.msra.mxu0 0
      %1422 = vmatprep.subr.bf16.mxu0 0
      %1423 = vmatpush2.bf16.xpose.msra.mxu0 0
      %1424 = vmatprep.subr.bf16.mxu0 0
      %1425 = vmatpush2.bf16.xpose.msra.mxu0 0
      %1426 = vmatprep.subr.bf16.mxu0 0
      %1427 = vmatpush2.bf16.xpose.msra.mxu0 0
      %1428 = vmatprep.subr.bf16.mxu0 0
      %1429 = vmatpush2.bf16.xpose.msra.mxu0 0
      %1430 = vmatprep.mubr.bf16.mxu0 0
      %1431 = vmatmul.mubr.bf16.gmra.mxu0 %v1393
      %v1432 = vpop.f32.mrf.mxu0
      %v1433 = vadd.f32 0.0, %v1432
      %v1434 = vpop.f32.mrf.mxu0
      %v1435 = vpop.f32.mrf.mxu0
      %v1436 = vpop.f32.mrf.mxu0
      %1437 = vdwg.mxu0
      %v1439 = vsel %vm1253, %v641, 0
      %v1442 = vsel %vm1253, %v945, 0
      %1444 = vmatprep.subr.bf16.mxu0 0
      %1445 = vmatpush1.bf16.xpose.msra.mxu0 0
      %1446 = vmatprep.subr.bf16.mxu0 0
      %1447 = vmatpush1.bf16.xpose.msra.mxu0 0
      %1448 = vmatprep.subr.bf16.mxu0 0
      %1449 = vmatpush1.bf16.xpose.msra.mxu0 0
      %1450 = vmatprep.subr.bf16.mxu0 0
      %1451 = vmatpush1.bf16.xpose.msra.mxu0 0
      %1452 = vmatprep.subr.bf16.mxu0 0
      %1453 = vmatpush1.bf16.xpose.msra.mxu0 0
      %1454 = vmatprep.subr.bf16.mxu0 0
      %1455 = vmatpush1.bf16.xpose.msra.mxu0 0
      %1456 = vmatprep.subr.bf16.mxu0 0
      %1457 = vmatpush1.bf16.xpose.msra.mxu0 0
      %1458 = vmatprep.subr.bf16.mxu0 0
      %1459 = vmatpush1.bf16.xpose.msra.mxu0 %v1442
      %1460 = vmatprep.subr.bf16.mxu0 0
      %1461 = vmatpush2.bf16.xpose.msra.mxu0 0
      %1462 = vmatprep.subr.bf16.mxu0 0
      %1463 = vmatpush2.bf16.xpose.msra.mxu0 0
      %1464 = vmatprep.subr.bf16.mxu0 0
      %1465 = vmatpush2.bf16.xpose.msra.mxu0 0
      %1466 = vmatprep.subr.bf16.mxu0 0
      %1467 = vmatpush2.bf16.xpose.msra.mxu0 0
      %1468 = vmatprep.subr.bf16.mxu0 0
      %1469 = vmatpush2.bf16.xpose.msra.mxu0 0
      %1470 = vmatprep.subr.bf16.mxu0 0
      %1471 = vmatpush2.bf16.xpose.msra.mxu0 0
      %1472 = vmatprep.subr.bf16.mxu0 0
      %1473 = vmatpush2.bf16.xpose.msra.mxu0 0
      %1474 = vmatprep.subr.bf16.mxu0 0
      %1475 = vmatpush2.bf16.xpose.msra.mxu0 0
      %1476 = vmatprep.mubr.bf16.mxu0 0
      %1477 = vmatmul.mubr.bf16.gmra.mxu0 %v1439
      %v1478 = vpop.f32.mrf.mxu0
      %v1479 = vadd.f32 0.0, %v1478
      %v1480 = vpop.f32.mrf.mxu0
      %v1481 = vpop.f32.mrf.mxu0
      %v1482 = vpop.f32.mrf.mxu0
      %1483 = vdwg.mxu0
      %v1485 = vsel %vm1253, %v642, 0
      %v1488 = vsel %vm1253, %v946, 0
      %1490 = vmatprep.subr.bf16.mxu0 0
      %1491 = vmatpush1.bf16.xpose.msra.mxu0 0
      %1492 = vmatprep.subr.bf16.mxu0 0
      %1493 = vmatpush1.bf16.xpose.msra.mxu0 0
      %1494 = vmatprep.subr.bf16.mxu0 0
      %1495 = vmatpush1.bf16.xpose.msra.mxu0 0
      %1496 = vmatprep.subr.bf16.mxu0 0
      %1497 = vmatpush1.bf16.xpose.msra.mxu0 0
      %1498 = vmatprep.subr.bf16.mxu0 0
      %1499 = vmatpush1.bf16.xpose.msra.mxu0 0
      %1500 = vmatprep.subr.bf16.mxu0 0
      %1501 = vmatpush1.bf16.xpose.msra.mxu0 0
      %1502 = vmatprep.subr.bf16.mxu0 0
      %1503 = vmatpush1.bf16.xpose.msra.mxu0 0
      %1504 = vmatprep.subr.bf16.mxu0 0
      %1505 = vmatpush1.bf16.xpose.msra.mxu0 %v1488
      %1506 = vmatprep.subr.bf16.mxu0 0
      %1507 = vmatpush2.bf16.xpose.msra.mxu0 0
      %1508 = vmatprep.subr.bf16.mxu0 0
      %1509 = vmatpush2.bf16.xpose.msra.mxu0 0
      %1510 = vmatprep.subr.bf16.mxu0 0
      %1511 = vmatpush2.bf16.xpose.msra.mxu0 0
      %1512 = vmatprep.subr.bf16.mxu0 0
      %1513 = vmatpush2.bf16.xpose.msra.mxu0 0
      %1514 = vmatprep.subr.bf16.mxu0 0
      %1515 = vmatpush2.bf16.xpose.msra.mxu0 0
      %1516 = vmatprep.subr.bf16.mxu0 0
      %1517 = vmatpush2.bf16.xpose.msra.mxu0 0
      %1518 = vmatprep.subr.bf16.mxu0 0
      %1519 = vmatpush2.bf16.xpose.msra.mxu0 0
      %1520 = vmatprep.subr.bf16.mxu0 0
      %1521 = vmatpush2.bf16.xpose.msra.mxu0 0
      %1522 = vmatprep.mubr.bf16.mxu0 0
      %1523 = vmatmul.mubr.bf16.gmra.mxu0 %v1485
      %v1524 = vpop.f32.mrf.mxu0
      %v1525 = vadd.f32 0.0, %v1524
      %v1526 = vpop.f32.mrf.mxu0
      %v1527 = vpop.f32.mrf.mxu0
      %v1528 = vpop.f32.mrf.mxu0
      %1529 = vdwg.mxu0
      %v1531 = vsel %vm1253, %v643, 0
      %v1534 = vsel %vm1253, %v947, 0
      %1536 = vmatprep.subr.bf16.mxu0 0
      %1537 = vmatpush1.bf16.xpose.msra.mxu0 0
      %1538 = vmatprep.subr.bf16.mxu0 0
      %1539 = vmatpush1.bf16.xpose.msra.mxu0 0
      %1540 = vmatprep.subr.bf16.mxu0 0
      %1541 = vmatpush1.bf16.xpose.msra.mxu0 0
      %1542 = vmatprep.subr.bf16.mxu0 0
      %1543 = vmatpush1.bf16.xpose.msra.mxu0 0
      %1544 = vmatprep.subr.bf16.mxu0 0
      %1545 = vmatpush1.bf16.xpose.msra.mxu0 0
      %1546 = vmatprep.subr.bf16.mxu0 0
      %1547 = vmatpush1.bf16.xpose.msra.mxu0 0
      %1548 = vmatprep.subr.bf16.mxu0 0
      %1549 = vmatpush1.bf16.xpose.msra.mxu0 0
      %1550 = vmatprep.subr.bf16.mxu0 0
      %1551 = vmatpush1.bf16.xpose.msra.mxu0 %v1534
      %1552 = vmatprep.subr.bf16.mxu0 0
      %1553 = vmatpush2.bf16.xpose.msra.mxu0 0
      %1554 = vmatprep.subr.bf16.mxu0 0
      %1555 = vmatpush2.bf16.xpose.msra.mxu0 0
      %1556 = vmatprep.subr.bf16.mxu0 0
      %1557 = vmatpush2.bf16.xpose.msra.mxu0 0
      %1558 = vmatprep.subr.bf16.mxu0 0
      %1559 = vmatpush2.bf16.xpose.msra.mxu0 0
      %1560 = vmatprep.subr.bf16.mxu0 0
      %1561 = vmatpush2.bf16.xpose.msra.mxu0 0
      %1562 = vmatprep.subr.bf16.mxu0 0
      %1563 = vmatpush2.bf16.xpose.msra.mxu0 0
      %1564 = vmatprep.subr.bf16.mxu0 0
      %1565 = vmatpush2.bf16.xpose.msra.mxu0 0
      %1566 = vmatprep.subr.bf16.mxu0 0
      %1567 = vmatpush2.bf16.xpose.msra.mxu0 0
      %1568 = vmatprep.mubr.bf16.mxu0 0
      %1569 = vmatmul.mubr.bf16.gmra.mxu0 %v1531
      %v1570 = vpop.f32.mrf.mxu0
      %v1571 = vadd.f32 0.0, %v1570
      %v1572 = vpop.f32.mrf.mxu0
      %v1573 = vpop.f32.mrf.mxu0
      %v1574 = vpop.f32.mrf.mxu0
      %1575 = vdwg.mxu0
      %v1577 = vsel %vm1253, %v644, 0
      %v1580 = vsel %vm1253, %v948, 0
      %1582 = vmatprep.subr.bf16.mxu0 0
      %1583 = vmatpush1.bf16.xpose.msra.mxu0 0
      %1584 = vmatprep.subr.bf16.mxu0 0
      %1585 = vmatpush1.bf16.xpose.msra.mxu0 0
      %1586 = vmatprep.subr.bf16.mxu0 0
      %1587 = vmatpush1.bf16.xpose.msra.mxu0 0
      %1588 = vmatprep.subr.bf16.mxu0 0
      %1589 = vmatpush1.bf16.xpose.msra.mxu0 0
      %1590 = vmatprep.subr.bf16.mxu0 0
      %1591 = vmatpush1.bf16.xpose.msra.mxu0 0
      %1592 = vmatprep.subr.bf16.mxu0 0
      %1593 = vmatpush1.bf16.xpose.msra.mxu0 0
      %1594 = vmatprep.subr.bf16.mxu0 0
      %1595 = vmatpush1.bf16.xpose.msra.mxu0 0
      %1596 = vmatprep.subr.bf16.mxu0 0
      %1597 = vmatpush1.bf16.xpose.msra.mxu0 %v1580
      %1598 = vmatprep.subr.bf16.mxu0 0
      %1599 = vmatpush2.bf16.xpose.msra.mxu0 0
      %1600 = vmatprep.subr.bf16.mxu0 0
      %1601 = vmatpush2.bf16.xpose.msra.mxu0 0
      %1602 = vmatprep.subr.bf16.mxu0 0
      %1603 = vmatpush2.bf16.xpose.msra.mxu0 0
      %1604 = vmatprep.subr.bf16.mxu0 0
      %1605 = vmatpush2.bf16.xpose.msra.mxu0 0
      %1606 = vmatprep.subr.bf16.mxu0 0
      %1607 = vmatpush2.bf16.xpose.msra.mxu0 0
      %1608 = vmatprep.subr.bf16.mxu0 0
      %1609 = vmatpush2.bf16.xpose.msra.mxu0 0
      %1610 = vmatprep.subr.bf16.mxu0 0
      %1611 = vmatpush2.bf16.xpose.msra.mxu0 0
      %1612 = vmatprep.subr.bf16.mxu0 0
      %1613 = vmatpush2.bf16.xpose.msra.mxu0 0
      %1614 = vmatprep.mubr.bf16.mxu0 0
      %1615 = vmatmul.mubr.bf16.gmra.mxu0 %v1577
      %v1616 = vpop.f32.mrf.mxu0
      %v1617 = vadd.f32 0.0, %v1616
      %v1618 = vpop.f32.mrf.mxu0
      %v1619 = vpop.f32.mrf.mxu0
      %v1620 = vpop.f32.mrf.mxu0
      %1621 = vdwg.mxu0
      %v1622 = vlaneseq
      %v1623 = vshrl.u32 %v1622, 7
      %v1624 = vlaneseq
      %v1625 = vand.u32 %v1624, 127
      %vm1626 = vcmp.ge.s32.totalorder %v1623, %v1625
      %v1627 = vsel %vm1626, 1, 0
      %vm1628 = vcmp.eq.s32.totalorder %v1627, 1
      %v1629 = vsel %vm1628, %v1295, -1e+30
      %v1630 = vsel %vm1628, %v1341, -1e+30
      %v1631 = vsel %vm1628, %v1387, -1e+30
      %v1632 = vsel %vm1628, %v1433, -1e+30
      %v1633 = vsel %vm1628, %v1479, -1e+30
      %v1634 = vsel %vm1628, %v1525, -1e+30
      %v1635 = vsel %vm1628, %v1571, -1e+30
      %v1636 = vsel %vm1628, %v1617, -1e+30
      %vm1637 = vcmask 64512
      %v1638 = vsel %vm1637, %v1629, -inf
      %1639 = vmax.xlane.f32.xlu0 %v1638
      %v1640 = vpop.xlane.xlu0 %1639
      %v1641 = vsel %vm1637, %v1630, -inf
      %1642 = vmax.xlane.f32.xlu0 %v1641
      %v1643 = vpop.xlane.xlu0 %1642
      %v1644 = vsel %vm1637, %v1631, -inf
      %1645 = vmax.xlane.f32.xlu0 %v1644
      %v1646 = vpop.xlane.xlu0 %1645
      %v1647 = vsel %vm1637, %v1632, -inf
      %1648 = vmax.xlane.f32.xlu0 %v1647
      %v1649 = vpop.xlane.xlu0 %1648
      %v1650 = vsel %vm1637, %v1633, -inf
      %1651 = vmax.xlane.f32.xlu0 %v1650
      %v1652 = vpop.xlane.xlu0 %1651
      %v1653 = vsel %vm1637, %v1634, -inf
      %1654 = vmax.xlane.f32.xlu0 %v1653
      %v1655 = vpop.xlane.xlu0 %1654
      %v1656 = vsel %vm1637, %v1635, -inf
      %1657 = vmax.xlane.f32.xlu0 %v1656
      %v1658 = vpop.xlane.xlu0 %1657
      %v1659 = vsel %vm1637, %v1636, -inf
      %1660 = vmax.xlane.f32.xlu0 %v1659
      %v1661 = vpop.xlane.xlu0 %1660
      %v1662 = vsub.f32 %v1629, %v1640
      %v1663 = vsub.f32 %v1630, %v1643
      %v1664 = vsub.f32 %v1631, %v1646
      %v1665 = vsub.f32 %v1632, %v1649
      %v1666 = vsub.f32 %v1633, %v1652
      %v1667 = vsub.f32 %v1634, %v1655
      %v1668 = vsub.f32 %v1635, %v1658
      %v1669 = vsub.f32 %v1636, %v1661
      %v1670 = vmul.f32 %v1662, 1.442695
      %v1671 = vpow.pop %v1670
      %v1672 = vmul.f32 %v1663, 1.442695
      %v1673 = vpow.pop %v1672
      %v1674 = vmul.f32 %v1664, 1.442695
      %v1675 = vpow.pop %v1674
      %v1676 = vmul.f32 %v1665, 1.442695
      %v1677 = vpow.pop %v1676
      %v1678 = vmul.f32 %v1666, 1.442695
      %v1679 = vpow.pop %v1678
      %v1680 = vmul.f32 %v1667, 1.442695
      %v1681 = vpow.pop %v1680
      %v1682 = vmul.f32 %v1668, 1.442695
      %v1683 = vpow.pop %v1682
      %v1684 = vmul.f32 %v1669, 1.442695
      %v1685 = vpow.pop %v1684
      %v1686 = vsel %vm1637, %v1671, 0.0
      %1687 = vadd.xlane.f32.xlu0 %v1686
      %v1688 = vpop.xlane.xlu0 %1687
      %v1689 = vsel %vm1637, %v1673, 0.0
      %1690 = vadd.xlane.f32.xlu0 %v1689
      %v1691 = vpop.xlane.xlu0 %1690
      %v1692 = vsel %vm1637, %v1675, 0.0
      %1693 = vadd.xlane.f32.xlu0 %v1692
      %v1694 = vpop.xlane.xlu0 %1693
      %v1695 = vsel %vm1637, %v1677, 0.0
      %1696 = vadd.xlane.f32.xlu0 %v1695
      %v1697 = vpop.xlane.xlu0 %1696
      %v1698 = vsel %vm1637, %v1679, 0.0
      %1699 = vadd.xlane.f32.xlu0 %v1698
      %v1700 = vpop.xlane.xlu0 %1699
      %v1701 = vsel %vm1637, %v1681, 0.0
      %1702 = vadd.xlane.f32.xlu0 %v1701
      %v1703 = vpop.xlane.xlu0 %1702
      %v1704 = vsel %vm1637, %v1683, 0.0
      %1705 = vadd.xlane.f32.xlu0 %v1704
      %v1706 = vpop.xlane.xlu0 %1705
      %v1707 = vsel %vm1637, %v1685, 0.0
      %1708 = vadd.xlane.f32.xlu0 %v1707
      %v1709 = vpop.xlane.xlu0 %1708
      %v1710 = vrcp.pop %v1688
      %v1711 = vrcp.pop %v1691
      %v1712 = vrcp.pop %v1694
      %v1713 = vrcp.pop %v1697
      %v1714 = vrcp.pop %v1700
      %v1715 = vrcp.pop %v1703
      %v1716 = vrcp.pop %v1706
      %v1717 = vrcp.pop %v1709
      %v1718 = vmul.f32 %v1671, %v1710
      %v1719 = vmul.f32 %v1673, %v1711
      %v1720 = vmul.f32 %v1675, %v1712
      %v1721 = vmul.f32 %v1677, %v1713
      %v1722 = vmul.f32 %v1679, %v1714
      %v1723 = vmul.f32 %v1681, %v1715
      %v1724 = vmul.f32 %v1683, %v1716
      %v1725 = vmul.f32 %v1685, %v1717
      %v1726 = vpack.c.bf16 %v1718, %v1718
      %v1727 = vpack.c.bf16 %v1719, %v1719
      %v1728 = vpack.c.bf16 %v1720, %v1720
      %v1729 = vpack.c.bf16 %v1721, %v1721
      %v1730 = vpack.c.bf16 %v1722, %v1722
      %v1731 = vpack.c.bf16 %v1723, %v1723
      %v1732 = vpack.c.bf16 %v1724, %v1724
      %v1733 = vpack.c.bf16 %v1725, %v1725
      %v1735 = vsel %vm1637, %v1726, 0
      %vm1737 = vcmask 1043456
      %v1739 = vsel %vm1737, %v1245, 0
      %1741 = vmatprep.subr.bf16.mxu0 0
      %1742 = vmatpush1.bf16.msra.mxu0 0
      %1743 = vmatprep.subr.bf16.mxu0 0
      %1744 = vmatpush1.bf16.msra.mxu0 0
      %1745 = vmatprep.subr.bf16.mxu0 0
      %1746 = vmatpush1.bf16.msra.mxu0 0
      %1747 = vmatprep.subr.bf16.mxu0 0
      %1748 = vmatpush1.bf16.msra.mxu0 0
      %1749 = vmatprep.subr.bf16.mxu0 0
      %1750 = vmatpush1.bf16.msra.mxu0 0
      %1751 = vmatprep.subr.bf16.mxu0 0
      %1752 = vmatpush1.bf16.msra.mxu0 0
      %1753 = vmatprep.subr.bf16.mxu0 0
      %1754 = vmatpush1.bf16.msra.mxu0 0
      %1755 = vmatprep.subr.bf16.mxu0 0
      %1756 = vmatpush1.bf16.msra.mxu0 %v1739
      %1757 = vmatprep.subr.bf16.mxu0 0
      %1758 = vmatpush2.bf16.msra.mxu0 0
      %1759 = vmatprep.subr.bf16.mxu0 0
      %1760 = vmatpush2.bf16.msra.mxu0 0
      %1761 = vmatprep.subr.bf16.mxu0 0
      %1762 = vmatpush2.bf16.msra.mxu0 0
      %1763 = vmatprep.subr.bf16.mxu0 0
      %1764 = vmatpush2.bf16.msra.mxu0 0
      %1765 = vmatprep.subr.bf16.mxu0 0
      %1766 = vmatpush2.bf16.msra.mxu0 0
      %1767 = vmatprep.subr.bf16.mxu0 0
      %1768 = vmatpush2.bf16.msra.mxu0 0
      %1769 = vmatprep.subr.bf16.mxu0 0
      %1770 = vmatpush2.bf16.msra.mxu0 0
      %1771 = vmatprep.subr.bf16.mxu0 0
      %1772 = vmatpush2.bf16.msra.mxu0 0
      %1773 = vmatprep.mubr.bf16.mxu0 0
      %1774 = vmatmul.mubr.bf16.gmra.mxu0 %v1735
      %v1775 = vpop.f32.mrf.mxu0
      %v1776 = vadd.f32 0.0, %v1775
      %v1777 = vpop.f32.mrf.mxu0
      %v1778 = vpop.f32.mrf.mxu0
      %v1779 = vpop.f32.mrf.mxu0
      %1780 = vdwg.mxu0
      %v1782 = vsel %vm1637, %v1727, 0
      %v1785 = vsel %vm1737, %v1246, 0
      %1787 = vmatprep.subr.bf16.mxu0 0
      %1788 = vmatpush1.bf16.msra.mxu0 0
      %1789 = vmatprep.subr.bf16.mxu0 0
      %1790 = vmatpush1.bf16.msra.mxu0 0
      %1791 = vmatprep.subr.bf16.mxu0 0
      %1792 = vmatpush1.bf16.msra.mxu0 0
      %1793 = vmatprep.subr.bf16.mxu0 0
      %1794 = vmatpush1.bf16.msra.mxu0 0
      %1795 = vmatprep.subr.bf16.mxu0 0
      %1796 = vmatpush1.bf16.msra.mxu0 0
      %1797 = vmatprep.subr.bf16.mxu0 0
      %1798 = vmatpush1.bf16.msra.mxu0 0
      %1799 = vmatprep.subr.bf16.mxu0 0
      %1800 = vmatpush1.bf16.msra.mxu0 0
      %1801 = vmatprep.subr.bf16.mxu0 0
      %1802 = vmatpush1.bf16.msra.mxu0 %v1785
      %1803 = vmatprep.subr.bf16.mxu0 0
      %1804 = vmatpush2.bf16.msra.mxu0 0
      %1805 = vmatprep.subr.bf16.mxu0 0
      %1806 = vmatpush2.bf16.msra.mxu0 0
      %1807 = vmatprep.subr.bf16.mxu0 0
      %1808 = vmatpush2.bf16.msra.mxu0 0
      %1809 = vmatprep.subr.bf16.mxu0 0
      %1810 = vmatpush2.bf16.msra.mxu0 0
      %1811 = vmatprep.subr.bf16.mxu0 0
      %1812 = vmatpush2.bf16.msra.mxu0 0
      %1813 = vmatprep.subr.bf16.mxu0 0
      %1814 = vmatpush2.bf16.msra.mxu0 0
      %1815 = vmatprep.subr.bf16.mxu0 0
      %1816 = vmatpush2.bf16.msra.mxu0 0
      %1817 = vmatprep.subr.bf16.mxu0 0
      %1818 = vmatpush2.bf16.msra.mxu0 0
      %1819 = vmatprep.mubr.bf16.mxu0 0
      %1820 = vmatmul.mubr.bf16.gmra.mxu0 %v1782
      %v1821 = vpop.f32.mrf.mxu0
      %v1822 = vadd.f32 0.0, %v1821
      %v1823 = vpop.f32.mrf.mxu0
      %v1824 = vpop.f32.mrf.mxu0
      %v1825 = vpop.f32.mrf.mxu0
      %1826 = vdwg.mxu0
      %v1828 = vsel %vm1637, %v1728, 0
      %v1831 = vsel %vm1737, %v1247, 0
      %1833 = vmatprep.subr.bf16.mxu0 0
      %1834 = vmatpush1.bf16.msra.mxu0 0
      %1835 = vmatprep.subr.bf16.mxu0 0
      %1836 = vmatpush1.bf16.msra.mxu0 0
      %1837 = vmatprep.subr.bf16.mxu0 0
      %1838 = vmatpush1.bf16.msra.mxu0 0
      %1839 = vmatprep.subr.bf16.mxu0 0
      %1840 = vmatpush1.bf16.msra.mxu0 0
      %1841 = vmatprep.subr.bf16.mxu0 0
      %1842 = vmatpush1.bf16.msra.mxu0 0
      %1843 = vmatprep.subr.bf16.mxu0 0
      %1844 = vmatpush1.bf16.msra.mxu0 0
      %1845 = vmatprep.subr.bf16.mxu0 0
      %1846 = vmatpush1.bf16.msra.mxu0 0
      %1847 = vmatprep.subr.bf16.mxu0 0
      %1848 = vmatpush1.bf16.msra.mxu0 %v1831
      %1849 = vmatprep.subr.bf16.mxu0 0
      %1850 = vmatpush2.bf16.msra.mxu0 0
      %1851 = vmatprep.subr.bf16.mxu0 0
      %1852 = vmatpush2.bf16.msra.mxu0 0
      %1853 = vmatprep.subr.bf16.mxu0 0
      %1854 = vmatpush2.bf16.msra.mxu0 0
      %1855 = vmatprep.subr.bf16.mxu0 0
      %1856 = vmatpush2.bf16.msra.mxu0 0
      %1857 = vmatprep.subr.bf16.mxu0 0
      %1858 = vmatpush2.bf16.msra.mxu0 0
      %1859 = vmatprep.subr.bf16.mxu0 0
      %1860 = vmatpush2.bf16.msra.mxu0 0
      %1861 = vmatprep.subr.bf16.mxu0 0
      %1862 = vmatpush2.bf16.msra.mxu0 0
      %1863 = vmatprep.subr.bf16.mxu0 0
      %1864 = vmatpush2.bf16.msra.mxu0 0
      %1865 = vmatprep.mubr.bf16.mxu0 0
      %1866 = vmatmul.mubr.bf16.gmra.mxu0 %v1828
      %v1867 = vpop.f32.mrf.mxu0
      %v1868 = vadd.f32 0.0, %v1867
      %v1869 = vpop.f32.mrf.mxu0
      %v1870 = vpop.f32.mrf.mxu0
      %v1871 = vpop.f32.mrf.mxu0
      %1872 = vdwg.mxu0
      %v1874 = vsel %vm1637, %v1729, 0
      %v1877 = vsel %vm1737, %v1248, 0
      %1879 = vmatprep.subr.bf16.mxu0 0
      %1880 = vmatpush1.bf16.msra.mxu0 0
      %1881 = vmatprep.subr.bf16.mxu0 0
      %1882 = vmatpush1.bf16.msra.mxu0 0
      %1883 = vmatprep.subr.bf16.mxu0 0
      %1884 = vmatpush1.bf16.msra.mxu0 0
      %1885 = vmatprep.subr.bf16.mxu0 0
      %1886 = vmatpush1.bf16.msra.mxu0 0
      %1887 = vmatprep.subr.bf16.mxu0 0
      %1888 = vmatpush1.bf16.msra.mxu0 0
      %1889 = vmatprep.subr.bf16.mxu0 0
      %1890 = vmatpush1.bf16.msra.mxu0 0
      %1891 = vmatprep.subr.bf16.mxu0 0
      %1892 = vmatpush1.bf16.msra.mxu0 0
      %1893 = vmatprep.subr.bf16.mxu0 0
      %1894 = vmatpush1.bf16.msra.mxu0 %v1877
      %1895 = vmatprep.subr.bf16.mxu0 0
      %1896 = vmatpush2.bf16.msra.mxu0 0
      %1897 = vmatprep.subr.bf16.mxu0 0
      %1898 = vmatpush2.bf16.msra.mxu0 0
      %1899 = vmatprep.subr.bf16.mxu0 0
      %1900 = vmatpush2.bf16.msra.mxu0 0
      %1901 = vmatprep.subr.bf16.mxu0 0
      %1902 = vmatpush2.bf16.msra.mxu0 0
      %1903 = vmatprep.subr.bf16.mxu0 0
      %1904 = vmatpush2.bf16.msra.mxu0 0
      %1905 = vmatprep.subr.bf16.mxu0 0
      %1906 = vmatpush2.bf16.msra.mxu0 0
      %1907 = vmatprep.subr.bf16.mxu0 0
      %1908 = vmatpush2.bf16.msra.mxu0 0
      %1909 = vmatprep.subr.bf16.mxu0 0
      %1910 = vmatpush2.bf16.msra.mxu0 0
      %1911 = vmatprep.mubr.bf16.mxu0 0
      %1912 = vmatmul.mubr.bf16.gmra.mxu0 %v1874
      %v1913 = vpop.f32.mrf.mxu0
      %v1914 = vadd.f32 0.0, %v1913
      %v1915 = vpop.f32.mrf.mxu0
      %v1916 = vpop.f32.mrf.mxu0
      %v1917 = vpop.f32.mrf.mxu0
      %1918 = vdwg.mxu0
      %v1920 = vsel %vm1637, %v1730, 0
      %v1923 = vsel %vm1737, %v1249, 0
      %1925 = vmatprep.subr.bf16.mxu0 0
      %1926 = vmatpush1.bf16.msra.mxu0 0
      %1927 = vmatprep.subr.bf16.mxu0 0
      %1928 = vmatpush1.bf16.msra.mxu0 0
      %1929 = vmatprep.subr.bf16.mxu0 0
      %1930 = vmatpush1.bf16.msra.mxu0 0
      %1931 = vmatprep.subr.bf16.mxu0 0
      %1932 = vmatpush1.bf16.msra.mxu0 0
      %1933 = vmatprep.subr.bf16.mxu0 0
      %1934 = vmatpush1.bf16.msra.mxu0 0
      %1935 = vmatprep.subr.bf16.mxu0 0
      %1936 = vmatpush1.bf16.msra.mxu0 0
      %1937 = vmatprep.subr.bf16.mxu0 0
      %1938 = vmatpush1.bf16.msra.mxu0 0
      %1939 = vmatprep.subr.bf16.mxu0 0
      %1940 = vmatpush1.bf16.msra.mxu0 %v1923
      %1941 = vmatprep.subr.bf16.mxu0 0
      %1942 = vmatpush2.bf16.msra.mxu0 0
      %1943 = vmatprep.subr.bf16.mxu0 0
      %1944 = vmatpush2.bf16.msra.mxu0 0
      %1945 = vmatprep.subr.bf16.mxu0 0
      %1946 = vmatpush2.bf16.msra.mxu0 0
      %1947 = vmatprep.subr.bf16.mxu0 0
      %1948 = vmatpush2.bf16.msra.mxu0 0
      %1949 = vmatprep.subr.bf16.mxu0 0
      %1950 = vmatpush2.bf16.msra.mxu0 0
      %1951 = vmatprep.subr.bf16.mxu0 0
      %1952 = vmatpush2.bf16.msra.mxu0 0
      %1953 = vmatprep.subr.bf16.mxu0 0
      %1954 = vmatpush2.bf16.msra.mxu0 0
      %1955 = vmatprep.subr.bf16.mxu0 0
      %1956 = vmatpush2.bf16.msra.mxu0 0
      %1957 = vmatprep.mubr.bf16.mxu0 0
      %1958 = vmatmul.mubr.bf16.gmra.mxu0 %v1920
      %v1959 = vpop.f32.mrf.mxu0
      %v1960 = vadd.f32 0.0, %v1959
      %v1961 = vpop.f32.mrf.mxu0
      %v1962 = vpop.f32.mrf.mxu0
      %v1963 = vpop.f32.mrf.mxu0
      %1964 = vdwg.mxu0
      %v1966 = vsel %vm1637, %v1731, 0
      %v1969 = vsel %vm1737, %v1250, 0
      %1971 = vmatprep.subr.bf16.mxu0 0
      %1972 = vmatpush1.bf16.msra.mxu0 0
      %1973 = vmatprep.subr.bf16.mxu0 0
      %1974 = vmatpush1.bf16.msra.mxu0 0
      %1975 = vmatprep.subr.bf16.mxu0 0
      %1976 = vmatpush1.bf16.msra.mxu0 0
      %1977 = vmatprep.subr.bf16.mxu0 0
      %1978 = vmatpush1.bf16.msra.mxu0 0
      %1979 = vmatprep.subr.bf16.mxu0 0
      %1980 = vmatpush1.bf16.msra.mxu0 0
      %1981 = vmatprep.subr.bf16.mxu0 0
      %1982 = vmatpush1.bf16.msra.mxu0 0
      %1983 = vmatprep.subr.bf16.mxu0 0
      %1984 = vmatpush1.bf16.msra.mxu0 0
      %1985 = vmatprep.subr.bf16.mxu0 0
      %1986 = vmatpush1.bf16.msra.mxu0 %v1969
      %1987 = vmatprep.subr.bf16.mxu0 0
      %1988 = vmatpush2.bf16.msra.mxu0 0
      %1989 = vmatprep.subr.bf16.mxu0 0
      %1990 = vmatpush2.bf16.msra.mxu0 0
      %1991 = vmatprep.subr.bf16.mxu0 0
      %1992 = vmatpush2.bf16.msra.mxu0 0
      %1993 = vmatprep.subr.bf16.mxu0 0
      %1994 = vmatpush2.bf16.msra.mxu0 0
      %1995 = vmatprep.subr.bf16.mxu0 0
      %1996 = vmatpush2.bf16.msra.mxu0 0
      %1997 = vmatprep.subr.bf16.mxu0 0
      %1998 = vmatpush2.bf16.msra.mxu0 0
      %1999 = vmatprep.subr.bf16.mxu0 0
      %2000 = vmatpush2.bf16.msra.mxu0 0
      %2001 = vmatprep.subr.bf16.mxu0 0
      %2002 = vmatpush2.bf16.msra.mxu0 0
      %2003 = vmatprep.mubr.bf16.mxu0 0
      %2004 = vmatmul.mubr.bf16.gmra.mxu0 %v1966
      %v2005 = vpop.f32.mrf.mxu0
      %v2006 = vadd.f32 0.0, %v2005
      %v2007 = vpop.f32.mrf.mxu0
      %v2008 = vpop.f32.mrf.mxu0
      %v2009 = vpop.f32.mrf.mxu0
      %2010 = vdwg.mxu0
      %v2012 = vsel %vm1637, %v1732, 0
      %v2015 = vsel %vm1737, %v1251, 0
      %2017 = vmatprep.subr.bf16.mxu0 0
      %2018 = vmatpush1.bf16.msra.mxu0 0
      %2019 = vmatprep.subr.bf16.mxu0 0
      %2020 = vmatpush1.bf16.msra.mxu0 0
      %2021 = vmatprep.subr.bf16.mxu0 0
      %2022 = vmatpush1.bf16.msra.mxu0 0
      %2023 = vmatprep.subr.bf16.mxu0 0
      %2024 = vmatpush1.bf16.msra.mxu0 0
      %2025 = vmatprep.subr.bf16.mxu0 0
      %2026 = vmatpush1.bf16.msra.mxu0 0
      %2027 = vmatprep.subr.bf16.mxu0 0
      %2028 = vmatpush1.bf16.msra.mxu0 0
      %2029 = vmatprep.subr.bf16.mxu0 0
      %2030 = vmatpush1.bf16.msra.mxu0 0
      %2031 = vmatprep.subr.bf16.mxu0 0
      %2032 = vmatpush1.bf16.msra.mxu0 %v2015
      %2033 = vmatprep.subr.bf16.mxu0 0
      %2034 = vmatpush2.bf16.msra.mxu0 0
      %2035 = vmatprep.subr.bf16.mxu0 0
      %2036 = vmatpush2.bf16.msra.mxu0 0
      %2037 = vmatprep.subr.bf16.mxu0 0
      %2038 = vmatpush2.bf16.msra.mxu0 0
      %2039 = vmatprep.subr.bf16.mxu0 0
      %2040 = vmatpush2.bf16.msra.mxu0 0
      %2041 = vmatprep.subr.bf16.mxu0 0
      %2042 = vmatpush2.bf16.msra.mxu0 0
      %2043 = vmatprep.subr.bf16.mxu0 0
      %2044 = vmatpush2.bf16.msra.mxu0 0
      %2045 = vmatprep.subr.bf16.mxu0 0
      %2046 = vmatpush2.bf16.msra.mxu0 0
      %2047 = vmatprep.subr.bf16.mxu0 0
      %2048 = vmatpush2.bf16.msra.mxu0 0
      %2049 = vmatprep.mubr.bf16.mxu0 0
      %2050 = vmatmul.mubr.bf16.gmra.mxu0 %v2012
      %v2051 = vpop.f32.mrf.mxu0
      %v2052 = vadd.f32 0.0, %v2051
      %v2053 = vpop.f32.mrf.mxu0
      %v2054 = vpop.f32.mrf.mxu0
      %v2055 = vpop.f32.mrf.mxu0
      %2056 = vdwg.mxu0
      %v2058 = vsel %vm1637, %v1733, 0
      %v2061 = vsel %vm1737, %v1252, 0
      %2063 = vmatprep.subr.bf16.mxu0 0
      %2064 = vmatpush1.bf16.msra.mxu0 0
      %2065 = vmatprep.subr.bf16.mxu0 0
      %2066 = vmatpush1.bf16.msra.mxu0 0
      %2067 = vmatprep.subr.bf16.mxu0 0
      %2068 = vmatpush1.bf16.msra.mxu0 0
      %2069 = vmatprep.subr.bf16.mxu0 0
      %2070 = vmatpush1.bf16.msra.mxu0 0
      %2071 = vmatprep.subr.bf16.mxu0 0
      %2072 = vmatpush1.bf16.msra.mxu0 0
      %2073 = vmatprep.subr.bf16.mxu0 0
      %2074 = vmatpush1.bf16.msra.mxu0 0
      %2075 = vmatprep.subr.bf16.mxu0 0
      %2076 = vmatpush1.bf16.msra.mxu0 0
      %2077 = vmatprep.subr.bf16.mxu0 0
      %2078 = vmatpush1.bf16.msra.mxu0 %v2061
      %2079 = vmatprep.subr.bf16.mxu0 0
      %2080 = vmatpush2.bf16.msra.mxu0 0
      %2081 = vmatprep.subr.bf16.mxu0 0
      %2082 = vmatpush2.bf16.msra.mxu0 0
      %2083 = vmatprep.subr.bf16.mxu0 0
      %2084 = vmatpush2.bf16.msra.mxu0 0
      %2085 = vmatprep.subr.bf16.mxu0 0
      %2086 = vmatpush2.bf16.msra.mxu0 0
      %2087 = vmatprep.subr.bf16.mxu0 0
      %2088 = vmatpush2.bf16.msra.mxu0 0
      %2089 = vmatprep.subr.bf16.mxu0 0
      %2090 = vmatpush2.bf16.msra.mxu0 0
      %2091 = vmatprep.subr.bf16.mxu0 0
      %2092 = vmatpush2.bf16.msra.mxu0 0
      %2093 = vmatprep.subr.bf16.mxu0 0
      %2094 = vmatpush2.bf16.msra.mxu0 0
      %2095 = vmatprep.mubr.bf16.mxu0 0
      %2096 = vmatmul.mubr.bf16.gmra.mxu0 %v2058
      %v2097 = vpop.f32.mrf.mxu0
      %v2098 = vadd.f32 0.0, %v2097
      %v2099 = vpop.f32.mrf.mxu0
      %v2100 = vpop.f32.mrf.mxu0
      %v2101 = vpop.f32.mrf.mxu0
      %2102 = vdwg.mxu0
      %v2103 = vcombine.low %v1776, %v1868
      %v2104 = vcombine.high %v1776, %v1868
      %v2106 = vunpack.c.l.s4 1983009808
      %v2107 = vunpack.c.0.s8 %v2106
      %v2108 = vlaneseq
      %v2109 = vshrl.u32 %v2108, 7
      %v2110 = vsub.s32 %v2107, %v2109
      %v2111 = vrot.slane %v2103, %v2110
      %v2113 = vunpack.c.l.s4 1983009808
      %v2114 = vunpack.c.0.s8 %v2113
      %v2115 = vlaneseq
      %v2116 = vshrl.u32 %v2115, 7
      %v2117 = vsub.s32 %v2114, %v2116
      %v2118 = vrot.slane %v2104, %v2117
      %v2119 = vcombine.low %v1822, %v1914
      %v2120 = vcombine.high %v1822, %v1914
      %v2122 = vunpack.c.l.s4 1983009808
      %v2123 = vunpack.c.0.s8 %v2122
      %v2124 = vlaneseq
      %v2125 = vshrl.u32 %v2124, 7
      %v2126 = vsub.s32 %v2123, %v2125
      %v2127 = vrot.slane %v2119, %v2126
      %v2129 = vunpack.c.l.s4 1983009808
      %v2130 = vunpack.c.0.s8 %v2129
      %v2131 = vlaneseq
      %v2132 = vshrl.u32 %v2131, 7
      %v2133 = vsub.s32 %v2130, %v2132
      %v2134 = vrot.slane %v2120, %v2133
      %v2135 = vcombine.low %v1960, %v2052
      %v2136 = vcombine.high %v1960, %v2052
      %v2138 = vunpack.c.l.s4 1983009808
      %v2139 = vunpack.c.0.s8 %v2138
      %v2140 = vlaneseq
      %v2141 = vshrl.u32 %v2140, 7
      %v2142 = vsub.s32 %v2139, %v2141
      %v2143 = vrot.slane %v2135, %v2142
      %v2145 = vunpack.c.l.s4 1983009808
      %v2146 = vunpack.c.0.s8 %v2145
      %v2147 = vlaneseq
      %v2148 = vshrl.u32 %v2147, 7
      %v2149 = vsub.s32 %v2146, %v2148
      %v2150 = vrot.slane %v2136, %v2149
      %v2151 = vcombine.low %v2006, %v2098
      %v2152 = vcombine.high %v2006, %v2098
      %v2154 = vunpack.c.l.s4 1983009808
      %v2155 = vunpack.c.0.s8 %v2154
      %v2156 = vlaneseq
      %v2157 = vshrl.u32 %v2156, 7
      %v2158 = vsub.s32 %v2155, %v2157
      %v2159 = vrot.slane %v2151, %v2158
      %v2161 = vunpack.c.l.s4 1983009808
      %v2162 = vunpack.c.0.s8 %v2161
      %v2163 = vlaneseq
      %v2164 = vshrl.u32 %v2163, 7
      %v2165 = vsub.s32 %v2162, %v2164
      %v2166 = vrot.slane %v2152, %v2165
      %v2167 = vcombine.low %v2111, %v2127
      %v2168 = vcombine.high %v2111, %v2127
      %v2170 = vunpack.c.l.s4 1934713408
      %v2171 = vunpack.c.0.s8 %v2170
      %v2172 = vlaneseq
      %v2173 = vshrl.u32 %v2172, 7
      %v2174 = vsub.s32 %v2171, %v2173
      %v2175 = vrot.slane %v2167, %v2174
      %v2177 = vunpack.c.l.s4 1934713408
      %v2178 = vunpack.c.0.s8 %v2177
      %v2179 = vlaneseq
      %v2180 = vshrl.u32 %v2179, 7
      %v2181 = vsub.s32 %v2178, %v2180
      %v2182 = vrot.slane %v2168, %v2181
      %v2183 = vcombine.low %v2118, %v2134
      %v2184 = vcombine.high %v2118, %v2134
      %v2186 = vunpack.c.l.s4 1934713408
      %v2187 = vunpack.c.0.s8 %v2186
      %v2188 = vlaneseq
      %v2189 = vshrl.u32 %v2188, 7
      %v2190 = vsub.s32 %v2187, %v2189
      %v2191 = vrot.slane %v2183, %v2190
      %v2193 = vunpack.c.l.s4 1934713408
      %v2194 = vunpack.c.0.s8 %v2193
      %v2195 = vlaneseq
      %v2196 = vshrl.u32 %v2195, 7
      %v2197 = vsub.s32 %v2194, %v2196
      %v2198 = vrot.slane %v2184, %v2197
      %v2199 = vcombine.low %v2143, %v2159
      %v2200 = vcombine.high %v2143, %v2159
      %v2202 = vunpack.c.l.s4 1934713408
      %v2203 = vunpack.c.0.s8 %v2202
      %v2204 = vlaneseq
      %v2205 = vshrl.u32 %v2204, 7
      %v2206 = vsub.s32 %v2203, %v2205
      %v2207 = vrot.slane %v2199, %v2206
      %v2209 = vunpack.c.l.s4 1934713408
      %v2210 = vunpack.c.0.s8 %v2209
      %v2211 = vlaneseq
      %v2212 = vshrl.u32 %v2211, 7
      %v2213 = vsub.s32 %v2210, %v2212
      %v2214 = vrot.slane %v2200, %v2213
      %v2215 = vcombine.low %v2150, %v2166
      %v2216 = vcombine.high %v2150, %v2166
      %v2218 = vunpack.c.l.s4 1934713408
      %v2219 = vunpack.c.0.s8 %v2218
      %v2220 = vlaneseq
      %v2221 = vshrl.u32 %v2220, 7
      %v2222 = vsub.s32 %v2219, %v2221
      %v2223 = vrot.slane %v2215, %v2222
      %v2225 = vunpack.c.l.s4 1934713408
      %v2226 = vunpack.c.0.s8 %v2225
      %v2227 = vlaneseq
      %v2228 = vshrl.u32 %v2227, 7
      %v2229 = vsub.s32 %v2226, %v2228
      %v2230 = vrot.slane %v2216, %v2229
      %v2231 = vcombine.low %v2175, %v2207
      %v2232 = vcombine.high %v2175, %v2207
      %v2233 = vcombine.low %v2182, %v2214
      %v2234 = vcombine.high %v2182, %v2214
      %v2235 = vcombine.low %v2191, %v2223
      %v2236 = vcombine.high %v2191, %v2223
      %v2237 = vcombine.low %v2198, %v2230
      %v2238 = vcombine.high %v2198, %v2230
      %v2239 = vcombine.low %v2231, %v2233
      %v2240 = vcombine.high %v2231, %v2233
      %v2242 = vunpack.c.l.s4 1983009808
      %v2243 = vunpack.c.0.s8 %v2242
      %v2244 = vlaneseq
      %v2245 = vshrl.u32 %v2244, 7
      %v2246 = vsub.s32 %v2243, %v2245
      %v2247 = vrot.slane %v2239, %v2246
      %v2249 = vunpack.c.l.s4 1983009808
      %v2250 = vunpack.c.0.s8 %v2249
      %v2251 = vlaneseq
      %v2252 = vshrl.u32 %v2251, 7
      %v2253 = vsub.s32 %v2250, %v2252
      %v2254 = vrot.slane %v2240, %v2253
      %v2255 = vcombine.low %v2232, %v2234
      %v2256 = vcombine.high %v2232, %v2234
      %v2258 = vunpack.c.l.s4 1983009808
      %v2259 = vunpack.c.0.s8 %v2258
      %v2260 = vlaneseq
      %v2261 = vshrl.u32 %v2260, 7
      %v2262 = vsub.s32 %v2259, %v2261
      %v2263 = vrot.slane %v2255, %v2262
      %v2265 = vunpack.c.l.s4 1983009808
      %v2266 = vunpack.c.0.s8 %v2265
      %v2267 = vlaneseq
      %v2268 = vshrl.u32 %v2267, 7
      %v2269 = vsub.s32 %v2266, %v2268
      %v2270 = vrot.slane %v2256, %v2269
      %v2271 = vcombine.low %v2235, %v2237
      %v2272 = vcombine.high %v2235, %v2237
      %v2274 = vunpack.c.l.s4 1983009808
      %v2275 = vunpack.c.0.s8 %v2274
      %v2276 = vlaneseq
      %v2277 = vshrl.u32 %v2276, 7
      %v2278 = vsub.s32 %v2275, %v2277
      %v2279 = vrot.slane %v2271, %v2278
      %v2281 = vunpack.c.l.s4 1983009808
      %v2282 = vunpack.c.0.s8 %v2281
      %v2283 = vlaneseq
      %v2284 = vshrl.u32 %v2283, 7
      %v2285 = vsub.s32 %v2282, %v2284
      %v2286 = vrot.slane %v2272, %v2285
      %v2287 = vcombine.low %v2236, %v2238
      %v2288 = vcombine.high %v2236, %v2238
      %v2290 = vunpack.c.l.s4 1983009808
      %v2291 = vunpack.c.0.s8 %v2290
      %v2292 = vlaneseq
      %v2293 = vshrl.u32 %v2292, 7
      %v2294 = vsub.s32 %v2291, %v2293
      %v2295 = vrot.slane %v2287, %v2294
      %v2297 = vunpack.c.l.s4 1983009808
      %v2298 = vunpack.c.0.s8 %v2297
      %v2299 = vlaneseq
      %v2300 = vshrl.u32 %v2299, 7
      %v2301 = vsub.s32 %v2298, %v2300
      %v2302 = vrot.slane %v2288, %v2301
      %v2303 = vcombine.low %v2247, %v2263
      %v2304 = vcombine.high %v2247, %v2263
      %v2306 = vunpack.c.l.s4 1934713408
      %v2307 = vunpack.c.0.s8 %v2306
      %v2308 = vlaneseq
      %v2309 = vshrl.u32 %v2308, 7
      %v2310 = vsub.s32 %v2307, %v2309
      %v2311 = vrot.slane %v2303, %v2310
      %v2313 = vunpack.c.l.s4 1934713408
      %v2314 = vunpack.c.0.s8 %v2313
      %v2315 = vlaneseq
      %v2316 = vshrl.u32 %v2315, 7
      %v2317 = vsub.s32 %v2314, %v2316
      %v2318 = vrot.slane %v2304, %v2317
      %v2319 = vcombine.low %v2254, %v2270
      %v2320 = vcombine.high %v2254, %v2270
      %v2322 = vunpack.c.l.s4 1934713408
      %v2323 = vunpack.c.0.s8 %v2322
      %v2324 = vlaneseq
      %v2325 = vshrl.u32 %v2324, 7
      %v2326 = vsub.s32 %v2323, %v2325
      %v2327 = vrot.slane %v2319, %v2326
      %v2329 = vunpack.c.l.s4 1934713408
      %v2330 = vunpack.c.0.s8 %v2329
      %v2331 = vlaneseq
      %v2332 = vshrl.u32 %v2331, 7
      %v2333 = vsub.s32 %v2330, %v2332
      %v2334 = vrot.slane %v2320, %v2333
      %v2335 = vcombine.low %v2279, %v2295
      %v2336 = vcombine.high %v2279, %v2295
      %v2338 = vunpack.c.l.s4 1934713408
      %v2339 = vunpack.c.0.s8 %v2338
      %v2340 = vlaneseq
      %v2341 = vshrl.u32 %v2340, 7
      %v2342 = vsub.s32 %v2339, %v2341
      %v2343 = vrot.slane %v2335, %v2342
      %v2345 = vunpack.c.l.s4 1934713408
      %v2346 = vunpack.c.0.s8 %v2345
      %v2347 = vlaneseq
      %v2348 = vshrl.u32 %v2347, 7
      %v2349 = vsub.s32 %v2346, %v2348
      %v2350 = vrot.slane %v2336, %v2349
      %v2351 = vcombine.low %v2286, %v2302
      %v2352 = vcombine.high %v2286, %v2302
      %v2354 = vunpack.c.l.s4 1934713408
      %v2355 = vunpack.c.0.s8 %v2354
      %v2356 = vlaneseq
      %v2357 = vshrl.u32 %v2356, 7
      %v2358 = vsub.s32 %v2355, %v2357
      %v2359 = vrot.slane %v2351, %v2358
      %v2361 = vunpack.c.l.s4 1934713408
      %v2362 = vunpack.c.0.s8 %v2361
      %v2363 = vlaneseq
      %v2364 = vshrl.u32 %v2363, 7
      %v2365 = vsub.s32 %v2362, %v2364
      %v2366 = vrot.slane %v2352, %v2365
      %v2367 = vcombine.low %v2311, %v2343
      %v2368 = vcombine.high %v2311, %v2343
      %v2369 = vcombine.low %v2318, %v2350
      %v2370 = vcombine.high %v2318, %v2350
      %v2371 = vcombine.low %v2327, %v2359
      %v2372 = vcombine.high %v2327, %v2359
      %v2373 = vcombine.low %v2334, %v2366
      %v2374 = vcombine.high %v2334, %v2366
      %2376 = vrot.lane.b32.xlu0 %v2368, 4
      %v2377 = vpop.permute.xlu0 %2376
      %2380 = vrot.lane.b32.xlu0 %v2369, 8
      %v2381 = vpop.permute.xlu0 %2380
      %2384 = vrot.lane.b32.xlu0 %v2370, 12
      %v2385 = vpop.permute.xlu0 %2384
      %2388 = vrot.lane.b32.xlu0 %v2371, 16
      %v2389 = vpop.permute.xlu0 %2388
      %2392 = vrot.lane.b32.xlu0 %v2372, 20
      %v2393 = vpop.permute.xlu0 %2392
      %2396 = vrot.lane.b32.xlu0 %v2373, 24
      %v2397 = vpop.permute.xlu0 %2396
      %2400 = vrot.lane.b32.xlu0 %v2374, 28
      %v2401 = vpop.permute.xlu0 %2400
      %v2403 = vsel %vm1253, %v2367, %v2377
      %v2404 = vsel %vm1637, %v2403, %v2381
      %vm2405 = vcmask 97280
      %v2406 = vsel %vm2405, %v2404, %v2385
      %vm2407 = vcmask 130048
      %v2408 = vsel %vm2407, %v2406, %v2389
      %vm2409 = vcmask 162816
      %v2410 = vsel %vm2409, %v2408, %v2393
      %vm2411 = vcmask 195584
      %v2412 = vsel %vm2411, %v2410, %v2397
      %vm2413 = vcmask 228352
      %v2414 = vsel %vm2413, %v2412, %v2401
      %v2415 = vpack.c.bf16 %v2414, %v2414
      %v2416 = vld [vmem:[%s3] sm:$0xf]
      %v2417 = vld [vmem:[%s3 + $0x4] sm:$0xf]
      %v2418 = vld [vmem:[%s3 + $0x8] sm:$0xf]
      %v2419 = vld [vmem:[%s3 + $0xc] sm:$0xf]
      %v2420 = vld [vmem:[%s4] sm:$0x1]
      %v2422 = vlaneseq
      %v2423 = vshrl.u32 %v2422, 7
      %v2424 = vsub.s32 0, %v2423
      %v2425 = vrot.slane %v2420, %v2424
      %v2431 = vunpack.c.l.b16 %v2416
      %v2432 = vunpack.c.l.b16 %v2417
      %v2433 = vunpack.c.l.b16 %v2418
      %v2434 = vunpack.c.l.b16 %v2419
      %v2435 = vpack.c.b16 %v2432, %v2431
      %v2436 = vpack.c.b16 %v2434, %v2433
      %v2440 = vsel %vm299, %v2415, 0
      %2442 = vmatprep.subr.bf16.mxu0 0
      %2443 = vmatpush1.bf16.msra.mxu0 0
      %2444 = vmatprep.subr.bf16.mxu0 0
      %2445 = vmatpush1.bf16.msra.mxu0 0
      %2446 = vmatprep.subr.bf16.mxu0 0
      %2447 = vmatpush1.bf16.msra.mxu0 0
      %2448 = vmatprep.subr.bf16.mxu0 0
      %2449 = vmatpush1.bf16.msra.mxu0 0
      %2450 = vmatprep.subr.bf16.mxu0 0
      %2451 = vmatpush1.bf16.msra.mxu0 0
      %2452 = vmatprep.subr.bf16.mxu0 0
      %2453 = vmatpush1.bf16.msra.mxu0 0
      %2454 = vmatprep.subr.bf16.mxu0 0
      %2455 = vmatpush1.bf16.msra.mxu0 %v2436
      %2456 = vmatprep.subr.bf16.mxu0 0
      %2457 = vmatpush1.bf16.msra.mxu0 %v2435
      %2458 = vmatprep.subr.bf16.mxu0 0
      %2459 = vmatpush2.bf16.msra.mxu0 0
      %2460 = vmatprep.subr.bf16.mxu0 0
      %2461 = vmatpush2.bf16.msra.mxu0 0
      %2462 = vmatprep.subr.bf16.mxu0 0
      %2463 = vmatpush2.bf16.msra.mxu0 0
      %2464 = vmatprep.subr.bf16.mxu0 0
      %2465 = vmatpush2.bf16.msra.mxu0 0
      %2466 = vmatprep.subr.bf16.mxu0 0
      %2467 = vmatpush2.bf16.msra.mxu0 0
      %2468 = vmatprep.subr.bf16.mxu0 0
      %2469 = vmatpush2.bf16.msra.mxu0 0
      %2470 = vmatprep.subr.bf16.mxu0 0
      %2471 = vmatpush2.bf16.msra.mxu0 0
      %2472 = vmatprep.subr.bf16.mxu0 0
      %2473 = vmatpush2.bf16.msra.mxu0 0
      %2474 = vmatprep.mubr.bf16.mxu0 0
      %2475 = vmatmul.mubr.bf16.gmra.mxu0 %v2440
      %v2476 = vpop.f32.mrf.mxu0
      %v2477 = vadd.f32 %v2425, %v2476
      %v2478 = vpop.f32.mrf.mxu0
      %v2479 = vpop.f32.mrf.mxu0
      %v2480 = vpop.f32.mrf.mxu0
      %2481 = vdwg.mxu0
      %v2482 = vunpack.c.l.bf16 %v275
      %v2483 = vadd.f32 %v2482, %v2477
      %v2484 = vld [vmem:[%s5] sm:$0x1]
      %v2485 = vld [vmem:[%s6] sm:$0x1]
      %v2486 = vsel %vm299, %v2483, 0.0
      %2487 = vadd.xlane.f32.xlu0 %v2486
      %v2488 = vpop.xlane.xlu0 %2487
      %v2489 = vrcp.pop 32.0
      %v2490 = vmul.f32 %v2488, %v2489
      %v2491 = vsub.f32 %v2483, %v2490
      %v2492 = vmul.f32 %v2491, %v2491
      %v2493 = vsel %vm299, %v2492, 0.0
      %2494 = vadd.xlane.f32.xlu0 %v2493
      %v2495 = vpop.xlane.xlu0 %2494
      %v2496 = vmul.f32 %v2495, %v2489
      %v2497 = vadd.f32 %v2496, 1e-05
      %v2498 = vrsqrt.pop %v2497
      %v2499 = vmul.f32 %v2491, %v2498
      %v2501 = vlaneseq
      %v2502 = vshrl.u32 %v2501, 7
      %v2503 = vsub.s32 0, %v2502
      %v2504 = vrot.slane %v2484, %v2503
      %v2506 = vmul.f32 %v2499, %v2504
      %v2508 = vlaneseq
      %v2509 = vshrl.u32 %v2508, 7
      %v2510 = vsub.s32 0, %v2509
      %v2511 = vrot.slane %v2485, %v2510
      %v2513 = vadd.f32 %v2506, %v2511
      %v2514 = vpack.c.bf16 %v2513, %v2513
      %vm2515 = vcmask 257024
      %2516 = vst.msk [vmem:[%s273] sm:$0xf] %vm2515, %v2514
      %p2517 = scmp.lt.s32.totalorder %s18, 1
      %s2518 = scalar_select %p2517, %s18, 1
      %s2519 = smul.addr %s2518, 4
      %s2520 = scalar_lea.vmem %s7, %s2519
      // Predicated region
      $region49: #{prooformer_forward.18} parent=47 // pred_check
        %p2521 = pneg %p188
      $region50: #{prooformer_forward.18} parent=47 // pred_check_branch
        %2523 = sbr.rel (%p2521) target = $region52
      $region51: #{prooformer_forward.18} parent=47 // pred_region
        _
      $region52: #{prooformer_forward.18} parent=47 // pred_fallthru
        _
    $region48: #{prooformer_forward.18} parent=5 // pred_fallthru
      _
    %p2524 = scmp.le.s32.totalorder 2, %s13
    // Predicated region
    $region53: #{prooformer_forward.18} parent=5 // pred_check
      %p2525 = pneg %p2524
    $region54: #{prooformer_forward.18} parent=5 // pred_check_branch
      %2527 = sbr.rel (%p2525) target = $region56
    $region55: #{prooformer_forward.18} parent=5 // pred_region
      %s2528 = ssub.s32 %s13, 2
      // Predicated region
      $region57: #{prooformer_forward.18} parent=55 // pred_check
        %p2529 = pneg %p194
      $region58: #{prooformer_forward.18} parent=55 // pred_check_branch
        %2531 = sbr.rel (%p2529) target = $region60
      $region59: #{prooformer_forward.18} parent=55 // pred_region
        %p2532 = scmp.lt.s32.totalorder %s19, 1
        %s2533 = scalar_select %p2532, %s19, 1
        %s2534 = smul.addr %s2533, 4
        %s2535 = scalar_lea.vmem %s7, %s2534
      $region60: #{prooformer_forward.18} parent=55 // pred_fallthru
        _
    $region56: #{prooformer_forward.18} parent=5 // pred_fallthru
      _
  $region6: #{prooformer_forward.18} parent=0 // loop_footer
    %s17 = sadd.s32 1, %s13
  $region7: #{prooformer_forward.18} parent=0 // loop_footer_branch
    %12 = sbr.rel target = $region3
  $region8: #{prooformer_forward.18} parent=0 // loop_exit
    _

// kernel: prooformer_forward.13
$region0: #{prooformer_forward.13}
  #allocation0 [shape = 'u32[]', space=smem, size = 0x4, offset = 0x4, fixed_abs, tag = 'smem constant byte address 0x4 - core index']
  #allocation1 [shape = 'u32[144,128]{1,0:T(1,128)}', space=vmem, size = 0x12000, scoped, tag = 'internal scratch']
  %s0 = inlined_call_operand.vmem [shape: bf16[2,8,32], index: 0, kind: input, shape index: {}]
  %s1 = inlined_call_operand.vmem [shape: bf16[32,96], index: 1, kind: input, shape index: {}]
  %s2 = inlined_call_operand.vmem [shape: f32[1,96], index: 2, kind: input, shape index: {}]
  %s3 = inlined_call_operand.vmem [shape: bf16[32,32], index: 3, kind: input, shape index: {}]
  %s4 = inlined_call_operand.vmem [shape: f32[1,32], index: 4, kind: input, shape index: {}]
  %s5 = inlined_call_operand.vmem [shape: f32[1,32], index: 5, kind: input, shape index: {}]
  %s6 = inlined_call_operand.vmem [shape: f32[1,32], index: 6, kind: input, shape index: {}]
  %s7 = inlined_call_operand.vmem [shape: bf16[2,8,32], index: 7, kind: output, shape index: {}]
  %s8 = sld [smem:[#allocation0]]
  $region61: #{prooformer_forward.13} parent=0
    _
  %s10 = ssub.s32 1, %s8
  %s11 = scalar_select 0, %s10, %s8
  loop: start=0, step=1, limit=4
  $region2: #{prooformer_forward.13} parent=0 // loop_pre_header
    _
  $region3: #{prooformer_forward.13} parent=0 // loop_header
    %s13 = sphi 0, %s17
    %p14 = scmp.ge.s32.totalorder %s13, 4
    %s23 = sphi 0, %s25
    %s26 = sphi 0, %s23
    %s27 = sphi 0, %s26
    %s43 = sphi 0, %s27
    %s47 = sphi 0, %s47
    %s49 = sphi 0, %s47
    %s50 = sphi 0, %s49
    %s64 = sphi 0, %s50
    %s68 = sphi 0, %s68
    %s70 = sphi 0, %s68
    %s71 = sphi 0, %s70
    %s85 = sphi 0, %s71
    %s89 = sphi 0, %s89
    %s91 = sphi 0, %s89
    %s92 = sphi 0, %s91
    %s106 = sphi 0, %s92
    %s110 = sphi 0, %s110
    %s112 = sphi 0, %s110
    %s113 = sphi 0, %s112
    %s127 = sphi 0, %s113
    %s131 = sphi 0, %s131
    %s133 = sphi 0, %s131
    %s134 = sphi 0, %s133
    %s148 = sphi 0, %s134
    %s152 = sphi 0, %s152
    %s154 = sphi 0, %s152
    %s155 = sphi 0, %s154
    %s169 = sphi 0, %s155
    %s175 = sphi 0, %s177
    %s178 = sphi 0, %s175
    %s179 = sphi 0, %s178
    %s195 = sphi 0, %s179
  $region4: #{prooformer_forward.13} parent=0 // loop_header_branch
    %16 = sbr.rel (%p14) target = $region8
  $region5: #{prooformer_forward.13} parent=0 // loop_body
    %s18 = ssub.s32 %s13, 1
    %s19 = ssub.s32 %s13, 2
    %s20 = sadd.s32 %s13, 1
    %s21 = ssub.s32 %s13, %s20
    %p22 = scmp.eq.s32.totalorder %s21, 0
    %s24 = sadd.s32 %s23, 1
    %s25 = scalar_select %p22, %s23, %s24
    %p28 = pneg %p22
    %p29 = scmp.eq.s32.totalorder %s13, 1
    %p30 = por %p28, %p29
    %p31 = scmp.ne.s32.totalorder %s23, %s26
    %p32 = scmp.eq.s32.totalorder %s13, 0
    %p33 = por %p31, %p32
    %p34 = scmp.ne.s32.totalorder %s23, %s26
    %p35 = scmp.eq.s32.totalorder %s18, 1
    %p36 = por %p34, %p35
    %p37 = scmp.ne.s32.totalorder %s26, %s27
    %p38 = scmp.eq.s32.totalorder %s18, 0
    %p39 = por %p37, %p38
    %p40 = scmp.ne.s32.totalorder %s26, %s27
    %p41 = scmp.eq.s32.totalorder %s19, 1
    %p42 = por %p40, %p41
    %p44 = scmp.ne.s32.totalorder %s27, %s43
    %p45 = scmp.eq.s32.totalorder %s19, 0
    %p46 = por %p44, %p45
    %s48 = sadd.s32 %s47, 1
    %p51 = scmp.eq.s32.totalorder %s13, 1
    %p52 = scmp.ne.s32.totalorder %s47, %s49
    %p53 = scmp.eq.s32.totalorder %s13, 0
    %p54 = por %p52, %p53
    %p55 = scmp.ne.s32.totalorder %s47, %s49
    %p56 = scmp.eq.s32.totalorder %s18, 1
    %p57 = por %p55, %p56
    %p58 = scmp.ne.s32.totalorder %s49, %s50
    %p59 = scmp.eq.s32.totalorder %s18, 0
    %p60 = por %p58, %p59
    %p61 = scmp.ne.s32.totalorder %s49, %s50
    %p62 = scmp.eq.s32.totalorder %s19, 1
    %p63 = por %p61, %p62
    %p65 = scmp.ne.s32.totalorder %s50, %s64
    %p66 = scmp.eq.s32.totalorder %s19, 0
    %p67 = por %p65, %p66
    %s69 = sadd.s32 %s68, 1
    %p72 = scmp.eq.s32.totalorder %s13, 1
    %p73 = scmp.ne.s32.totalorder %s68, %s70
    %p74 = scmp.eq.s32.totalorder %s13, 0
    %p75 = por %p73, %p74
    %p76 = scmp.ne.s32.totalorder %s68, %s70
    %p77 = scmp.eq.s32.totalorder %s18, 1
    %p78 = por %p76, %p77
    %p79 = scmp.ne.s32.totalorder %s70, %s71
    %p80 = scmp.eq.s32.totalorder %s18, 0
    %p81 = por %p79, %p80
    %p82 = scmp.ne.s32.totalorder %s70, %s71
    %p83 = scmp.eq.s32.totalorder %s19, 1
    %p84 = por %p82, %p83
    %p86 = scmp.ne.s32.totalorder %s71, %s85
    %p87 = scmp.eq.s32.totalorder %s19, 0
    %p88 = por %p86, %p87
    %s90 = sadd.s32 %s89, 1
    %p93 = scmp.eq.s32.totalorder %s13, 1
    %p94 = scmp.ne.s32.totalorder %s89, %s91
    %p95 = scmp.eq.s32.totalorder %s13, 0
    %p96 = por %p94, %p95
    %p97 = scmp.ne.s32.totalorder %s89, %s91
    %p98 = scmp.eq.s32.totalorder %s18, 1
    %p99 = por %p97, %p98
    %p100 = scmp.ne.s32.totalorder %s91, %s92
    %p101 = scmp.eq.s32.totalorder %s18, 0
    %p102 = por %p100, %p101
    %p103 = scmp.ne.s32.totalorder %s91, %s92
    %p104 = scmp.eq.s32.totalorder %s19, 1
    %p105 = por %p103, %p104
    %p107 = scmp.ne.s32.totalorder %s92, %s106
    %p108 = scmp.eq.s32.totalorder %s19, 0
    %p109 = por %p107, %p108
    %s111 = sadd.s32 %s110, 1
    %p114 = scmp.eq.s32.totalorder %s13, 1
    %p115 = scmp.ne.s32.totalorder %s110, %s112
    %p116 = scmp.eq.s32.totalorder %s13, 0
    %p117 = por %p115, %p116
    %p118 = scmp.ne.s32.totalorder %s110, %s112
    %p119 = scmp.eq.s32.totalorder %s18, 1
    %p120 = por %p118, %p119
    %p121 = scmp.ne.s32.totalorder %s112, %s113
    %p122 = scmp.eq.s32.totalorder %s18, 0
    %p123 = por %p121, %p122
    %p124 = scmp.ne.s32.totalorder %s112, %s113
    %p125 = scmp.eq.s32.totalorder %s19, 1
    %p126 = por %p124, %p125
    %p128 = scmp.ne.s32.totalorder %s113, %s127
    %p129 = scmp.eq.s32.totalorder %s19, 0
    %p130 = por %p128, %p129
    %s132 = sadd.s32 %s131, 1
    %p135 = scmp.eq.s32.totalorder %s13, 1
    %p136 = scmp.ne.s32.totalorder %s131, %s133
    %p137 = scmp.eq.s32.totalorder %s13, 0
    %p138 = por %p136, %p137
    %p139 = scmp.ne.s32.totalorder %s131, %s133
    %p140 = scmp.eq.s32.totalorder %s18, 1
    %p141 = por %p139, %p140
    %p142 = scmp.ne.s32.totalorder %s133, %s134
    %p143 = scmp.eq.s32.totalorder %s18, 0
    %p144 = por %p142, %p143
    %p145 = scmp.ne.s32.totalorder %s133, %s134
    %p146 = scmp.eq.s32.totalorder %s19, 1
    %p147 = por %p145, %p146
    %p149 = scmp.ne.s32.totalorder %s134, %s148
    %p150 = scmp.eq.s32.totalorder %s19, 0
    %p151 = por %p149, %p150
    %s153 = sadd.s32 %s152, 1
    %p156 = scmp.eq.s32.totalorder %s13, 1
    %p157 = scmp.ne.s32.totalorder %s152, %s154
    %p158 = scmp.eq.s32.totalorder %s13, 0
    %p159 = por %p157, %p158
    %p160 = scmp.ne.s32.totalorder %s152, %s154
    %p161 = scmp.eq.s32.totalorder %s18, 1
    %p162 = por %p160, %p161
    %p163 = scmp.ne.s32.totalorder %s154, %s155
    %p164 = scmp.eq.s32.totalorder %s18, 0
    %p165 = por %p163, %p164
    %p166 = scmp.ne.s32.totalorder %s154, %s155
    %p167 = scmp.eq.s32.totalorder %s19, 1
    %p168 = por %p166, %p167
    %p170 = scmp.ne.s32.totalorder %s155, %s169
    %p171 = scmp.eq.s32.totalorder %s19, 0
    %p172 = por %p170, %p171
    %s173 = ssub.s32 %s13, %s20
    %p174 = scmp.eq.s32.totalorder %s173, 0
    %s176 = sadd.s32 %s175, 1
    %s177 = scalar_select %p174, %s175, %s176
    %p180 = pneg %p174
    %p181 = scmp.eq.s32.totalorder %s13, 1
    %p182 = por %p180, %p181
    %p183 = scmp.ne.s32.totalorder %s175, %s178
    %p184 = scmp.eq.s32.totalorder %s13, 0
    %p185 = por %p183, %p184
    %p186 = scmp.ne.s32.totalorder %s175, %s178
    %p187 = scmp.eq.s32.totalorder %s18, 1
    %p188 = por %p186, %p187
    %p189 = scmp.ne.s32.totalorder %s178, %s179
    %p190 = scmp.eq.s32.totalorder %s18, 0
    %p191 = por %p189, %p190
    %p192 = scmp.ne.s32.totalorder %s178, %s179
    %p193 = scmp.eq.s32.totalorder %s19, 1
    %p194 = por %p192, %p193
    %p196 = scmp.ne.s32.totalorder %s179, %s195
    %p197 = scmp.eq.s32.totalorder %s19, 0
    %p198 = por %p196, %p197
    %p199 = scmp.le.s32.totalorder 1, %s13
    %p200 = scmp.lt.s32.totalorder %s13, 3
    %p201 = pnand %p199, %p200
    %p202 = pneg %p201
    // Predicated region
    $region9: #{prooformer_forward.13} parent=5 // pred_check
      _
    $region10: #{prooformer_forward.13} parent=5 // pred_check_branch
      %204 = sbr.rel (%p201) target = $region12
    $region11: #{prooformer_forward.13} parent=5 // pred_region
      %s205 = ssub.s32 %s13, 1
      // Predicated region
      $region13: #{prooformer_forward.13} parent=11 // pred_check
        %p206 = pneg %p60
      $region14: #{prooformer_forward.13} parent=11 // pred_check_branch
        %208 = sbr.rel (%p206) target = $region16
      $region15: #{prooformer_forward.13} parent=11 // pred_region
        _
      $region16: #{prooformer_forward.13} parent=11 // pred_fallthru
        _
      // Predicated region
      $region17: #{prooformer_forward.13} parent=11 // pred_check
        %p209 = pneg %p81
      $region18: #{prooformer_forward.13} parent=11 // pred_check_branch
        %211 = sbr.rel (%p209) target = $region20
      $region19: #{prooformer_forward.13} parent=11 // pred_region
        _
      $region20: #{prooformer_forward.13} parent=11 // pred_fallthru
        _
      // Predicated region
      $region21: #{prooformer_forward.13} parent=11 // pred_check
        %p212 = pneg %p102
      $region22: #{prooformer_forward.13} parent=11 // pred_check_branch
        %214 = sbr.rel (%p212) target = $region24
      $region23: #{prooformer_forward.13} parent=11 // pred_region
        _
      $region24: #{prooformer_forward.13} parent=11 // pred_fallthru
        _
      // Predicated region
      $region25: #{prooformer_forward.13} parent=11 // pred_check
        %p215 = pneg %p123
      $region26: #{prooformer_forward.13} parent=11 // pred_check_branch
        %217 = sbr.rel (%p215) target = $region28
      $region27: #{prooformer_forward.13} parent=11 // pred_region
        _
      $region28: #{prooformer_forward.13} parent=11 // pred_fallthru
        _
      // Predicated region
      $region29: #{prooformer_forward.13} parent=11 // pred_check
        %p218 = pneg %p144
      $region30: #{prooformer_forward.13} parent=11 // pred_check_branch
        %220 = sbr.rel (%p218) target = $region32
      $region31: #{prooformer_forward.13} parent=11 // pred_region
        _
      $region32: #{prooformer_forward.13} parent=11 // pred_fallthru
        _
      // Predicated region
      $region33: #{prooformer_forward.13} parent=11 // pred_check
        %p221 = pneg %p165
      $region34: #{prooformer_forward.13} parent=11 // pred_check_branch
        %223 = sbr.rel (%p221) target = $region36
      $region35: #{prooformer_forward.13} parent=11 // pred_region
        _
      $region36: #{prooformer_forward.13} parent=11 // pred_fallthru
        _
    $region12: #{prooformer_forward.13} parent=5 // pred_fallthru
      _
    %p224 = scmp.lt.s32.totalorder %s13, 2
    // Predicated region
    $region37: #{prooformer_forward.13} parent=5 // pred_check
      %p225 = pneg %p224
    $region38: #{prooformer_forward.13} parent=5 // pred_check_branch
      %227 = sbr.rel (%p225) target = $region40
    $region39: #{prooformer_forward.13} parent=5 // pred_region
      // Predicated region
      $region41: #{prooformer_forward.13} parent=39 // pred_check
        %p228 = pneg %p33
      $region42: #{prooformer_forward.13} parent=39 // pred_check_branch
        %230 = sbr.rel (%p228) target = $region44
      $region43: #{prooformer_forward.13} parent=39 // pred_region
        %p231 = scmp.lt.s32.totalorder %s13, 1
        %s232 = scalar_select %p231, %s13, 1
        %s233 = smul.addr %s232, 4
        %s234 = scalar_lea.vmem %s0, %s233
      $region44: #{prooformer_forward.13} parent=39 // pred_fallthru
        _
    $region40: #{prooformer_forward.13} parent=5 // pred_fallthru
      _
    %p235 = scmp.le.s32.totalorder 1, %s13
    %p236 = scmp.lt.s32.totalorder %s13, 3
    %p237 = pnand %p235, %p236
    %p238 = pneg %p237
    // Predicated region
    $region45: #{prooformer_forward.13} parent=5 // pred_check
      _
    $region46: #{prooformer_forward.13} parent=5 // pred_check_branch
      %240 = sbr.rel (%p237) target = $region48
    $region47: #{prooformer_forward.13} parent=5 // pred_region
      %s241 = ssub.s32 %s13, 1
      %p242 = scmp.lt.s32.totalorder %s18, 1
      %s243 = scalar_select %p242, %s18, 1
      %s244 = smul.addr %s243, 4
      %s245 = scalar_lea.vmem %s0, %s244
      %p246 = pneg %p39
      %p247 = pneg %p36
      %p248 = pneg %p60
      %p249 = pneg %p57
      %p250 = pneg %p81
      %p251 = pneg %p78
      %p252 = pneg %p102
      %p253 = pneg %p99
      %p254 = pneg %p123
      %p255 = pneg %p120
      %p256 = pneg %p144
      %p257 = pneg %p141
      %p258 = pneg %p165
      %p259 = pneg %p162
      %p260 = pneg %p191
      %p261 = pneg %p188
      %p262 = scmp.lt.s32.totalorder %s18, 1
      %s263 = scalar_select %p262, %s18, 1
      %s264 = smul.addr %s263, 4
      %s265 = scalar_lea.vmem %s7, %s264
      %p266 = scmp.lt.s32.totalorder %s18, 1
      %s267 = scalar_select %p266, %s18, 1
      %s268 = smul.addr %s267, 4
      %s269 = scalar_lea.vmem %s0, %s268
      %p270 = scmp.lt.s32.totalorder %s18, 1
      %s271 = scalar_select %p270, %s18, 1
      %s272 = smul.addr %s271, 4
      %s273 = scalar_lea.vmem %s7, %s272
      %v275 = vld [vmem:[%s269] sm:$0xf]
      %v276 = vld [vmem:[%s1] sm:$0xf]
      %v277 = vld [vmem:[%s1 + $0x4] sm:$0xf]
      %v278 = vld [vmem:[%s1 + $0x8] sm:$0xf]
      %v279 = vld [vmem:[%s1 + $0xc] sm:$0xf]
      %v280 = vld [vmem:[%s2] sm:$0x1]
      %v282 = vlaneseq
      %v283 = vshrl.u32 %v282, 7
      %v284 = vsub.s32 0, %v283
      %v285 = vrot.slane %v280, %v284
      %v291 = vunpack.c.l.b16 %v276
      %v292 = vunpack.c.l.b16 %v277
      %v293 = vunpack.c.l.b16 %v278
      %v294 = vunpack.c.l.b16 %v279
      %v295 = vpack.c.b16 %v292, %v291
      %v296 = vpack.c.b16 %v294, %v293
      %vm299 = vcmask 261120
      %v301 = vsel %vm299, %v275, 0
      %303 = vmatprep.subr.bf16.mxu0 0
      %304 = vmatpush1.bf16.msra.mxu0 0
      %305 = vmatprep.subr.bf16.mxu0 0
      %306 = vmatpush1.bf16.msra.mxu0 0
      %307 = vmatprep.subr.bf16.mxu0 0
      %308 = vmatpush1.bf16.msra.mxu0 0
      %309 = vmatprep.subr.bf16.mxu0 0
      %310 = vmatpush1.bf16.msra.mxu0 0
      %311 = vmatprep.subr.bf16.mxu0 0
      %312 = vmatpush1.bf16.msra.mxu0 0
      %313 = vmatprep.subr.bf16.mxu0 0
      %314 = vmatpush1.bf16.msra.mxu0 0
      %315 = vmatprep.subr.bf16.mxu0 0
      %316 = vmatpush1.bf16.msra.mxu0 %v296
      %317 = vmatprep.subr.bf16.mxu0 0
      %318 = vmatpush1.bf16.msra.mxu0 %v295
      %319 = vmatprep.subr.bf16.mxu0 0
      %320 = vmatpush2.bf16.msra.mxu0 0
      %321 = vmatprep.subr.bf16.mxu0 0
      %322 = vmatpush2.bf16.msra.mxu0 0
      %323 = vmatprep.subr.bf16.mxu0 0
      %324 = vmatpush2.bf16.msra.mxu0 0
      %325 = vmatprep.subr.bf16.mxu0 0
      %326 = vmatpush2.bf16.msra.mxu0 0
      %327 = vmatprep.subr.bf16.mxu0 0
      %328 = vmatpush2.bf16.msra.mxu0 0
      %329 = vmatprep.subr.bf16.mxu0 0
      %330 = vmatpush2.bf16.msra.mxu0 0
      %331 = vmatprep.subr.bf16.mxu0 0
      %332 = vmatpush2.bf16.msra.mxu0 0
      %333 = vmatprep.subr.bf16.mxu0 0
      %334 = vmatpush2.bf16.msra.mxu0 0
      %335 = vmatprep.mubr.bf16.mxu0 0
      %336 = vmatmul.mubr.bf16.gmra.mxu0 %v301
      %v337 = vpop.f32.mrf.mxu0
      %v338 = vadd.f32 %v285, %v337
      %v339 = vpop.f32.mrf.mxu0
      %v340 = vpop.f32.mrf.mxu0
      %v341 = vpop.f32.mrf.mxu0
      %342 = vdwg.mxu0
      %344 = vrot.lane.b32.xlu0 %v338, 124
      %v345 = vpop.permute.xlu0 %344
      %347 = vrot.lane.b32.xlu0 %v338, 120
      %v348 = vpop.permute.xlu0 %347
      %350 = vrot.lane.b32.xlu0 %v338, 116
      %v351 = vpop.permute.xlu0 %350
      %353 = vrot.lane.b32.xlu0 %v338, 112
      %v354 = vpop.permute.xlu0 %353
      %356 = vrot.lane.b32.xlu0 %v338, 108
      %v357 = vpop.permute.xlu0 %356
      %359 = vrot.lane.b32.xlu0 %v338, 104
      %v360 = vpop.permute.xlu0 %359
      %362 = vrot.lane.b32.xlu0 %v338, 100
      %v363 = vpop.permute.xlu0 %362
      %v365 = vcombine.low %v338, %v348
      %v366 = vcombine.high %v338, %v348
      %v368 = vunpack.c.l.s4 1983009808
      %v369 = vunpack.c.0.s8 %v368
      %v370 = vlaneseq
      %v371 = vshrl.u32 %v370, 7
      %v372 = vsub.s32 %v369, %v371
      %v373 = vrot.slane %v365, %v372
      %v375 = vunpack.c.l.s4 1983009808
      %v376 = vunpack.c.0.s8 %v375
      %v377 = vlaneseq
      %v378 = vshrl.u32 %v377, 7
      %v379 = vsub.s32 %v376, %v378
      %v380 = vrot.slane %v366, %v379
      %v381 = vcombine.low %v345, %v351
      %v382 = vcombine.high %v345, %v351
      %v384 = vunpack.c.l.s4 1983009808
      %v385 = vunpack.c.0.s8 %v384
      %v386 = vlaneseq
      %v387 = vshrl.u32 %v386, 7
      %v388 = vsub.s32 %v385, %v387
      %v389 = vrot.slane %v381, %v388
      %v391 = vunpack.c.l.s4 1983009808
      %v392 = vunpack.c.0.s8 %v391
      %v393 = vlaneseq
      %v394 = vshrl.u32 %v393, 7
      %v395 = vsub.s32 %v392, %v394
      %v396 = vrot.slane %v382, %v395
      %v397 = vcombine.low %v354, %v360
      %v398 = vcombine.high %v354, %v360
      %v400 = vunpack.c.l.s4 1983009808
      %v401 = vunpack.c.0.s8 %v400
      %v402 = vlaneseq
      %v403 = vshrl.u32 %v402, 7
      %v404 = vsub.s32 %v401, %v403
      %v405 = vrot.slane %v397, %v404
      %v407 = vunpack.c.l.s4 1983009808
      %v408 = vunpack.c.0.s8 %v407
      %v409 = vlaneseq
      %v410 = vshrl.u32 %v409, 7
      %v411 = vsub.s32 %v408, %v410
      %v412 = vrot.slane %v398, %v411
      %v413 = vcombine.low %v357, %v363
      %v414 = vcombine.high %v357, %v363
      %v416 = vunpack.c.l.s4 1983009808
      %v417 = vunpack.c.0.s8 %v416
      %v418 = vlaneseq
      %v419 = vshrl.u32 %v418, 7
      %v420 = vsub.s32 %v417, %v419
      %v421 = vrot.slane %v413, %v420
      %v423 = vunpack.c.l.s4 1983009808
      %v424 = vunpack.c.0.s8 %v423
      %v425 = vlaneseq
      %v426 = vshrl.u32 %v425, 7
      %v427 = vsub.s32 %v424, %v426
      %v428 = vrot.slane %v414, %v427
      %v429 = vcombine.low %v373, %v389
      %v430 = vcombine.high %v373, %v389
      %v432 = vunpack.c.l.s4 1934713408
      %v433 = vunpack.c.0.s8 %v432
      %v434 = vlaneseq
      %v435 = vshrl.u32 %v434, 7
      %v436 = vsub.s32 %v433, %v435
      %v437 = vrot.slane %v429, %v436
      %v439 = vunpack.c.l.s4 1934713408
      %v440 = vunpack.c.0.s8 %v439
      %v441 = vlaneseq
      %v442 = vshrl.u32 %v441, 7
      %v443 = vsub.s32 %v440, %v442
      %v444 = vrot.slane %v430, %v443
      %v445 = vcombine.low %v380, %v396
      %v446 = vcombine.high %v380, %v396
      %v448 = vunpack.c.l.s4 1934713408
      %v449 = vunpack.c.0.s8 %v448
      %v450 = vlaneseq
      %v451 = vshrl.u32 %v450, 7
      %v452 = vsub.s32 %v449, %v451
      %v453 = vrot.slane %v445, %v452
      %v455 = vunpack.c.l.s4 1934713408
      %v456 = vunpack.c.0.s8 %v455
      %v457 = vlaneseq
      %v458 = vshrl.u32 %v457, 7
      %v459 = vsub.s32 %v456, %v458
      %v460 = vrot.slane %v446, %v459
      %v461 = vcombine.low %v405, %v421
      %v462 = vcombine.high %v405, %v421
      %v464 = vunpack.c.l.s4 1934713408
      %v465 = vunpack.c.0.s8 %v464
      %v466 = vlaneseq
      %v467 = vshrl.u32 %v466, 7
      %v468 = vsub.s32 %v465, %v467
      %v469 = vrot.slane %v461, %v468
      %v471 = vunpack.c.l.s4 1934713408
      %v472 = vunpack.c.0.s8 %v471
      %v473 = vlaneseq
      %v474 = vshrl.u32 %v473, 7
      %v475 = vsub.s32 %v472, %v474
      %v476 = vrot.slane %v462, %v475
      %v477 = vcombine.low %v412, %v428
      %v478 = vcombine.high %v412, %v428
      %v480 = vunpack.c.l.s4 1934713408
      %v481 = vunpack.c.0.s8 %v480
      %v482 = vlaneseq
      %v483 = vshrl.u32 %v482, 7
      %v484 = vsub.s32 %v481, %v483
      %v485 = vrot.slane %v477, %v484
      %v487 = vunpack.c.l.s4 1934713408
      %v488 = vunpack.c.0.s8 %v487
      %v489 = vlaneseq
      %v490 = vshrl.u32 %v489, 7
      %v491 = vsub.s32 %v488, %v490
      %v492 = vrot.slane %v478, %v491
      %v493 = vcombine.low %v437, %v469
      %v494 = vcombine.high %v437, %v469
      %v495 = vcombine.low %v444, %v476
      %v496 = vcombine.high %v444, %v476
      %v497 = vcombine.low %v453, %v485
      %v498 = vcombine.high %v453, %v485
      %v499 = vcombine.low %v460, %v492
      %v500 = vcombine.high %v460, %v492
      %v501 = vcombine.low %v493, %v495
      %v502 = vcombine.high %v493, %v495
      %v504 = vunpack.c.l.s4 1983009808
      %v505 = vunpack.c.0.s8 %v504
      %v506 = vlaneseq
      %v507 = vshrl.u32 %v506, 7
      %v508 = vsub.s32 %v505, %v507
      %v509 = vrot.slane %v501, %v508
      %v511 = vunpack.c.l.s4 1983009808
      %v512 = vunpack.c.0.s8 %v511
      %v513 = vlaneseq
      %v514 = vshrl.u32 %v513, 7
      %v515 = vsub.s32 %v512, %v514
      %v516 = vrot.slane %v502, %v515
      %v517 = vcombine.low %v494, %v496
      %v518 = vcombine.high %v494, %v496
      %v520 = vunpack.c.l.s4 1983009808
      %v521 = vunpack.c.0.s8 %v520
      %v522 = vlaneseq
      %v523 = vshrl.u32 %v522, 7
      %v524 = vsub.s32 %v521, %v523
      %v525 = vrot.slane %v517, %v524
      %v527 = vunpack.c.l.s4 1983009808
      %v528 = vunpack.c.0.s8 %v527
      %v529 = vlaneseq
      %v530 = vshrl.u32 %v529, 7
      %v531 = vsub.s32 %v528, %v530
      %v532 = vrot.slane %v518, %v531
      %v533 = vcombine.low %v497, %v499
      %v534 = vcombine.high %v497, %v499
      %v536 = vunpack.c.l.s4 1983009808
      %v537 = vunpack.c.0.s8 %v536
      %v538 = vlaneseq
      %v539 = vshrl.u32 %v538, 7
      %v540 = vsub.s32 %v537, %v539
      %v541 = vrot.slane %v533, %v540
      %v543 = vunpack.c.l.s4 1983009808
      %v544 = vunpack.c.0.s8 %v543
      %v545 = vlaneseq
      %v546 = vshrl.u32 %v545, 7
      %v547 = vsub.s32 %v544, %v546
      %v548 = vrot.slane %v534, %v547
      %v549 = vcombine.low %v498, %v500
      %v550 = vcombine.high %v498, %v500
      %v552 = vunpack.c.l.s4 1983009808
      %v553 = vunpack.c.0.s8 %v552
      %v554 = vlaneseq
      %v555 = vshrl.u32 %v554, 7
      %v556 = vsub.s32 %v553, %v555
      %v557 = vrot.slane %v549, %v556
      %v559 = vunpack.c.l.s4 1983009808
      %v560 = vunpack.c.0.s8 %v559
      %v561 = vlaneseq
      %v562 = vshrl.u32 %v561, 7
      %v563 = vsub.s32 %v560, %v562
      %v564 = vrot.slane %v550, %v563
      %v565 = vcombine.low %v509, %v525
      %v566 = vcombine.high %v509, %v525
      %v568 = vunpack.c.l.s4 1934713408
      %v569 = vunpack.c.0.s8 %v568
      %v570 = vlaneseq
      %v571 = vshrl.u32 %v570, 7
      %v572 = vsub.s32 %v569, %v571
      %v573 = vrot.slane %v565, %v572
      %v575 = vunpack.c.l.s4 1934713408
      %v576 = vunpack.c.0.s8 %v575
      %v577 = vlaneseq
      %v578 = vshrl.u32 %v577, 7
      %v579 = vsub.s32 %v576, %v578
      %v580 = vrot.slane %v566, %v579
      %v581 = vcombine.low %v516, %v532
      %v582 = vcombine.high %v516, %v532
      %v584 = vunpack.c.l.s4 1934713408
      %v585 = vunpack.c.0.s8 %v584
      %v586 = vlaneseq
      %v587 = vshrl.u32 %v586, 7
      %v588 = vsub.s32 %v585, %v587
      %v589 = vrot.slane %v581, %v588
      %v591 = vunpack.c.l.s4 1934713408
      %v592 = vunpack.c.0.s8 %v591
      %v593 = vlaneseq
      %v594 = vshrl.u32 %v593, 7
      %v595 = vsub.s32 %v592, %v594
      %v596 = vrot.slane %v582, %v595
      %v597 = vcombine.low %v541, %v557
      %v598 = vcombine.high %v541, %v557
      %v600 = vunpack.c.l.s4 1934713408
      %v601 = vunpack.c.0.s8 %v600
      %v602 = vlaneseq
      %v603 = vshrl.u32 %v602, 7
      %v604 = vsub.s32 %v601, %v603
      %v605 = vrot.slane %v597, %v604
      %v607 = vunpack.c.l.s4 1934713408
      %v608 = vunpack.c.0.s8 %v607
      %v609 = vlaneseq
      %v610 = vshrl.u32 %v609, 7
      %v611 = vsub.s32 %v608, %v610
      %v612 = vrot.slane %v598, %v611
      %v613 = vcombine.low %v548, %v564
      %v614 = vcombine.high %v548, %v564
      %v616 = vunpack.c.l.s4 1934713408
      %v617 = vunpack.c.0.s8 %v616
      %v618 = vlaneseq
      %v619 = vshrl.u32 %v618, 7
      %v620 = vsub.s32 %v617, %v619
      %v621 = vrot.slane %v613, %v620
      %v623 = vunpack.c.l.s4 1934713408
      %v624 = vunpack.c.0.s8 %v623
      %v625 = vlaneseq
      %v626 = vshrl.u32 %v625, 7
      %v627 = vsub.s32 %v624, %v626
      %v628 = vrot.slane %v614, %v627
      %v629 = vcombine.low %v573, %v605
      %v630 = vcombine.high %v573, %v605
      %v631 = vcombine.low %v580, %v612
      %v632 = vcombine.high %v580, %v612
      %v633 = vcombine.low %v589, %v621
      %v634 = vcombine.high %v589, %v621
      %v635 = vcombine.low %v596, %v628
      %v636 = vcombine.high %v596, %v628
      %v637 = vpack.c.bf16 %v629, %v629
      %v638 = vpack.c.bf16 %v630, %v630
      %v639 = vpack.c.bf16 %v631, %v631
      %v640 = vpack.c.bf16 %v632, %v632
      %v641 = vpack.c.bf16 %v633, %v633
      %v642 = vpack.c.bf16 %v634, %v634
      %v643 = vpack.c.bf16 %v635, %v635
      %v644 = vpack.c.bf16 %v636, %v636
      %645 = vrot.lane.b32.xlu0 %v338, 96
      %v646 = vpop.permute.xlu0 %645
      %647 = vrot.lane.b32.xlu0 %v345, 96
      %v648 = vpop.permute.xlu0 %647
      %649 = vrot.lane.b32.xlu0 %v348, 96
      %v650 = vpop.permute.xlu0 %649
      %651 = vrot.lane.b32.xlu0 %v351, 96
      %v652 = vpop.permute.xlu0 %651
      %653 = vrot.lane.b32.xlu0 %v354, 96
      %v654 = vpop.permute.xlu0 %653
      %655 = vrot.lane.b32.xlu0 %v357, 96
      %v656 = vpop.permute.xlu0 %655
      %657 = vrot.lane.b32.xlu0 %v360, 96
      %v658 = vpop.permute.xlu0 %657
      %659 = vrot.lane.b32.xlu0 %v363, 96
      %v660 = vpop.permute.xlu0 %659
      %v669 = vcombine.low %v646, %v650
      %v670 = vcombine.high %v646, %v650
      %v672 = vunpack.c.l.s4 1983009808
      %v673 = vunpack.c.0.s8 %v672
      %v674 = vlaneseq
      %v675 = vshrl.u32 %v674, 7
      %v676 = vsub.s32 %v673, %v675
      %v677 = vrot.slane %v669, %v676
      %v679 = vunpack.c.l.s4 1983009808
      %v680 = vunpack.c.0.s8 %v679
      %v681 = vlaneseq
      %v682 = vshrl.u32 %v681, 7
      %v683 = vsub.s32 %v680, %v682
      %v684 = vrot.slane %v670, %v683
      %v685 = vcombine.low %v648, %v652
      %v686 = vcombine.high %v648, %v652
      %v688 = vunpack.c.l.s4 1983009808
      %v689 = vunpack.c.0.s8 %v688
      %v690 = vlaneseq
      %v691 = vshrl.u32 %v690, 7
      %v692 = vsub.s32 %v689, %v691
      %v693 = vrot.slane %v685, %v692
      %v695 = vunpack.c.l.s4 1983009808
      %v696 = vunpack.c.0.s8 %v695
      %v697 = vlaneseq
      %v698 = vshrl.u32 %v697, 7
      %v699 = vsub.s32 %v696, %v698
      %v700 = vrot.slane %v686, %v699
      %v701 = vcombine.low %v654, %v658
      %v702 = vcombine.high %v654, %v658
      %v704 = vunpack.c.l.s4 1983009808
      %v705 = vunpack.c.0.s8 %v704
      %v706 = vlaneseq
      %v707 = vshrl.u32 %v706, 7
      %v708 = vsub.s32 %v705, %v707
      %v709 = vrot.slane %v701, %v708
      %v711 = vunpack.c.l.s4 1983009808
      %v712 = vunpack.c.0.s8 %v711
      %v713 = vlaneseq
      %v714 = vshrl.u32 %v713, 7
      %v715 = vsub.s32 %v712, %v714
      %v716 = vrot.slane %v702, %v715
      %v717 = vcombine.low %v656, %v660
      %v718 = vcombine.high %v656, %v660
      %v720 = vunpack.c.l.s4 1983009808
      %v721 = vunpack.c.0.s8 %v720
      %v722 = vlaneseq
      %v723 = vshrl.u32 %v722, 7
      %v724 = vsub.s32 %v721, %v723
      %v725 = vrot.slane %v717, %v724
      %v727 = vunpack.c.l.s4 1983009808
      %v728 = vunpack.c.0.s8 %v727
      %v729 = vlaneseq
      %v730 = vshrl.u32 %v729, 7
      %v731 = vsub.s32 %v728, %v730
      %v732 = vrot.slane %v718, %v731
      %v733 = vcombine.low %v677, %v693
      %v734 = vcombine.high %v677, %v693
      %v736 = vunpack.c.l.s4 1934713408
      %v737 = vunpack.c.0.s8 %v736
      %v738 = vlaneseq
      %v739 = vshrl.u32 %v738, 7
      %v740 = vsub.s32 %v737, %v739
      %v741 = vrot.slane %v733, %v740
      %v743 = vunpack.c.l.s4 1934713408
      %v744 = vunpack.c.0.s8 %v743
      %v745 = vlaneseq
      %v746 = vshrl.u32 %v745, 7
      %v747 = vsub.s32 %v744, %v746
      %v748 = vrot.slane %v734, %v747
      %v749 = vcombine.low %v684, %v700
      %v750 = vcombine.high %v684, %v700
      %v752 = vunpack.c.l.s4 1934713408
      %v753 = vunpack.c.0.s8 %v752
      %v754 = vlaneseq
      %v755 = vshrl.u32 %v754, 7
      %v756 = vsub.s32 %v753, %v755
      %v757 = vrot.slane %v749, %v756
      %v759 = vunpack.c.l.s4 1934713408
      %v760 = vunpack.c.0.s8 %v759
      %v761 = vlaneseq
      %v762 = vshrl.u32 %v761, 7
      %v763 = vsub.s32 %v760, %v762
      %v764 = vrot.slane %v750, %v763
      %v765 = vcombine.low %v709, %v725
      %v766 = vcombine.high %v709, %v725
      %v768 = vunpack.c.l.s4 1934713408
      %v769 = vunpack.c.0.s8 %v768
      %v770 = vlaneseq
      %v771 = vshrl.u32 %v770, 7
      %v772 = vsub.s32 %v769, %v771
      %v773 = vrot.slane %v765, %v772
      %v775 = vunpack.c.l.s4 1934713408
      %v776 = vunpack.c.0.s8 %v775
      %v777 = vlaneseq
      %v778 = vshrl.u32 %v777, 7
      %v779 = vsub.s32 %v776, %v778
      %v780 = vrot.slane %v766, %v779
      %v781 = vcombine.low %v716, %v732
      %v782 = vcombine.high %v716, %v732
      %v784 = vunpack.c.l.s4 1934713408
      %v785 = vunpack.c.0.s8 %v784
      %v786 = vlaneseq
      %v787 = vshrl.u32 %v786, 7
      %v788 = vsub.s32 %v785, %v787
      %v789 = vrot.slane %v781, %v788
      %v791 = vunpack.c.l.s4 1934713408
      %v792 = vunpack.c.0.s8 %v791
      %v793 = vlaneseq
      %v794 = vshrl.u32 %v793, 7
      %v795 = vsub.s32 %v792, %v794
      %v796 = vrot.slane %v782, %v795
      %v797 = vcombine.low %v741, %v773
      %v798 = vcombine.high %v741, %v773
      %v799 = vcombine.low %v748, %v780
      %v800 = vcombine.high %v748, %v780
      %v801 = vcombine.low %v757, %v789
      %v802 = vcombine.high %v757, %v789
      %v803 = vcombine.low %v764, %v796
      %v804 = vcombine.high %v764, %v796
      %v805 = vcombine.low %v797, %v799
      %v806 = vcombine.high %v797, %v799
      %v808 = vunpack.c.l.s4 1983009808
      %v809 = vunpack.c.0.s8 %v808
      %v810 = vlaneseq
      %v811 = vshrl.u32 %v810, 7
      %v812 = vsub.s32 %v809, %v811
      %v813 = vrot.slane %v805, %v812
      %v815 = vunpack.c.l.s4 1983009808
      %v816 = vunpack.c.0.s8 %v815
      %v817 = vlaneseq
      %v818 = vshrl.u32 %v817, 7
      %v819 = vsub.s32 %v816, %v818
      %v820 = vrot.slane %v806, %v819
      %v821 = vcombine.low %v798, %v800
      %v822 = vcombine.high %v798, %v800
      %v824 = vunpack.c.l.s4 1983009808
      %v825 = vunpack.c.0.s8 %v824
      %v826 = vlaneseq
      %v827 = vshrl.u32 %v826, 7
      %v828 = vsub.s32 %v825, %v827
      %v829 = vrot.slane %v821, %v828
      %v831 = vunpack.c.l.s4 1983009808
      %v832 = vunpack.c.0.s8 %v831
      %v833 = vlaneseq
      %v834 = vshrl.u32 %v833, 7
      %v835 = vsub.s32 %v832, %v834
      %v836 = vrot.slane %v822, %v835
      %v837 = vcombine.low %v801, %v803
      %v838 = vcombine.high %v801, %v803
      %v840 = vunpack.c.l.s4 1983009808
      %v841 = vunpack.c.0.s8 %v840
      %v842 = vlaneseq
      %v843 = vshrl.u32 %v842, 7
      %v844 = vsub.s32 %v841, %v843
      %v845 = vrot.slane %v837, %v844
      %v847 = vunpack.c.l.s4 1983009808
      %v848 = vunpack.c.0.s8 %v847
      %v849 = vlaneseq
      %v850 = vshrl.u32 %v849, 7
      %v851 = vsub.s32 %v848, %v850
      %v852 = vrot.slane %v838, %v851
      %v853 = vcombine.low %v802, %v804
      %v854 = vcombine.high %v802, %v804
      %v856 = vunpack.c.l.s4 1983009808
      %v857 = vunpack.c.0.s8 %v856
      %v858 = vlaneseq
      %v859 = vshrl.u32 %v858, 7
      %v860 = vsub.s32 %v857, %v859
      %v861 = vrot.slane %v853, %v860
      %v863 = vunpack.c.l.s4 1983009808
      %v864 = vunpack.c.0.s8 %v863
      %v865 = vlaneseq
      %v866 = vshrl.u32 %v865, 7
      %v867 = vsub.s32 %v864, %v866
      %v868 = vrot.slane %v854, %v867
      %v869 = vcombine.low %v813, %v829
      %v870 = vcombine.high %v813, %v829
      %v872 = vunpack.c.l.s4 1934713408
      %v873 = vunpack.c.0.s8 %v872
      %v874 = vlaneseq
      %v875 = vshrl.u32 %v874, 7
      %v876 = vsub.s32 %v873, %v875
      %v877 = vrot.slane %v869, %v876
      %v879 = vunpack.c.l.s4 1934713408
      %v880 = vunpack.c.0.s8 %v879
      %v881 = vlaneseq
      %v882 = vshrl.u32 %v881, 7
      %v883 = vsub.s32 %v880, %v882
      %v884 = vrot.slane %v870, %v883
      %v885 = vcombine.low %v820, %v836
      %v886 = vcombine.high %v820, %v836
      %v888 = vunpack.c.l.s4 1934713408
      %v889 = vunpack.c.0.s8 %v888
      %v890 = vlaneseq
      %v891 = vshrl.u32 %v890, 7
      %v892 = vsub.s32 %v889, %v891
      %v893 = vrot.slane %v885, %v892
      %v895 = vunpack.c.l.s4 1934713408
      %v896 = vunpack.c.0.s8 %v895
      %v897 = vlaneseq
      %v898 = vshrl.u32 %v897, 7
      %v899 = vsub.s32 %v896, %v898
      %v900 = vrot.slane %v886, %v899
      %v901 = vcombine.low %v845, %v861
      %v902 = vcombine.high %v845, %v861
      %v904 = vunpack.c.l.s4 1934713408
      %v905 = vunpack.c.0.s8 %v904
      %v906 = vlaneseq
      %v907 = vshrl.u32 %v906, 7
      %v908 = vsub.s32 %v905, %v907
      %v909 = vrot.slane %v901, %v908
      %v911 = vunpack.c.l.s4 1934713408
      %v912 = vunpack.c.0.s8 %v911
      %v913 = vlaneseq
      %v914 = vshrl.u32 %v913, 7
      %v915 = vsub.s32 %v912, %v914
      %v916 = vrot.slane %v902, %v915
      %v917 = vcombine.low %v852, %v868
      %v918 = vcombine.high %v852, %v868
      %v920 = vunpack.c.l.s4 1934713408
      %v921 = vunpack.c.0.s8 %v920
      %v922 = vlaneseq
      %v923 = vshrl.u32 %v922, 7
      %v924 = vsub.s32 %v921, %v923
      %v925 = vrot.slane %v917, %v924
      %v927 = vunpack.c.l.s4 1934713408
      %v928 = vunpack.c.0.s8 %v927
      %v929 = vlaneseq
      %v930 = vshrl.u32 %v929, 7
      %v931 = vsub.s32 %v928, %v930
      %v932 = vrot.slane %v918, %v931
      %v933 = vcombine.low %v877, %v909
      %v934 = vcombine.high %v877, %v909
      %v935 = vcombine.low %v884, %v916
      %v936 = vcombine.high %v884, %v916
      %v937 = vcombine.low %v893, %v925
      %v938 = vcombine.high %v893, %v925
      %v939 = vcombine.low %v900, %v932
      %v940 = vcombine.high %v900, %v932
      %v941 = vpack.c.bf16 %v933, %v933
      %v942 = vpack.c.bf16 %v934, %v934
      %v943 = vpack.c.bf16 %v935, %v935
      %v944 = vpack.c.bf16 %v936, %v936
      %v945 = vpack.c.bf16 %v937, %v937
      %v946 = vpack.c.bf16 %v938, %v938
      %v947 = vpack.c.bf16 %v939, %v939
      %v948 = vpack.c.bf16 %v940, %v940
      %949 = vrot.lane.b32.xlu0 %v338, 64
      %v950 = vpop.permute.xlu0 %949
      %951 = vrot.lane.b32.xlu0 %v345, 64
      %v952 = vpop.permute.xlu0 %951
      %953 = vrot.lane.b32.xlu0 %v348, 64
      %v954 = vpop.permute.xlu0 %953
      %955 = vrot.lane.b32.xlu0 %v351, 64
      %v956 = vpop.permute.xlu0 %955
      %957 = vrot.lane.b32.xlu0 %v354, 64
      %v958 = vpop.permute.xlu0 %957
      %959 = vrot.lane.b32.xlu0 %v357, 64
      %v960 = vpop.permute.xlu0 %959
      %961 = vrot.lane.b32.xlu0 %v360, 64
      %v962 = vpop.permute.xlu0 %961
      %963 = vrot.lane.b32.xlu0 %v363, 64
      %v964 = vpop.permute.xlu0 %963
      %v973 = vcombine.low %v950, %v954
      %v974 = vcombine.high %v950, %v954
      %v976 = vunpack.c.l.s4 1983009808
      %v977 = vunpack.c.0.s8 %v976
      %v978 = vlaneseq
      %v979 = vshrl.u32 %v978, 7
      %v980 = vsub.s32 %v977, %v979
      %v981 = vrot.slane %v973, %v980
      %v983 = vunpack.c.l.s4 1983009808
      %v984 = vunpack.c.0.s8 %v983
      %v985 = vlaneseq
      %v986 = vshrl.u32 %v985, 7
      %v987 = vsub.s32 %v984, %v986
      %v988 = vrot.slane %v974, %v987
      %v989 = vcombine.low %v952, %v956
      %v990 = vcombine.high %v952, %v956
      %v992 = vunpack.c.l.s4 1983009808
      %v993 = vunpack.c.0.s8 %v992
      %v994 = vlaneseq
      %v995 = vshrl.u32 %v994, 7
      %v996 = vsub.s32 %v993, %v995
      %v997 = vrot.slane %v989, %v996
      %v999 = vunpack.c.l.s4 1983009808
      %v1000 = vunpack.c.0.s8 %v999
      %v1001 = vlaneseq
      %v1002 = vshrl.u32 %v1001, 7
      %v1003 = vsub.s32 %v1000, %v1002
      %v1004 = vrot.slane %v990, %v1003
      %v1005 = vcombine.low %v958, %v962
      %v1006 = vcombine.high %v958, %v962
      %v1008 = vunpack.c.l.s4 1983009808
      %v1009 = vunpack.c.0.s8 %v1008
      %v1010 = vlaneseq
      %v1011 = vshrl.u32 %v1010, 7
      %v1012 = vsub.s32 %v1009, %v1011
      %v1013 = vrot.slane %v1005, %v1012
      %v1015 = vunpack.c.l.s4 1983009808
      %v1016 = vunpack.c.0.s8 %v1015
      %v1017 = vlaneseq
      %v1018 = vshrl.u32 %v1017, 7
      %v1019 = vsub.s32 %v1016, %v1018
      %v1020 = vrot.slane %v1006, %v1019
      %v1021 = vcombine.low %v960, %v964
      %v1022 = vcombine.high %v960, %v964
      %v1024 = vunpack.c.l.s4 1983009808
      %v1025 = vunpack.c.0.s8 %v1024
      %v1026 = vlaneseq
      %v1027 = vshrl.u32 %v1026, 7
      %v1028 = vsub.s32 %v1025, %v1027
      %v1029 = vrot.slane %v1021, %v1028
      %v1031 = vunpack.c.l.s4 1983009808
      %v1032 = vunpack.c.0.s8 %v1031
      %v1033 = vlaneseq
      %v1034 = vshrl.u32 %v1033, 7
      %v1035 = vsub.s32 %v1032, %v1034
      %v1036 = vrot.slane %v1022, %v1035
      %v1037 = vcombine.low %v981, %v997
      %v1038 = vcombine.high %v981, %v997
      %v1040 = vunpack.c.l.s4 1934713408
      %v1041 = vunpack.c.0.s8 %v1040
      %v1042 = vlaneseq
      %v1043 = vshrl.u32 %v1042, 7
      %v1044 = vsub.s32 %v1041, %v1043
      %v1045 = vrot.slane %v1037, %v1044
      %v1047 = vunpack.c.l.s4 1934713408
      %v1048 = vunpack.c.0.s8 %v1047
      %v1049 = vlaneseq
      %v1050 = vshrl.u32 %v1049, 7
      %v1051 = vsub.s32 %v1048, %v1050
      %v1052 = vrot.slane %v1038, %v1051
      %v1053 = vcombine.low %v988, %v1004
      %v1054 = vcombine.high %v988, %v1004
      %v1056 = vunpack.c.l.s4 1934713408
      %v1057 = vunpack.c.0.s8 %v1056
      %v1058 = vlaneseq
      %v1059 = vshrl.u32 %v1058, 7
      %v1060 = vsub.s32 %v1057, %v1059
      %v1061 = vrot.slane %v1053, %v1060
      %v1063 = vunpack.c.l.s4 1934713408
      %v1064 = vunpack.c.0.s8 %v1063
      %v1065 = vlaneseq
      %v1066 = vshrl.u32 %v1065, 7
      %v1067 = vsub.s32 %v1064, %v1066
      %v1068 = vrot.slane %v1054, %v1067
      %v1069 = vcombine.low %v1013, %v1029
      %v1070 = vcombine.high %v1013, %v1029
      %v1072 = vunpack.c.l.s4 1934713408
      %v1073 = vunpack.c.0.s8 %v1072
      %v1074 = vlaneseq
      %v1075 = vshrl.u32 %v1074, 7
      %v1076 = vsub.s32 %v1073, %v1075
      %v1077 = vrot.slane %v1069, %v1076
      %v1079 = vunpack.c.l.s4 1934713408
      %v1080 = vunpack.c.0.s8 %v1079
      %v1081 = vlaneseq
      %v1082 = vshrl.u32 %v1081, 7
      %v1083 = vsub.s32 %v1080, %v1082
      %v1084 = vrot.slane %v1070, %v1083
      %v1085 = vcombine.low %v1020, %v1036
      %v1086 = vcombine.high %v1020, %v1036
      %v1088 = vunpack.c.l.s4 1934713408
      %v1089 = vunpack.c.0.s8 %v1088
      %v1090 = vlaneseq
      %v1091 = vshrl.u32 %v1090, 7
      %v1092 = vsub.s32 %v1089, %v1091
      %v1093 = vrot.slane %v1085, %v1092
      %v1095 = vunpack.c.l.s4 1934713408
      %v1096 = vunpack.c.0.s8 %v1095
      %v1097 = vlaneseq
      %v1098 = vshrl.u32 %v1097, 7
      %v1099 = vsub.s32 %v1096, %v1098
      %v1100 = vrot.slane %v1086, %v1099
      %v1101 = vcombine.low %v1045, %v1077
      %v1102 = vcombine.high %v1045, %v1077
      %v1103 = vcombine.low %v1052, %v1084
      %v1104 = vcombine.high %v1052, %v1084
      %v1105 = vcombine.low %v1061, %v1093
      %v1106 = vcombine.high %v1061, %v1093
      %v1107 = vcombine.low %v1068, %v1100
      %v1108 = vcombine.high %v1068, %v1100
      %v1109 = vcombine.low %v1101, %v1103
      %v1110 = vcombine.high %v1101, %v1103
      %v1112 = vunpack.c.l.s4 1983009808
      %v1113 = vunpack.c.0.s8 %v1112
      %v1114 = vlaneseq
      %v1115 = vshrl.u32 %v1114, 7
      %v1116 = vsub.s32 %v1113, %v1115
      %v1117 = vrot.slane %v1109, %v1116
      %v1119 = vunpack.c.l.s4 1983009808
      %v1120 = vunpack.c.0.s8 %v1119
      %v1121 = vlaneseq
      %v1122 = vshrl.u32 %v1121, 7
      %v1123 = vsub.s32 %v1120, %v1122
      %v1124 = vrot.slane %v1110, %v1123
      %v1125 = vcombine.low %v1102, %v1104
      %v1126 = vcombine.high %v1102, %v1104
      %v1128 = vunpack.c.l.s4 1983009808
      %v1129 = vunpack.c.0.s8 %v1128
      %v1130 = vlaneseq
      %v1131 = vshrl.u32 %v1130, 7
      %v1132 = vsub.s32 %v1129, %v1131
      %v1133 = vrot.slane %v1125, %v1132
      %v1135 = vunpack.c.l.s4 1983009808
      %v1136 = vunpack.c.0.s8 %v1135
      %v1137 = vlaneseq
      %v1138 = vshrl.u32 %v1137, 7
      %v1139 = vsub.s32 %v1136, %v1138
      %v1140 = vrot.slane %v1126, %v1139
      %v1141 = vcombine.low %v1105, %v1107
      %v1142 = vcombine.high %v1105, %v1107
      %v1144 = vunpack.c.l.s4 1983009808
      %v1145 = vunpack.c.0.s8 %v1144
      %v1146 = vlaneseq
      %v1147 = vshrl.u32 %v1146, 7
      %v1148 = vsub.s32 %v1145, %v1147
      %v1149 = vrot.slane %v1141, %v1148
      %v1151 = vunpack.c.l.s4 1983009808
      %v1152 = vunpack.c.0.s8 %v1151
      %v1153 = vlaneseq
      %v1154 = vshrl.u32 %v1153, 7
      %v1155 = vsub.s32 %v1152, %v1154
      %v1156 = vrot.slane %v1142, %v1155
      %v1157 = vcombine.low %v1106, %v1108
      %v1158 = vcombine.high %v1106, %v1108
      %v1160 = vunpack.c.l.s4 1983009808
      %v1161 = vunpack.c.0.s8 %v1160
      %v1162 = vlaneseq
      %v1163 = vshrl.u32 %v1162, 7
      %v1164 = vsub.s32 %v1161, %v1163
      %v1165 = vrot.slane %v1157, %v1164
      %v1167 = vunpack.c.l.s4 1983009808
      %v1168 = vunpack.c.0.s8 %v1167
      %v1169 = vlaneseq
      %v1170 = vshrl.u32 %v1169, 7
      %v1171 = vsub.s32 %v1168, %v1170
      %v1172 = vrot.slane %v1158, %v1171
      %v1173 = vcombine.low %v1117, %v1133
      %v1174 = vcombine.high %v1117, %v1133
      %v1176 = vunpack.c.l.s4 1934713408
      %v1177 = vunpack.c.0.s8 %v1176
      %v1178 = vlaneseq
      %v1179 = vshrl.u32 %v1178, 7
      %v1180 = vsub.s32 %v1177, %v1179
      %v1181 = vrot.slane %v1173, %v1180
      %v1183 = vunpack.c.l.s4 1934713408
      %v1184 = vunpack.c.0.s8 %v1183
      %v1185 = vlaneseq
      %v1186 = vshrl.u32 %v1185, 7
      %v1187 = vsub.s32 %v1184, %v1186
      %v1188 = vrot.slane %v1174, %v1187
      %v1189 = vcombine.low %v1124, %v1140
      %v1190 = vcombine.high %v1124, %v1140
      %v1192 = vunpack.c.l.s4 1934713408
      %v1193 = vunpack.c.0.s8 %v1192
      %v1194 = vlaneseq
      %v1195 = vshrl.u32 %v1194, 7
      %v1196 = vsub.s32 %v1193, %v1195
      %v1197 = vrot.slane %v1189, %v1196
      %v1199 = vunpack.c.l.s4 1934713408
      %v1200 = vunpack.c.0.s8 %v1199
      %v1201 = vlaneseq
      %v1202 = vshrl.u32 %v1201, 7
      %v1203 = vsub.s32 %v1200, %v1202
      %v1204 = vrot.slane %v1190, %v1203
      %v1205 = vcombine.low %v1149, %v1165
      %v1206 = vcombine.high %v1149, %v1165
      %v1208 = vunpack.c.l.s4 1934713408
      %v1209 = vunpack.c.0.s8 %v1208
      %v1210 = vlaneseq
      %v1211 = vshrl.u32 %v1210, 7
      %v1212 = vsub.s32 %v1209, %v1211
      %v1213 = vrot.slane %v1205, %v1212
      %v1215 = vunpack.c.l.s4 1934713408
      %v1216 = vunpack.c.0.s8 %v1215
      %v1217 = vlaneseq
      %v1218 = vshrl.u32 %v1217, 7
      %v1219 = vsub.s32 %v1216, %v1218
      %v1220 = vrot.slane %v1206, %v1219
      %v1221 = vcombine.low %v1156, %v1172
      %v1222 = vcombine.high %v1156, %v1172
      %v1224 = vunpack.c.l.s4 1934713408
      %v1225 = vunpack.c.0.s8 %v1224
      %v1226 = vlaneseq
      %v1227 = vshrl.u32 %v1226, 7
      %v1228 = vsub.s32 %v1225, %v1227
      %v1229 = vrot.slane %v1221, %v1228
      %v1231 = vunpack.c.l.s4 1934713408
      %v1232 = vunpack.c.0.s8 %v1231
      %v1233 = vlaneseq
      %v1234 = vshrl.u32 %v1233, 7
      %v1235 = vsub.s32 %v1232, %v1234
      %v1236 = vrot.slane %v1222, %v1235
      %v1237 = vcombine.low %v1181, %v1213
      %v1238 = vcombine.high %v1181, %v1213
      %v1239 = vcombine.low %v1188, %v1220
      %v1240 = vcombine.high %v1188, %v1220
      %v1241 = vcombine.low %v1197, %v1229
      %v1242 = vcombine.high %v1197, %v1229
      %v1243 = vcombine.low %v1204, %v1236
      %v1244 = vcombine.high %v1204, %v1236
      %v1245 = vpack.c.bf16 %v1237, %v1237
      %v1246 = vpack.c.bf16 %v1238, %v1238
      %v1247 = vpack.c.bf16 %v1239, %v1239
      %v1248 = vpack.c.bf16 %v1240, %v1240
      %v1249 = vpack.c.bf16 %v1241, %v1241
      %v1250 = vpack.c.bf16 %v1242, %v1242
      %v1251 = vpack.c.bf16 %v1243, %v1243
      %v1252 = vpack.c.bf16 %v1244, %v1244
      %vm1253 = vcmask 31744
      %v1255 = vsel %vm1253, %v637, 0
      %v1258 = vsel %vm1253, %v941, 0
      %1260 = vmatprep.subr.bf16.mxu0 0
      %1261 = vmatpush1.bf16.xpose.msra.mxu0 0
      %1262 = vmatprep.subr.bf16.mxu0 0
      %1263 = vmatpush1.bf16.xpose.msra.mxu0 0
      %1264 = vmatprep.subr.bf16.mxu0 0
      %1265 = vmatpush1.bf16.xpose.msra.mxu0 0
      %1266 = vmatprep.subr.bf16.mxu0 0
      %1267 = vmatpush1.bf16.xpose.msra.mxu0 0
      %1268 = vmatprep.subr.bf16.mxu0 0
      %1269 = vmatpush1.bf16.xpose.msra.mxu0 0
      %1270 = vmatprep.subr.bf16.mxu0 0
      %1271 = vmatpush1.bf16.xpose.msra.mxu0 0
      %1272 = vmatprep.subr.bf16.mxu0 0
      %1273 = vmatpush1.bf16.xpose.msra.mxu0 0
      %1274 = vmatprep.subr.bf16.mxu0 0
      %1275 = vmatpush1.bf16.xpose.msra.mxu0 %v1258
      %1276 = vmatprep.subr.bf16.mxu0 0
      %1277 = vmatpush2.bf16.xpose.msra.mxu0 0
      %1278 = vmatprep.subr.bf16.mxu0 0
      %1279 = vmatpush2.bf16.xpose.msra.mxu0 0
      %1280 = vmatprep.subr.bf16.mxu0 0
      %1281 = vmatpush2.bf16.xpose.msra.mxu0 0
      %1282 = vmatprep.subr.bf16.mxu0 0
      %1283 = vmatpush2.bf16.xpose.msra.mxu0 0
      %1284 = vmatprep.subr.bf16.mxu0 0
      %1285 = vmatpush2.bf16.xpose.msra.mxu0 0
      %1286 = vmatprep.subr.bf16.mxu0 0
      %1287 = vmatpush2.bf16.xpose.msra.mxu0 0
      %1288 = vmatprep.subr.bf16.mxu0 0
      %1289 = vmatpush2.bf16.xpose.msra.mxu0 0
      %1290 = vmatprep.subr.bf16.mxu0 0
      %1291 = vmatpush2.bf16.xpose.msra.mxu0 0
      %1292 = vmatprep.mubr.bf16.mxu0 0
      %1293 = vmatmul.mubr.bf16.gmra.mxu0 %v1255
      %v1294 = vpop.f32.mrf.mxu0
      %v1295 = vadd.f32 0.0, %v1294
      %v1296 = vpop.f32.mrf.mxu0
      %v1297 = vpop.f32.mrf.mxu0
      %v1298 = vpop.f32.mrf.mxu0
      %1299 = vdwg.mxu0
      %v1301 = vsel %vm1253, %v638, 0
      %v1304 = vsel %vm1253, %v942, 0
      %1306 = vmatprep.subr.bf16.mxu0 0
      %1307 = vmatpush1.bf16.xpose.msra.mxu0 0
      %1308 = vmatprep.subr.bf16.mxu0 0
      %1309 = vmatpush1.bf16.xpose.msra.mxu0 0
      %1310 = vmatprep.subr.bf16.mxu0 0
      %1311 = vmatpush1.bf16.xpose.msra.mxu0 0
      %1312 = vmatprep.subr.bf16.mxu0 0
      %1313 = vmatpush1.bf16.xpose.msra.mxu0 0
      %1314 = vmatprep.subr.bf16.mxu0 0
      %1315 = vmatpush1.bf16.xpose.msra.mxu0 0
      %1316 = vmatprep.subr.bf16.mxu0 0
      %1317 = vmatpush1.bf16.xpose.msra.mxu0 0
      %1318 = vmatprep.subr.bf16.mxu0 0
      %1319 = vmatpush1.bf16.xpose.msra.mxu0 0
      %1320 = vmatprep.subr.bf16.mxu0 0
      %1321 = vmatpush1.bf16.xpose.msra.mxu0 %v1304
      %1322 = vmatprep.subr.bf16.mxu0 0
      %1323 = vmatpush2.bf16.xpose.msra.mxu0 0
      %1324 = vmatprep.subr.bf16.mxu0 0
      %1325 = vmatpush2.bf16.xpose.msra.mxu0 0
      %1326 = vmatprep.subr.bf16.mxu0 0
      %1327 = vmatpush2.bf16.xpose.msra.mxu0 0
      %1328 = vmatprep.subr.bf16.mxu0 0
      %1329 = vmatpush2.bf16.xpose.msra.mxu0 0
      %1330 = vmatprep.subr.bf16.mxu0 0
      %1331 = vmatpush2.bf16.xpose.msra.mxu0 0
      %1332 = vmatprep.subr.bf16.mxu0 0
      %1333 = vmatpush2.bf16.xpose.msra.mxu0 0
      %1334 = vmatprep.subr.bf16.mxu0 0
      %1335 = vmatpush2.bf16.xpose.msra.mxu0 0
      %1336 = vmatprep.subr.bf16.mxu0 0
      %1337 = vmatpush2.bf16.xpose.msra.mxu0 0
      %1338 = vmatprep.mubr.bf16.mxu0 0
      %1339 = vmatmul.mubr.bf16.gmra.mxu0 %v1301
      %v1340 = vpop.f32.mrf.mxu0
      %v1341 = vadd.f32 0.0, %v1340
      %v1342 = vpop.f32.mrf.mxu0
      %v1343 = vpop.f32.mrf.mxu0
      %v1344 = vpop.f32.mrf.mxu0
      %1345 = vdwg.mxu0
      %v1347 = vsel %vm1253, %v639, 0
      %v1350 = vsel %vm1253, %v943, 0
      %1352 = vmatprep.subr.bf16.mxu0 0
      %1353 = vmatpush1.bf16.xpose.msra.mxu0 0
      %1354 = vmatprep.subr.bf16.mxu0 0
      %1355 = vmatpush1.bf16.xpose.msra.mxu0 0
      %1356 = vmatprep.subr.bf16.mxu0 0
      %1357 = vmatpush1.bf16.xpose.msra.mxu0 0
      %1358 = vmatprep.subr.bf16.mxu0 0
      %1359 = vmatpush1.bf16.xpose.msra.mxu0 0
      %1360 = vmatprep.subr.bf16.mxu0 0
      %1361 = vmatpush1.bf16.xpose.msra.mxu0 0
      %1362 = vmatprep.subr.bf16.mxu0 0
      %1363 = vmatpush1.bf16.xpose.msra.mxu0 0
      %1364 = vmatprep.subr.bf16.mxu0 0
      %1365 = vmatpush1.bf16.xpose.msra.mxu0 0
      %1366 = vmatprep.subr.bf16.mxu0 0
      %1367 = vmatpush1.bf16.xpose.msra.mxu0 %v1350
      %1368 = vmatprep.subr.bf16.mxu0 0
      %1369 = vmatpush2.bf16.xpose.msra.mxu0 0
      %1370 = vmatprep.subr.bf16.mxu0 0
      %1371 = vmatpush2.bf16.xpose.msra.mxu0 0
      %1372 = vmatprep.subr.bf16.mxu0 0
      %1373 = vmatpush2.bf16.xpose.msra.mxu0 0
      %1374 = vmatprep.subr.bf16.mxu0 0
      %1375 = vmatpush2.bf16.xpose.msra.mxu0 0
      %1376 = vmatprep.subr.bf16.mxu0 0
      %1377 = vmatpush2.bf16.xpose.msra.mxu0 0
      %1378 = vmatprep.subr.bf16.mxu0 0
      %1379 = vmatpush2.bf16.xpose.msra.mxu0 0
      %1380 = vmatprep.subr.bf16.mxu0 0
      %1381 = vmatpush2.bf16.xpose.msra.mxu0 0
      %1382 = vmatprep.subr.bf16.mxu0 0
      %1383 = vmatpush2.bf16.xpose.msra.mxu0 0
      %1384 = vmatprep.mubr.bf16.mxu0 0
      %1385 = vmatmul.mubr.bf16.gmra.mxu0 %v1347
      %v1386 = vpop.f32.mrf.mxu0
      %v1387 = vadd.f32 0.0, %v1386
      %v1388 = vpop.f32.mrf.mxu0
      %v1389 = vpop.f32.mrf.mxu0
      %v1390 = vpop.f32.mrf.mxu0
      %1391 = vdwg.mxu0
      %v1393 = vsel %vm1253, %v640, 0
      %v1396 = vsel %vm1253, %v944, 0
      %1398 = vmatprep.subr.bf16.mxu0 0
      %1399 = vmatpush1.bf16.xpose.msra.mxu0 0
      %1400 = vmatprep.subr.bf16.mxu0 0
      %1401 = vmatpush1.bf16.xpose.msra.mxu0 0
      %1402 = vmatprep.subr.bf16.mxu0 0
      %1403 = vmatpush1.bf16.xpose.msra.mxu0 0
      %1404 = vmatprep.subr.bf16.mxu0 0
      %1405 = vmatpush1.bf16.xpose.msra.mxu0 0
      %1406 = vmatprep.subr.bf16.mxu0 0
      %1407 = vmatpush1.bf16.xpose.msra.mxu0 0
      %1408 = vmatprep.subr.bf16.mxu0 0
      %1409 = vmatpush1.bf16.xpose.msra.mxu0 0
      %1410 = vmatprep.subr.bf16.mxu0 0
      %1411 = vmatpush1.bf16.xpose.msra.mxu0 0
      %1412 = vmatprep.subr.bf16.mxu0 0
      %1413 = vmatpush1.bf16.xpose.msra.mxu0 %v1396
      %1414 = vmatprep.subr.bf16.mxu0 0
      %1415 = vmatpush2.bf16.xpose.msra.mxu0 0
      %1416 = vmatprep.subr.bf16.mxu0 0
      %1417 = vmatpush2.bf16.xpose.msra.mxu0 0
      %1418 = vmatprep.subr.bf16.mxu0 0
      %1419 = vmatpush2.bf16.xpose.msra.mxu0 0
      %1420 = vmatprep.subr.bf16.mxu0 0
      %1421 = vmatpush2.bf16.xpose.msra.mxu0 0
      %1422 = vmatprep.subr.bf16.mxu0 0
      %1423 = vmatpush2.bf16.xpose.msra.mxu0 0
      %1424 = vmatprep.subr.bf16.mxu0 0
      %1425 = vmatpush2.bf16.xpose.msra.mxu0 0
      %1426 = vmatprep.subr.bf16.mxu0 0
      %1427 = vmatpush2.bf16.xpose.msra.mxu0 0
      %1428 = vmatprep.subr.bf16.mxu0 0
      %1429 = vmatpush2.bf16.xpose.msra.mxu0 0
      %1430 = vmatprep.mubr.bf16.mxu0 0
      %1431 = vmatmul.mubr.bf16.gmra.mxu0 %v1393
      %v1432 = vpop.f32.mrf.mxu0
      %v1433 = vadd.f32 0.0, %v1432
      %v1434 = vpop.f32.mrf.mxu0
      %v1435 = vpop.f32.mrf.mxu0
      %v1436 = vpop.f32.mrf.mxu0
      %1437 = vdwg.mxu0
      %v1439 = vsel %vm1253, %v641, 0
      %v1442 = vsel %vm1253, %v945, 0
      %1444 = vmatprep.subr.bf16.mxu0 0
      %1445 = vmatpush1.bf16.xpose.msra.mxu0 0
      %1446 = vmatprep.subr.bf16.mxu0 0
      %1447 = vmatpush1.bf16.xpose.msra.mxu0 0
      %1448 = vmatprep.subr.bf16.mxu0 0
      %1449 = vmatpush1.bf16.xpose.msra.mxu0 0
      %1450 = vmatprep.subr.bf16.mxu0 0
      %1451 = vmatpush1.bf16.xpose.msra.mxu0 0
      %1452 = vmatprep.subr.bf16.mxu0 0
      %1453 = vmatpush1.bf16.xpose.msra.mxu0 0
      %1454 = vmatprep.subr.bf16.mxu0 0
      %1455 = vmatpush1.bf16.xpose.msra.mxu0 0
      %1456 = vmatprep.subr.bf16.mxu0 0
      %1457 = vmatpush1.bf16.xpose.msra.mxu0 0
      %1458 = vmatprep.subr.bf16.mxu0 0
      %1459 = vmatpush1.bf16.xpose.msra.mxu0 %v1442
      %1460 = vmatprep.subr.bf16.mxu0 0
      %1461 = vmatpush2.bf16.xpose.msra.mxu0 0
      %1462 = vmatprep.subr.bf16.mxu0 0
      %1463 = vmatpush2.bf16.xpose.msra.mxu0 0
      %1464 = vmatprep.subr.bf16.mxu0 0
      %1465 = vmatpush2.bf16.xpose.msra.mxu0 0
      %1466 = vmatprep.subr.bf16.mxu0 0
      %1467 = vmatpush2.bf16.xpose.msra.mxu0 0
      %1468 = vmatprep.subr.bf16.mxu0 0
      %1469 = vmatpush2.bf16.xpose.msra.mxu0 0
      %1470 = vmatprep.subr.bf16.mxu0 0
      %1471 = vmatpush2.bf16.xpose.msra.mxu0 0
      %1472 = vmatprep.subr.bf16.mxu0 0
      %1473 = vmatpush2.bf16.xpose.msra.mxu0 0
      %1474 = vmatprep.subr.bf16.mxu0 0
      %1475 = vmatpush2.bf16.xpose.msra.mxu0 0
      %1476 = vmatprep.mubr.bf16.mxu0 0
      %1477 = vmatmul.mubr.bf16.gmra.mxu0 %v1439
      %v1478 = vpop.f32.mrf.mxu0
      %v1479 = vadd.f32 0.0, %v1478
      %v1480 = vpop.f32.mrf.mxu0
      %v1481 = vpop.f32.mrf.mxu0
      %v1482 = vpop.f32.mrf.mxu0
      %1483 = vdwg.mxu0
      %v1485 = vsel %vm1253, %v642, 0
      %v1488 = vsel %vm1253, %v946, 0
      %1490 = vmatprep.subr.bf16.mxu0 0
      %1491 = vmatpush1.bf16.xpose.msra.mxu0 0
      %1492 = vmatprep.subr.bf16.mxu0 0
      %1493 = vmatpush1.bf16.xpose.msra.mxu0 0
      %1494 = vmatprep.subr.bf16.mxu0 0
      %1495 = vmatpush1.bf16.xpose.msra.mxu0 0
      %1496 = vmatprep.subr.bf16.mxu0 0
      %1497 = vmatpush1.bf16.xpose.msra.mxu0 0
      %1498 = vmatprep.subr.bf16.mxu0 0
      %1499 = vmatpush1.bf16.xpose.msra.mxu0 0
      %1500 = vmatprep.subr.bf16.mxu0 0
      %1501 = vmatpush1.bf16.xpose.msra.mxu0 0
      %1502 = vmatprep.subr.bf16.mxu0 0
      %1503 = vmatpush1.bf16.xpose.msra.mxu0 0
      %1504 = vmatprep.subr.bf16.mxu0 0
      %1505 = vmatpush1.bf16.xpose.msra.mxu0 %v1488
      %1506 = vmatprep.subr.bf16.mxu0 0
      %1507 = vmatpush2.bf16.xpose.msra.mxu0 0
      %1508 = vmatprep.subr.bf16.mxu0 0
      %1509 = vmatpush2.bf16.xpose.msra.mxu0 0
      %1510 = vmatprep.subr.bf16.mxu0 0
      %1511 = vmatpush2.bf16.xpose.msra.mxu0 0
      %1512 = vmatprep.subr.bf16.mxu0 0
      %1513 = vmatpush2.bf16.xpose.msra.mxu0 0
      %1514 = vmatprep.subr.bf16.mxu0 0
      %1515 = vmatpush2.bf16.xpose.msra.mxu0 0
      %1516 = vmatprep.subr.bf16.mxu0 0
      %1517 = vmatpush2.bf16.xpose.msra.mxu0 0
      %1518 = vmatprep.subr.bf16.mxu0 0
      %1519 = vmatpush2.bf16.xpose.msra.mxu0 0
      %1520 = vmatprep.subr.bf16.mxu0 0
      %1521 = vmatpush2.bf16.xpose.msra.mxu0 0
      %1522 = vmatprep.mubr.bf16.mxu0 0
      %1523 = vmatmul.mubr.bf16.gmra.mxu0 %v1485
      %v1524 = vpop.f32.mrf.mxu0
      %v1525 = vadd.f32 0.0, %v1524
      %v1526 = vpop.f32.mrf.mxu0
      %v1527 = vpop.f32.mrf.mxu0
      %v1528 = vpop.f32.mrf.mxu0
      %1529 = vdwg.mxu0
      %v1531 = vsel %vm1253, %v643, 0
      %v1534 = vsel %vm1253, %v947, 0
      %1536 = vmatprep.subr.bf16.mxu0 0
      %1537 = vmatpush1.bf16.xpose.msra.mxu0 0
      %1538 = vmatprep.subr.bf16.mxu0 0
      %1539 = vmatpush1.bf16.xpose.msra.mxu0 0
      %1540 = vmatprep.subr.bf16.mxu0 0
      %1541 = vmatpush1.bf16.xpose.msra.mxu0 0
      %1542 = vmatprep.subr.bf16.mxu0 0
      %1543 = vmatpush1.bf16.xpose.msra.mxu0 0
      %1544 = vmatprep.subr.bf16.mxu0 0
      %1545 = vmatpush1.bf16.xpose.msra.mxu0 0
      %1546 = vmatprep.subr.bf16.mxu0 0
      %1547 = vmatpush1.bf16.xpose.msra.mxu0 0
      %1548 = vmatprep.subr.bf16.mxu0 0
      %1549 = vmatpush1.bf16.xpose.msra.mxu0 0
      %1550 = vmatprep.subr.bf16.mxu0 0
      %1551 = vmatpush1.bf16.xpose.msra.mxu0 %v1534
      %1552 = vmatprep.subr.bf16.mxu0 0
      %1553 = vmatpush2.bf16.xpose.msra.mxu0 0
      %1554 = vmatprep.subr.bf16.mxu0 0
      %1555 = vmatpush2.bf16.xpose.msra.mxu0 0
      %1556 = vmatprep.subr.bf16.mxu0 0
      %1557 = vmatpush2.bf16.xpose.msra.mxu0 0
      %1558 = vmatprep.subr.bf16.mxu0 0
      %1559 = vmatpush2.bf16.xpose.msra.mxu0 0
      %1560 = vmatprep.subr.bf16.mxu0 0
      %1561 = vmatpush2.bf16.xpose.msra.mxu0 0
      %1562 = vmatprep.subr.bf16.mxu0 0
      %1563 = vmatpush2.bf16.xpose.msra.mxu0 0
      %1564 = vmatprep.subr.bf16.mxu0 0
      %1565 = vmatpush2.bf16.xpose.msra.mxu0 0
      %1566 = vmatprep.subr.bf16.mxu0 0
      %1567 = vmatpush2.bf16.xpose.msra.mxu0 0
      %1568 = vmatprep.mubr.bf16.mxu0 0
      %1569 = vmatmul.mubr.bf16.gmra.mxu0 %v1531
      %v1570 = vpop.f32.mrf.mxu0
      %v1571 = vadd.f32 0.0, %v1570
      %v1572 = vpop.f32.mrf.mxu0
      %v1573 = vpop.f32.mrf.mxu0
      %v1574 = vpop.f32.mrf.mxu0
      %1575 = vdwg.mxu0
      %v1577 = vsel %vm1253, %v644, 0
      %v1580 = vsel %vm1253, %v948, 0
      %1582 = vmatprep.subr.bf16.mxu0 0
      %1583 = vmatpush1.bf16.xpose.msra.mxu0 0
      %1584 = vmatprep.subr.bf16.mxu0 0
      %1585 = vmatpush1.bf16.xpose.msra.mxu0 0
      %1586 = vmatprep.subr.bf16.mxu0 0
      %1587 = vmatpush1.bf16.xpose.msra.mxu0 0
      %1588 = vmatprep.subr.bf16.mxu0 0
      %1589 = vmatpush1.bf16.xpose.msra.mxu0 0
      %1590 = vmatprep.subr.bf16.mxu0 0
      %1591 = vmatpush1.bf16.xpose.msra.mxu0 0
      %1592 = vmatprep.subr.bf16.mxu0 0
      %1593 = vmatpush1.bf16.xpose.msra.mxu0 0
      %1594 = vmatprep.subr.bf16.mxu0 0
      %1595 = vmatpush1.bf16.xpose.msra.mxu0 0
      %1596 = vmatprep.subr.bf16.mxu0 0
      %1597 = vmatpush1.bf16.xpose.msra.mxu0 %v1580
      %1598 = vmatprep.subr.bf16.mxu0 0
      %1599 = vmatpush2.bf16.xpose.msra.mxu0 0
      %1600 = vmatprep.subr.bf16.mxu0 0
      %1601 = vmatpush2.bf16.xpose.msra.mxu0 0
      %1602 = vmatprep.subr.bf16.mxu0 0
      %1603 = vmatpush2.bf16.xpose.msra.mxu0 0
      %1604 = vmatprep.subr.bf16.mxu0 0
      %1605 = vmatpush2.bf16.xpose.msra.mxu0 0
      %1606 = vmatprep.subr.bf16.mxu0 0
      %1607 = vmatpush2.bf16.xpose.msra.mxu0 0
      %1608 = vmatprep.subr.bf16.mxu0 0
      %1609 = vmatpush2.bf16.xpose.msra.mxu0 0
      %1610 = vmatprep.subr.bf16.mxu0 0
      %1611 = vmatpush2.bf16.xpose.msra.mxu0 0
      %1612 = vmatprep.subr.bf16.mxu0 0
      %1613 = vmatpush2.bf16.xpose.msra.mxu0 0
      %1614 = vmatprep.mubr.bf16.mxu0 0
      %1615 = vmatmul.mubr.bf16.gmra.mxu0 %v1577
      %v1616 = vpop.f32.mrf.mxu0
      %v1617 = vadd.f32 0.0, %v1616
      %v1618 = vpop.f32.mrf.mxu0
      %v1619 = vpop.f32.mrf.mxu0
      %v1620 = vpop.f32.mrf.mxu0
      %1621 = vdwg.mxu0
      %vm1622 = vcmask 64512
      %v1623 = vsel %vm1622, %v1295, -inf
      %1624 = vmax.xlane.f32.xlu0 %v1623
      %v1625 = vpop.xlane.xlu0 %1624
      %v1626 = vsel %vm1622, %v1341, -inf
      %1627 = vmax.xlane.f32.xlu0 %v1626
      %v1628 = vpop.xlane.xlu0 %1627
      %v1629 = vsel %vm1622, %v1387, -inf
      %1630 = vmax.xlane.f32.xlu0 %v1629
      %v1631 = vpop.xlane.xlu0 %1630
      %v1632 = vsel %vm1622, %v1433, -inf
      %1633 = vmax.xlane.f32.xlu0 %v1632
      %v1634 = vpop.xlane.xlu0 %1633
      %v1635 = vsel %vm1622, %v1479, -inf
      %1636 = vmax.xlane.f32.xlu0 %v1635
      %v1637 = vpop.xlane.xlu0 %1636
      %v1638 = vsel %vm1622, %v1525, -inf
      %1639 = vmax.xlane.f32.xlu0 %v1638
      %v1640 = vpop.xlane.xlu0 %1639
      %v1641 = vsel %vm1622, %v1571, -inf
      %1642 = vmax.xlane.f32.xlu0 %v1641
      %v1643 = vpop.xlane.xlu0 %1642
      %v1644 = vsel %vm1622, %v1617, -inf
      %1645 = vmax.xlane.f32.xlu0 %v1644
      %v1646 = vpop.xlane.xlu0 %1645
      %v1647 = vsub.f32 %v1295, %v1625
      %v1648 = vsub.f32 %v1341, %v1628
      %v1649 = vsub.f32 %v1387, %v1631
      %v1650 = vsub.f32 %v1433, %v1634
      %v1651 = vsub.f32 %v1479, %v1637
      %v1652 = vsub.f32 %v1525, %v1640
      %v1653 = vsub.f32 %v1571, %v1643
      %v1654 = vsub.f32 %v1617, %v1646
      %v1655 = vmul.f32 %v1647, 1.442695
      %v1656 = vpow.pop %v1655
      %v1657 = vmul.f32 %v1648, 1.442695
      %v1658 = vpow.pop %v1657
      %v1659 = vmul.f32 %v1649, 1.442695
      %v1660 = vpow.pop %v1659
      %v1661 = vmul.f32 %v1650, 1.442695
      %v1662 = vpow.pop %v1661
      %v1663 = vmul.f32 %v1651, 1.442695
      %v1664 = vpow.pop %v1663
      %v1665 = vmul.f32 %v1652, 1.442695
      %v1666 = vpow.pop %v1665
      %v1667 = vmul.f32 %v1653, 1.442695
      %v1668 = vpow.pop %v1667
      %v1669 = vmul.f32 %v1654, 1.442695
      %v1670 = vpow.pop %v1669
      %v1671 = vsel %vm1622, %v1656, 0.0
      %1672 = vadd.xlane.f32.xlu0 %v1671
      %v1673 = vpop.xlane.xlu0 %1672
      %v1674 = vsel %vm1622, %v1658, 0.0
      %1675 = vadd.xlane.f32.xlu0 %v1674
      %v1676 = vpop.xlane.xlu0 %1675
      %v1677 = vsel %vm1622, %v1660, 0.0
      %1678 = vadd.xlane.f32.xlu0 %v1677
      %v1679 = vpop.xlane.xlu0 %1678
      %v1680 = vsel %vm1622, %v1662, 0.0
      %1681 = vadd.xlane.f32.xlu0 %v1680
      %v1682 = vpop.xlane.xlu0 %1681
      %v1683 = vsel %vm1622, %v1664, 0.0
      %1684 = vadd.xlane.f32.xlu0 %v1683
      %v1685 = vpop.xlane.xlu0 %1684
      %v1686 = vsel %vm1622, %v1666, 0.0
      %1687 = vadd.xlane.f32.xlu0 %v1686
      %v1688 = vpop.xlane.xlu0 %1687
      %v1689 = vsel %vm1622, %v1668, 0.0
      %1690 = vadd.xlane.f32.xlu0 %v1689
      %v1691 = vpop.xlane.xlu0 %1690
      %v1692 = vsel %vm1622, %v1670, 0.0
      %1693 = vadd.xlane.f32.xlu0 %v1692
      %v1694 = vpop.xlane.xlu0 %1693
      %v1695 = vrcp.pop %v1673
      %v1696 = vrcp.pop %v1676
      %v1697 = vrcp.pop %v1679
      %v1698 = vrcp.pop %v1682
      %v1699 = vrcp.pop %v1685
      %v1700 = vrcp.pop %v1688
      %v1701 = vrcp.pop %v1691
      %v1702 = vrcp.pop %v1694
      %v1703 = vmul.f32 %v1656, %v1695
      %v1704 = vmul.f32 %v1658, %v1696
      %v1705 = vmul.f32 %v1660, %v1697
      %v1706 = vmul.f32 %v1662, %v1698
      %v1707 = vmul.f32 %v1664, %v1699
      %v1708 = vmul.f32 %v1666, %v1700
      %v1709 = vmul.f32 %v1668, %v1701
      %v1710 = vmul.f32 %v1670, %v1702
      %v1711 = vpack.c.bf16 %v1703, %v1703
      %v1712 = vpack.c.bf16 %v1704, %v1704
      %v1713 = vpack.c.bf16 %v1705, %v1705
      %v1714 = vpack.c.bf16 %v1706, %v1706
      %v1715 = vpack.c.bf16 %v1707, %v1707
      %v1716 = vpack.c.bf16 %v1708, %v1708
      %v1717 = vpack.c.bf16 %v1709, %v1709
      %v1718 = vpack.c.bf16 %v1710, %v1710
      %v1720 = vsel %vm1622, %v1711, 0
      %vm1722 = vcmask 1043456
      %v1724 = vsel %vm1722, %v1245, 0
      %1726 = vmatprep.subr.bf16.mxu0 0
      %1727 = vmatpush1.bf16.msra.mxu0 0
      %1728 = vmatprep.subr.bf16.mxu0 0
      %1729 = vmatpush1.bf16.msra.mxu0 0
      %1730 = vmatprep.subr.bf16.mxu0 0
      %1731 = vmatpush1.bf16.msra.mxu0 0
      %1732 = vmatprep.subr.bf16.mxu0 0
      %1733 = vmatpush1.bf16.msra.mxu0 0
      %1734 = vmatprep.subr.bf16.mxu0 0
      %1735 = vmatpush1.bf16.msra.mxu0 0
      %1736 = vmatprep.subr.bf16.mxu0 0
      %1737 = vmatpush1.bf16.msra.mxu0 0
      %1738 = vmatprep.subr.bf16.mxu0 0
      %1739 = vmatpush1.bf16.msra.mxu0 0
      %1740 = vmatprep.subr.bf16.mxu0 0
      %1741 = vmatpush1.bf16.msra.mxu0 %v1724
      %1742 = vmatprep.subr.bf16.mxu0 0
      %1743 = vmatpush2.bf16.msra.mxu0 0
      %1744 = vmatprep.subr.bf16.mxu0 0
      %1745 = vmatpush2.bf16.msra.mxu0 0
      %1746 = vmatprep.subr.bf16.mxu0 0
      %1747 = vmatpush2.bf16.msra.mxu0 0
      %1748 = vmatprep.subr.bf16.mxu0 0
      %1749 = vmatpush2.bf16.msra.mxu0 0
      %1750 = vmatprep.subr.bf16.mxu0 0
      %1751 = vmatpush2.bf16.msra.mxu0 0
      %1752 = vmatprep.subr.bf16.mxu0 0
      %1753 = vmatpush2.bf16.msra.mxu0 0
      %1754 = vmatprep.subr.bf16.mxu0 0
      %1755 = vmatpush2.bf16.msra.mxu0 0
      %1756 = vmatprep.subr.bf16.mxu0 0
      %1757 = vmatpush2.bf16.msra.mxu0 0
      %1758 = vmatprep.mubr.bf16.mxu0 0
      %1759 = vmatmul.mubr.bf16.gmra.mxu0 %v1720
      %v1760 = vpop.f32.mrf.mxu0
      %v1761 = vadd.f32 0.0, %v1760
      %v1762 = vpop.f32.mrf.mxu0
      %v1763 = vpop.f32.mrf.mxu0
      %v1764 = vpop.f32.mrf.mxu0
      %1765 = vdwg.mxu0
      %v1767 = vsel %vm1622, %v1712, 0
      %v1770 = vsel %vm1722, %v1246, 0
      %1772 = vmatprep.subr.bf16.mxu0 0
      %1773 = vmatpush1.bf16.msra.mxu0 0
      %1774 = vmatprep.subr.bf16.mxu0 0
      %1775 = vmatpush1.bf16.msra.mxu0 0
      %1776 = vmatprep.subr.bf16.mxu0 0
      %1777 = vmatpush1.bf16.msra.mxu0 0
      %1778 = vmatprep.subr.bf16.mxu0 0
      %1779 = vmatpush1.bf16.msra.mxu0 0
      %1780 = vmatprep.subr.bf16.mxu0 0
      %1781 = vmatpush1.bf16.msra.mxu0 0
      %1782 = vmatprep.subr.bf16.mxu0 0
      %1783 = vmatpush1.bf16.msra.mxu0 0
      %1784 = vmatprep.subr.bf16.mxu0 0
      %1785 = vmatpush1.bf16.msra.mxu0 0
      %1786 = vmatprep.subr.bf16.mxu0 0
      %1787 = vmatpush1.bf16.msra.mxu0 %v1770
      %1788 = vmatprep.subr.bf16.mxu0 0
      %1789 = vmatpush2.bf16.msra.mxu0 0
      %1790 = vmatprep.subr.bf16.mxu0 0
      %1791 = vmatpush2.bf16.msra.mxu0 0
      %1792 = vmatprep.subr.bf16.mxu0 0
      %1793 = vmatpush2.bf16.msra.mxu0 0
      %1794 = vmatprep.subr.bf16.mxu0 0
      %1795 = vmatpush2.bf16.msra.mxu0 0
      %1796 = vmatprep.subr.bf16.mxu0 0
      %1797 = vmatpush2.bf16.msra.mxu0 0
      %1798 = vmatprep.subr.bf16.mxu0 0
      %1799 = vmatpush2.bf16.msra.mxu0 0
      %1800 = vmatprep.subr.bf16.mxu0 0
      %1801 = vmatpush2.bf16.msra.mxu0 0
      %1802 = vmatprep.subr.bf16.mxu0 0
      %1803 = vmatpush2.bf16.msra.mxu0 0
      %1804 = vmatprep.mubr.bf16.mxu0 0
      %1805 = vmatmul.mubr.bf16.gmra.mxu0 %v1767
      %v1806 = vpop.f32.mrf.mxu0
      %v1807 = vadd.f32 0.0, %v1806
      %v1808 = vpop.f32.mrf.mxu0
      %v1809 = vpop.f32.mrf.mxu0
      %v1810 = vpop.f32.mrf.mxu0
      %1811 = vdwg.mxu0
      %v1813 = vsel %vm1622, %v1713, 0
      %v1816 = vsel %vm1722, %v1247, 0
      %1818 = vmatprep.subr.bf16.mxu0 0
      %1819 = vmatpush1.bf16.msra.mxu0 0
      %1820 = vmatprep.subr.bf16.mxu0 0
      %1821 = vmatpush1.bf16.msra.mxu0 0
      %1822 = vmatprep.subr.bf16.mxu0 0
      %1823 = vmatpush1.bf16.msra.mxu0 0
      %1824 = vmatprep.subr.bf16.mxu0 0
      %1825 = vmatpush1.bf16.msra.mxu0 0
      %1826 = vmatprep.subr.bf16.mxu0 0
      %1827 = vmatpush1.bf16.msra.mxu0 0
      %1828 = vmatprep.subr.bf16.mxu0 0
      %1829 = vmatpush1.bf16.msra.mxu0 0
      %1830 = vmatprep.subr.bf16.mxu0 0
      %1831 = vmatpush1.bf16.msra.mxu0 0
      %1832 = vmatprep.subr.bf16.mxu0 0
      %1833 = vmatpush1.bf16.msra.mxu0 %v1816
      %1834 = vmatprep.subr.bf16.mxu0 0
      %1835 = vmatpush2.bf16.msra.mxu0 0
      %1836 = vmatprep.subr.bf16.mxu0 0
      %1837 = vmatpush2.bf16.msra.mxu0 0
      %1838 = vmatprep.subr.bf16.mxu0 0
      %1839 = vmatpush2.bf16.msra.mxu0 0
      %1840 = vmatprep.subr.bf16.mxu0 0
      %1841 = vmatpush2.bf16.msra.mxu0 0
      %1842 = vmatprep.subr.bf16.mxu0 0
      %1843 = vmatpush2.bf16.msra.mxu0 0
      %1844 = vmatprep.subr.bf16.mxu0 0
      %1845 = vmatpush2.bf16.msra.mxu0 0
      %1846 = vmatprep.subr.bf16.mxu0 0
      %1847 = vmatpush2.bf16.msra.mxu0 0
      %1848 = vmatprep.subr.bf16.mxu0 0
      %1849 = vmatpush2.bf16.msra.mxu0 0
      %1850 = vmatprep.mubr.bf16.mxu0 0
      %1851 = vmatmul.mubr.bf16.gmra.mxu0 %v1813
      %v1852 = vpop.f32.mrf.mxu0
      %v1853 = vadd.f32 0.0, %v1852
      %v1854 = vpop.f32.mrf.mxu0
      %v1855 = vpop.f32.mrf.mxu0
      %v1856 = vpop.f32.mrf.mxu0
      %1857 = vdwg.mxu0
      %v1859 = vsel %vm1622, %v1714, 0
      %v1862 = vsel %vm1722, %v1248, 0
      %1864 = vmatprep.subr.bf16.mxu0 0
      %1865 = vmatpush1.bf16.msra.mxu0 0
      %1866 = vmatprep.subr.bf16.mxu0 0
      %1867 = vmatpush1.bf16.msra.mxu0 0
      %1868 = vmatprep.subr.bf16.mxu0 0
      %1869 = vmatpush1.bf16.msra.mxu0 0
      %1870 = vmatprep.subr.bf16.mxu0 0
      %1871 = vmatpush1.bf16.msra.mxu0 0
      %1872 = vmatprep.subr.bf16.mxu0 0
      %1873 = vmatpush1.bf16.msra.mxu0 0
      %1874 = vmatprep.subr.bf16.mxu0 0
      %1875 = vmatpush1.bf16.msra.mxu0 0
      %1876 = vmatprep.subr.bf16.mxu0 0
      %1877 = vmatpush1.bf16.msra.mxu0 0
      %1878 = vmatprep.subr.bf16.mxu0 0
      %1879 = vmatpush1.bf16.msra.mxu0 %v1862
      %1880 = vmatprep.subr.bf16.mxu0 0
      %1881 = vmatpush2.bf16.msra.mxu0 0
      %1882 = vmatprep.subr.bf16.mxu0 0
      %1883 = vmatpush2.bf16.msra.mxu0 0
      %1884 = vmatprep.subr.bf16.mxu0 0
      %1885 = vmatpush2.bf16.msra.mxu0 0
      %1886 = vmatprep.subr.bf16.mxu0 0
      %1887 = vmatpush2.bf16.msra.mxu0 0
      %1888 = vmatprep.subr.bf16.mxu0 0
      %1889 = vmatpush2.bf16.msra.mxu0 0
      %1890 = vmatprep.subr.bf16.mxu0 0
      %1891 = vmatpush2.bf16.msra.mxu0 0
      %1892 = vmatprep.subr.bf16.mxu0 0
      %1893 = vmatpush2.bf16.msra.mxu0 0
      %1894 = vmatprep.subr.bf16.mxu0 0
      %1895 = vmatpush2.bf16.msra.mxu0 0
      %1896 = vmatprep.mubr.bf16.mxu0 0
      %1897 = vmatmul.mubr.bf16.gmra.mxu0 %v1859
      %v1898 = vpop.f32.mrf.mxu0
      %v1899 = vadd.f32 0.0, %v1898
      %v1900 = vpop.f32.mrf.mxu0
      %v1901 = vpop.f32.mrf.mxu0
      %v1902 = vpop.f32.mrf.mxu0
      %1903 = vdwg.mxu0
      %v1905 = vsel %vm1622, %v1715, 0
      %v1908 = vsel %vm1722, %v1249, 0
      %1910 = vmatprep.subr.bf16.mxu0 0
      %1911 = vmatpush1.bf16.msra.mxu0 0
      %1912 = vmatprep.subr.bf16.mxu0 0
      %1913 = vmatpush1.bf16.msra.mxu0 0
      %1914 = vmatprep.subr.bf16.mxu0 0
      %1915 = vmatpush1.bf16.msra.mxu0 0
      %1916 = vmatprep.subr.bf16.mxu0 0
      %1917 = vmatpush1.bf16.msra.mxu0 0
      %1918 = vmatprep.subr.bf16.mxu0 0
      %1919 = vmatpush1.bf16.msra.mxu0 0
      %1920 = vmatprep.subr.bf16.mxu0 0
      %1921 = vmatpush1.bf16.msra.mxu0 0
      %1922 = vmatprep.subr.bf16.mxu0 0
      %1923 = vmatpush1.bf16.msra.mxu0 0
      %1924 = vmatprep.subr.bf16.mxu0 0
      %1925 = vmatpush1.bf16.msra.mxu0 %v1908
      %1926 = vmatprep.subr.bf16.mxu0 0
      %1927 = vmatpush2.bf16.msra.mxu0 0
      %1928 = vmatprep.subr.bf16.mxu0 0
      %1929 = vmatpush2.bf16.msra.mxu0 0
      %1930 = vmatprep.subr.bf16.mxu0 0
      %1931 = vmatpush2.bf16.msra.mxu0 0
      %1932 = vmatprep.subr.bf16.mxu0 0
      %1933 = vmatpush2.bf16.msra.mxu0 0
      %1934 = vmatprep.subr.bf16.mxu0 0
      %1935 = vmatpush2.bf16.msra.mxu0 0
      %1936 = vmatprep.subr.bf16.mxu0 0
      %1937 = vmatpush2.bf16.msra.mxu0 0
      %1938 = vmatprep.subr.bf16.mxu0 0
      %1939 = vmatpush2.bf16.msra.mxu0 0
      %1940 = vmatprep.subr.bf16.mxu0 0
      %1941 = vmatpush2.bf16.msra.mxu0 0
      %1942 = vmatprep.mubr.bf16.mxu0 0
      %1943 = vmatmul.mubr.bf16.gmra.mxu0 %v1905
      %v1944 = vpop.f32.mrf.mxu0
      %v1945 = vadd.f32 0.0, %v1944
      %v1946 = vpop.f32.mrf.mxu0
      %v1947 = vpop.f32.mrf.mxu0
      %v1948 = vpop.f32.mrf.mxu0
      %1949 = vdwg.mxu0
      %v1951 = vsel %vm1622, %v1716, 0
      %v1954 = vsel %vm1722, %v1250, 0
      %1956 = vmatprep.subr.bf16.mxu0 0
      %1957 = vmatpush1.bf16.msra.mxu0 0
      %1958 = vmatprep.subr.bf16.mxu0 0
      %1959 = vmatpush1.bf16.msra.mxu0 0
      %1960 = vmatprep.subr.bf16.mxu0 0
      %1961 = vmatpush1.bf16.msra.mxu0 0
      %1962 = vmatprep.subr.bf16.mxu0 0
      %1963 = vmatpush1.bf16.msra.mxu0 0
      %1964 = vmatprep.subr.bf16.mxu0 0
      %1965 = vmatpush1.bf16.msra.mxu0 0
      %1966 = vmatprep.subr.bf16.mxu0 0
      %1967 = vmatpush1.bf16.msra.mxu0 0
      %1968 = vmatprep.subr.bf16.mxu0 0
      %1969 = vmatpush1.bf16.msra.mxu0 0
      %1970 = vmatprep.subr.bf16.mxu0 0
      %1971 = vmatpush1.bf16.msra.mxu0 %v1954
      %1972 = vmatprep.subr.bf16.mxu0 0
      %1973 = vmatpush2.bf16.msra.mxu0 0
      %1974 = vmatprep.subr.bf16.mxu0 0
      %1975 = vmatpush2.bf16.msra.mxu0 0
      %1976 = vmatprep.subr.bf16.mxu0 0
      %1977 = vmatpush2.bf16.msra.mxu0 0
      %1978 = vmatprep.subr.bf16.mxu0 0
      %1979 = vmatpush2.bf16.msra.mxu0 0
      %1980 = vmatprep.subr.bf16.mxu0 0
      %1981 = vmatpush2.bf16.msra.mxu0 0
      %1982 = vmatprep.subr.bf16.mxu0 0
      %1983 = vmatpush2.bf16.msra.mxu0 0
      %1984 = vmatprep.subr.bf16.mxu0 0
      %1985 = vmatpush2.bf16.msra.mxu0 0
      %1986 = vmatprep.subr.bf16.mxu0 0
      %1987 = vmatpush2.bf16.msra.mxu0 0
      %1988 = vmatprep.mubr.bf16.mxu0 0
      %1989 = vmatmul.mubr.bf16.gmra.mxu0 %v1951
      %v1990 = vpop.f32.mrf.mxu0
      %v1991 = vadd.f32 0.0, %v1990
      %v1992 = vpop.f32.mrf.mxu0
      %v1993 = vpop.f32.mrf.mxu0
      %v1994 = vpop.f32.mrf.mxu0
      %1995 = vdwg.mxu0
      %v1997 = vsel %vm1622, %v1717, 0
      %v2000 = vsel %vm1722, %v1251, 0
      %2002 = vmatprep.subr.bf16.mxu0 0
      %2003 = vmatpush1.bf16.msra.mxu0 0
      %2004 = vmatprep.subr.bf16.mxu0 0
      %2005 = vmatpush1.bf16.msra.mxu0 0
      %2006 = vmatprep.subr.bf16.mxu0 0
      %2007 = vmatpush1.bf16.msra.mxu0 0
      %2008 = vmatprep.subr.bf16.mxu0 0
      %2009 = vmatpush1.bf16.msra.mxu0 0
      %2010 = vmatprep.subr.bf16.mxu0 0
      %2011 = vmatpush1.bf16.msra.mxu0 0
      %2012 = vmatprep.subr.bf16.mxu0 0
      %2013 = vmatpush1.bf16.msra.mxu0 0
      %2014 = vmatprep.subr.bf16.mxu0 0
      %2015 = vmatpush1.bf16.msra.mxu0 0
      %2016 = vmatprep.subr.bf16.mxu0 0
      %2017 = vmatpush1.bf16.msra.mxu0 %v2000
      %2018 = vmatprep.subr.bf16.mxu0 0
      %2019 = vmatpush2.bf16.msra.mxu0 0
      %2020 = vmatprep.subr.bf16.mxu0 0
      %2021 = vmatpush2.bf16.msra.mxu0 0
      %2022 = vmatprep.subr.bf16.mxu0 0
      %2023 = vmatpush2.bf16.msra.mxu0 0
      %2024 = vmatprep.subr.bf16.mxu0 0
      %2025 = vmatpush2.bf16.msra.mxu0 0
      %2026 = vmatprep.subr.bf16.mxu0 0
      %2027 = vmatpush2.bf16.msra.mxu0 0
      %2028 = vmatprep.subr.bf16.mxu0 0
      %2029 = vmatpush2.bf16.msra.mxu0 0
      %2030 = vmatprep.subr.bf16.mxu0 0
      %2031 = vmatpush2.bf16.msra.mxu0 0
      %2032 = vmatprep.subr.bf16.mxu0 0
      %2033 = vmatpush2.bf16.msra.mxu0 0
      %2034 = vmatprep.mubr.bf16.mxu0 0
      %2035 = vmatmul.mubr.bf16.gmra.mxu0 %v1997
      %v2036 = vpop.f32.mrf.mxu0
      %v2037 = vadd.f32 0.0, %v2036
      %v2038 = vpop.f32.mrf.mxu0
      %v2039 = vpop.f32.mrf.mxu0
      %v2040 = vpop.f32.mrf.mxu0
      %2041 = vdwg.mxu0
      %v2043 = vsel %vm1622, %v1718, 0
      %v2046 = vsel %vm1722, %v1252, 0
      %2048 = vmatprep.subr.bf16.mxu0 0
      %2049 = vmatpush1.bf16.msra.mxu0 0
      %2050 = vmatprep.subr.bf16.mxu0 0
      %2051 = vmatpush1.bf16.msra.mxu0 0
      %2052 = vmatprep.subr.bf16.mxu0 0
      %2053 = vmatpush1.bf16.msra.mxu0 0
      %2054 = vmatprep.subr.bf16.mxu0 0
      %2055 = vmatpush1.bf16.msra.mxu0 0
      %2056 = vmatprep.subr.bf16.mxu0 0
      %2057 = vmatpush1.bf16.msra.mxu0 0
      %2058 = vmatprep.subr.bf16.mxu0 0
      %2059 = vmatpush1.bf16.msra.mxu0 0
      %2060 = vmatprep.subr.bf16.mxu0 0
      %2061 = vmatpush1.bf16.msra.mxu0 0
      %2062 = vmatprep.subr.bf16.mxu0 0
      %2063 = vmatpush1.bf16.msra.mxu0 %v2046
      %2064 = vmatprep.subr.bf16.mxu0 0
      %2065 = vmatpush2.bf16.msra.mxu0 0
      %2066 = vmatprep.subr.bf16.mxu0 0
      %2067 = vmatpush2.bf16.msra.mxu0 0
      %2068 = vmatprep.subr.bf16.mxu0 0
      %2069 = vmatpush2.bf16.msra.mxu0 0
      %2070 = vmatprep.subr.bf16.mxu0 0
      %2071 = vmatpush2.bf16.msra.mxu0 0
      %2072 = vmatprep.subr.bf16.mxu0 0
      %2073 = vmatpush2.bf16.msra.mxu0 0
      %2074 = vmatprep.subr.bf16.mxu0 0
      %2075 = vmatpush2.bf16.msra.mxu0 0
      %2076 = vmatprep.subr.bf16.mxu0 0
      %2077 = vmatpush2.bf16.msra.mxu0 0
      %2078 = vmatprep.subr.bf16.mxu0 0
      %2079 = vmatpush2.bf16.msra.mxu0 0
      %2080 = vmatprep.mubr.bf16.mxu0 0
      %2081 = vmatmul.mubr.bf16.gmra.mxu0 %v2043
      %v2082 = vpop.f32.mrf.mxu0
      %v2083 = vadd.f32 0.0, %v2082
      %v2084 = vpop.f32.mrf.mxu0
      %v2085 = vpop.f32.mrf.mxu0
      %v2086 = vpop.f32.mrf.mxu0
      %2087 = vdwg.mxu0
      %v2088 = vcombine.low %v1761, %v1853
      %v2089 = vcombine.high %v1761, %v1853
      %v2091 = vunpack.c.l.s4 1983009808
      %v2092 = vunpack.c.0.s8 %v2091
      %v2093 = vlaneseq
      %v2094 = vshrl.u32 %v2093, 7
      %v2095 = vsub.s32 %v2092, %v2094
      %v2096 = vrot.slane %v2088, %v2095
      %v2098 = vunpack.c.l.s4 1983009808
      %v2099 = vunpack.c.0.s8 %v2098
      %v2100 = vlaneseq
      %v2101 = vshrl.u32 %v2100, 7
      %v2102 = vsub.s32 %v2099, %v2101
      %v2103 = vrot.slane %v2089, %v2102
      %v2104 = vcombine.low %v1807, %v1899
      %v2105 = vcombine.high %v1807, %v1899
      %v2107 = vunpack.c.l.s4 1983009808
      %v2108 = vunpack.c.0.s8 %v2107
      %v2109 = vlaneseq
      %v2110 = vshrl.u32 %v2109, 7
      %v2111 = vsub.s32 %v2108, %v2110
      %v2112 = vrot.slane %v2104, %v2111
      %v2114 = vunpack.c.l.s4 1983009808
      %v2115 = vunpack.c.0.s8 %v2114
      %v2116 = vlaneseq
      %v2117 = vshrl.u32 %v2116, 7
      %v2118 = vsub.s32 %v2115, %v2117
      %v2119 = vrot.slane %v2105, %v2118
      %v2120 = vcombine.low %v1945, %v2037
      %v2121 = vcombine.high %v1945, %v2037
      %v2123 = vunpack.c.l.s4 1983009808
      %v2124 = vunpack.c.0.s8 %v2123
      %v2125 = vlaneseq
      %v2126 = vshrl.u32 %v2125, 7
      %v2127 = vsub.s32 %v2124, %v2126
      %v2128 = vrot.slane %v2120, %v2127
      %v2130 = vunpack.c.l.s4 1983009808
      %v2131 = vunpack.c.0.s8 %v2130
      %v2132 = vlaneseq
      %v2133 = vshrl.u32 %v2132, 7
      %v2134 = vsub.s32 %v2131, %v2133
      %v2135 = vrot.slane %v2121, %v2134
      %v2136 = vcombine.low %v1991, %v2083
      %v2137 = vcombine.high %v1991, %v2083
      %v2139 = vunpack.c.l.s4 1983009808
      %v2140 = vunpack.c.0.s8 %v2139
      %v2141 = vlaneseq
      %v2142 = vshrl.u32 %v2141, 7
      %v2143 = vsub.s32 %v2140, %v2142
      %v2144 = vrot.slane %v2136, %v2143
      %v2146 = vunpack.c.l.s4 1983009808
      %v2147 = vunpack.c.0.s8 %v2146
      %v2148 = vlaneseq
      %v2149 = vshrl.u32 %v2148, 7
      %v2150 = vsub.s32 %v2147, %v2149
      %v2151 = vrot.slane %v2137, %v2150
      %v2152 = vcombine.low %v2096, %v2112
      %v2153 = vcombine.high %v2096, %v2112
      %v2155 = vunpack.c.l.s4 1934713408
      %v2156 = vunpack.c.0.s8 %v2155
      %v2157 = vlaneseq
      %v2158 = vshrl.u32 %v2157, 7
      %v2159 = vsub.s32 %v2156, %v2158
      %v2160 = vrot.slane %v2152, %v2159
      %v2162 = vunpack.c.l.s4 1934713408
      %v2163 = vunpack.c.0.s8 %v2162
      %v2164 = vlaneseq
      %v2165 = vshrl.u32 %v2164, 7
      %v2166 = vsub.s32 %v2163, %v2165
      %v2167 = vrot.slane %v2153, %v2166
      %v2168 = vcombine.low %v2103, %v2119
      %v2169 = vcombine.high %v2103, %v2119
      %v2171 = vunpack.c.l.s4 1934713408
      %v2172 = vunpack.c.0.s8 %v2171
      %v2173 = vlaneseq
      %v2174 = vshrl.u32 %v2173, 7
      %v2175 = vsub.s32 %v2172, %v2174
      %v2176 = vrot.slane %v2168, %v2175
      %v2178 = vunpack.c.l.s4 1934713408
      %v2179 = vunpack.c.0.s8 %v2178
      %v2180 = vlaneseq
      %v2181 = vshrl.u32 %v2180, 7
      %v2182 = vsub.s32 %v2179, %v2181
      %v2183 = vrot.slane %v2169, %v2182
      %v2184 = vcombine.low %v2128, %v2144
      %v2185 = vcombine.high %v2128, %v2144
      %v2187 = vunpack.c.l.s4 1934713408
      %v2188 = vunpack.c.0.s8 %v2187
      %v2189 = vlaneseq
      %v2190 = vshrl.u32 %v2189, 7
      %v2191 = vsub.s32 %v2188, %v2190
      %v2192 = vrot.slane %v2184, %v2191
      %v2194 = vunpack.c.l.s4 1934713408
      %v2195 = vunpack.c.0.s8 %v2194
      %v2196 = vlaneseq
      %v2197 = vshrl.u32 %v2196, 7
      %v2198 = vsub.s32 %v2195, %v2197
      %v2199 = vrot.slane %v2185, %v2198
      %v2200 = vcombine.low %v2135, %v2151
      %v2201 = vcombine.high %v2135, %v2151
      %v2203 = vunpack.c.l.s4 1934713408
      %v2204 = vunpack.c.0.s8 %v2203
      %v2205 = vlaneseq
      %v2206 = vshrl.u32 %v2205, 7
      %v2207 = vsub.s32 %v2204, %v2206
      %v2208 = vrot.slane %v2200, %v2207
      %v2210 = vunpack.c.l.s4 1934713408
      %v2211 = vunpack.c.0.s8 %v2210
      %v2212 = vlaneseq
      %v2213 = vshrl.u32 %v2212, 7
      %v2214 = vsub.s32 %v2211, %v2213
      %v2215 = vrot.slane %v2201, %v2214
      %v2216 = vcombine.low %v2160, %v2192
      %v2217 = vcombine.high %v2160, %v2192
      %v2218 = vcombine.low %v2167, %v2199
      %v2219 = vcombine.high %v2167, %v2199
      %v2220 = vcombine.low %v2176, %v2208
      %v2221 = vcombine.high %v2176, %v2208
      %v2222 = vcombine.low %v2183, %v2215
      %v2223 = vcombine.high %v2183, %v2215
      %v2224 = vcombine.low %v2216, %v2218
      %v2225 = vcombine.high %v2216, %v2218
      %v2227 = vunpack.c.l.s4 1983009808
      %v2228 = vunpack.c.0.s8 %v2227
      %v2229 = vlaneseq
      %v2230 = vshrl.u32 %v2229, 7
      %v2231 = vsub.s32 %v2228, %v2230
      %v2232 = vrot.slane %v2224, %v2231
      %v2234 = vunpack.c.l.s4 1983009808
      %v2235 = vunpack.c.0.s8 %v2234
      %v2236 = vlaneseq
      %v2237 = vshrl.u32 %v2236, 7
      %v2238 = vsub.s32 %v2235, %v2237
      %v2239 = vrot.slane %v2225, %v2238
      %v2240 = vcombine.low %v2217, %v2219
      %v2241 = vcombine.high %v2217, %v2219
      %v2243 = vunpack.c.l.s4 1983009808
      %v2244 = vunpack.c.0.s8 %v2243
      %v2245 = vlaneseq
      %v2246 = vshrl.u32 %v2245, 7
      %v2247 = vsub.s32 %v2244, %v2246
      %v2248 = vrot.slane %v2240, %v2247
      %v2250 = vunpack.c.l.s4 1983009808
      %v2251 = vunpack.c.0.s8 %v2250
      %v2252 = vlaneseq
      %v2253 = vshrl.u32 %v2252, 7
      %v2254 = vsub.s32 %v2251, %v2253
      %v2255 = vrot.slane %v2241, %v2254
      %v2256 = vcombine.low %v2220, %v2222
      %v2257 = vcombine.high %v2220, %v2222
      %v2259 = vunpack.c.l.s4 1983009808
      %v2260 = vunpack.c.0.s8 %v2259
      %v2261 = vlaneseq
      %v2262 = vshrl.u32 %v2261, 7
      %v2263 = vsub.s32 %v2260, %v2262
      %v2264 = vrot.slane %v2256, %v2263
      %v2266 = vunpack.c.l.s4 1983009808
      %v2267 = vunpack.c.0.s8 %v2266
      %v2268 = vlaneseq
      %v2269 = vshrl.u32 %v2268, 7
      %v2270 = vsub.s32 %v2267, %v2269
      %v2271 = vrot.slane %v2257, %v2270
      %v2272 = vcombine.low %v2221, %v2223
      %v2273 = vcombine.high %v2221, %v2223
      %v2275 = vunpack.c.l.s4 1983009808
      %v2276 = vunpack.c.0.s8 %v2275
      %v2277 = vlaneseq
      %v2278 = vshrl.u32 %v2277, 7
      %v2279 = vsub.s32 %v2276, %v2278
      %v2280 = vrot.slane %v2272, %v2279
      %v2282 = vunpack.c.l.s4 1983009808
      %v2283 = vunpack.c.0.s8 %v2282
      %v2284 = vlaneseq
      %v2285 = vshrl.u32 %v2284, 7
      %v2286 = vsub.s32 %v2283, %v2285
      %v2287 = vrot.slane %v2273, %v2286
      %v2288 = vcombine.low %v2232, %v2248
      %v2289 = vcombine.high %v2232, %v2248
      %v2291 = vunpack.c.l.s4 1934713408
      %v2292 = vunpack.c.0.s8 %v2291
      %v2293 = vlaneseq
      %v2294 = vshrl.u32 %v2293, 7
      %v2295 = vsub.s32 %v2292, %v2294
      %v2296 = vrot.slane %v2288, %v2295
      %v2298 = vunpack.c.l.s4 1934713408
      %v2299 = vunpack.c.0.s8 %v2298
      %v2300 = vlaneseq
      %v2301 = vshrl.u32 %v2300, 7
      %v2302 = vsub.s32 %v2299, %v2301
      %v2303 = vrot.slane %v2289, %v2302
      %v2304 = vcombine.low %v2239, %v2255
      %v2305 = vcombine.high %v2239, %v2255
      %v2307 = vunpack.c.l.s4 1934713408
      %v2308 = vunpack.c.0.s8 %v2307
      %v2309 = vlaneseq
      %v2310 = vshrl.u32 %v2309, 7
      %v2311 = vsub.s32 %v2308, %v2310
      %v2312 = vrot.slane %v2304, %v2311
      %v2314 = vunpack.c.l.s4 1934713408
      %v2315 = vunpack.c.0.s8 %v2314
      %v2316 = vlaneseq
      %v2317 = vshrl.u32 %v2316, 7
      %v2318 = vsub.s32 %v2315, %v2317
      %v2319 = vrot.slane %v2305, %v2318
      %v2320 = vcombine.low %v2264, %v2280
      %v2321 = vcombine.high %v2264, %v2280
      %v2323 = vunpack.c.l.s4 1934713408
      %v2324 = vunpack.c.0.s8 %v2323
      %v2325 = vlaneseq
      %v2326 = vshrl.u32 %v2325, 7
      %v2327 = vsub.s32 %v2324, %v2326
      %v2328 = vrot.slane %v2320, %v2327
      %v2330 = vunpack.c.l.s4 1934713408
      %v2331 = vunpack.c.0.s8 %v2330
      %v2332 = vlaneseq
      %v2333 = vshrl.u32 %v2332, 7
      %v2334 = vsub.s32 %v2331, %v2333
      %v2335 = vrot.slane %v2321, %v2334
      %v2336 = vcombine.low %v2271, %v2287
      %v2337 = vcombine.high %v2271, %v2287
      %v2339 = vunpack.c.l.s4 1934713408
      %v2340 = vunpack.c.0.s8 %v2339
      %v2341 = vlaneseq
      %v2342 = vshrl.u32 %v2341, 7
      %v2343 = vsub.s32 %v2340, %v2342
      %v2344 = vrot.slane %v2336, %v2343
      %v2346 = vunpack.c.l.s4 1934713408
      %v2347 = vunpack.c.0.s8 %v2346
      %v2348 = vlaneseq
      %v2349 = vshrl.u32 %v2348, 7
      %v2350 = vsub.s32 %v2347, %v2349
      %v2351 = vrot.slane %v2337, %v2350
      %v2352 = vcombine.low %v2296, %v2328
      %v2353 = vcombine.high %v2296, %v2328
      %v2354 = vcombine.low %v2303, %v2335
      %v2355 = vcombine.high %v2303, %v2335
      %v2356 = vcombine.low %v2312, %v2344
      %v2357 = vcombine.high %v2312, %v2344
      %v2358 = vcombine.low %v2319, %v2351
      %v2359 = vcombine.high %v2319, %v2351
      %2361 = vrot.lane.b32.xlu0 %v2353, 4
      %v2362 = vpop.permute.xlu0 %2361
      %2365 = vrot.lane.b32.xlu0 %v2354, 8
      %v2366 = vpop.permute.xlu0 %2365
      %2369 = vrot.lane.b32.xlu0 %v2355, 12
      %v2370 = vpop.permute.xlu0 %2369
      %2373 = vrot.lane.b32.xlu0 %v2356, 16
      %v2374 = vpop.permute.xlu0 %2373
      %2377 = vrot.lane.b32.xlu0 %v2357, 20
      %v2378 = vpop.permute.xlu0 %2377
      %2381 = vrot.lane.b32.xlu0 %v2358, 24
      %v2382 = vpop.permute.xlu0 %2381
      %2385 = vrot.lane.b32.xlu0 %v2359, 28
      %v2386 = vpop.permute.xlu0 %2385
      %v2388 = vsel %vm1253, %v2352, %v2362
      %v2389 = vsel %vm1622, %v2388, %v2366
      %vm2390 = vcmask 97280
      %v2391 = vsel %vm2390, %v2389, %v2370
      %vm2392 = vcmask 130048
      %v2393 = vsel %vm2392, %v2391, %v2374
      %vm2394 = vcmask 162816
      %v2395 = vsel %vm2394, %v2393, %v2378
      %vm2396 = vcmask 195584
      %v2397 = vsel %vm2396, %v2395, %v2382
      %vm2398 = vcmask 228352
      %v2399 = vsel %vm2398, %v2397, %v2386
      %v2400 = vpack.c.bf16 %v2399, %v2399
      %v2401 = vld [vmem:[%s3] sm:$0xf]
      %v2402 = vld [vmem:[%s3 + $0x4] sm:$0xf]
      %v2403 = vld [vmem:[%s3 + $0x8] sm:$0xf]
      %v2404 = vld [vmem:[%s3 + $0xc] sm:$0xf]
      %v2405 = vld [vmem:[%s4] sm:$0x1]
      %v2407 = vlaneseq
      %v2408 = vshrl.u32 %v2407, 7
      %v2409 = vsub.s32 0, %v2408
      %v2410 = vrot.slane %v2405, %v2409
      %v2416 = vunpack.c.l.b16 %v2401
      %v2417 = vunpack.c.l.b16 %v2402
      %v2418 = vunpack.c.l.b16 %v2403
      %v2419 = vunpack.c.l.b16 %v2404
      %v2420 = vpack.c.b16 %v2417, %v2416
      %v2421 = vpack.c.b16 %v2419, %v2418
      %v2425 = vsel %vm299, %v2400, 0
      %2427 = vmatprep.subr.bf16.mxu0 0
      %2428 = vmatpush1.bf16.msra.mxu0 0
      %2429 = vmatprep.subr.bf16.mxu0 0
      %2430 = vmatpush1.bf16.msra.mxu0 0
      %2431 = vmatprep.subr.bf16.mxu0 0
      %2432 = vmatpush1.bf16.msra.mxu0 0
      %2433 = vmatprep.subr.bf16.mxu0 0
      %2434 = vmatpush1.bf16.msra.mxu0 0
      %2435 = vmatprep.subr.bf16.mxu0 0
      %2436 = vmatpush1.bf16.msra.mxu0 0
      %2437 = vmatprep.subr.bf16.mxu0 0
      %2438 = vmatpush1.bf16.msra.mxu0 0
      %2439 = vmatprep.subr.bf16.mxu0 0
      %2440 = vmatpush1.bf16.msra.mxu0 %v2421
      %2441 = vmatprep.subr.bf16.mxu0 0
      %2442 = vmatpush1.bf16.msra.mxu0 %v2420
      %2443 = vmatprep.subr.bf16.mxu0 0
      %2444 = vmatpush2.bf16.msra.mxu0 0
      %2445 = vmatprep.subr.bf16.mxu0 0
      %2446 = vmatpush2.bf16.msra.mxu0 0
      %2447 = vmatprep.subr.bf16.mxu0 0
      %2448 = vmatpush2.bf16.msra.mxu0 0
      %2449 = vmatprep.subr.bf16.mxu0 0
      %2450 = vmatpush2.bf16.msra.mxu0 0
      %2451 = vmatprep.subr.bf16.mxu0 0
      %2452 = vmatpush2.bf16.msra.mxu0 0
      %2453 = vmatprep.subr.bf16.mxu0 0
      %2454 = vmatpush2.bf16.msra.mxu0 0
      %2455 = vmatprep.subr.bf16.mxu0 0
      %2456 = vmatpush2.bf16.msra.mxu0 0
      %2457 = vmatprep.subr.bf16.mxu0 0
      %2458 = vmatpush2.bf16.msra.mxu0 0
      %2459 = vmatprep.mubr.bf16.mxu0 0
      %2460 = vmatmul.mubr.bf16.gmra.mxu0 %v2425
      %v2461 = vpop.f32.mrf.mxu0
      %v2462 = vadd.f32 %v2410, %v2461
      %v2463 = vpop.f32.mrf.mxu0
      %v2464 = vpop.f32.mrf.mxu0
      %v2465 = vpop.f32.mrf.mxu0
      %2466 = vdwg.mxu0
      %v2467 = vunpack.c.l.bf16 %v275
      %v2468 = vadd.f32 %v2467, %v2462
      %v2469 = vld [vmem:[%s5] sm:$0x1]
      %v2470 = vld [vmem:[%s6] sm:$0x1]
      %v2471 = vsel %vm299, %v2468, 0.0
      %2472 = vadd.xlane.f32.xlu0 %v2471
      %v2473 = vpop.xlane.xlu0 %2472
      %v2474 = vrcp.pop 32.0
      %v2475 = vmul.f32 %v2473, %v2474
      %v2476 = vsub.f32 %v2468, %v2475
      %v2477 = vmul.f32 %v2476, %v2476
      %v2478 = vsel %vm299, %v2477, 0.0
      %2479 = vadd.xlane.f32.xlu0 %v2478
      %v2480 = vpop.xlane.xlu0 %2479
      %v2481 = vmul.f32 %v2480, %v2474
      %v2482 = vadd.f32 %v2481, 1e-05
      %v2483 = vrsqrt.pop %v2482
      %v2484 = vmul.f32 %v2476, %v2483
      %v2486 = vlaneseq
      %v2487 = vshrl.u32 %v2486, 7
      %v2488 = vsub.s32 0, %v2487
      %v2489 = vrot.slane %v2469, %v2488
      %v2491 = vmul.f32 %v2484, %v2489
      %v2493 = vlaneseq
      %v2494 = vshrl.u32 %v2493, 7
      %v2495 = vsub.s32 0, %v2494
      %v2496 = vrot.slane %v2470, %v2495
      %v2498 = vadd.f32 %v2491, %v2496
      %v2499 = vpack.c.bf16 %v2498, %v2498
      %vm2500 = vcmask 257024
      %2501 = vst.msk [vmem:[%s273] sm:$0xf] %vm2500, %v2499
      %p2502 = scmp.lt.s32.totalorder %s18, 1
      %s2503 = scalar_select %p2502, %s18, 1
      %s2504 = smul.addr %s2503, 4
      %s2505 = scalar_lea.vmem %s7, %s2504
      // Predicated region
      $region49: #{prooformer_forward.13} parent=47 // pred_check
        %p2506 = pneg %p188
      $region50: #{prooformer_forward.13} parent=47 // pred_check_branch
        %2508 = sbr.rel (%p2506) target = $region52
      $region51: #{prooformer_forward.13} parent=47 // pred_region
        _
      $region52: #{prooformer_forward.13} parent=47 // pred_fallthru
        _
    $region48: #{prooformer_forward.13} parent=5 // pred_fallthru
      _
    %p2509 = scmp.le.s32.totalorder 2, %s13
    // Predicated region
    $region53: #{prooformer_forward.13} parent=5 // pred_check
      %p2510 = pneg %p2509
    $region54: #{prooformer_forward.13} parent=5 // pred_check_branch
      %2512 = sbr.rel (%p2510) target = $region56
    $region55: #{prooformer_forward.13} parent=5 // pred_region
      %s2513 = ssub.s32 %s13, 2
      // Predicated region
      $region57: #{prooformer_forward.13} parent=55 // pred_check
        %p2514 = pneg %p194
      $region58: #{prooformer_forward.13} parent=55 // pred_check_branch
        %2516 = sbr.rel (%p2514) target = $region60
      $region59: #{prooformer_forward.13} parent=55 // pred_region
        %p2517 = scmp.lt.s32.totalorder %s19, 1
        %s2518 = scalar_select %p2517, %s19, 1
        %s2519 = smul.addr %s2518, 4
        %s2520 = scalar_lea.vmem %s7, %s2519
      $region60: #{prooformer_forward.13} parent=55 // pred_fallthru
        _
    $region56: #{prooformer_forward.13} parent=5 // pred_fallthru
      _
  $region6: #{prooformer_forward.13} parent=0 // loop_footer
    %s17 = sadd.s32 1, %s13
  $region7: #{prooformer_forward.13} parent=0 // loop_footer_branch
    %12 = sbr.rel target = $region3
  $region8: #{prooformer_forward.13} parent=0 // loop_exit
    _

// kernel: prooformer_forward.17
$region0: #{prooformer_forward.17}
  #allocation0 [shape = 'u32[]', space=smem, size = 0x4, offset = 0x4, fixed_abs, tag = 'smem constant byte address 0x4 - core index']
  #allocation1 [shape = 'u32[144,128]{1,0:T(1,128)}', space=vmem, size = 0x12000, scoped, tag = 'internal scratch']
  %s0 = inlined_call_operand.vmem [shape: bf16[16,32], index: 0, kind: input, shape index: {}]
  %s1 = inlined_call_operand.vmem [shape: f32[1,32], index: 1, kind: input, shape index: {}]
  %s2 = inlined_call_operand.vmem [shape: f32[1,32], index: 2, kind: input, shape index: {}]
  %s3 = inlined_call_operand.vmem [shape: bf16[16,32], index: 3, kind: output, shape index: {}]
  %s4 = sld [smem:[#allocation0]]
  $region45: #{prooformer_forward.17} parent=0
    _
  %s6 = ssub.s32 1, %s4
  %s7 = scalar_select 0, %s6, %s4
  loop: start=0, step=1, limit=4
  $region2: #{prooformer_forward.17} parent=0 // loop_pre_header
    _
  $region3: #{prooformer_forward.17} parent=0 // loop_header
    %s9 = sphi 0, %s13
    %p10 = scmp.ge.s32.totalorder %s9, 4
    %s19 = sphi 0, %s21
    %s22 = sphi 0, %s19
    %s23 = sphi 0, %s22
    %s39 = sphi 0, %s23
    %s43 = sphi 0, %s43
    %s45 = sphi 0, %s43
    %s46 = sphi 0, %s45
    %s60 = sphi 0, %s46
    %s64 = sphi 0, %s64
    %s66 = sphi 0, %s64
    %s67 = sphi 0, %s66
    %s81 = sphi 0, %s67
    %s87 = sphi 0, %s89
    %s90 = sphi 0, %s87
    %s91 = sphi 0, %s90
    %s107 = sphi 0, %s91
  $region4: #{prooformer_forward.17} parent=0 // loop_header_branch
    %12 = sbr.rel (%p10) target = $region8
  $region5: #{prooformer_forward.17} parent=0 // loop_body
    %s14 = ssub.s32 %s9, 1
    %s15 = ssub.s32 %s9, 2
    %s16 = sadd.s32 %s9, 1
    %s17 = ssub.s32 %s9, %s16
    %p18 = scmp.eq.s32.totalorder %s17, 0
    %s20 = sadd.s32 %s19, 1
    %s21 = scalar_select %p18, %s19, %s20
    %p24 = pneg %p18
    %p25 = scmp.eq.s32.totalorder %s9, 1
    %p26 = por %p24, %p25
    %p27 = scmp.ne.s32.totalorder %s19, %s22
    %p28 = scmp.eq.s32.totalorder %s9, 0
    %p29 = por %p27, %p28
    %p30 = scmp.ne.s32.totalorder %s19, %s22
    %p31 = scmp.eq.s32.totalorder %s14, 1
    %p32 = por %p30, %p31
    %p33 = scmp.ne.s32.totalorder %s22, %s23
    %p34 = scmp.eq.s32.totalorder %s14, 0
    %p35 = por %p33, %p34
    %p36 = scmp.ne.s32.totalorder %s22, %s23
    %p37 = scmp.eq.s32.totalorder %s15, 1
    %p38 = por %p36, %p37
    %p40 = scmp.ne.s32.totalorder %s23, %s39
    %p41 = scmp.eq.s32.totalorder %s15, 0
    %p42 = por %p40, %p41
    %s44 = sadd.s32 %s43, 1
    %p47 = scmp.eq.s32.totalorder %s9, 1
    %p48 = scmp.ne.s32.totalorder %s43, %s45
    %p49 = scmp.eq.s32.totalorder %s9, 0
    %p50 = por %p48, %p49
    %p51 = scmp.ne.s32.totalorder %s43, %s45
    %p52 = scmp.eq.s32.totalorder %s14, 1
    %p53 = por %p51, %p52
    %p54 = scmp.ne.s32.totalorder %s45, %s46
    %p55 = scmp.eq.s32.totalorder %s14, 0
    %p56 = por %p54, %p55
    %p57 = scmp.ne.s32.totalorder %s45, %s46
    %p58 = scmp.eq.s32.totalorder %s15, 1
    %p59 = por %p57, %p58
    %p61 = scmp.ne.s32.totalorder %s46, %s60
    %p62 = scmp.eq.s32.totalorder %s15, 0
    %p63 = por %p61, %p62
    %s65 = sadd.s32 %s64, 1
    %p68 = scmp.eq.s32.totalorder %s9, 1
    %p69 = scmp.ne.s32.totalorder %s64, %s66
    %p70 = scmp.eq.s32.totalorder %s9, 0
    %p71 = por %p69, %p70
    %p72 = scmp.ne.s32.totalorder %s64, %s66
    %p73 = scmp.eq.s32.totalorder %s14, 1
    %p74 = por %p72, %p73
    %p75 = scmp.ne.s32.totalorder %s66, %s67
    %p76 = scmp.eq.s32.totalorder %s14, 0
    %p77 = por %p75, %p76
    %p78 = scmp.ne.s32.totalorder %s66, %s67
    %p79 = scmp.eq.s32.totalorder %s15, 1
    %p80 = por %p78, %p79
    %p82 = scmp.ne.s32.totalorder %s67, %s81
    %p83 = scmp.eq.s32.totalorder %s15, 0
    %p84 = por %p82, %p83
    %s85 = ssub.s32 %s9, %s16
    %p86 = scmp.eq.s32.totalorder %s85, 0
    %s88 = sadd.s32 %s87, 1
    %s89 = scalar_select %p86, %s87, %s88
    %p92 = pneg %p86
    %p93 = scmp.eq.s32.totalorder %s9, 1
    %p94 = por %p92, %p93
    %p95 = scmp.ne.s32.totalorder %s87, %s90
    %p96 = scmp.eq.s32.totalorder %s9, 0
    %p97 = por %p95, %p96
    %p98 = scmp.ne.s32.totalorder %s87, %s90
    %p99 = scmp.eq.s32.totalorder %s14, 1
    %p100 = por %p98, %p99
    %p101 = scmp.ne.s32.totalorder %s90, %s91
    %p102 = scmp.eq.s32.totalorder %s14, 0
    %p103 = por %p101, %p102
    %p104 = scmp.ne.s32.totalorder %s90, %s91
    %p105 = scmp.eq.s32.totalorder %s15, 1
    %p106 = por %p104, %p105
    %p108 = scmp.ne.s32.totalorder %s91, %s107
    %p109 = scmp.eq.s32.totalorder %s15, 0
    %p110 = por %p108, %p109
    %p111 = scmp.le.s32.totalorder 1, %s9
    %p112 = scmp.lt.s32.totalorder %s9, 3
    %p113 = pnand %p111, %p112
    %p114 = pneg %p113
    // Predicated region
    $region9: #{prooformer_forward.17} parent=5 // pred_check
      _
    $region10: #{prooformer_forward.17} parent=5 // pred_check_branch
      %116 = sbr.rel (%p113) target = $region12
    $region11: #{prooformer_forward.17} parent=5 // pred_region
      %s117 = ssub.s32 %s9, 1
      // Predicated region
      $region13: #{prooformer_forward.17} parent=11 // pred_check
        %p118 = pneg %p56
      $region14: #{prooformer_forward.17} parent=11 // pred_check_branch
        %120 = sbr.rel (%p118) target = $region16
      $region15: #{prooformer_forward.17} parent=11 // pred_region
        _
      $region16: #{prooformer_forward.17} parent=11 // pred_fallthru
        _
      // Predicated region
      $region17: #{prooformer_forward.17} parent=11 // pred_check
        %p121 = pneg %p77
      $region18: #{prooformer_forward.17} parent=11 // pred_check_branch
        %123 = sbr.rel (%p121) target = $region20
      $region19: #{prooformer_forward.17} parent=11 // pred_region
        _
      $region20: #{prooformer_forward.17} parent=11 // pred_fallthru
        _
    $region12: #{prooformer_forward.17} parent=5 // pred_fallthru
      _
    %p124 = scmp.lt.s32.totalorder %s9, 2
    // Predicated region
    $region21: #{prooformer_forward.17} parent=5 // pred_check
      %p125 = pneg %p124
    $region22: #{prooformer_forward.17} parent=5 // pred_check_branch
      %127 = sbr.rel (%p125) target = $region24
    $region23: #{prooformer_forward.17} parent=5 // pred_region
      // Predicated region
      $region25: #{prooformer_forward.17} parent=23 // pred_check
        %p128 = pneg %p29
      $region26: #{prooformer_forward.17} parent=23 // pred_check_branch
        %130 = sbr.rel (%p128) target = $region28
      $region27: #{prooformer_forward.17} parent=23 // pred_region
        %p131 = scmp.lt.s32.totalorder %s9, 1
        %s132 = scalar_select %p131, %s9, 1
        %s133 = smul.addr %s132, 4
        %s134 = scalar_lea.vmem %s0, %s133
      $region28: #{prooformer_forward.17} parent=23 // pred_fallthru
        _
    $region24: #{prooformer_forward.17} parent=5 // pred_fallthru
      _
    %p135 = scmp.le.s32.totalorder 1, %s9
    %p136 = scmp.lt.s32.totalorder %s9, 3
    %p137 = pnand %p135, %p136
    %p138 = pneg %p137
    // Predicated region
    $region29: #{prooformer_forward.17} parent=5 // pred_check
      _
    $region30: #{prooformer_forward.17} parent=5 // pred_check_branch
      %140 = sbr.rel (%p137) target = $region32
    $region31: #{prooformer_forward.17} parent=5 // pred_region
      %s141 = ssub.s32 %s9, 1
      %p142 = scmp.lt.s32.totalorder %s14, 1
      %s143 = scalar_select %p142, %s14, 1
      %s144 = smul.addr %s143, 4
      %s145 = scalar_lea.vmem %s0, %s144
      %p146 = pneg %p35
      %p147 = pneg %p32
      %p148 = pneg %p56
      %p149 = pneg %p53
      %p150 = pneg %p77
      %p151 = pneg %p74
      %p152 = pneg %p103
      %p153 = pneg %p100
      %p154 = scmp.lt.s32.totalorder %s14, 1
      %s155 = scalar_select %p154, %s14, 1
      %s156 = smul.addr %s155, 4
      %s157 = scalar_lea.vmem %s3, %s156
      %p158 = scmp.lt.s32.totalorder %s14, 1
      %s159 = scalar_select %p158, %s14, 1
      %s160 = smul.addr %s159, 4
      %s161 = scalar_lea.vmem %s0, %s160
      %p162 = scmp.lt.s32.totalorder %s14, 1
      %s163 = scalar_select %p162, %s14, 1
      %s164 = smul.addr %s163, 4
      %s165 = scalar_lea.vmem %s3, %s164
      %v166 = vld [vmem:[%s161] sm:$0xf]
      %v167 = vunpack.c.l.bf16 %v166
      %v168 = vld [vmem:[%s1] sm:$0x1]
      %v169 = vld [vmem:[%s2] sm:$0x1]
      %vm170 = vcmask 261120
      %v171 = vsel %vm170, %v167, 0.0
      %172 = vadd.xlane.f32.xlu0 %v171
      %v173 = vpop.xlane.xlu0 %172
      %v174 = vrcp.pop 32.0
      %v175 = vmul.f32 %v173, %v174
      %v176 = vsub.f32 %v167, %v175
      %v177 = vmul.f32 %v176, %v176
      %v178 = vsel %vm170, %v177, 0.0
      %179 = vadd.xlane.f32.xlu0 %v178
      %v180 = vpop.xlane.xlu0 %179
      %v181 = vmul.f32 %v180, %v174
      %v182 = vadd.f32 %v181, 1e-05
      %v183 = vrsqrt.pop %v182
      %v184 = vmul.f32 %v176, %v183
      %v186 = vlaneseq
      %v187 = vshrl.u32 %v186, 7
      %v188 = vsub.s32 0, %v187
      %v189 = vrot.slane %v168, %v188
      %v191 = vmul.f32 %v184, %v189
      %v193 = vlaneseq
      %v194 = vshrl.u32 %v193, 7
      %v195 = vsub.s32 0, %v194
      %v196 = vrot.slane %v169, %v195
      %v198 = vadd.f32 %v191, %v196
      %v199 = vpack.c.bf16 %v198, %v198
      %vm200 = vcmask 257024
      %201 = vst.msk [vmem:[%s165] sm:$0xf] %vm200, %v199
      %p202 = scmp.lt.s32.totalorder %s14, 1
      %s203 = scalar_select %p202, %s14, 1
      %s204 = smul.addr %s203, 4
      %s205 = scalar_lea.vmem %s3, %s204
      // Predicated region
      $region33: #{prooformer_forward.17} parent=31 // pred_check
        %p206 = pneg %p100
      $region34: #{prooformer_forward.17} parent=31 // pred_check_branch
        %208 = sbr.rel (%p206) target = $region36
      $region35: #{prooformer_forward.17} parent=31 // pred_region
        _
      $region36: #{prooformer_forward.17} parent=31 // pred_fallthru
        _
    $region32: #{prooformer_forward.17} parent=5 // pred_fallthru
      _
    %p209 = scmp.le.s32.totalorder 2, %s9
    // Predicated region
    $region37: #{prooformer_forward.17} parent=5 // pred_check
      %p210 = pneg %p209
    $region38: #{prooformer_forward.17} parent=5 // pred_check_branch
      %212 = sbr.rel (%p210) target = $region40
    $region39: #{prooformer_forward.17} parent=5 // pred_region
      %s213 = ssub.s32 %s9, 2
      // Predicated region
      $region41: #{prooformer_forward.17} parent=39 // pred_check
        %p214 = pneg %p106
      $region42: #{prooformer_forward.17} parent=39 // pred_check_branch
        %216 = sbr.rel (%p214) target = $region44
      $region43: #{prooformer_forward.17} parent=39 // pred_region
        %p217 = scmp.lt.s32.totalorder %s15, 1
        %s218 = scalar_select %p217, %s15, 1
        %s219 = smul.addr %s218, 4
        %s220 = scalar_lea.vmem %s3, %s219
      $region44: #{prooformer_forward.17} parent=39 // pred_fallthru
        _
    $region40: #{prooformer_forward.17} parent=5 // pred_fallthru
      _
  $region6: #{prooformer_forward.17} parent=0 // loop_footer
    %s13 = sadd.s32 1, %s9
  $region7: #{prooformer_forward.17} parent=0 // loop_footer_branch
    %8 = sbr.rel target = $region3
  $region8: #{prooformer_forward.17} parent=0 // loop_exit
    _

// kernel: prooformer_forward.14
$region0: #{prooformer_forward.14}
  #allocation0 [shape = 'u32[]', space=smem, size = 0x4, offset = 0x4, fixed_abs, tag = 'smem constant byte address 0x4 - core index']
  #allocation1 [shape = 'u32[144,128]{1,0:T(1,128)}', space=vmem, size = 0x12000, scoped, tag = 'internal scratch']
  %s0 = inlined_call_operand.vmem [shape: bf16[16,32], index: 0, kind: input, shape index: {}]
  %s1 = inlined_call_operand.vmem [shape: bf16[32,2048], index: 1, kind: input, shape index: {}]
  %s2 = inlined_call_operand.vmem [shape: f32[1,2048], index: 2, kind: input, shape index: {}]
  %s3 = inlined_call_operand.vmem [shape: bf16[2048,32], index: 3, kind: input, shape index: {}]
  %s4 = inlined_call_operand.vmem [shape: f32[1,32], index: 4, kind: input, shape index: {}]
  %s5 = inlined_call_operand.vmem [shape: f32[1,32], index: 5, kind: input, shape index: {}]
  %s6 = inlined_call_operand.vmem [shape: f32[1,32], index: 6, kind: input, shape index: {}]
  %s7 = inlined_call_operand.vmem [shape: bf16[16,32], index: 7, kind: output, shape index: {}]
  %s8 = sld [smem:[#allocation0]]
  $region61: #{prooformer_forward.14} parent=0
    _
  %s10 = ssub.s32 1, %s8
  %s11 = scalar_select 0, %s10, %s8
  loop: start=0, step=1, limit=4
  $region2: #{prooformer_forward.14} parent=0 // loop_pre_header
    _
  $region3: #{prooformer_forward.14} parent=0 // loop_header
    %s13 = sphi 0, %s17
    %p14 = scmp.ge.s32.totalorder %s13, 4
    %s23 = sphi 0, %s25
    %s26 = sphi 0, %s23
    %s27 = sphi 0, %s26
    %s43 = sphi 0, %s27
    %s47 = sphi 0, %s47
    %s49 = sphi 0, %s47
    %s50 = sphi 0, %s49
    %s64 = sphi 0, %s50
    %s68 = sphi 0, %s68
    %s70 = sphi 0, %s68
    %s71 = sphi 0, %s70
    %s85 = sphi 0, %s71
    %s89 = sphi 0, %s89
    %s91 = sphi 0, %s89
    %s92 = sphi 0, %s91
    %s106 = sphi 0, %s92
    %s110 = sphi 0, %s110
    %s112 = sphi 0, %s110
    %s113 = sphi 0, %s112
    %s127 = sphi 0, %s113
    %s131 = sphi 0, %s131
    %s133 = sphi 0, %s131
    %s134 = sphi 0, %s133
    %s148 = sphi 0, %s134
    %s152 = sphi 0, %s152
    %s154 = sphi 0, %s152
    %s155 = sphi 0, %s154
    %s169 = sphi 0, %s155
    %s175 = sphi 0, %s177
    %s178 = sphi 0, %s175
    %s179 = sphi 0, %s178
    %s195 = sphi 0, %s179
  $region4: #{prooformer_forward.14} parent=0 // loop_header_branch
    %16 = sbr.rel (%p14) target = $region8
  $region5: #{prooformer_forward.14} parent=0 // loop_body
    %s18 = ssub.s32 %s13, 1
    %s19 = ssub.s32 %s13, 2
    %s20 = sadd.s32 %s13, 1
    %s21 = ssub.s32 %s13, %s20
    %p22 = scmp.eq.s32.totalorder %s21, 0
    %s24 = sadd.s32 %s23, 1
    %s25 = scalar_select %p22, %s23, %s24
    %p28 = pneg %p22
    %p29 = scmp.eq.s32.totalorder %s13, 1
    %p30 = por %p28, %p29
    %p31 = scmp.ne.s32.totalorder %s23, %s26
    %p32 = scmp.eq.s32.totalorder %s13, 0
    %p33 = por %p31, %p32
    %p34 = scmp.ne.s32.totalorder %s23, %s26
    %p35 = scmp.eq.s32.totalorder %s18, 1
    %p36 = por %p34, %p35
    %p37 = scmp.ne.s32.totalorder %s26, %s27
    %p38 = scmp.eq.s32.totalorder %s18, 0
    %p39 = por %p37, %p38
    %p40 = scmp.ne.s32.totalorder %s26, %s27
    %p41 = scmp.eq.s32.totalorder %s19, 1
    %p42 = por %p40, %p41
    %p44 = scmp.ne.s32.totalorder %s27, %s43
    %p45 = scmp.eq.s32.totalorder %s19, 0
    %p46 = por %p44, %p45
    %s48 = sadd.s32 %s47, 1
    %p51 = scmp.eq.s32.totalorder %s13, 1
    %p52 = scmp.ne.s32.totalorder %s47, %s49
    %p53 = scmp.eq.s32.totalorder %s13, 0
    %p54 = por %p52, %p53
    %p55 = scmp.ne.s32.totalorder %s47, %s49
    %p56 = scmp.eq.s32.totalorder %s18, 1
    %p57 = por %p55, %p56
    %p58 = scmp.ne.s32.totalorder %s49, %s50
    %p59 = scmp.eq.s32.totalorder %s18, 0
    %p60 = por %p58, %p59
    %p61 = scmp.ne.s32.totalorder %s49, %s50
    %p62 = scmp.eq.s32.totalorder %s19, 1
    %p63 = por %p61, %p62
    %p65 = scmp.ne.s32.totalorder %s50, %s64
    %p66 = scmp.eq.s32.totalorder %s19, 0
    %p67 = por %p65, %p66
    %s69 = sadd.s32 %s68, 1
    %p72 = scmp.eq.s32.totalorder %s13, 1
    %p73 = scmp.ne.s32.totalorder %s68, %s70
    %p74 = scmp.eq.s32.totalorder %s13, 0
    %p75 = por %p73, %p74
    %p76 = scmp.ne.s32.totalorder %s68, %s70
    %p77 = scmp.eq.s32.totalorder %s18, 1
    %p78 = por %p76, %p77
    %p79 = scmp.ne.s32.totalorder %s70, %s71
    %p80 = scmp.eq.s32.totalorder %s18, 0
    %p81 = por %p79, %p80
    %p82 = scmp.ne.s32.totalorder %s70, %s71
    %p83 = scmp.eq.s32.totalorder %s19, 1
    %p84 = por %p82, %p83
    %p86 = scmp.ne.s32.totalorder %s71, %s85
    %p87 = scmp.eq.s32.totalorder %s19, 0
    %p88 = por %p86, %p87
    %s90 = sadd.s32 %s89, 1
    %p93 = scmp.eq.s32.totalorder %s13, 1
    %p94 = scmp.ne.s32.totalorder %s89, %s91
    %p95 = scmp.eq.s32.totalorder %s13, 0
    %p96 = por %p94, %p95
    %p97 = scmp.ne.s32.totalorder %s89, %s91
    %p98 = scmp.eq.s32.totalorder %s18, 1
    %p99 = por %p97, %p98
    %p100 = scmp.ne.s32.totalorder %s91, %s92
    %p101 = scmp.eq.s32.totalorder %s18, 0
    %p102 = por %p100, %p101
    %p103 = scmp.ne.s32.totalorder %s91, %s92
    %p104 = scmp.eq.s32.totalorder %s19, 1
    %p105 = por %p103, %p104
    %p107 = scmp.ne.s32.totalorder %s92, %s106
    %p108 = scmp.eq.s32.totalorder %s19, 0
    %p109 = por %p107, %p108
    %s111 = sadd.s32 %s110, 1
    %p114 = scmp.eq.s32.totalorder %s13, 1
    %p115 = scmp.ne.s32.totalorder %s110, %s112
    %p116 = scmp.eq.s32.totalorder %s13, 0
    %p117 = por %p115, %p116
    %p118 = scmp.ne.s32.totalorder %s110, %s112
    %p119 = scmp.eq.s32.totalorder %s18, 1
    %p120 = por %p118, %p119
    %p121 = scmp.ne.s32.totalorder %s112, %s113
    %p122 = scmp.eq.s32.totalorder %s18, 0
    %p123 = por %p121, %p122
    %p124 = scmp.ne.s32.totalorder %s112, %s113
    %p125 = scmp.eq.s32.totalorder %s19, 1
    %p126 = por %p124, %p125
    %p128 = scmp.ne.s32.totalorder %s113, %s127
    %p129 = scmp.eq.s32.totalorder %s19, 0
    %p130 = por %p128, %p129
    %s132 = sadd.s32 %s131, 1
    %p135 = scmp.eq.s32.totalorder %s13, 1
    %p136 = scmp.ne.s32.totalorder %s131, %s133
    %p137 = scmp.eq.s32.totalorder %s13, 0
    %p138 = por %p136, %p137
    %p139 = scmp.ne.s32.totalorder %s131, %s133
    %p140 = scmp.eq.s32.totalorder %s18, 1
    %p141 = por %p139, %p140
    %p142 = scmp.ne.s32.totalorder %s133, %s134
    %p143 = scmp.eq.s32.totalorder %s18, 0
    %p144 = por %p142, %p143
    %p145 = scmp.ne.s32.totalorder %s133, %s134
    %p146 = scmp.eq.s32.totalorder %s19, 1
    %p147 = por %p145, %p146
    %p149 = scmp.ne.s32.totalorder %s134, %s148
    %p150 = scmp.eq.s32.totalorder %s19, 0
    %p151 = por %p149, %p150
    %s153 = sadd.s32 %s152, 1
    %p156 = scmp.eq.s32.totalorder %s13, 1
    %p157 = scmp.ne.s32.totalorder %s152, %s154
    %p158 = scmp.eq.s32.totalorder %s13, 0
    %p159 = por %p157, %p158
    %p160 = scmp.ne.s32.totalorder %s152, %s154
    %p161 = scmp.eq.s32.totalorder %s18, 1
    %p162 = por %p160, %p161
    %p163 = scmp.ne.s32.totalorder %s154, %s155
    %p164 = scmp.eq.s32.totalorder %s18, 0
    %p165 = por %p163, %p164
    %p166 = scmp.ne.s32.totalorder %s154, %s155
    %p167 = scmp.eq.s32.totalorder %s19, 1
    %p168 = por %p166, %p167
    %p170 = scmp.ne.s32.totalorder %s155, %s169
    %p171 = scmp.eq.s32.totalorder %s19, 0
    %p172 = por %p170, %p171
    %s173 = ssub.s32 %s13, %s20
    %p174 = scmp.eq.s32.totalorder %s173, 0
    %s176 = sadd.s32 %s175, 1
    %s177 = scalar_select %p174, %s175, %s176
    %p180 = pneg %p174
    %p181 = scmp.eq.s32.totalorder %s13, 1
    %p182 = por %p180, %p181
    %p183 = scmp.ne.s32.totalorder %s175, %s178
    %p184 = scmp.eq.s32.totalorder %s13, 0
    %p185 = por %p183, %p184
    %p186 = scmp.ne.s32.totalorder %s175, %s178
    %p187 = scmp.eq.s32.totalorder %s18, 1
    %p188 = por %p186, %p187
    %p189 = scmp.ne.s32.totalorder %s178, %s179
    %p190 = scmp.eq.s32.totalorder %s18, 0
    %p191 = por %p189, %p190
    %p192 = scmp.ne.s32.totalorder %s178, %s179
    %p193 = scmp.eq.s32.totalorder %s19, 1
    %p194 = por %p192, %p193
    %p196 = scmp.ne.s32.totalorder %s179, %s195
    %p197 = scmp.eq.s32.totalorder %s19, 0
    %p198 = por %p196, %p197
    %p199 = scmp.le.s32.totalorder 1, %s13
    %p200 = scmp.lt.s32.totalorder %s13, 3
    %p201 = pnand %p199, %p200
    %p202 = pneg %p201
    // Predicated region
    $region9: #{prooformer_forward.14} parent=5 // pred_check
      _
    $region10: #{prooformer_forward.14} parent=5 // pred_check_branch
      %204 = sbr.rel (%p201) target = $region12
    $region11: #{prooformer_forward.14} parent=5 // pred_region
      %s205 = ssub.s32 %s13, 1
      // Predicated region
      $region13: #{prooformer_forward.14} parent=11 // pred_check
        %p206 = pneg %p60
      $region14: #{prooformer_forward.14} parent=11 // pred_check_branch
        %208 = sbr.rel (%p206) target = $region16
      $region15: #{prooformer_forward.14} parent=11 // pred_region
        _
      $region16: #{prooformer_forward.14} parent=11 // pred_fallthru
        _
      // Predicated region
      $region17: #{prooformer_forward.14} parent=11 // pred_check
        %p209 = pneg %p81
      $region18: #{prooformer_forward.14} parent=11 // pred_check_branch
        %211 = sbr.rel (%p209) target = $region20
      $region19: #{prooformer_forward.14} parent=11 // pred_region
        _
      $region20: #{prooformer_forward.14} parent=11 // pred_fallthru
        _
      // Predicated region
      $region21: #{prooformer_forward.14} parent=11 // pred_check
        %p212 = pneg %p102
      $region22: #{prooformer_forward.14} parent=11 // pred_check_branch
        %214 = sbr.rel (%p212) target = $region24
      $region23: #{prooformer_forward.14} parent=11 // pred_region
        _
      $region24: #{prooformer_forward.14} parent=11 // pred_fallthru
        _
      // Predicated region
      $region25: #{prooformer_forward.14} parent=11 // pred_check
        %p215 = pneg %p123
      $region26: #{prooformer_forward.14} parent=11 // pred_check_branch
        %217 = sbr.rel (%p215) target = $region28
      $region27: #{prooformer_forward.14} parent=11 // pred_region
        _
      $region28: #{prooformer_forward.14} parent=11 // pred_fallthru
        _
      // Predicated region
      $region29: #{prooformer_forward.14} parent=11 // pred_check
        %p218 = pneg %p144
      $region30: #{prooformer_forward.14} parent=11 // pred_check_branch
        %220 = sbr.rel (%p218) target = $region32
      $region31: #{prooformer_forward.14} parent=11 // pred_region
        _
      $region32: #{prooformer_forward.14} parent=11 // pred_fallthru
        _
      // Predicated region
      $region33: #{prooformer_forward.14} parent=11 // pred_check
        %p221 = pneg %p165
      $region34: #{prooformer_forward.14} parent=11 // pred_check_branch
        %223 = sbr.rel (%p221) target = $region36
      $region35: #{prooformer_forward.14} parent=11 // pred_region
        _
      $region36: #{prooformer_forward.14} parent=11 // pred_fallthru
        _
    $region12: #{prooformer_forward.14} parent=5 // pred_fallthru
      _
    %p224 = scmp.lt.s32.totalorder %s13, 2
    // Predicated region
    $region37: #{prooformer_forward.14} parent=5 // pred_check
      %p225 = pneg %p224
    $region38: #{prooformer_forward.14} parent=5 // pred_check_branch
      %227 = sbr.rel (%p225) target = $region40
    $region39: #{prooformer_forward.14} parent=5 // pred_region
      // Predicated region
      $region41: #{prooformer_forward.14} parent=39 // pred_check
        %p228 = pneg %p33
      $region42: #{prooformer_forward.14} parent=39 // pred_check_branch
        %230 = sbr.rel (%p228) target = $region44
      $region43: #{prooformer_forward.14} parent=39 // pred_region
        %p231 = scmp.lt.s32.totalorder %s13, 1
        %s232 = scalar_select %p231, %s13, 1
        %s233 = smul.addr %s232, 4
        %s234 = scalar_lea.vmem %s0, %s233
      $region44: #{prooformer_forward.14} parent=39 // pred_fallthru
        _
    $region40: #{prooformer_forward.14} parent=5 // pred_fallthru
      _
    %p235 = scmp.le.s32.totalorder 1, %s13
    %p236 = scmp.lt.s32.totalorder %s13, 3
    %p237 = pnand %p235, %p236
    %p238 = pneg %p237
    // Predicated region
    $region45: #{prooformer_forward.14} parent=5 // pred_check
      _
    $region46: #{prooformer_forward.14} parent=5 // pred_check_branch
      %240 = sbr.rel (%p237) target = $region48
    $region47: #{prooformer_forward.14} parent=5 // pred_region
      %s241 = ssub.s32 %s13, 1
      %p242 = scmp.lt.s32.totalorder %s18, 1
      %s243 = scalar_select %p242, %s18, 1
      %s244 = smul.addr %s243, 4
      %s245 = scalar_lea.vmem %s0, %s244
      %p246 = pneg %p39
      %p247 = pneg %p36
      %p248 = pneg %p60
      %p249 = pneg %p57
      %p250 = pneg %p81
      %p251 = pneg %p78
      %p252 = pneg %p102
      %p253 = pneg %p99
      %p254 = pneg %p123
      %p255 = pneg %p120
      %p256 = pneg %p144
      %p257 = pneg %p141
      %p258 = pneg %p165
      %p259 = pneg %p162
      %p260 = pneg %p191
      %p261 = pneg %p188
      %p262 = scmp.lt.s32.totalorder %s18, 1
      %s263 = scalar_select %p262, %s18, 1
      %s264 = smul.addr %s263, 4
      %s265 = scalar_lea.vmem %s7, %s264
      %p266 = scmp.lt.s32.totalorder %s18, 1
      %s267 = scalar_select %p266, %s18, 1
      %s268 = smul.addr %s267, 4
      %s269 = scalar_lea.vmem %s0, %s268
      %p270 = scmp.lt.s32.totalorder %s18, 1
      %s271 = scalar_select %p270, %s18, 1
      %s272 = smul.addr %s271, 4
      %s273 = scalar_lea.vmem %s7, %s272
      %v275 = vld [vmem:[%s269] sm:$0xf]
      %v276 = vld [vmem:[%s1] sm:$0xff]
      %v277 = vld [vmem:[%s1 + $0x8] sm:$0xff]
      %v278 = vld [vmem:[%s1 + $0x10] sm:$0xff]
      %v279 = vld [vmem:[%s1 + $0x18] sm:$0xff]
      %v280 = vld [vmem:[%s1 + $0x20] sm:$0xff]
      %v281 = vld [vmem:[%s1 + $0x28] sm:$0xff]
      %v282 = vld [vmem:[%s1 + $0x30] sm:$0xff]
      %v283 = vld [vmem:[%s1 + $0x38] sm:$0xff]
      %v284 = vld [vmem:[%s1 + $0x40] sm:$0xff]
      %v285 = vld [vmem:[%s1 + $0x48] sm:$0xff]
      %v286 = vld [vmem:[%s1 + $0x50] sm:$0xff]
      %v287 = vld [vmem:[%s1 + $0x58] sm:$0xff]
      %v288 = vld [vmem:[%s1 + $0x60] sm:$0xff]
      %v289 = vld [vmem:[%s1 + $0x68] sm:$0xff]
      %v290 = vld [vmem:[%s1 + $0x70] sm:$0xff]
      %v291 = vld [vmem:[%s1 + $0x78] sm:$0xff]
      %v292 = vld [vmem:[%s1 + $0x80] sm:$0xff]
      %v293 = vld [vmem:[%s1 + $0x88] sm:$0xff]
      %v294 = vld [vmem:[%s1 + $0x90] sm:$0xff]
      %v295 = vld [vmem:[%s1 + $0x98] sm:$0xff]
      %v296 = vld [vmem:[%s1 + $0xa0] sm:$0xff]
      %v297 = vld [vmem:[%s1 + $0xa8] sm:$0xff]
      %v298 = vld [vmem:[%s1 + $0xb0] sm:$0xff]
      %v299 = vld [vmem:[%s1 + $0xb8] sm:$0xff]
      %v300 = vld [vmem:[%s1 + $0xc0] sm:$0xff]
      %v301 = vld [vmem:[%s1 + $0xc8] sm:$0xff]
      %v302 = vld [vmem:[%s1 + $0xd0] sm:$0xff]
      %v303 = vld [vmem:[%s1 + $0xd8] sm:$0xff]
      %v304 = vld [vmem:[%s1 + $0xe0] sm:$0xff]
      %v305 = vld [vmem:[%s1 + $0xe8] sm:$0xff]
      %v306 = vld [vmem:[%s1 + $0xf0] sm:$0xff]
      %v307 = vld [vmem:[%s1 + $0xf8] sm:$0xff]
      %v308 = vld [vmem:[%s2] sm:$0xff]
      %v309 = vld [vmem:[%s2 + $0x8] sm:$0xff]
      %v312 = vlaneseq
      %v313 = vshrl.u32 %v312, 7
      %v314 = vsub.s32 0, %v313
      %v315 = vrot.slane %v308, %v314
      %v316 = vlaneseq
      %v317 = vshrl.u32 %v316, 7
      %v318 = vsub.s32 1, %v317
      %v319 = vrot.slane %v308, %v318
      %v320 = vlaneseq
      %v321 = vshrl.u32 %v320, 7
      %v322 = vsub.s32 2, %v321
      %v323 = vrot.slane %v308, %v322
      %v324 = vlaneseq
      %v325 = vshrl.u32 %v324, 7
      %v326 = vsub.s32 3, %v325
      %v327 = vrot.slane %v308, %v326
      %v328 = vlaneseq
      %v329 = vshrl.u32 %v328, 7
      %v330 = vsub.s32 4, %v329
      %v331 = vrot.slane %v308, %v330
      %v332 = vlaneseq
      %v333 = vshrl.u32 %v332, 7
      %v334 = vsub.s32 5, %v333
      %v335 = vrot.slane %v308, %v334
      %v336 = vlaneseq
      %v337 = vshrl.u32 %v336, 7
      %v338 = vsub.s32 6, %v337
      %v339 = vrot.slane %v308, %v338
      %v340 = vlaneseq
      %v341 = vshrl.u32 %v340, 7
      %v342 = vsub.s32 7, %v341
      %v343 = vrot.slane %v308, %v342
      %v344 = vlaneseq
      %v345 = vshrl.u32 %v344, 7
      %v346 = vsub.s32 0, %v345
      %v347 = vrot.slane %v309, %v346
      %v348 = vlaneseq
      %v349 = vshrl.u32 %v348, 7
      %v350 = vsub.s32 1, %v349
      %v351 = vrot.slane %v309, %v350
      %v352 = vlaneseq
      %v353 = vshrl.u32 %v352, 7
      %v354 = vsub.s32 2, %v353
      %v355 = vrot.slane %v309, %v354
      %v356 = vlaneseq
      %v357 = vshrl.u32 %v356, 7
      %v358 = vsub.s32 3, %v357
      %v359 = vrot.slane %v309, %v358
      %v360 = vlaneseq
      %v361 = vshrl.u32 %v360, 7
      %v362 = vsub.s32 4, %v361
      %v363 = vrot.slane %v309, %v362
      %v364 = vlaneseq
      %v365 = vshrl.u32 %v364, 7
      %v366 = vsub.s32 5, %v365
      %v367 = vrot.slane %v309, %v366
      %v368 = vlaneseq
      %v369 = vshrl.u32 %v368, 7
      %v370 = vsub.s32 6, %v369
      %v371 = vrot.slane %v309, %v370
      %v372 = vlaneseq
      %v373 = vshrl.u32 %v372, 7
      %v374 = vsub.s32 7, %v373
      %v375 = vrot.slane %v309, %v374
      %v424 = vunpack.c.l.b16 %v276
      %v425 = vunpack.c.h.b16 %v276
      %v426 = vunpack.c.l.b16 %v277
      %v427 = vunpack.c.h.b16 %v277
      %v428 = vunpack.c.l.b16 %v278
      %v429 = vunpack.c.h.b16 %v278
      %v430 = vunpack.c.l.b16 %v279
      %v431 = vunpack.c.h.b16 %v279
      %v432 = vunpack.c.l.b16 %v280
      %v433 = vunpack.c.h.b16 %v280
      %v434 = vunpack.c.l.b16 %v281
      %v435 = vunpack.c.h.b16 %v281
      %v436 = vunpack.c.l.b16 %v282
      %v437 = vunpack.c.h.b16 %v282
      %v438 = vunpack.c.l.b16 %v283
      %v439 = vunpack.c.h.b16 %v283
      %v440 = vunpack.c.l.b16 %v284
      %v441 = vunpack.c.h.b16 %v284
      %v442 = vunpack.c.l.b16 %v285
      %v443 = vunpack.c.h.b16 %v285
      %v444 = vunpack.c.l.b16 %v286
      %v445 = vunpack.c.h.b16 %v286
      %v446 = vunpack.c.l.b16 %v287
      %v447 = vunpack.c.h.b16 %v287
      %v448 = vunpack.c.l.b16 %v288
      %v449 = vunpack.c.h.b16 %v288
      %v450 = vunpack.c.l.b16 %v289
      %v451 = vunpack.c.h.b16 %v289
      %v452 = vunpack.c.l.b16 %v290
      %v453 = vunpack.c.h.b16 %v290
      %v454 = vunpack.c.l.b16 %v291
      %v455 = vunpack.c.h.b16 %v291
      %v456 = vunpack.c.l.b16 %v292
      %v457 = vunpack.c.h.b16 %v292
      %v458 = vunpack.c.l.b16 %v293
      %v459 = vunpack.c.h.b16 %v293
      %v460 = vunpack.c.l.b16 %v294
      %v461 = vunpack.c.h.b16 %v294
      %v462 = vunpack.c.l.b16 %v295
      %v463 = vunpack.c.h.b16 %v295
      %v464 = vunpack.c.l.b16 %v296
      %v465 = vunpack.c.h.b16 %v296
      %v466 = vunpack.c.l.b16 %v297
      %v467 = vunpack.c.h.b16 %v297
      %v468 = vunpack.c.l.b16 %v298
      %v469 = vunpack.c.h.b16 %v298
      %v470 = vunpack.c.l.b16 %v299
      %v471 = vunpack.c.h.b16 %v299
      %v472 = vunpack.c.l.b16 %v300
      %v473 = vunpack.c.h.b16 %v300
      %v474 = vunpack.c.l.b16 %v301
      %v475 = vunpack.c.h.b16 %v301
      %v476 = vunpack.c.l.b16 %v302
      %v477 = vunpack.c.h.b16 %v302
      %v478 = vunpack.c.l.b16 %v303
      %v479 = vunpack.c.h.b16 %v303
      %v480 = vunpack.c.l.b16 %v304
      %v481 = vunpack.c.h.b16 %v304
      %v482 = vunpack.c.l.b16 %v305
      %v483 = vunpack.c.h.b16 %v305
      %v484 = vunpack.c.l.b16 %v306
      %v485 = vunpack.c.h.b16 %v306
      %v486 = vunpack.c.l.b16 %v307
      %v487 = vunpack.c.h.b16 %v307
      %v488 = vpack.c.b16 %v440, %v424
      %v489 = vpack.c.b16 %v441, %v425
      %v490 = vpack.c.b16 %v442, %v426
      %v491 = vpack.c.b16 %v443, %v427
      %v492 = vpack.c.b16 %v444, %v428
      %v493 = vpack.c.b16 %v445, %v429
      %v494 = vpack.c.b16 %v446, %v430
      %v495 = vpack.c.b16 %v447, %v431
      %v496 = vpack.c.b16 %v448, %v432
      %v497 = vpack.c.b16 %v449, %v433
      %v498 = vpack.c.b16 %v450, %v434
      %v499 = vpack.c.b16 %v451, %v435
      %v500 = vpack.c.b16 %v452, %v436
      %v501 = vpack.c.b16 %v453, %v437
      %v502 = vpack.c.b16 %v454, %v438
      %v503 = vpack.c.b16 %v455, %v439
      %v504 = vpack.c.b16 %v472, %v456
      %v505 = vpack.c.b16 %v473, %v457
      %v506 = vpack.c.b16 %v474, %v458
      %v507 = vpack.c.b16 %v475, %v459
      %v508 = vpack.c.b16 %v476, %v460
      %v509 = vpack.c.b16 %v477, %v461
      %v510 = vpack.c.b16 %v478, %v462
      %v511 = vpack.c.b16 %v479, %v463
      %v512 = vpack.c.b16 %v480, %v464
      %v513 = vpack.c.b16 %v481, %v465
      %v514 = vpack.c.b16 %v482, %v466
      %v515 = vpack.c.b16 %v483, %v467
      %v516 = vpack.c.b16 %v484, %v468
      %v517 = vpack.c.b16 %v485, %v469
      %v518 = vpack.c.b16 %v486, %v470
      %v519 = vpack.c.b16 %v487, %v471
      %vm552 = vcmask 261120
      %v554 = vsel %vm552, %v275, 0
      %556 = vmatprep.subr.bf16.mxu0 0
      %557 = vmatpush1.bf16.msra.mxu0 0
      %558 = vmatprep.subr.bf16.mxu0 0
      %559 = vmatpush1.bf16.msra.mxu0 0
      %560 = vmatprep.subr.bf16.mxu0 0
      %561 = vmatpush1.bf16.msra.mxu0 0
      %562 = vmatprep.subr.bf16.mxu0 0
      %563 = vmatpush1.bf16.msra.mxu0 0
      %564 = vmatprep.subr.bf16.mxu0 0
      %565 = vmatpush1.bf16.msra.mxu0 0
      %566 = vmatprep.subr.bf16.mxu0 0
      %567 = vmatpush1.bf16.msra.mxu0 0
      %568 = vmatprep.subr.bf16.mxu0 %v505
      %569 = vmatpush1.bf16.msra.mxu0 %v504
      %570 = vmatprep.subr.bf16.mxu0 %v489
      %571 = vmatpush1.bf16.msra.mxu0 %v488
      %572 = vmatprep.subr.bf16.mxu0 0
      %573 = vmatpush2.bf16.msra.mxu0 0
      %574 = vmatprep.subr.bf16.mxu0 0
      %575 = vmatpush2.bf16.msra.mxu0 0
      %576 = vmatprep.subr.bf16.mxu0 0
      %577 = vmatpush2.bf16.msra.mxu0 0
      %578 = vmatprep.subr.bf16.mxu0 0
      %579 = vmatpush2.bf16.msra.mxu0 0
      %580 = vmatprep.subr.bf16.mxu0 0
      %581 = vmatpush2.bf16.msra.mxu0 0
      %582 = vmatprep.subr.bf16.mxu0 0
      %583 = vmatpush2.bf16.msra.mxu0 0
      %584 = vmatprep.subr.bf16.mxu0 0
      %585 = vmatpush2.bf16.msra.mxu0 0
      %586 = vmatprep.subr.bf16.mxu0 0
      %587 = vmatpush2.bf16.msra.mxu0 0
      %588 = vmatprep.mubr.bf16.mxu0 0
      %589 = vmatmul.mubr.bf16.gmra.mxu0 %v554
      %v590 = vpop.f32.mrf.mxu0
      %v591 = vadd.f32 %v315, %v590
      %v592 = vpop.f32.mrf.mxu0
      %v593 = vadd.f32 %v319, %v592
      %v594 = vpop.f32.mrf.mxu0
      %v595 = vpop.f32.mrf.mxu0
      %596 = vdwg.mxu0
      %597 = vmatprep.subr.bf16.mxu0 0
      %598 = vmatpush1.bf16.msra.mxu0 0
      %599 = vmatprep.subr.bf16.mxu0 0
      %600 = vmatpush1.bf16.msra.mxu0 0
      %601 = vmatprep.subr.bf16.mxu0 0
      %602 = vmatpush1.bf16.msra.mxu0 0
      %603 = vmatprep.subr.bf16.mxu0 0
      %604 = vmatpush1.bf16.msra.mxu0 0
      %605 = vmatprep.subr.bf16.mxu0 0
      %606 = vmatpush1.bf16.msra.mxu0 0
      %607 = vmatprep.subr.bf16.mxu0 0
      %608 = vmatpush1.bf16.msra.mxu0 0
      %609 = vmatprep.subr.bf16.mxu0 %v507
      %610 = vmatpush1.bf16.msra.mxu0 %v506
      %611 = vmatprep.subr.bf16.mxu0 %v491
      %612 = vmatpush1.bf16.msra.mxu0 %v490
      %613 = vmatprep.subr.bf16.mxu0 0
      %614 = vmatpush2.bf16.msra.mxu0 0
      %615 = vmatprep.subr.bf16.mxu0 0
      %616 = vmatpush2.bf16.msra.mxu0 0
      %617 = vmatprep.subr.bf16.mxu0 0
      %618 = vmatpush2.bf16.msra.mxu0 0
      %619 = vmatprep.subr.bf16.mxu0 0
      %620 = vmatpush2.bf16.msra.mxu0 0
      %621 = vmatprep.subr.bf16.mxu0 0
      %622 = vmatpush2.bf16.msra.mxu0 0
      %623 = vmatprep.subr.bf16.mxu0 0
      %624 = vmatpush2.bf16.msra.mxu0 0
      %625 = vmatprep.subr.bf16.mxu0 0
      %626 = vmatpush2.bf16.msra.mxu0 0
      %627 = vmatprep.subr.bf16.mxu0 0
      %628 = vmatpush2.bf16.msra.mxu0 0
      %629 = vmatprep.mubr.bf16.mxu0 0
      %630 = vmatmul.mubr.bf16.gmra.mxu0 %v554
      %v631 = vpop.f32.mrf.mxu0
      %v632 = vadd.f32 %v323, %v631
      %v633 = vpop.f32.mrf.mxu0
      %v634 = vadd.f32 %v327, %v633
      %v635 = vpop.f32.mrf.mxu0
      %v636 = vpop.f32.mrf.mxu0
      %637 = vdwg.mxu0
      %638 = vmatprep.subr.bf16.mxu0 0
      %639 = vmatpush1.bf16.msra.mxu0 0
      %640 = vmatprep.subr.bf16.mxu0 0
      %641 = vmatpush1.bf16.msra.mxu0 0
      %642 = vmatprep.subr.bf16.mxu0 0
      %643 = vmatpush1.bf16.msra.mxu0 0
      %644 = vmatprep.subr.bf16.mxu0 0
      %645 = vmatpush1.bf16.msra.mxu0 0
      %646 = vmatprep.subr.bf16.mxu0 0
      %647 = vmatpush1.bf16.msra.mxu0 0
      %648 = vmatprep.subr.bf16.mxu0 0
      %649 = vmatpush1.bf16.msra.mxu0 0
      %650 = vmatprep.subr.bf16.mxu0 %v509
      %651 = vmatpush1.bf16.msra.mxu0 %v508
      %652 = vmatprep.subr.bf16.mxu0 %v493
      %653 = vmatpush1.bf16.msra.mxu0 %v492
      %654 = vmatprep.subr.bf16.mxu0 0
      %655 = vmatpush2.bf16.msra.mxu0 0
      %656 = vmatprep.subr.bf16.mxu0 0
      %657 = vmatpush2.bf16.msra.mxu0 0
      %658 = vmatprep.subr.bf16.mxu0 0
      %659 = vmatpush2.bf16.msra.mxu0 0
      %660 = vmatprep.subr.bf16.mxu0 0
      %661 = vmatpush2.bf16.msra.mxu0 0
      %662 = vmatprep.subr.bf16.mxu0 0
      %663 = vmatpush2.bf16.msra.mxu0 0
      %664 = vmatprep.subr.bf16.mxu0 0
      %665 = vmatpush2.bf16.msra.mxu0 0
      %666 = vmatprep.subr.bf16.mxu0 0
      %667 = vmatpush2.bf16.msra.mxu0 0
      %668 = vmatprep.subr.bf16.mxu0 0
      %669 = vmatpush2.bf16.msra.mxu0 0
      %670 = vmatprep.mubr.bf16.mxu0 0
      %671 = vmatmul.mubr.bf16.gmra.mxu0 %v554
      %v672 = vpop.f32.mrf.mxu0
      %v673 = vadd.f32 %v331, %v672
      %v674 = vpop.f32.mrf.mxu0
      %v675 = vadd.f32 %v335, %v674
      %v676 = vpop.f32.mrf.mxu0
      %v677 = vpop.f32.mrf.mxu0
      %678 = vdwg.mxu0
      %679 = vmatprep.subr.bf16.mxu0 0
      %680 = vmatpush1.bf16.msra.mxu0 0
      %681 = vmatprep.subr.bf16.mxu0 0
      %682 = vmatpush1.bf16.msra.mxu0 0
      %683 = vmatprep.subr.bf16.mxu0 0
      %684 = vmatpush1.bf16.msra.mxu0 0
      %685 = vmatprep.subr.bf16.mxu0 0
      %686 = vmatpush1.bf16.msra.mxu0 0
      %687 = vmatprep.subr.bf16.mxu0 0
      %688 = vmatpush1.bf16.msra.mxu0 0
      %689 = vmatprep.subr.bf16.mxu0 0
      %690 = vmatpush1.bf16.msra.mxu0 0
      %691 = vmatprep.subr.bf16.mxu0 %v511
      %692 = vmatpush1.bf16.msra.mxu0 %v510
      %693 = vmatprep.subr.bf16.mxu0 %v495
      %694 = vmatpush1.bf16.msra.mxu0 %v494
      %695 = vmatprep.subr.bf16.mxu0 0
      %696 = vmatpush2.bf16.msra.mxu0 0
      %697 = vmatprep.subr.bf16.mxu0 0
      %698 = vmatpush2.bf16.msra.mxu0 0
      %699 = vmatprep.subr.bf16.mxu0 0
      %700 = vmatpush2.bf16.msra.mxu0 0
      %701 = vmatprep.subr.bf16.mxu0 0
      %702 = vmatpush2.bf16.msra.mxu0 0
      %703 = vmatprep.subr.bf16.mxu0 0
      %704 = vmatpush2.bf16.msra.mxu0 0
      %705 = vmatprep.subr.bf16.mxu0 0
      %706 = vmatpush2.bf16.msra.mxu0 0
      %707 = vmatprep.subr.bf16.mxu0 0
      %708 = vmatpush2.bf16.msra.mxu0 0
      %709 = vmatprep.subr.bf16.mxu0 0
      %710 = vmatpush2.bf16.msra.mxu0 0
      %711 = vmatprep.mubr.bf16.mxu0 0
      %712 = vmatmul.mubr.bf16.gmra.mxu0 %v554
      %v713 = vpop.f32.mrf.mxu0
      %v714 = vadd.f32 %v339, %v713
      %v715 = vpop.f32.mrf.mxu0
      %v716 = vadd.f32 %v343, %v715
      %v717 = vpop.f32.mrf.mxu0
      %v718 = vpop.f32.mrf.mxu0
      %719 = vdwg.mxu0
      %720 = vmatprep.subr.bf16.mxu0 0
      %721 = vmatpush1.bf16.msra.mxu0 0
      %722 = vmatprep.subr.bf16.mxu0 0
      %723 = vmatpush1.bf16.msra.mxu0 0
      %724 = vmatprep.subr.bf16.mxu0 0
      %725 = vmatpush1.bf16.msra.mxu0 0
      %726 = vmatprep.subr.bf16.mxu0 0
      %727 = vmatpush1.bf16.msra.mxu0 0
      %728 = vmatprep.subr.bf16.mxu0 0
      %729 = vmatpush1.bf16.msra.mxu0 0
      %730 = vmatprep.subr.bf16.mxu0 0
      %731 = vmatpush1.bf16.msra.mxu0 0
      %732 = vmatprep.subr.bf16.mxu0 %v513
      %733 = vmatpush1.bf16.msra.mxu0 %v512
      %734 = vmatprep.subr.bf16.mxu0 %v497
      %735 = vmatpush1.bf16.msra.mxu0 %v496
      %736 = vmatprep.subr.bf16.mxu0 0
      %737 = vmatpush2.bf16.msra.mxu0 0
      %738 = vmatprep.subr.bf16.mxu0 0
      %739 = vmatpush2.bf16.msra.mxu0 0
      %740 = vmatprep.subr.bf16.mxu0 0
      %741 = vmatpush2.bf16.msra.mxu0 0
      %742 = vmatprep.subr.bf16.mxu0 0
      %743 = vmatpush2.bf16.msra.mxu0 0
      %744 = vmatprep.subr.bf16.mxu0 0
      %745 = vmatpush2.bf16.msra.mxu0 0
      %746 = vmatprep.subr.bf16.mxu0 0
      %747 = vmatpush2.bf16.msra.mxu0 0
      %748 = vmatprep.subr.bf16.mxu0 0
      %749 = vmatpush2.bf16.msra.mxu0 0
      %750 = vmatprep.subr.bf16.mxu0 0
      %751 = vmatpush2.bf16.msra.mxu0 0
      %752 = vmatprep.mubr.bf16.mxu0 0
      %753 = vmatmul.mubr.bf16.gmra.mxu0 %v554
      %v754 = vpop.f32.mrf.mxu0
      %v755 = vadd.f32 %v347, %v754
      %v756 = vpop.f32.mrf.mxu0
      %v757 = vadd.f32 %v351, %v756
      %v758 = vpop.f32.mrf.mxu0
      %v759 = vpop.f32.mrf.mxu0
      %760 = vdwg.mxu0
      %761 = vmatprep.subr.bf16.mxu0 0
      %762 = vmatpush1.bf16.msra.mxu0 0
      %763 = vmatprep.subr.bf16.mxu0 0
      %764 = vmatpush1.bf16.msra.mxu0 0
      %765 = vmatprep.subr.bf16.mxu0 0
      %766 = vmatpush1.bf16.msra.mxu0 0
      %767 = vmatprep.subr.bf16.mxu0 0
      %768 = vmatpush1.bf16.msra.mxu0 0
      %769 = vmatprep.subr.bf16.mxu0 0
      %770 = vmatpush1.bf16.msra.mxu0 0
      %771 = vmatprep.subr.bf16.mxu0 0
      %772 = vmatpush1.bf16.msra.mxu0 0
      %773 = vmatprep.subr.bf16.mxu0 %v515
      %774 = vmatpush1.bf16.msra.mxu0 %v514
      %775 = vmatprep.subr.bf16.mxu0 %v499
      %776 = vmatpush1.bf16.msra.mxu0 %v498
      %777 = vmatprep.subr.bf16.mxu0 0
      %778 = vmatpush2.bf16.msra.mxu0 0
      %779 = vmatprep.subr.bf16.mxu0 0
      %780 = vmatpush2.bf16.msra.mxu0 0
      %781 = vmatprep.subr.bf16.mxu0 0
      %782 = vmatpush2.bf16.msra.mxu0 0
      %783 = vmatprep.subr.bf16.mxu0 0
      %784 = vmatpush2.bf16.msra.mxu0 0
      %785 = vmatprep.subr.bf16.mxu0 0
      %786 = vmatpush2.bf16.msra.mxu0 0
      %787 = vmatprep.subr.bf16.mxu0 0
      %788 = vmatpush2.bf16.msra.mxu0 0
      %789 = vmatprep.subr.bf16.mxu0 0
      %790 = vmatpush2.bf16.msra.mxu0 0
      %791 = vmatprep.subr.bf16.mxu0 0
      %792 = vmatpush2.bf16.msra.mxu0 0
      %793 = vmatprep.mubr.bf16.mxu0 0
      %794 = vmatmul.mubr.bf16.gmra.mxu0 %v554
      %v795 = vpop.f32.mrf.mxu0
      %v796 = vadd.f32 %v355, %v795
      %v797 = vpop.f32.mrf.mxu0
      %v798 = vadd.f32 %v359, %v797
      %v799 = vpop.f32.mrf.mxu0
      %v800 = vpop.f32.mrf.mxu0
      %801 = vdwg.mxu0
      %802 = vmatprep.subr.bf16.mxu0 0
      %803 = vmatpush1.bf16.msra.mxu0 0
      %804 = vmatprep.subr.bf16.mxu0 0
      %805 = vmatpush1.bf16.msra.mxu0 0
      %806 = vmatprep.subr.bf16.mxu0 0
      %807 = vmatpush1.bf16.msra.mxu0 0
      %808 = vmatprep.subr.bf16.mxu0 0
      %809 = vmatpush1.bf16.msra.mxu0 0
      %810 = vmatprep.subr.bf16.mxu0 0
      %811 = vmatpush1.bf16.msra.mxu0 0
      %812 = vmatprep.subr.bf16.mxu0 0
      %813 = vmatpush1.bf16.msra.mxu0 0
      %814 = vmatprep.subr.bf16.mxu0 %v517
      %815 = vmatpush1.bf16.msra.mxu0 %v516
      %816 = vmatprep.subr.bf16.mxu0 %v501
      %817 = vmatpush1.bf16.msra.mxu0 %v500
      %818 = vmatprep.subr.bf16.mxu0 0
      %819 = vmatpush2.bf16.msra.mxu0 0
      %820 = vmatprep.subr.bf16.mxu0 0
      %821 = vmatpush2.bf16.msra.mxu0 0
      %822 = vmatprep.subr.bf16.mxu0 0
      %823 = vmatpush2.bf16.msra.mxu0 0
      %824 = vmatprep.subr.bf16.mxu0 0
      %825 = vmatpush2.bf16.msra.mxu0 0
      %826 = vmatprep.subr.bf16.mxu0 0
      %827 = vmatpush2.bf16.msra.mxu0 0
      %828 = vmatprep.subr.bf16.mxu0 0
      %829 = vmatpush2.bf16.msra.mxu0 0
      %830 = vmatprep.subr.bf16.mxu0 0
      %831 = vmatpush2.bf16.msra.mxu0 0
      %832 = vmatprep.subr.bf16.mxu0 0
      %833 = vmatpush2.bf16.msra.mxu0 0
      %834 = vmatprep.mubr.bf16.mxu0 0
      %835 = vmatmul.mubr.bf16.gmra.mxu0 %v554
      %v836 = vpop.f32.mrf.mxu0
      %v837 = vadd.f32 %v363, %v836
      %v838 = vpop.f32.mrf.mxu0
      %v839 = vadd.f32 %v367, %v838
      %v840 = vpop.f32.mrf.mxu0
      %v841 = vpop.f32.mrf.mxu0
      %842 = vdwg.mxu0
      %843 = vmatprep.subr.bf16.mxu0 0
      %844 = vmatpush1.bf16.msra.mxu0 0
      %845 = vmatprep.subr.bf16.mxu0 0
      %846 = vmatpush1.bf16.msra.mxu0 0
      %847 = vmatprep.subr.bf16.mxu0 0
      %848 = vmatpush1.bf16.msra.mxu0 0
      %849 = vmatprep.subr.bf16.mxu0 0
      %850 = vmatpush1.bf16.msra.mxu0 0
      %851 = vmatprep.subr.bf16.mxu0 0
      %852 = vmatpush1.bf16.msra.mxu0 0
      %853 = vmatprep.subr.bf16.mxu0 0
      %854 = vmatpush1.bf16.msra.mxu0 0
      %855 = vmatprep.subr.bf16.mxu0 %v519
      %856 = vmatpush1.bf16.msra.mxu0 %v518
      %857 = vmatprep.subr.bf16.mxu0 %v503
      %858 = vmatpush1.bf16.msra.mxu0 %v502
      %859 = vmatprep.subr.bf16.mxu0 0
      %860 = vmatpush2.bf16.msra.mxu0 0
      %861 = vmatprep.subr.bf16.mxu0 0
      %862 = vmatpush2.bf16.msra.mxu0 0
      %863 = vmatprep.subr.bf16.mxu0 0
      %864 = vmatpush2.bf16.msra.mxu0 0
      %865 = vmatprep.subr.bf16.mxu0 0
      %866 = vmatpush2.bf16.msra.mxu0 0
      %867 = vmatprep.subr.bf16.mxu0 0
      %868 = vmatpush2.bf16.msra.mxu0 0
      %869 = vmatprep.subr.bf16.mxu0 0
      %870 = vmatpush2.bf16.msra.mxu0 0
      %871 = vmatprep.subr.bf16.mxu0 0
      %872 = vmatpush2.bf16.msra.mxu0 0
      %873 = vmatprep.subr.bf16.mxu0 0
      %874 = vmatpush2.bf16.msra.mxu0 0
      %875 = vmatprep.mubr.bf16.mxu0 0
      %876 = vmatmul.mubr.bf16.gmra.mxu0 %v554
      %v877 = vpop.f32.mrf.mxu0
      %v878 = vadd.f32 %v371, %v877
      %v879 = vpop.f32.mrf.mxu0
      %v880 = vadd.f32 %v375, %v879
      %v881 = vpop.f32.mrf.mxu0
      %v882 = vpop.f32.mrf.mxu0
      %883 = vdwg.mxu0
      %v884 = vmax.f32 %v591, 0.0
      %v885 = vmax.f32 %v593, 0.0
      %v886 = vmax.f32 %v632, 0.0
      %v887 = vmax.f32 %v634, 0.0
      %v888 = vmax.f32 %v673, 0.0
      %v889 = vmax.f32 %v675, 0.0
      %v890 = vmax.f32 %v714, 0.0
      %v891 = vmax.f32 %v716, 0.0
      %v892 = vmax.f32 %v755, 0.0
      %v893 = vmax.f32 %v757, 0.0
      %v894 = vmax.f32 %v796, 0.0
      %v895 = vmax.f32 %v798, 0.0
      %v896 = vmax.f32 %v837, 0.0
      %v897 = vmax.f32 %v839, 0.0
      %v898 = vmax.f32 %v878, 0.0
      %v899 = vmax.f32 %v880, 0.0
      %v900 = vpack.c.bf16 %v884, %v884
      %v901 = vpack.c.bf16 %v885, %v885
      %v902 = vpack.c.bf16 %v886, %v886
      %v903 = vpack.c.bf16 %v887, %v887
      %v904 = vpack.c.bf16 %v888, %v888
      %v905 = vpack.c.bf16 %v889, %v889
      %v906 = vpack.c.bf16 %v890, %v890
      %v907 = vpack.c.bf16 %v891, %v891
      %v908 = vpack.c.bf16 %v892, %v892
      %v909 = vpack.c.bf16 %v893, %v893
      %v910 = vpack.c.bf16 %v894, %v894
      %v911 = vpack.c.bf16 %v895, %v895
      %v912 = vpack.c.bf16 %v896, %v896
      %v913 = vpack.c.bf16 %v897, %v897
      %v914 = vpack.c.bf16 %v898, %v898
      %v915 = vpack.c.bf16 %v899, %v899
      %v916 = vld [vmem:[%s3] sm:$0xf]
      %v917 = vld [vmem:[%s3 + $0x4] sm:$0xf]
      %v918 = vld [vmem:[%s3 + $0x8] sm:$0xf]
      %v919 = vld [vmem:[%s3 + $0xc] sm:$0xf]
      %v920 = vld [vmem:[%s3 + $0x10] sm:$0xf]
      %v921 = vld [vmem:[%s3 + $0x14] sm:$0xf]
      %v922 = vld [vmem:[%s3 + $0x18] sm:$0xf]
      %v923 = vld [vmem:[%s3 + $0x1c] sm:$0xf]
      %v924 = vld [vmem:[%s3 + $0x20] sm:$0xf]
      %v925 = vld [vmem:[%s3 + $0x24] sm:$0xf]
      %v926 = vld [vmem:[%s3 + $0x28] sm:$0xf]
      %v927 = vld [vmem:[%s3 + $0x2c] sm:$0xf]
      %v928 = vld [vmem:[%s3 + $0x30] sm:$0xf]
      %v929 = vld [vmem:[%s3 + $0x34] sm:$0xf]
      %v930 = vld [vmem:[%s3 + $0x38] sm:$0xf]
      %v931 = vld [vmem:[%s3 + $0x3c] sm:$0xf]
      %v932 = vld [vmem:[%s3 + $0x40] sm:$0xf]
      %v933 = vld [vmem:[%s3 + $0x44] sm:$0xf]
      %v934 = vld [vmem:[%s3 + $0x48] sm:$0xf]
      %v935 = vld [vmem:[%s3 + $0x4c] sm:$0xf]
      %v936 = vld [vmem:[%s3 + $0x50] sm:$0xf]
      %v937 = vld [vmem:[%s3 + $0x54] sm:$0xf]
      %v938 = vld [vmem:[%s3 + $0x58] sm:$0xf]
      %v939 = vld [vmem:[%s3 + $0x5c] sm:$0xf]
      %v940 = vld [vmem:[%s3 + $0x60] sm:$0xf]
      %v941 = vld [vmem:[%s3 + $0x64] sm:$0xf]
      %v942 = vld [vmem:[%s3 + $0x68] sm:$0xf]
      %v943 = vld [vmem:[%s3 + $0x6c] sm:$0xf]
      %v944 = vld [vmem:[%s3 + $0x70] sm:$0xf]
      %v945 = vld [vmem:[%s3 + $0x74] sm:$0xf]
      %v946 = vld [vmem:[%s3 + $0x78] sm:$0xf]
      %v947 = vld [vmem:[%s3 + $0x7c] sm:$0xf]
      %v948 = vld [vmem:[%s3 + $0x80] sm:$0xf]
      %v949 = vld [vmem:[%s3 + $0x84] sm:$0xf]
      %v950 = vld [vmem:[%s3 + $0x88] sm:$0xf]
      %v951 = vld [vmem:[%s3 + $0x8c] sm:$0xf]
      %v952 = vld [vmem:[%s3 + $0x90] sm:$0xf]
      %v953 = vld [vmem:[%s3 + $0x94] sm:$0xf]
      %v954 = vld [vmem:[%s3 + $0x98] sm:$0xf]
      %v955 = vld [vmem:[%s3 + $0x9c] sm:$0xf]
      %v956 = vld [vmem:[%s3 + $0xa0] sm:$0xf]
      %v957 = vld [vmem:[%s3 + $0xa4] sm:$0xf]
      %v958 = vld [vmem:[%s3 + $0xa8] sm:$0xf]
      %v959 = vld [vmem:[%s3 + $0xac] sm:$0xf]
      %v960 = vld [vmem:[%s3 + $0xb0] sm:$0xf]
      %v961 = vld [vmem:[%s3 + $0xb4] sm:$0xf]
      %v962 = vld [vmem:[%s3 + $0xb8] sm:$0xf]
      %v963 = vld [vmem:[%s3 + $0xbc] sm:$0xf]
      %v964 = vld [vmem:[%s3 + $0xc0] sm:$0xf]
      %v965 = vld [vmem:[%s3 + $0xc4] sm:$0xf]
      %v966 = vld [vmem:[%s3 + $0xc8] sm:$0xf]
      %v967 = vld [vmem:[%s3 + $0xcc] sm:$0xf]
      %v968 = vld [vmem:[%s3 + $0xd0] sm:$0xf]
      %v969 = vld [vmem:[%s3 + $0xd4] sm:$0xf]
      %v970 = vld [vmem:[%s3 + $0xd8] sm:$0xf]
      %v971 = vld [vmem:[%s3 + $0xdc] sm:$0xf]
      %v972 = vld [vmem:[%s3 + $0xe0] sm:$0xf]
      %v973 = vld [vmem:[%s3 + $0xe4] sm:$0xf]
      %v974 = vld [vmem:[%s3 + $0xe8] sm:$0xf]
      %v975 = vld [vmem:[%s3 + $0xec] sm:$0xf]
      %v976 = vld [vmem:[%s3 + $0xf0] sm:$0xf]
      %v977 = vld [vmem:[%s3 + $0xf4] sm:$0xf]
      %v978 = vld [vmem:[%s3 + $0xf8] sm:$0xf]
      %v979 = vld [vmem:[%s3 + $0xfc] sm:$0xf]
      %v980 = vld [vmem:[%s3 + $0x100] sm:$0xf]
      %v981 = vld [vmem:[%s3 + $0x104] sm:$0xf]
      %v982 = vld [vmem:[%s3 + $0x108] sm:$0xf]
      %v983 = vld [vmem:[%s3 + $0x10c] sm:$0xf]
      %v984 = vld [vmem:[%s3 + $0x110] sm:$0xf]
      %v985 = vld [vmem:[%s3 + $0x114] sm:$0xf]
      %v986 = vld [vmem:[%s3 + $0x118] sm:$0xf]
      %v987 = vld [vmem:[%s3 + $0x11c] sm:$0xf]
      %v988 = vld [vmem:[%s3 + $0x120] sm:$0xf]
      %v989 = vld [vmem:[%s3 + $0x124] sm:$0xf]
      %v990 = vld [vmem:[%s3 + $0x128] sm:$0xf]
      %v991 = vld [vmem:[%s3 + $0x12c] sm:$0xf]
      %v992 = vld [vmem:[%s3 + $0x130] sm:$0xf]
      %v993 = vld [vmem:[%s3 + $0x134] sm:$0xf]
      %v994 = vld [vmem:[%s3 + $0x138] sm:$0xf]
      %v995 = vld [vmem:[%s3 + $0x13c] sm:$0xf]
      %v996 = vld [vmem:[%s3 + $0x140] sm:$0xf]
      %v997 = vld [vmem:[%s3 + $0x144] sm:$0xf]
      %v998 = vld [vmem:[%s3 + $0x148] sm:$0xf]
      %v999 = vld [vmem:[%s3 + $0x14c] sm:$0xf]
      %v1000 = vld [vmem:[%s3 + $0x150] sm:$0xf]
      %v1001 = vld [vmem:[%s3 + $0x154] sm:$0xf]
      %v1002 = vld [vmem:[%s3 + $0x158] sm:$0xf]
      %v1003 = vld [vmem:[%s3 + $0x15c] sm:$0xf]
      %v1004 = vld [vmem:[%s3 + $0x160] sm:$0xf]
      %v1005 = vld [vmem:[%s3 + $0x164] sm:$0xf]
      %v1006 = vld [vmem:[%s3 + $0x168] sm:$0xf]
      %v1007 = vld [vmem:[%s3 + $0x16c] sm:$0xf]
      %v1008 = vld [vmem:[%s3 + $0x170] sm:$0xf]
      %v1009 = vld [vmem:[%s3 + $0x174] sm:$0xf]
      %v1010 = vld [vmem:[%s3 + $0x178] sm:$0xf]
      %v1011 = vld [vmem:[%s3 + $0x17c] sm:$0xf]
      %v1012 = vld [vmem:[%s3 + $0x180] sm:$0xf]
      %v1013 = vld [vmem:[%s3 + $0x184] sm:$0xf]
      %v1014 = vld [vmem:[%s3 + $0x188] sm:$0xf]
      %v1015 = vld [vmem:[%s3 + $0x18c] sm:$0xf]
      %v1016 = vld [vmem:[%s3 + $0x190] sm:$0xf]
      %v1017 = vld [vmem:[%s3 + $0x194] sm:$0xf]
      %v1018 = vld [vmem:[%s3 + $0x198] sm:$0xf]
      %v1019 = vld [vmem:[%s3 + $0x19c] sm:$0xf]
      %v1020 = vld [vmem:[%s3 + $0x1a0] sm:$0xf]
      %v1021 = vld [vmem:[%s3 + $0x1a4] sm:$0xf]
      %v1022 = vld [vmem:[%s3 + $0x1a8] sm:$0xf]
      %v1023 = vld [vmem:[%s3 + $0x1ac] sm:$0xf]
      %v1024 = vld [vmem:[%s3 + $0x1b0] sm:$0xf]
      %v1025 = vld [vmem:[%s3 + $0x1b4] sm:$0xf]
      %v1026 = vld [vmem:[%s3 + $0x1b8] sm:$0xf]
      %v1027 = vld [vmem:[%s3 + $0x1bc] sm:$0xf]
      %v1028 = vld [vmem:[%s3 + $0x1c0] sm:$0xf]
      %v1029 = vld [vmem:[%s3 + $0x1c4] sm:$0xf]
      %v1030 = vld [vmem:[%s3 + $0x1c8] sm:$0xf]
      %v1031 = vld [vmem:[%s3 + $0x1cc] sm:$0xf]
      %v1032 = vld [vmem:[%s3 + $0x1d0] sm:$0xf]
      %v1033 = vld [vmem:[%s3 + $0x1d4] sm:$0xf]
      %v1034 = vld [vmem:[%s3 + $0x1d8] sm:$0xf]
      %v1035 = vld [vmem:[%s3 + $0x1dc] sm:$0xf]
      %v1036 = vld [vmem:[%s3 + $0x1e0] sm:$0xf]
      %v1037 = vld [vmem:[%s3 + $0x1e4] sm:$0xf]
      %v1038 = vld [vmem:[%s3 + $0x1e8] sm:$0xf]
      %v1039 = vld [vmem:[%s3 + $0x1ec] sm:$0xf]
      %v1040 = vld [vmem:[%s3 + $0x1f0] sm:$0xf]
      %v1041 = vld [vmem:[%s3 + $0x1f4] sm:$0xf]
      %v1042 = vld [vmem:[%s3 + $0x1f8] sm:$0xf]
      %v1043 = vld [vmem:[%s3 + $0x1fc] sm:$0xf]
      %v1044 = vld [vmem:[%s3 + $0x200] sm:$0xf]
      %v1045 = vld [vmem:[%s3 + $0x204] sm:$0xf]
      %v1046 = vld [vmem:[%s3 + $0x208] sm:$0xf]
      %v1047 = vld [vmem:[%s3 + $0x20c] sm:$0xf]
      %v1048 = vld [vmem:[%s3 + $0x210] sm:$0xf]
      %v1049 = vld [vmem:[%s3 + $0x214] sm:$0xf]
      %v1050 = vld [vmem:[%s3 + $0x218] sm:$0xf]
      %v1051 = vld [vmem:[%s3 + $0x21c] sm:$0xf]
      %v1052 = vld [vmem:[%s3 + $0x220] sm:$0xf]
      %v1053 = vld [vmem:[%s3 + $0x224] sm:$0xf]
      %v1054 = vld [vmem:[%s3 + $0x228] sm:$0xf]
      %v1055 = vld [vmem:[%s3 + $0x22c] sm:$0xf]
      %v1056 = vld [vmem:[%s3 + $0x230] sm:$0xf]
      %v1057 = vld [vmem:[%s3 + $0x234] sm:$0xf]
      %v1058 = vld [vmem:[%s3 + $0x238] sm:$0xf]
      %v1059 = vld [vmem:[%s3 + $0x23c] sm:$0xf]
      %v1060 = vld [vmem:[%s3 + $0x240] sm:$0xf]
      %v1061 = vld [vmem:[%s3 + $0x244] sm:$0xf]
      %v1062 = vld [vmem:[%s3 + $0x248] sm:$0xf]
      %v1063 = vld [vmem:[%s3 + $0x24c] sm:$0xf]
      %v1064 = vld [vmem:[%s3 + $0x250] sm:$0xf]
      %v1065 = vld [vmem:[%s3 + $0x254] sm:$0xf]
      %v1066 = vld [vmem:[%s3 + $0x258] sm:$0xf]
      %v1067 = vld [vmem:[%s3 + $0x25c] sm:$0xf]
      %v1068 = vld [vmem:[%s3 + $0x260] sm:$0xf]
      %v1069 = vld [vmem:[%s3 + $0x264] sm:$0xf]
      %v1070 = vld [vmem:[%s3 + $0x268] sm:$0xf]
      %v1071 = vld [vmem:[%s3 + $0x26c] sm:$0xf]
      %v1072 = vld [vmem:[%s3 + $0x270] sm:$0xf]
      %v1073 = vld [vmem:[%s3 + $0x274] sm:$0xf]
      %v1074 = vld [vmem:[%s3 + $0x278] sm:$0xf]
      %v1075 = vld [vmem:[%s3 + $0x27c] sm:$0xf]
      %v1076 = vld [vmem:[%s3 + $0x280] sm:$0xf]
      %v1077 = vld [vmem:[%s3 + $0x284] sm:$0xf]
      %v1078 = vld [vmem:[%s3 + $0x288] sm:$0xf]
      %v1079 = vld [vmem:[%s3 + $0x28c] sm:$0xf]
      %v1080 = vld [vmem:[%s3 + $0x290] sm:$0xf]
      %v1081 = vld [vmem:[%s3 + $0x294] sm:$0xf]
      %v1082 = vld [vmem:[%s3 + $0x298] sm:$0xf]
      %v1083 = vld [vmem:[%s3 + $0x29c] sm:$0xf]
      %v1084 = vld [vmem:[%s3 + $0x2a0] sm:$0xf]
      %v1085 = vld [vmem:[%s3 + $0x2a4] sm:$0xf]
      %v1086 = vld [vmem:[%s3 + $0x2a8] sm:$0xf]
      %v1087 = vld [vmem:[%s3 + $0x2ac] sm:$0xf]
      %v1088 = vld [vmem:[%s3 + $0x2b0] sm:$0xf]
      %v1089 = vld [vmem:[%s3 + $0x2b4] sm:$0xf]
      %v1090 = vld [vmem:[%s3 + $0x2b8] sm:$0xf]
      %v1091 = vld [vmem:[%s3 + $0x2bc] sm:$0xf]
      %v1092 = vld [vmem:[%s3 + $0x2c0] sm:$0xf]
      %v1093 = vld [vmem:[%s3 + $0x2c4] sm:$0xf]
      %v1094 = vld [vmem:[%s3 + $0x2c8] sm:$0xf]
      %v1095 = vld [vmem:[%s3 + $0x2cc] sm:$0xf]
      %v1096 = vld [vmem:[%s3 + $0x2d0] sm:$0xf]
      %v1097 = vld [vmem:[%s3 + $0x2d4] sm:$0xf]
      %v1098 = vld [vmem:[%s3 + $0x2d8] sm:$0xf]
      %v1099 = vld [vmem:[%s3 + $0x2dc] sm:$0xf]
      %v1100 = vld [vmem:[%s3 + $0x2e0] sm:$0xf]
      %v1101 = vld [vmem:[%s3 + $0x2e4] sm:$0xf]
      %v1102 = vld [vmem:[%s3 + $0x2e8] sm:$0xf]
      %v1103 = vld [vmem:[%s3 + $0x2ec] sm:$0xf]
      %v1104 = vld [vmem:[%s3 + $0x2f0] sm:$0xf]
      %v1105 = vld [vmem:[%s3 + $0x2f4] sm:$0xf]
      %v1106 = vld [vmem:[%s3 + $0x2f8] sm:$0xf]
      %v1107 = vld [vmem:[%s3 + $0x2fc] sm:$0xf]
      %v1108 = vld [vmem:[%s3 + $0x300] sm:$0xf]
      %v1109 = vld [vmem:[%s3 + $0x304] sm:$0xf]
      %v1110 = vld [vmem:[%s3 + $0x308] sm:$0xf]
      %v1111 = vld [vmem:[%s3 + $0x30c] sm:$0xf]
      %v1112 = vld [vmem:[%s3 + $0x310] sm:$0xf]
      %v1113 = vld [vmem:[%s3 + $0x314] sm:$0xf]
      %v1114 = vld [vmem:[%s3 + $0x318] sm:$0xf]
      %v1115 = vld [vmem:[%s3 + $0x31c] sm:$0xf]
      %v1116 = vld [vmem:[%s3 + $0x320] sm:$0xf]
      %v1117 = vld [vmem:[%s3 + $0x324] sm:$0xf]
      %v1118 = vld [vmem:[%s3 + $0x328] sm:$0xf]
      %v1119 = vld [vmem:[%s3 + $0x32c] sm:$0xf]
      %v1120 = vld [vmem:[%s3 + $0x330] sm:$0xf]
      %v1121 = vld [vmem:[%s3 + $0x334] sm:$0xf]
      %v1122 = vld [vmem:[%s3 + $0x338] sm:$0xf]
      %v1123 = vld [vmem:[%s3 + $0x33c] sm:$0xf]
      %v1124 = vld [vmem:[%s3 + $0x340] sm:$0xf]
      %v1125 = vld [vmem:[%s3 + $0x344] sm:$0xf]
      %v1126 = vld [vmem:[%s3 + $0x348] sm:$0xf]
      %v1127 = vld [vmem:[%s3 + $0x34c] sm:$0xf]
      %v1128 = vld [vmem:[%s3 + $0x350] sm:$0xf]
      %v1129 = vld [vmem:[%s3 + $0x354] sm:$0xf]
      %v1130 = vld [vmem:[%s3 + $0x358] sm:$0xf]
      %v1131 = vld [vmem:[%s3 + $0x35c] sm:$0xf]
      %v1132 = vld [vmem:[%s3 + $0x360] sm:$0xf]
      %v1133 = vld [vmem:[%s3 + $0x364] sm:$0xf]
      %v1134 = vld [vmem:[%s3 + $0x368] sm:$0xf]
      %v1135 = vld [vmem:[%s3 + $0x36c] sm:$0xf]
      %v1136 = vld [vmem:[%s3 + $0x370] sm:$0xf]
      %v1137 = vld [vmem:[%s3 + $0x374] sm:$0xf]
      %v1138 = vld [vmem:[%s3 + $0x378] sm:$0xf]
      %v1139 = vld [vmem:[%s3 + $0x37c] sm:$0xf]
      %v1140 = vld [vmem:[%s3 + $0x380] sm:$0xf]
      %v1141 = vld [vmem:[%s3 + $0x384] sm:$0xf]
      %v1142 = vld [vmem:[%s3 + $0x388] sm:$0xf]
      %v1143 = vld [vmem:[%s3 + $0x38c] sm:$0xf]
      %v1144 = vld [vmem:[%s3 + $0x390] sm:$0xf]
      %v1145 = vld [vmem:[%s3 + $0x394] sm:$0xf]
      %v1146 = vld [vmem:[%s3 + $0x398] sm:$0xf]
      %v1147 = vld [vmem:[%s3 + $0x39c] sm:$0xf]
      %v1148 = vld [vmem:[%s3 + $0x3a0] sm:$0xf]
      %v1149 = vld [vmem:[%s3 + $0x3a4] sm:$0xf]
      %v1150 = vld [vmem:[%s3 + $0x3a8] sm:$0xf]
      %v1151 = vld [vmem:[%s3 + $0x3ac] sm:$0xf]
      %v1152 = vld [vmem:[%s3 + $0x3b0] sm:$0xf]
      %v1153 = vld [vmem:[%s3 + $0x3b4] sm:$0xf]
      %v1154 = vld [vmem:[%s3 + $0x3b8] sm:$0xf]
      %v1155 = vld [vmem:[%s3 + $0x3bc] sm:$0xf]
      %v1156 = vld [vmem:[%s3 + $0x3c0] sm:$0xf]
      %v1157 = vld [vmem:[%s3 + $0x3c4] sm:$0xf]
      %v1158 = vld [vmem:[%s3 + $0x3c8] sm:$0xf]
      %v1159 = vld [vmem:[%s3 + $0x3cc] sm:$0xf]
      %v1160 = vld [vmem:[%s3 + $0x3d0] sm:$0xf]
      %v1161 = vld [vmem:[%s3 + $0x3d4] sm:$0xf]
      %v1162 = vld [vmem:[%s3 + $0x3d8] sm:$0xf]
      %v1163 = vld [vmem:[%s3 + $0x3dc] sm:$0xf]
      %v1164 = vld [vmem:[%s3 + $0x3e0] sm:$0xf]
      %v1165 = vld [vmem:[%s3 + $0x3e4] sm:$0xf]
      %v1166 = vld [vmem:[%s3 + $0x3e8] sm:$0xf]
      %v1167 = vld [vmem:[%s3 + $0x3ec] sm:$0xf]
      %v1168 = vld [vmem:[%s3 + $0x3f0] sm:$0xf]
      %v1169 = vld [vmem:[%s3 + $0x3f4] sm:$0xf]
      %v1170 = vld [vmem:[%s3 + $0x3f8] sm:$0xf]
      %v1171 = vld [vmem:[%s3 + $0x3fc] sm:$0xf]
      %v1172 = vld [vmem:[%s4] sm:$0x1]
      %v1174 = vlaneseq
      %v1175 = vshrl.u32 %v1174, 7
      %v1176 = vsub.s32 0, %v1175
      %v1177 = vrot.slane %v1172, %v1176
      %v1435 = vunpack.c.l.b16 %v916
      %v1436 = vunpack.c.l.b16 %v917
      %v1437 = vunpack.c.l.b16 %v918
      %v1438 = vunpack.c.l.b16 %v919
      %v1439 = vunpack.c.l.b16 %v920
      %v1440 = vunpack.c.l.b16 %v921
      %v1441 = vunpack.c.l.b16 %v922
      %v1442 = vunpack.c.l.b16 %v923
      %v1443 = vunpack.c.l.b16 %v924
      %v1444 = vunpack.c.l.b16 %v925
      %v1445 = vunpack.c.l.b16 %v926
      %v1446 = vunpack.c.l.b16 %v927
      %v1447 = vunpack.c.l.b16 %v928
      %v1448 = vunpack.c.l.b16 %v929
      %v1449 = vunpack.c.l.b16 %v930
      %v1450 = vunpack.c.l.b16 %v931
      %v1451 = vunpack.c.l.b16 %v932
      %v1452 = vunpack.c.l.b16 %v933
      %v1453 = vunpack.c.l.b16 %v934
      %v1454 = vunpack.c.l.b16 %v935
      %v1455 = vunpack.c.l.b16 %v936
      %v1456 = vunpack.c.l.b16 %v937
      %v1457 = vunpack.c.l.b16 %v938
      %v1458 = vunpack.c.l.b16 %v939
      %v1459 = vunpack.c.l.b16 %v940
      %v1460 = vunpack.c.l.b16 %v941
      %v1461 = vunpack.c.l.b16 %v942
      %v1462 = vunpack.c.l.b16 %v943
      %v1463 = vunpack.c.l.b16 %v944
      %v1464 = vunpack.c.l.b16 %v945
      %v1465 = vunpack.c.l.b16 %v946
      %v1466 = vunpack.c.l.b16 %v947
      %v1467 = vunpack.c.l.b16 %v948
      %v1468 = vunpack.c.l.b16 %v949
      %v1469 = vunpack.c.l.b16 %v950
      %v1470 = vunpack.c.l.b16 %v951
      %v1471 = vunpack.c.l.b16 %v952
      %v1472 = vunpack.c.l.b16 %v953
      %v1473 = vunpack.c.l.b16 %v954
      %v1474 = vunpack.c.l.b16 %v955
      %v1475 = vunpack.c.l.b16 %v956
      %v1476 = vunpack.c.l.b16 %v957
      %v1477 = vunpack.c.l.b16 %v958
      %v1478 = vunpack.c.l.b16 %v959
      %v1479 = vunpack.c.l.b16 %v960
      %v1480 = vunpack.c.l.b16 %v961
      %v1481 = vunpack.c.l.b16 %v962
      %v1482 = vunpack.c.l.b16 %v963
      %v1483 = vunpack.c.l.b16 %v964
      %v1484 = vunpack.c.l.b16 %v965
      %v1485 = vunpack.c.l.b16 %v966
      %v1486 = vunpack.c.l.b16 %v967
      %v1487 = vunpack.c.l.b16 %v968
      %v1488 = vunpack.c.l.b16 %v969
      %v1489 = vunpack.c.l.b16 %v970
      %v1490 = vunpack.c.l.b16 %v971
      %v1491 = vunpack.c.l.b16 %v972
      %v1492 = vunpack.c.l.b16 %v973
      %v1493 = vunpack.c.l.b16 %v974
      %v1494 = vunpack.c.l.b16 %v975
      %v1495 = vunpack.c.l.b16 %v976
      %v1496 = vunpack.c.l.b16 %v977
      %v1497 = vunpack.c.l.b16 %v978
      %v1498 = vunpack.c.l.b16 %v979
      %v1499 = vunpack.c.l.b16 %v980
      %v1500 = vunpack.c.l.b16 %v981
      %v1501 = vunpack.c.l.b16 %v982
      %v1502 = vunpack.c.l.b16 %v983
      %v1503 = vunpack.c.l.b16 %v984
      %v1504 = vunpack.c.l.b16 %v985
      %v1505 = vunpack.c.l.b16 %v986
      %v1506 = vunpack.c.l.b16 %v987
      %v1507 = vunpack.c.l.b16 %v988
      %v1508 = vunpack.c.l.b16 %v989
      %v1509 = vunpack.c.l.b16 %v990
      %v1510 = vunpack.c.l.b16 %v991
      %v1511 = vunpack.c.l.b16 %v992
      %v1512 = vunpack.c.l.b16 %v993
      %v1513 = vunpack.c.l.b16 %v994
      %v1514 = vunpack.c.l.b16 %v995
      %v1515 = vunpack.c.l.b16 %v996
      %v1516 = vunpack.c.l.b16 %v997
      %v1517 = vunpack.c.l.b16 %v998
      %v1518 = vunpack.c.l.b16 %v999
      %v1519 = vunpack.c.l.b16 %v1000
      %v1520 = vunpack.c.l.b16 %v1001
      %v1521 = vunpack.c.l.b16 %v1002
      %v1522 = vunpack.c.l.b16 %v1003
      %v1523 = vunpack.c.l.b16 %v1004
      %v1524 = vunpack.c.l.b16 %v1005
      %v1525 = vunpack.c.l.b16 %v1006
      %v1526 = vunpack.c.l.b16 %v1007
      %v1527 = vunpack.c.l.b16 %v1008
      %v1528 = vunpack.c.l.b16 %v1009
      %v1529 = vunpack.c.l.b16 %v1010
      %v1530 = vunpack.c.l.b16 %v1011
      %v1531 = vunpack.c.l.b16 %v1012
      %v1532 = vunpack.c.l.b16 %v1013
      %v1533 = vunpack.c.l.b16 %v1014
      %v1534 = vunpack.c.l.b16 %v1015
      %v1535 = vunpack.c.l.b16 %v1016
      %v1536 = vunpack.c.l.b16 %v1017
      %v1537 = vunpack.c.l.b16 %v1018
      %v1538 = vunpack.c.l.b16 %v1019
      %v1539 = vunpack.c.l.b16 %v1020
      %v1540 = vunpack.c.l.b16 %v1021
      %v1541 = vunpack.c.l.b16 %v1022
      %v1542 = vunpack.c.l.b16 %v1023
      %v1543 = vunpack.c.l.b16 %v1024
      %v1544 = vunpack.c.l.b16 %v1025
      %v1545 = vunpack.c.l.b16 %v1026
      %v1546 = vunpack.c.l.b16 %v1027
      %v1547 = vunpack.c.l.b16 %v1028
      %v1548 = vunpack.c.l.b16 %v1029
      %v1549 = vunpack.c.l.b16 %v1030
      %v1550 = vunpack.c.l.b16 %v1031
      %v1551 = vunpack.c.l.b16 %v1032
      %v1552 = vunpack.c.l.b16 %v1033
      %v1553 = vunpack.c.l.b16 %v1034
      %v1554 = vunpack.c.l.b16 %v1035
      %v1555 = vunpack.c.l.b16 %v1036
      %v1556 = vunpack.c.l.b16 %v1037
      %v1557 = vunpack.c.l.b16 %v1038
      %v1558 = vunpack.c.l.b16 %v1039
      %v1559 = vunpack.c.l.b16 %v1040
      %v1560 = vunpack.c.l.b16 %v1041
      %v1561 = vunpack.c.l.b16 %v1042
      %v1562 = vunpack.c.l.b16 %v1043
      %v1563 = vunpack.c.l.b16 %v1044
      %v1564 = vunpack.c.l.b16 %v1045
      %v1565 = vunpack.c.l.b16 %v1046
      %v1566 = vunpack.c.l.b16 %v1047
      %v1567 = vunpack.c.l.b16 %v1048
      %v1568 = vunpack.c.l.b16 %v1049
      %v1569 = vunpack.c.l.b16 %v1050
      %v1570 = vunpack.c.l.b16 %v1051
      %v1571 = vunpack.c.l.b16 %v1052
      %v1572 = vunpack.c.l.b16 %v1053
      %v1573 = vunpack.c.l.b16 %v1054
      %v1574 = vunpack.c.l.b16 %v1055
      %v1575 = vunpack.c.l.b16 %v1056
      %v1576 = vunpack.c.l.b16 %v1057
      %v1577 = vunpack.c.l.b16 %v1058
      %v1578 = vunpack.c.l.b16 %v1059
      %v1579 = vunpack.c.l.b16 %v1060
      %v1580 = vunpack.c.l.b16 %v1061
      %v1581 = vunpack.c.l.b16 %v1062
      %v1582 = vunpack.c.l.b16 %v1063
      %v1583 = vunpack.c.l.b16 %v1064
      %v1584 = vunpack.c.l.b16 %v1065
      %v1585 = vunpack.c.l.b16 %v1066
      %v1586 = vunpack.c.l.b16 %v1067
      %v1587 = vunpack.c.l.b16 %v1068
      %v1588 = vunpack.c.l.b16 %v1069
      %v1589 = vunpack.c.l.b16 %v1070
      %v1590 = vunpack.c.l.b16 %v1071
      %v1591 = vunpack.c.l.b16 %v1072
      %v1592 = vunpack.c.l.b16 %v1073
      %v1593 = vunpack.c.l.b16 %v1074
      %v1594 = vunpack.c.l.b16 %v1075
      %v1595 = vunpack.c.l.b16 %v1076
      %v1596 = vunpack.c.l.b16 %v1077
      %v1597 = vunpack.c.l.b16 %v1078
      %v1598 = vunpack.c.l.b16 %v1079
      %v1599 = vunpack.c.l.b16 %v1080
      %v1600 = vunpack.c.l.b16 %v1081
      %v1601 = vunpack.c.l.b16 %v1082
      %v1602 = vunpack.c.l.b16 %v1083
      %v1603 = vunpack.c.l.b16 %v1084
      %v1604 = vunpack.c.l.b16 %v1085
      %v1605 = vunpack.c.l.b16 %v1086
      %v1606 = vunpack.c.l.b16 %v1087
      %v1607 = vunpack.c.l.b16 %v1088
      %v1608 = vunpack.c.l.b16 %v1089
      %v1609 = vunpack.c.l.b16 %v1090
      %v1610 = vunpack.c.l.b16 %v1091
      %v1611 = vunpack.c.l.b16 %v1092
      %v1612 = vunpack.c.l.b16 %v1093
      %v1613 = vunpack.c.l.b16 %v1094
      %v1614 = vunpack.c.l.b16 %v1095
      %v1615 = vunpack.c.l.b16 %v1096
      %v1616 = vunpack.c.l.b16 %v1097
      %v1617 = vunpack.c.l.b16 %v1098
      %v1618 = vunpack.c.l.b16 %v1099
      %v1619 = vunpack.c.l.b16 %v1100
      %v1620 = vunpack.c.l.b16 %v1101
      %v1621 = vunpack.c.l.b16 %v1102
      %v1622 = vunpack.c.l.b16 %v1103
      %v1623 = vunpack.c.l.b16 %v1104
      %v1624 = vunpack.c.l.b16 %v1105
      %v1625 = vunpack.c.l.b16 %v1106
      %v1626 = vunpack.c.l.b16 %v1107
      %v1627 = vunpack.c.l.b16 %v1108
      %v1628 = vunpack.c.l.b16 %v1109
      %v1629 = vunpack.c.l.b16 %v1110
      %v1630 = vunpack.c.l.b16 %v1111
      %v1631 = vunpack.c.l.b16 %v1112
      %v1632 = vunpack.c.l.b16 %v1113
      %v1633 = vunpack.c.l.b16 %v1114
      %v1634 = vunpack.c.l.b16 %v1115
      %v1635 = vunpack.c.l.b16 %v1116
      %v1636 = vunpack.c.l.b16 %v1117
      %v1637 = vunpack.c.l.b16 %v1118
      %v1638 = vunpack.c.l.b16 %v1119
      %v1639 = vunpack.c.l.b16 %v1120
      %v1640 = vunpack.c.l.b16 %v1121
      %v1641 = vunpack.c.l.b16 %v1122
      %v1642 = vunpack.c.l.b16 %v1123
      %v1643 = vunpack.c.l.b16 %v1124
      %v1644 = vunpack.c.l.b16 %v1125
      %v1645 = vunpack.c.l.b16 %v1126
      %v1646 = vunpack.c.l.b16 %v1127
      %v1647 = vunpack.c.l.b16 %v1128
      %v1648 = vunpack.c.l.b16 %v1129
      %v1649 = vunpack.c.l.b16 %v1130
      %v1650 = vunpack.c.l.b16 %v1131
      %v1651 = vunpack.c.l.b16 %v1132
      %v1652 = vunpack.c.l.b16 %v1133
      %v1653 = vunpack.c.l.b16 %v1134
      %v1654 = vunpack.c.l.b16 %v1135
      %v1655 = vunpack.c.l.b16 %v1136
      %v1656 = vunpack.c.l.b16 %v1137
      %v1657 = vunpack.c.l.b16 %v1138
      %v1658 = vunpack.c.l.b16 %v1139
      %v1659 = vunpack.c.l.b16 %v1140
      %v1660 = vunpack.c.l.b16 %v1141
      %v1661 = vunpack.c.l.b16 %v1142
      %v1662 = vunpack.c.l.b16 %v1143
      %v1663 = vunpack.c.l.b16 %v1144
      %v1664 = vunpack.c.l.b16 %v1145
      %v1665 = vunpack.c.l.b16 %v1146
      %v1666 = vunpack.c.l.b16 %v1147
      %v1667 = vunpack.c.l.b16 %v1148
      %v1668 = vunpack.c.l.b16 %v1149
      %v1669 = vunpack.c.l.b16 %v1150
      %v1670 = vunpack.c.l.b16 %v1151
      %v1671 = vunpack.c.l.b16 %v1152
      %v1672 = vunpack.c.l.b16 %v1153
      %v1673 = vunpack.c.l.b16 %v1154
      %v1674 = vunpack.c.l.b16 %v1155
      %v1675 = vunpack.c.l.b16 %v1156
      %v1676 = vunpack.c.l.b16 %v1157
      %v1677 = vunpack.c.l.b16 %v1158
      %v1678 = vunpack.c.l.b16 %v1159
      %v1679 = vunpack.c.l.b16 %v1160
      %v1680 = vunpack.c.l.b16 %v1161
      %v1681 = vunpack.c.l.b16 %v1162
      %v1682 = vunpack.c.l.b16 %v1163
      %v1683 = vunpack.c.l.b16 %v1164
      %v1684 = vunpack.c.l.b16 %v1165
      %v1685 = vunpack.c.l.b16 %v1166
      %v1686 = vunpack.c.l.b16 %v1167
      %v1687 = vunpack.c.l.b16 %v1168
      %v1688 = vunpack.c.l.b16 %v1169
      %v1689 = vunpack.c.l.b16 %v1170
      %v1690 = vunpack.c.l.b16 %v1171
      %v1691 = vpack.c.b16 %v1436, %v1435
      %v1692 = vpack.c.b16 %v1438, %v1437
      %v1693 = vpack.c.b16 %v1440, %v1439
      %v1694 = vpack.c.b16 %v1442, %v1441
      %v1695 = vpack.c.b16 %v1444, %v1443
      %v1696 = vpack.c.b16 %v1446, %v1445
      %v1697 = vpack.c.b16 %v1448, %v1447
      %v1698 = vpack.c.b16 %v1450, %v1449
      %v1699 = vpack.c.b16 %v1452, %v1451
      %v1700 = vpack.c.b16 %v1454, %v1453
      %v1701 = vpack.c.b16 %v1456, %v1455
      %v1702 = vpack.c.b16 %v1458, %v1457
      %v1703 = vpack.c.b16 %v1460, %v1459
      %v1704 = vpack.c.b16 %v1462, %v1461
      %v1705 = vpack.c.b16 %v1464, %v1463
      %v1706 = vpack.c.b16 %v1466, %v1465
      %v1707 = vpack.c.b16 %v1468, %v1467
      %v1708 = vpack.c.b16 %v1470, %v1469
      %v1709 = vpack.c.b16 %v1472, %v1471
      %v1710 = vpack.c.b16 %v1474, %v1473
      %v1711 = vpack.c.b16 %v1476, %v1475
      %v1712 = vpack.c.b16 %v1478, %v1477
      %v1713 = vpack.c.b16 %v1480, %v1479
      %v1714 = vpack.c.b16 %v1482, %v1481
      %v1715 = vpack.c.b16 %v1484, %v1483
      %v1716 = vpack.c.b16 %v1486, %v1485
      %v1717 = vpack.c.b16 %v1488, %v1487
      %v1718 = vpack.c.b16 %v1490, %v1489
      %v1719 = vpack.c.b16 %v1492, %v1491
      %v1720 = vpack.c.b16 %v1494, %v1493
      %v1721 = vpack.c.b16 %v1496, %v1495
      %v1722 = vpack.c.b16 %v1498, %v1497
      %v1723 = vpack.c.b16 %v1500, %v1499
      %v1724 = vpack.c.b16 %v1502, %v1501
      %v1725 = vpack.c.b16 %v1504, %v1503
      %v1726 = vpack.c.b16 %v1506, %v1505
      %v1727 = vpack.c.b16 %v1508, %v1507
      %v1728 = vpack.c.b16 %v1510, %v1509
      %v1729 = vpack.c.b16 %v1512, %v1511
      %v1730 = vpack.c.b16 %v1514, %v1513
      %v1731 = vpack.c.b16 %v1516, %v1515
      %v1732 = vpack.c.b16 %v1518, %v1517
      %v1733 = vpack.c.b16 %v1520, %v1519
      %v1734 = vpack.c.b16 %v1522, %v1521
      %v1735 = vpack.c.b16 %v1524, %v1523
      %v1736 = vpack.c.b16 %v1526, %v1525
      %v1737 = vpack.c.b16 %v1528, %v1527
      %v1738 = vpack.c.b16 %v1530, %v1529
      %v1739 = vpack.c.b16 %v1532, %v1531
      %v1740 = vpack.c.b16 %v1534, %v1533
      %v1741 = vpack.c.b16 %v1536, %v1535
      %v1742 = vpack.c.b16 %v1538, %v1537
      %v1743 = vpack.c.b16 %v1540, %v1539
      %v1744 = vpack.c.b16 %v1542, %v1541
      %v1745 = vpack.c.b16 %v1544, %v1543
      %v1746 = vpack.c.b16 %v1546, %v1545
      %v1747 = vpack.c.b16 %v1548, %v1547
      %v1748 = vpack.c.b16 %v1550, %v1549
      %v1749 = vpack.c.b16 %v1552, %v1551
      %v1750 = vpack.c.b16 %v1554, %v1553
      %v1751 = vpack.c.b16 %v1556, %v1555
      %v1752 = vpack.c.b16 %v1558, %v1557
      %v1753 = vpack.c.b16 %v1560, %v1559
      %v1754 = vpack.c.b16 %v1562, %v1561
      %v1755 = vpack.c.b16 %v1564, %v1563
      %v1756 = vpack.c.b16 %v1566, %v1565
      %v1757 = vpack.c.b16 %v1568, %v1567
      %v1758 = vpack.c.b16 %v1570, %v1569
      %v1759 = vpack.c.b16 %v1572, %v1571
      %v1760 = vpack.c.b16 %v1574, %v1573
      %v1761 = vpack.c.b16 %v1576, %v1575
      %v1762 = vpack.c.b16 %v1578, %v1577
      %v1763 = vpack.c.b16 %v1580, %v1579
      %v1764 = vpack.c.b16 %v1582, %v1581
      %v1765 = vpack.c.b16 %v1584, %v1583
      %v1766 = vpack.c.b16 %v1586, %v1585
      %v1767 = vpack.c.b16 %v1588, %v1587
      %v1768 = vpack.c.b16 %v1590, %v1589
      %v1769 = vpack.c.b16 %v1592, %v1591
      %v1770 = vpack.c.b16 %v1594, %v1593
      %v1771 = vpack.c.b16 %v1596, %v1595
      %v1772 = vpack.c.b16 %v1598, %v1597
      %v1773 = vpack.c.b16 %v1600, %v1599
      %v1774 = vpack.c.b16 %v1602, %v1601
      %v1775 = vpack.c.b16 %v1604, %v1603
      %v1776 = vpack.c.b16 %v1606, %v1605
      %v1777 = vpack.c.b16 %v1608, %v1607
      %v1778 = vpack.c.b16 %v1610, %v1609
      %v1779 = vpack.c.b16 %v1612, %v1611
      %v1780 = vpack.c.b16 %v1614, %v1613
      %v1781 = vpack.c.b16 %v1616, %v1615
      %v1782 = vpack.c.b16 %v1618, %v1617
      %v1783 = vpack.c.b16 %v1620, %v1619
      %v1784 = vpack.c.b16 %v1622, %v1621
      %v1785 = vpack.c.b16 %v1624, %v1623
      %v1786 = vpack.c.b16 %v1626, %v1625
      %v1787 = vpack.c.b16 %v1628, %v1627
      %v1788 = vpack.c.b16 %v1630, %v1629
      %v1789 = vpack.c.b16 %v1632, %v1631
      %v1790 = vpack.c.b16 %v1634, %v1633
      %v1791 = vpack.c.b16 %v1636, %v1635
      %v1792 = vpack.c.b16 %v1638, %v1637
      %v1793 = vpack.c.b16 %v1640, %v1639
      %v1794 = vpack.c.b16 %v1642, %v1641
      %v1795 = vpack.c.b16 %v1644, %v1643
      %v1796 = vpack.c.b16 %v1646, %v1645
      %v1797 = vpack.c.b16 %v1648, %v1647
      %v1798 = vpack.c.b16 %v1650, %v1649
      %v1799 = vpack.c.b16 %v1652, %v1651
      %v1800 = vpack.c.b16 %v1654, %v1653
      %v1801 = vpack.c.b16 %v1656, %v1655
      %v1802 = vpack.c.b16 %v1658, %v1657
      %v1803 = vpack.c.b16 %v1660, %v1659
      %v1804 = vpack.c.b16 %v1662, %v1661
      %v1805 = vpack.c.b16 %v1664, %v1663
      %v1806 = vpack.c.b16 %v1666, %v1665
      %v1807 = vpack.c.b16 %v1668, %v1667
      %v1808 = vpack.c.b16 %v1670, %v1669
      %v1809 = vpack.c.b16 %v1672, %v1671
      %v1810 = vpack.c.b16 %v1674, %v1673
      %v1811 = vpack.c.b16 %v1676, %v1675
      %v1812 = vpack.c.b16 %v1678, %v1677
      %v1813 = vpack.c.b16 %v1680, %v1679
      %v1814 = vpack.c.b16 %v1682, %v1681
      %v1815 = vpack.c.b16 %v1684, %v1683
      %v1816 = vpack.c.b16 %v1686, %v1685
      %v1817 = vpack.c.b16 %v1688, %v1687
      %v1818 = vpack.c.b16 %v1690, %v1689
      %1947 = vmatprep.subr.bf16.mxu0 0
      %1948 = vmatpush1.bf16.msra.mxu0 %v1698
      %1949 = vmatprep.subr.bf16.mxu0 0
      %1950 = vmatpush1.bf16.msra.mxu0 %v1697
      %1951 = vmatprep.subr.bf16.mxu0 0
      %1952 = vmatpush1.bf16.msra.mxu0 %v1696
      %1953 = vmatprep.subr.bf16.mxu0 0
      %1954 = vmatpush1.bf16.msra.mxu0 %v1695
      %1955 = vmatprep.subr.bf16.mxu0 0
      %1956 = vmatpush1.bf16.msra.mxu0 %v1694
      %1957 = vmatprep.subr.bf16.mxu0 0
      %1958 = vmatpush1.bf16.msra.mxu0 %v1693
      %1959 = vmatprep.subr.bf16.mxu0 0
      %1960 = vmatpush1.bf16.msra.mxu0 %v1692
      %1961 = vmatprep.subr.bf16.mxu0 0
      %1962 = vmatpush1.bf16.msra.mxu0 %v1691
      %1963 = vmatprep.subr.bf16.mxu0 0
      %1964 = vmatpush2.bf16.msra.mxu0 %v1706
      %1965 = vmatprep.subr.bf16.mxu0 0
      %1966 = vmatpush2.bf16.msra.mxu0 %v1705
      %1967 = vmatprep.subr.bf16.mxu0 0
      %1968 = vmatpush2.bf16.msra.mxu0 %v1704
      %1969 = vmatprep.subr.bf16.mxu0 0
      %1970 = vmatpush2.bf16.msra.mxu0 %v1703
      %1971 = vmatprep.subr.bf16.mxu0 0
      %1972 = vmatpush2.bf16.msra.mxu0 %v1702
      %1973 = vmatprep.subr.bf16.mxu0 0
      %1974 = vmatpush2.bf16.msra.mxu0 %v1701
      %1975 = vmatprep.subr.bf16.mxu0 0
      %1976 = vmatpush2.bf16.msra.mxu0 %v1700
      %1977 = vmatprep.subr.bf16.mxu0 0
      %1978 = vmatpush2.bf16.msra.mxu0 %v1699
      %1979 = vmatprep.mubr.bf16.mxu0 %v901
      %1980 = vmatmul.mubr.bf16.gmra.mxu0 %v900
      %v1981 = vpop.f32.mrf.mxu0
      %v1982 = vadd.f32 %v1177, %v1981
      %v1983 = vpop.f32.mrf.mxu0
      %v1984 = vpop.f32.mrf.mxu0
      %v1985 = vpop.f32.mrf.mxu0
      %1986 = vdwg.mxu0
      %1987 = vmatprep.subr.bf16.mxu0 0
      %1988 = vmatpush1.bf16.msra.mxu0 %v1714
      %1989 = vmatprep.subr.bf16.mxu0 0
      %1990 = vmatpush1.bf16.msra.mxu0 %v1713
      %1991 = vmatprep.subr.bf16.mxu0 0
      %1992 = vmatpush1.bf16.msra.mxu0 %v1712
      %1993 = vmatprep.subr.bf16.mxu0 0
      %1994 = vmatpush1.bf16.msra.mxu0 %v1711
      %1995 = vmatprep.subr.bf16.mxu0 0
      %1996 = vmatpush1.bf16.msra.mxu0 %v1710
      %1997 = vmatprep.subr.bf16.mxu0 0
      %1998 = vmatpush1.bf16.msra.mxu0 %v1709
      %1999 = vmatprep.subr.bf16.mxu0 0
      %2000 = vmatpush1.bf16.msra.mxu0 %v1708
      %2001 = vmatprep.subr.bf16.mxu0 0
      %2002 = vmatpush1.bf16.msra.mxu0 %v1707
      %2003 = vmatprep.subr.bf16.mxu0 0
      %2004 = vmatpush2.bf16.msra.mxu0 %v1722
      %2005 = vmatprep.subr.bf16.mxu0 0
      %2006 = vmatpush2.bf16.msra.mxu0 %v1721
      %2007 = vmatprep.subr.bf16.mxu0 0
      %2008 = vmatpush2.bf16.msra.mxu0 %v1720
      %2009 = vmatprep.subr.bf16.mxu0 0
      %2010 = vmatpush2.bf16.msra.mxu0 %v1719
      %2011 = vmatprep.subr.bf16.mxu0 0
      %2012 = vmatpush2.bf16.msra.mxu0 %v1718
      %2013 = vmatprep.subr.bf16.mxu0 0
      %2014 = vmatpush2.bf16.msra.mxu0 %v1717
      %2015 = vmatprep.subr.bf16.mxu0 0
      %2016 = vmatpush2.bf16.msra.mxu0 %v1716
      %2017 = vmatprep.subr.bf16.mxu0 0
      %2018 = vmatpush2.bf16.msra.mxu0 %v1715
      %2019 = vmatprep.mubr.bf16.mxu0 %v903
      %2020 = vmatmul.mubr.bf16.gmra.mxu0 %v902
      %v2021 = vpop.f32.mrf.mxu0
      %v2022 = vadd.f32 %v1982, %v2021
      %v2023 = vpop.f32.mrf.mxu0
      %v2024 = vpop.f32.mrf.mxu0
      %v2025 = vpop.f32.mrf.mxu0
      %2026 = vdwg.mxu0
      %2027 = vmatprep.subr.bf16.mxu0 0
      %2028 = vmatpush1.bf16.msra.mxu0 %v1730
      %2029 = vmatprep.subr.bf16.mxu0 0
      %2030 = vmatpush1.bf16.msra.mxu0 %v1729
      %2031 = vmatprep.subr.bf16.mxu0 0
      %2032 = vmatpush1.bf16.msra.mxu0 %v1728
      %2033 = vmatprep.subr.bf16.mxu0 0
      %2034 = vmatpush1.bf16.msra.mxu0 %v1727
      %2035 = vmatprep.subr.bf16.mxu0 0
      %2036 = vmatpush1.bf16.msra.mxu0 %v1726
      %2037 = vmatprep.subr.bf16.mxu0 0
      %2038 = vmatpush1.bf16.msra.mxu0 %v1725
      %2039 = vmatprep.subr.bf16.mxu0 0
      %2040 = vmatpush1.bf16.msra.mxu0 %v1724
      %2041 = vmatprep.subr.bf16.mxu0 0
      %2042 = vmatpush1.bf16.msra.mxu0 %v1723
      %2043 = vmatprep.subr.bf16.mxu0 0
      %2044 = vmatpush2.bf16.msra.mxu0 %v1738
      %2045 = vmatprep.subr.bf16.mxu0 0
      %2046 = vmatpush2.bf16.msra.mxu0 %v1737
      %2047 = vmatprep.subr.bf16.mxu0 0
      %2048 = vmatpush2.bf16.msra.mxu0 %v1736
      %2049 = vmatprep.subr.bf16.mxu0 0
      %2050 = vmatpush2.bf16.msra.mxu0 %v1735
      %2051 = vmatprep.subr.bf16.mxu0 0
      %2052 = vmatpush2.bf16.msra.mxu0 %v1734
      %2053 = vmatprep.subr.bf16.mxu0 0
      %2054 = vmatpush2.bf16.msra.mxu0 %v1733
      %2055 = vmatprep.subr.bf16.mxu0 0
      %2056 = vmatpush2.bf16.msra.mxu0 %v1732
      %2057 = vmatprep.subr.bf16.mxu0 0
      %2058 = vmatpush2.bf16.msra.mxu0 %v1731
      %2059 = vmatprep.mubr.bf16.mxu0 %v905
      %2060 = vmatmul.mubr.bf16.gmra.mxu0 %v904
      %v2061 = vpop.f32.mrf.mxu0
      %v2062 = vadd.f32 %v2022, %v2061
      %v2063 = vpop.f32.mrf.mxu0
      %v2064 = vpop.f32.mrf.mxu0
      %v2065 = vpop.f32.mrf.mxu0
      %2066 = vdwg.mxu0
      %2067 = vmatprep.subr.bf16.mxu0 0
      %2068 = vmatpush1.bf16.msra.mxu0 %v1746
      %2069 = vmatprep.subr.bf16.mxu0 0
      %2070 = vmatpush1.bf16.msra.mxu0 %v1745
      %2071 = vmatprep.subr.bf16.mxu0 0
      %2072 = vmatpush1.bf16.msra.mxu0 %v1744
      %2073 = vmatprep.subr.bf16.mxu0 0
      %2074 = vmatpush1.bf16.msra.mxu0 %v1743
      %2075 = vmatprep.subr.bf16.mxu0 0
      %2076 = vmatpush1.bf16.msra.mxu0 %v1742
      %2077 = vmatprep.subr.bf16.mxu0 0
      %2078 = vmatpush1.bf16.msra.mxu0 %v1741
      %2079 = vmatprep.subr.bf16.mxu0 0
      %2080 = vmatpush1.bf16.msra.mxu0 %v1740
      %2081 = vmatprep.subr.bf16.mxu0 0
      %2082 = vmatpush1.bf16.msra.mxu0 %v1739
      %2083 = vmatprep.subr.bf16.mxu0 0
      %2084 = vmatpush2.bf16.msra.mxu0 %v1754
      %2085 = vmatprep.subr.bf16.mxu0 0
      %2086 = vmatpush2.bf16.msra.mxu0 %v1753
      %2087 = vmatprep.subr.bf16.mxu0 0
      %2088 = vmatpush2.bf16.msra.mxu0 %v1752
      %2089 = vmatprep.subr.bf16.mxu0 0
      %2090 = vmatpush2.bf16.msra.mxu0 %v1751
      %2091 = vmatprep.subr.bf16.mxu0 0
      %2092 = vmatpush2.bf16.msra.mxu0 %v1750
      %2093 = vmatprep.subr.bf16.mxu0 0
      %2094 = vmatpush2.bf16.msra.mxu0 %v1749
      %2095 = vmatprep.subr.bf16.mxu0 0
      %2096 = vmatpush2.bf16.msra.mxu0 %v1748
      %2097 = vmatprep.subr.bf16.mxu0 0
      %2098 = vmatpush2.bf16.msra.mxu0 %v1747
      %2099 = vmatprep.mubr.bf16.mxu0 %v907
      %2100 = vmatmul.mubr.bf16.gmra.mxu0 %v906
      %v2101 = vpop.f32.mrf.mxu0
      %v2102 = vadd.f32 %v2062, %v2101
      %v2103 = vpop.f32.mrf.mxu0
      %v2104 = vpop.f32.mrf.mxu0
      %v2105 = vpop.f32.mrf.mxu0
      %2106 = vdwg.mxu0
      %2107 = vmatprep.subr.bf16.mxu0 0
      %2108 = vmatpush1.bf16.msra.mxu0 %v1762
      %2109 = vmatprep.subr.bf16.mxu0 0
      %2110 = vmatpush1.bf16.msra.mxu0 %v1761
      %2111 = vmatprep.subr.bf16.mxu0 0
      %2112 = vmatpush1.bf16.msra.mxu0 %v1760
      %2113 = vmatprep.subr.bf16.mxu0 0
      %2114 = vmatpush1.bf16.msra.mxu0 %v1759
      %2115 = vmatprep.subr.bf16.mxu0 0
      %2116 = vmatpush1.bf16.msra.mxu0 %v1758
      %2117 = vmatprep.subr.bf16.mxu0 0
      %2118 = vmatpush1.bf16.msra.mxu0 %v1757
      %2119 = vmatprep.subr.bf16.mxu0 0
      %2120 = vmatpush1.bf16.msra.mxu0 %v1756
      %2121 = vmatprep.subr.bf16.mxu0 0
      %2122 = vmatpush1.bf16.msra.mxu0 %v1755
      %2123 = vmatprep.subr.bf16.mxu0 0
      %2124 = vmatpush2.bf16.msra.mxu0 %v1770
      %2125 = vmatprep.subr.bf16.mxu0 0
      %2126 = vmatpush2.bf16.msra.mxu0 %v1769
      %2127 = vmatprep.subr.bf16.mxu0 0
      %2128 = vmatpush2.bf16.msra.mxu0 %v1768
      %2129 = vmatprep.subr.bf16.mxu0 0
      %2130 = vmatpush2.bf16.msra.mxu0 %v1767
      %2131 = vmatprep.subr.bf16.mxu0 0
      %2132 = vmatpush2.bf16.msra.mxu0 %v1766
      %2133 = vmatprep.subr.bf16.mxu0 0
      %2134 = vmatpush2.bf16.msra.mxu0 %v1765
      %2135 = vmatprep.subr.bf16.mxu0 0
      %2136 = vmatpush2.bf16.msra.mxu0 %v1764
      %2137 = vmatprep.subr.bf16.mxu0 0
      %2138 = vmatpush2.bf16.msra.mxu0 %v1763
      %2139 = vmatprep.mubr.bf16.mxu0 %v909
      %2140 = vmatmul.mubr.bf16.gmra.mxu0 %v908
      %v2141 = vpop.f32.mrf.mxu0
      %v2142 = vadd.f32 %v2102, %v2141
      %v2143 = vpop.f32.mrf.mxu0
      %v2144 = vpop.f32.mrf.mxu0
      %v2145 = vpop.f32.mrf.mxu0
      %2146 = vdwg.mxu0
      %2147 = vmatprep.subr.bf16.mxu0 0
      %2148 = vmatpush1.bf16.msra.mxu0 %v1778
      %2149 = vmatprep.subr.bf16.mxu0 0
      %2150 = vmatpush1.bf16.msra.mxu0 %v1777
      %2151 = vmatprep.subr.bf16.mxu0 0
      %2152 = vmatpush1.bf16.msra.mxu0 %v1776
      %2153 = vmatprep.subr.bf16.mxu0 0
      %2154 = vmatpush1.bf16.msra.mxu0 %v1775
      %2155 = vmatprep.subr.bf16.mxu0 0
      %2156 = vmatpush1.bf16.msra.mxu0 %v1774
      %2157 = vmatprep.subr.bf16.mxu0 0
      %2158 = vmatpush1.bf16.msra.mxu0 %v1773
      %2159 = vmatprep.subr.bf16.mxu0 0
      %2160 = vmatpush1.bf16.msra.mxu0 %v1772
      %2161 = vmatprep.subr.bf16.mxu0 0
      %2162 = vmatpush1.bf16.msra.mxu0 %v1771
      %2163 = vmatprep.subr.bf16.mxu0 0
      %2164 = vmatpush2.bf16.msra.mxu0 %v1786
      %2165 = vmatprep.subr.bf16.mxu0 0
      %2166 = vmatpush2.bf16.msra.mxu0 %v1785
      %2167 = vmatprep.subr.bf16.mxu0 0
      %2168 = vmatpush2.bf16.msra.mxu0 %v1784
      %2169 = vmatprep.subr.bf16.mxu0 0
      %2170 = vmatpush2.bf16.msra.mxu0 %v1783
      %2171 = vmatprep.subr.bf16.mxu0 0
      %2172 = vmatpush2.bf16.msra.mxu0 %v1782
      %2173 = vmatprep.subr.bf16.mxu0 0
      %2174 = vmatpush2.bf16.msra.mxu0 %v1781
      %2175 = vmatprep.subr.bf16.mxu0 0
      %2176 = vmatpush2.bf16.msra.mxu0 %v1780
      %2177 = vmatprep.subr.bf16.mxu0 0
      %2178 = vmatpush2.bf16.msra.mxu0 %v1779
      %2179 = vmatprep.mubr.bf16.mxu0 %v911
      %2180 = vmatmul.mubr.bf16.gmra.mxu0 %v910
      %v2181 = vpop.f32.mrf.mxu0
      %v2182 = vadd.f32 %v2142, %v2181
      %v2183 = vpop.f32.mrf.mxu0
      %v2184 = vpop.f32.mrf.mxu0
      %v2185 = vpop.f32.mrf.mxu0
      %2186 = vdwg.mxu0
      %2187 = vmatprep.subr.bf16.mxu0 0
      %2188 = vmatpush1.bf16.msra.mxu0 %v1794
      %2189 = vmatprep.subr.bf16.mxu0 0
      %2190 = vmatpush1.bf16.msra.mxu0 %v1793
      %2191 = vmatprep.subr.bf16.mxu0 0
      %2192 = vmatpush1.bf16.msra.mxu0 %v1792
      %2193 = vmatprep.subr.bf16.mxu0 0
      %2194 = vmatpush1.bf16.msra.mxu0 %v1791
      %2195 = vmatprep.subr.bf16.mxu0 0
      %2196 = vmatpush1.bf16.msra.mxu0 %v1790
      %2197 = vmatprep.subr.bf16.mxu0 0
      %2198 = vmatpush1.bf16.msra.mxu0 %v1789
      %2199 = vmatprep.subr.bf16.mxu0 0
      %2200 = vmatpush1.bf16.msra.mxu0 %v1788
      %2201 = vmatprep.subr.bf16.mxu0 0
      %2202 = vmatpush1.bf16.msra.mxu0 %v1787
      %2203 = vmatprep.subr.bf16.mxu0 0
      %2204 = vmatpush2.bf16.msra.mxu0 %v1802
      %2205 = vmatprep.subr.bf16.mxu0 0
      %2206 = vmatpush2.bf16.msra.mxu0 %v1801
      %2207 = vmatprep.subr.bf16.mxu0 0
      %2208 = vmatpush2.bf16.msra.mxu0 %v1800
      %2209 = vmatprep.subr.bf16.mxu0 0
      %2210 = vmatpush2.bf16.msra.mxu0 %v1799
      %2211 = vmatprep.subr.bf16.mxu0 0
      %2212 = vmatpush2.bf16.msra.mxu0 %v1798
      %2213 = vmatprep.subr.bf16.mxu0 0
      %2214 = vmatpush2.bf16.msra.mxu0 %v1797
      %2215 = vmatprep.subr.bf16.mxu0 0
      %2216 = vmatpush2.bf16.msra.mxu0 %v1796
      %2217 = vmatprep.subr.bf16.mxu0 0
      %2218 = vmatpush2.bf16.msra.mxu0 %v1795
      %2219 = vmatprep.mubr.bf16.mxu0 %v913
      %2220 = vmatmul.mubr.bf16.gmra.mxu0 %v912
      %v2221 = vpop.f32.mrf.mxu0
      %v2222 = vadd.f32 %v2182, %v2221
      %v2223 = vpop.f32.mrf.mxu0
      %v2224 = vpop.f32.mrf.mxu0
      %v2225 = vpop.f32.mrf.mxu0
      %2226 = vdwg.mxu0
      %2227 = vmatprep.subr.bf16.mxu0 0
      %2228 = vmatpush1.bf16.msra.mxu0 %v1810
      %2229 = vmatprep.subr.bf16.mxu0 0
      %2230 = vmatpush1.bf16.msra.mxu0 %v1809
      %2231 = vmatprep.subr.bf16.mxu0 0
      %2232 = vmatpush1.bf16.msra.mxu0 %v1808
      %2233 = vmatprep.subr.bf16.mxu0 0
      %2234 = vmatpush1.bf16.msra.mxu0 %v1807
      %2235 = vmatprep.subr.bf16.mxu0 0
      %2236 = vmatpush1.bf16.msra.mxu0 %v1806
      %2237 = vmatprep.subr.bf16.mxu0 0
      %2238 = vmatpush1.bf16.msra.mxu0 %v1805
      %2239 = vmatprep.subr.bf16.mxu0 0
      %2240 = vmatpush1.bf16.msra.mxu0 %v1804
      %2241 = vmatprep.subr.bf16.mxu0 0
      %2242 = vmatpush1.bf16.msra.mxu0 %v1803
      %2243 = vmatprep.subr.bf16.mxu0 0
      %2244 = vmatpush2.bf16.msra.mxu0 %v1818
      %2245 = vmatprep.subr.bf16.mxu0 0
      %2246 = vmatpush2.bf16.msra.mxu0 %v1817
      %2247 = vmatprep.subr.bf16.mxu0 0
      %2248 = vmatpush2.bf16.msra.mxu0 %v1816
      %2249 = vmatprep.subr.bf16.mxu0 0
      %2250 = vmatpush2.bf16.msra.mxu0 %v1815
      %2251 = vmatprep.subr.bf16.mxu0 0
      %2252 = vmatpush2.bf16.msra.mxu0 %v1814
      %2253 = vmatprep.subr.bf16.mxu0 0
      %2254 = vmatpush2.bf16.msra.mxu0 %v1813
      %2255 = vmatprep.subr.bf16.mxu0 0
      %2256 = vmatpush2.bf16.msra.mxu0 %v1812
      %2257 = vmatprep.subr.bf16.mxu0 0
      %2258 = vmatpush2.bf16.msra.mxu0 %v1811
      %2259 = vmatprep.mubr.bf16.mxu0 %v915
      %2260 = vmatmul.mubr.bf16.gmra.mxu0 %v914
      %v2261 = vpop.f32.mrf.mxu0
      %v2262 = vadd.f32 %v2222, %v2261
      %v2263 = vpop.f32.mrf.mxu0
      %v2264 = vpop.f32.mrf.mxu0
      %v2265 = vpop.f32.mrf.mxu0
      %2266 = vdwg.mxu0
      %v2267 = vunpack.c.l.bf16 %v275
      %v2268 = vadd.f32 %v2267, %v2262
      %v2269 = vld [vmem:[%s5] sm:$0x1]
      %v2270 = vld [vmem:[%s6] sm:$0x1]
      %v2271 = vsel %vm552, %v2268, 0.0
      %2272 = vadd.xlane.f32.xlu0 %v2271
      %v2273 = vpop.xlane.xlu0 %2272
      %v2274 = vrcp.pop 32.0
      %v2275 = vmul.f32 %v2273, %v2274
      %v2276 = vsub.f32 %v2268, %v2275
      %v2277 = vmul.f32 %v2276, %v2276
      %v2278 = vsel %vm552, %v2277, 0.0
      %2279 = vadd.xlane.f32.xlu0 %v2278
      %v2280 = vpop.xlane.xlu0 %2279
      %v2281 = vmul.f32 %v2280, %v2274
      %v2282 = vadd.f32 %v2281, 1e-05
      %v2283 = vrsqrt.pop %v2282
      %v2284 = vmul.f32 %v2276, %v2283
      %v2286 = vlaneseq
      %v2287 = vshrl.u32 %v2286, 7
      %v2288 = vsub.s32 0, %v2287
      %v2289 = vrot.slane %v2269, %v2288
      %v2291 = vmul.f32 %v2284, %v2289
      %v2293 = vlaneseq
      %v2294 = vshrl.u32 %v2293, 7
      %v2295 = vsub.s32 0, %v2294
      %v2296 = vrot.slane %v2270, %v2295
      %v2298 = vadd.f32 %v2291, %v2296
      %v2299 = vpack.c.bf16 %v2298, %v2298
      %vm2300 = vcmask 257024
      %2301 = vst.msk [vmem:[%s273] sm:$0xf] %vm2300, %v2299
      %p2302 = scmp.lt.s32.totalorder %s18, 1
      %s2303 = scalar_select %p2302, %s18, 1
      %s2304 = smul.addr %s2303, 4
      %s2305 = scalar_lea.vmem %s7, %s2304
      // Predicated region
      $region49: #{prooformer_forward.14} parent=47 // pred_check
        %p2306 = pneg %p188
      $region50: #{prooformer_forward.14} parent=47 // pred_check_branch
        %2308 = sbr.rel (%p2306) target = $region52
      $region51: #{prooformer_forward.14} parent=47 // pred_region
        _
      $region52: #{prooformer_forward.14} parent=47 // pred_fallthru
        _
    $region48: #{prooformer_forward.14} parent=5 // pred_fallthru
      _
    %p2309 = scmp.le.s32.totalorder 2, %s13
    // Predicated region
    $region53: #{prooformer_forward.14} parent=5 // pred_check
      %p2310 = pneg %p2309
    $region54: #{prooformer_forward.14} parent=5 // pred_check_branch
      %2312 = sbr.rel (%p2310) target = $region56
    $region55: #{prooformer_forward.14} parent=5 // pred_region
      %s2313 = ssub.s32 %s13, 2
      // Predicated region
      $region57: #{prooformer_forward.14} parent=55 // pred_check
        %p2314 = pneg %p194
      $region58: #{prooformer_forward.14} parent=55 // pred_check_branch
        %2316 = sbr.rel (%p2314) target = $region60
      $region59: #{prooformer_forward.14} parent=55 // pred_region
        %p2317 = scmp.lt.s32.totalorder %s19, 1
        %s2318 = scalar_select %p2317, %s19, 1
        %s2319 = smul.addr %s2318, 4
        %s2320 = scalar_lea.vmem %s7, %s2319
      $region60: #{prooformer_forward.14} parent=55 // pred_fallthru
        _
    $region56: #{prooformer_forward.14} parent=5 // pred_fallthru
      _
  $region6: #{prooformer_forward.14} parent=0 // loop_footer
    %s17 = sadd.s32 1, %s13
  $region7: #{prooformer_forward.14} parent=0 // loop_footer_branch
    %12 = sbr.rel target = $region3
  $region8: #{prooformer_forward.14} parent=0 // loop_exit
    _

// kernel: prooformer_forward.25
$region0: #{prooformer_forward.25}
  #allocation0 [shape = 'u32[]', space=smem, size = 0x4, offset = 0x4, fixed_abs, tag = 'smem constant byte address 0x4 - core index']
  #allocation1 [shape = 'u32[144,128]{1,0:T(1,128)}', space=vmem, size = 0x12000, scoped, tag = 'internal scratch']
  %s0 = inlined_call_operand.vmem [shape: bf16[16,32], index: 0, kind: input, shape index: {}]
  %s1 = inlined_call_operand.vmem [shape: bf16[32,64], index: 1, kind: input, shape index: {}]
  %s2 = inlined_call_operand.vmem [shape: f32[1,64], index: 2, kind: input, shape index: {}]
  %s3 = inlined_call_operand.hbm [shape: f32[16,64], index: 3, kind: output, shape index: {}]
  %s4 = sld [smem:[#allocation0]]
  $region45: #{prooformer_forward.25} parent=0
    _
  %s6 = ssub.s32 1, %s4
  %s7 = scalar_select 0, %s6, %s4
  $region1: #{prooformer_forward.25} parent=0
    #allocation2 [shape = 'u8[8192]{0}', space=vmem, size = 0x2000, scoped, tag = 'output window, operand 0']
    #allocation3 [shape = 's32[2]{0}', space=sflag, size = 0x8, scoped, tag = 'scoped memory for prooformer_forward.25']
    %8 = vsyncpa [#allocation3], 0
    %s9 = scalar_lea.sflag [#allocation3], 1
    %10 = vsyncpa %s9, 0
    loop: start=0, step=1, limit=4
    $region2: #{prooformer_forward.25} parent=1 // loop_pre_header
      _
    $region3: #{prooformer_forward.25} parent=1 // loop_header
      %s12 = sphi 0, %s16
      %p13 = scmp.ge.s32.totalorder %s12, 4
      %s22 = sphi 0, %s24
      %s25 = sphi 0, %s22
      %s26 = sphi 0, %s25
      %s42 = sphi 0, %s26
      %s46 = sphi 0, %s46
      %s48 = sphi 0, %s46
      %s49 = sphi 0, %s48
      %s63 = sphi 0, %s49
      %s67 = sphi 0, %s67
      %s69 = sphi 0, %s67
      %s70 = sphi 0, %s69
      %s84 = sphi 0, %s70
      %s90 = sphi 0, %s92
      %s93 = sphi 0, %s90
      %s94 = sphi 0, %s93
      %s110 = sphi 0, %s94
    $region4: #{prooformer_forward.25} parent=1 // loop_header_branch
      %15 = sbr.rel (%p13) target = $region8
    $region5: #{prooformer_forward.25} parent=1 // loop_body
      %s17 = ssub.s32 %s12, 1
      %s18 = ssub.s32 %s12, 2
      %s19 = sadd.s32 %s12, 1
      %s20 = ssub.s32 %s12, %s19
      %p21 = scmp.eq.s32.totalorder %s20, 0
      %s23 = sadd.s32 %s22, 1
      %s24 = scalar_select %p21, %s22, %s23
      %p27 = pneg %p21
      %p28 = scmp.eq.s32.totalorder %s12, 1
      %p29 = por %p27, %p28
      %p30 = scmp.ne.s32.totalorder %s22, %s25
      %p31 = scmp.eq.s32.totalorder %s12, 0
      %p32 = por %p30, %p31
      %p33 = scmp.ne.s32.totalorder %s22, %s25
      %p34 = scmp.eq.s32.totalorder %s17, 1
      %p35 = por %p33, %p34
      %p36 = scmp.ne.s32.totalorder %s25, %s26
      %p37 = scmp.eq.s32.totalorder %s17, 0
      %p38 = por %p36, %p37
      %p39 = scmp.ne.s32.totalorder %s25, %s26
      %p40 = scmp.eq.s32.totalorder %s18, 1
      %p41 = por %p39, %p40
      %p43 = scmp.ne.s32.totalorder %s26, %s42
      %p44 = scmp.eq.s32.totalorder %s18, 0
      %p45 = por %p43, %p44
      %s47 = sadd.s32 %s46, 1
      %p50 = scmp.eq.s32.totalorder %s12, 1
      %p51 = scmp.ne.s32.totalorder %s46, %s48
      %p52 = scmp.eq.s32.totalorder %s12, 0
      %p53 = por %p51, %p52
      %p54 = scmp.ne.s32.totalorder %s46, %s48
      %p55 = scmp.eq.s32.totalorder %s17, 1
      %p56 = por %p54, %p55
      %p57 = scmp.ne.s32.totalorder %s48, %s49
      %p58 = scmp.eq.s32.totalorder %s17, 0
      %p59 = por %p57, %p58
      %p60 = scmp.ne.s32.totalorder %s48, %s49
      %p61 = scmp.eq.s32.totalorder %s18, 1
      %p62 = por %p60, %p61
      %p64 = scmp.ne.s32.totalorder %s49, %s63
      %p65 = scmp.eq.s32.totalorder %s18, 0
      %p66 = por %p64, %p65
      %s68 = sadd.s32 %s67, 1
      %p71 = scmp.eq.s32.totalorder %s12, 1
      %p72 = scmp.ne.s32.totalorder %s67, %s69
      %p73 = scmp.eq.s32.totalorder %s12, 0
      %p74 = por %p72, %p73
      %p75 = scmp.ne.s32.totalorder %s67, %s69
      %p76 = scmp.eq.s32.totalorder %s17, 1
      %p77 = por %p75, %p76
      %p78 = scmp.ne.s32.totalorder %s69, %s70
      %p79 = scmp.eq.s32.totalorder %s17, 0
      %p80 = por %p78, %p79
      %p81 = scmp.ne.s32.totalorder %s69, %s70
      %p82 = scmp.eq.s32.totalorder %s18, 1
      %p83 = por %p81, %p82
      %p85 = scmp.ne.s32.totalorder %s70, %s84
      %p86 = scmp.eq.s32.totalorder %s18, 0
      %p87 = por %p85, %p86
      %s88 = ssub.s32 %s12, %s19
      %p89 = scmp.eq.s32.totalorder %s88, 0
      %s91 = sadd.s32 %s90, 1
      %s92 = scalar_select %p89, %s90, %s91
      %p95 = pneg %p89
      %p96 = scmp.eq.s32.totalorder %s12, 1
      %p97 = por %p95, %p96
      %p98 = scmp.ne.s32.totalorder %s90, %s93
      %p99 = scmp.eq.s32.totalorder %s12, 0
      %p100 = por %p98, %p99
      %p101 = scmp.ne.s32.totalorder %s90, %s93
      %p102 = scmp.eq.s32.totalorder %s17, 1
      %p103 = por %p101, %p102
      %p104 = scmp.ne.s32.totalorder %s93, %s94
      %p105 = scmp.eq.s32.totalorder %s17, 0
      %p106 = por %p104, %p105
      %p107 = scmp.ne.s32.totalorder %s93, %s94
      %p108 = scmp.eq.s32.totalorder %s18, 1
      %p109 = por %p107, %p108
      %p111 = scmp.ne.s32.totalorder %s94, %s110
      %p112 = scmp.eq.s32.totalorder %s18, 0
      %p113 = por %p111, %p112
      %p114 = scmp.le.s32.totalorder 1, %s12
      %p115 = scmp.lt.s32.totalorder %s12, 3
      %p116 = pnand %p114, %p115
      %p117 = pneg %p116
      // Predicated region
      $region9: #{prooformer_forward.25} parent=5 // pred_check
        _
      $region10: #{prooformer_forward.25} parent=5 // pred_check_branch
        %119 = sbr.rel (%p116) target = $region12
      $region11: #{prooformer_forward.25} parent=5 // pred_region
        %s120 = ssub.s32 %s12, 1
        // Predicated region
        $region13: #{prooformer_forward.25} parent=11 // pred_check
          %p121 = pneg %p59
        $region14: #{prooformer_forward.25} parent=11 // pred_check_branch
          %123 = sbr.rel (%p121) target = $region16
        $region15: #{prooformer_forward.25} parent=11 // pred_region
          _
        $region16: #{prooformer_forward.25} parent=11 // pred_fallthru
          _
        // Predicated region
        $region17: #{prooformer_forward.25} parent=11 // pred_check
          %p124 = pneg %p80
        $region18: #{prooformer_forward.25} parent=11 // pred_check_branch
          %126 = sbr.rel (%p124) target = $region20
        $region19: #{prooformer_forward.25} parent=11 // pred_region
          _
        $region20: #{prooformer_forward.25} parent=11 // pred_fallthru
          _
      $region12: #{prooformer_forward.25} parent=5 // pred_fallthru
        _
      %p127 = scmp.lt.s32.totalorder %s12, 2
      // Predicated region
      $region21: #{prooformer_forward.25} parent=5 // pred_check
        %p128 = pneg %p127
      $region22: #{prooformer_forward.25} parent=5 // pred_check_branch
        %130 = sbr.rel (%p128) target = $region24
      $region23: #{prooformer_forward.25} parent=5 // pred_region
        // Predicated region
        $region25: #{prooformer_forward.25} parent=23 // pred_check
          %p131 = pneg %p32
        $region26: #{prooformer_forward.25} parent=23 // pred_check_branch
          %133 = sbr.rel (%p131) target = $region28
        $region27: #{prooformer_forward.25} parent=23 // pred_region
          %p134 = scmp.lt.s32.totalorder %s12, 1
          %s135 = scalar_select %p134, %s12, 1
          %s136 = smul.addr %s135, 4
          %s137 = scalar_lea.vmem %s0, %s136
        $region28: #{prooformer_forward.25} parent=23 // pred_fallthru
          _
      $region24: #{prooformer_forward.25} parent=5 // pred_fallthru
        _
      %p138 = scmp.le.s32.totalorder 1, %s12
      %p139 = scmp.lt.s32.totalorder %s12, 3
      %p140 = pnand %p138, %p139
      %p141 = pneg %p140
      // Predicated region
      $region29: #{prooformer_forward.25} parent=5 // pred_check
        _
      $region30: #{prooformer_forward.25} parent=5 // pred_check_branch
        %143 = sbr.rel (%p140) target = $region32
      $region31: #{prooformer_forward.25} parent=5 // pred_region
        %s144 = ssub.s32 %s12, 1
        %p145 = scmp.lt.s32.totalorder %s17, 1
        %s146 = scalar_select %p145, %s17, 1
        %s147 = smul.addr %s146, 4
        %s148 = scalar_lea.vmem %s0, %s147
        %p149 = pneg %p38
        %p150 = pneg %p35
        %p151 = pneg %p59
        %p152 = pneg %p56
        %p153 = pneg %p80
        %p154 = pneg %p77
        %p155 = pneg %p106
        %p156 = pneg %p103
        %s157 = sand.u32 %s93, 1
        %s158 = scalar_lea.sflag [#allocation3], %s157
        %s159 = sand.u32 %s93, 1
        %s160 = smul.addr %s159, 8
        %s161 = scalar_lea.vmem [#allocation2], %s160
        %p162 = scmp.lt.s32.totalorder %s17, 1
        %s163 = scalar_select %p162, %s17, 1
        %s164 = smul.addr %s163, 4
        %s165 = scalar_lea.vmem %s0, %s164
        %v167 = vld [vmem:[%s165] sm:$0xf]
        %v168 = vld [vmem:[%s1] sm:$0xf]
        %v169 = vld [vmem:[%s1 + $0x4] sm:$0xf]
        %v170 = vld [vmem:[%s1 + $0x8] sm:$0xf]
        %v171 = vld [vmem:[%s1 + $0xc] sm:$0xf]
        %v172 = vld [vmem:[%s2] sm:$0x1]
        %v174 = vlaneseq
        %v175 = vshrl.u32 %v174, 7
        %v176 = vsub.s32 0, %v175
        %v177 = vrot.slane %v172, %v176
        %v183 = vunpack.c.l.b16 %v168
        %v184 = vunpack.c.l.b16 %v169
        %v185 = vunpack.c.l.b16 %v170
        %v186 = vunpack.c.l.b16 %v171
        %v187 = vpack.c.b16 %v184, %v183
        %v188 = vpack.c.b16 %v186, %v185
        %vm191 = vcmask 261120
        %v193 = vsel %vm191, %v167, 0
        %195 = vmatprep.subr.bf16.mxu0 0
        %196 = vmatpush1.bf16.msra.mxu0 0
        %197 = vmatprep.subr.bf16.mxu0 0
        %198 = vmatpush1.bf16.msra.mxu0 0
        %199 = vmatprep.subr.bf16.mxu0 0
        %200 = vmatpush1.bf16.msra.mxu0 0
        %201 = vmatprep.subr.bf16.mxu0 0
        %202 = vmatpush1.bf16.msra.mxu0 0
        %203 = vmatprep.subr.bf16.mxu0 0
        %204 = vmatpush1.bf16.msra.mxu0 0
        %205 = vmatprep.subr.bf16.mxu0 0
        %206 = vmatpush1.bf16.msra.mxu0 0
        %207 = vmatprep.subr.bf16.mxu0 0
        %208 = vmatpush1.bf16.msra.mxu0 %v188
        %209 = vmatprep.subr.bf16.mxu0 0
        %210 = vmatpush1.bf16.msra.mxu0 %v187
        %211 = vmatprep.subr.bf16.mxu0 0
        %212 = vmatpush2.bf16.msra.mxu0 0
        %213 = vmatprep.subr.bf16.mxu0 0
        %214 = vmatpush2.bf16.msra.mxu0 0
        %215 = vmatprep.subr.bf16.mxu0 0
        %216 = vmatpush2.bf16.msra.mxu0 0
        %217 = vmatprep.subr.bf16.mxu0 0
        %218 = vmatpush2.bf16.msra.mxu0 0
        %219 = vmatprep.subr.bf16.mxu0 0
        %220 = vmatpush2.bf16.msra.mxu0 0
        %221 = vmatprep.subr.bf16.mxu0 0
        %222 = vmatpush2.bf16.msra.mxu0 0
        %223 = vmatprep.subr.bf16.mxu0 0
        %224 = vmatpush2.bf16.msra.mxu0 0
        %225 = vmatprep.subr.bf16.mxu0 0
        %226 = vmatpush2.bf16.msra.mxu0 0
        %227 = vmatprep.mubr.bf16.mxu0 0
        %228 = vmatmul.mubr.bf16.gmra.mxu0 %v193
        %v229 = vpop.f32.mrf.mxu0
        %v230 = vadd.f32 %v177, %v229
        %v231 = vpop.f32.mrf.mxu0
        %v232 = vpop.f32.mrf.mxu0
        %v233 = vpop.f32.mrf.mxu0
        %234 = vdwg.mxu0
        %vm235 = vcmask 523264
        %v236 = vsel %vm235, %v230, -inf
        %237 = vmax.xlane.f32.xlu0 %v236
        %v238 = vpop.xlane.xlu0 %237
        %v239 = vsub.f32 %v230, %v238
        %v240 = vmul.f32 %v239, 1.442695
        %v241 = vpow.pop %v240
        %v242 = vsel %vm235, %v241, 0.0
        %243 = vadd.xlane.f32.xlu0 %v242
        %v244 = vpop.xlane.xlu0 %243
        %v245 = vrcp.pop %v244
        %v246 = vmul.f32 %v241, %v245
        %247 = vst.msk [vmem:[%s161] sm:$0xff] %vm235, %v246
        %s248 = sand.u32 %s93, 1
        %s249 = scalar_lea.sflag [#allocation3], %s248
        %s250 = sand.u32 %s93, 1
        %s251 = smul.addr %s250, 8
        %s252 = scalar_lea.vmem [#allocation2], %s251
        // Predicated region
        $region33: #{prooformer_forward.25} parent=31 // pred_check
          %p253 = pneg %p103
        $region34: #{prooformer_forward.25} parent=31 // pred_check_branch
          %255 = sbr.rel (%p253) target = $region36
        $region35: #{prooformer_forward.25} parent=31 // pred_region
          %s257 = ssub.s32 128, 128
          %258 = vsyncadd %s249, %s257
          %s259 = smul.addr %s17, 128
          %s260 = scalar_lea.hbm %s3, %s259
          %s262 = sshll.u32 %s252, 4
          %s263 = int_to_ptr.vmem [resolvable:$true] %s262
          %265 = dma.vmem_to_hbm [thread:$0]  %s263, 128, %s260, %s249
        $region36: #{prooformer_forward.25} parent=31 // pred_fallthru
          _
      $region32: #{prooformer_forward.25} parent=5 // pred_fallthru
        _
      %p266 = scmp.le.s32.totalorder 2, %s12
      // Predicated region
      $region37: #{prooformer_forward.25} parent=5 // pred_check
        %p267 = pneg %p266
      $region38: #{prooformer_forward.25} parent=5 // pred_check_branch
        %269 = sbr.rel (%p267) target = $region40
      $region39: #{prooformer_forward.25} parent=5 // pred_region
        %s270 = ssub.s32 %s12, 2
        // Predicated region
        $region41: #{prooformer_forward.25} parent=39 // pred_check
          %p271 = pneg %p109
        $region42: #{prooformer_forward.25} parent=39 // pred_check_branch
          %273 = sbr.rel (%p271) target = $region44
        $region43: #{prooformer_forward.25} parent=39 // pred_region
          %s274 = sand.u32 %s94, 1
          %s275 = scalar_lea.sflag [#allocation3], %s274
          %s276 = sand.u32 %s94, 1
          %s277 = smul.addr %s276, 8
          %s278 = scalar_lea.vmem [#allocation2], %s277
          %279 = dma.done %s275, 128
        $region44: #{prooformer_forward.25} parent=39 // pred_fallthru
          _
      $region40: #{prooformer_forward.25} parent=5 // pred_fallthru
        _
    $region6: #{prooformer_forward.25} parent=1 // loop_footer
      %s16 = sadd.s32 1, %s12
    $region7: #{prooformer_forward.25} parent=1 // loop_footer_branch
      %11 = sbr.rel target = $region3
    $region8: #{prooformer_forward.25} parent=1 // loop_exit
      _
    %280 = vsyncpa [#allocation3], 1
    %s281 = scalar_lea.sflag [#allocation3], 1
    %282 = vsyncpa %s281, 1

// kernel: prooformer_forward.19
$region0: #{prooformer_forward.19}
  #allocation0 [shape = 'u32[]', space=smem, size = 0x4, offset = 0x4, fixed_abs, tag = 'smem constant byte address 0x4 - core index']
  #allocation1 [shape = 'u32[144,128]{1,0:T(1,128)}', space=vmem, size = 0x12000, scoped, tag = 'internal scratch']
  %s0 = inlined_call_operand.vmem [shape: bf16[2,8,32], index: 0, kind: input, shape index: {}]
  %s1 = inlined_call_operand.vmem [shape: bf16[2,8,32], index: 1, kind: input, shape index: {}]
  %s2 = inlined_call_operand.vmem [shape: bf16[32,32], index: 2, kind: input, shape index: {}]
  %s3 = inlined_call_operand.vmem [shape: f32[1,32], index: 3, kind: input, shape index: {}]
  %s4 = inlined_call_operand.vmem [shape: bf16[32,64], index: 4, kind: input, shape index: {}]
  %s5 = inlined_call_operand.vmem [shape: f32[1,64], index: 5, kind: input, shape index: {}]
  %s6 = inlined_call_operand.vmem [shape: bf16[32,32], index: 6, kind: input, shape index: {}]
  %s7 = inlined_call_operand.vmem [shape: f32[1,32], index: 7, kind: input, shape index: {}]
  %s8 = inlined_call_operand.vmem [shape: f32[1,32], index: 8, kind: input, shape index: {}]
  %s9 = inlined_call_operand.vmem [shape: f32[1,32], index: 9, kind: input, shape index: {}]
  %s10 = inlined_call_operand.vmem [shape: bf16[2,8,32], index: 10, kind: output, shape index: {}]
  %s11 = sld [smem:[#allocation0]]
  $region73: #{prooformer_forward.19} parent=0
    _
  %s13 = ssub.s32 1, %s11
  %s14 = scalar_select 0, %s13, %s11
  loop: start=0, step=1, limit=4
  $region2: #{prooformer_forward.19} parent=0 // loop_pre_header
    _
  $region3: #{prooformer_forward.19} parent=0 // loop_header
    %s16 = sphi 0, %s20
    %p17 = scmp.ge.s32.totalorder %s16, 4
    %s26 = sphi 0, %s28
    %s29 = sphi 0, %s26
    %s30 = sphi 0, %s29
    %s46 = sphi 0, %s30
    %s52 = sphi 0, %s54
    %s55 = sphi 0, %s52
    %s56 = sphi 0, %s55
    %s72 = sphi 0, %s56
    %s76 = sphi 0, %s76
    %s78 = sphi 0, %s76
    %s79 = sphi 0, %s78
    %s93 = sphi 0, %s79
    %s97 = sphi 0, %s97
    %s99 = sphi 0, %s97
    %s100 = sphi 0, %s99
    %s114 = sphi 0, %s100
    %s118 = sphi 0, %s118
    %s120 = sphi 0, %s118
    %s121 = sphi 0, %s120
    %s135 = sphi 0, %s121
    %s139 = sphi 0, %s139
    %s141 = sphi 0, %s139
    %s142 = sphi 0, %s141
    %s156 = sphi 0, %s142
    %s160 = sphi 0, %s160
    %s162 = sphi 0, %s160
    %s163 = sphi 0, %s162
    %s177 = sphi 0, %s163
    %s181 = sphi 0, %s181
    %s183 = sphi 0, %s181
    %s184 = sphi 0, %s183
    %s198 = sphi 0, %s184
    %s202 = sphi 0, %s202
    %s204 = sphi 0, %s202
    %s205 = sphi 0, %s204
    %s219 = sphi 0, %s205
    %s223 = sphi 0, %s223
    %s225 = sphi 0, %s223
    %s226 = sphi 0, %s225
    %s240 = sphi 0, %s226
    %s246 = sphi 0, %s248
    %s249 = sphi 0, %s246
    %s250 = sphi 0, %s249
    %s266 = sphi 0, %s250
  $region4: #{prooformer_forward.19} parent=0 // loop_header_branch
    %19 = sbr.rel (%p17) target = $region8
  $region5: #{prooformer_forward.19} parent=0 // loop_body
    %s21 = ssub.s32 %s16, 1
    %s22 = ssub.s32 %s16, 2
    %s23 = sadd.s32 %s16, 1
    %s24 = ssub.s32 %s16, %s23
    %p25 = scmp.eq.s32.totalorder %s24, 0
    %s27 = sadd.s32 %s26, 1
    %s28 = scalar_select %p25, %s26, %s27
    %p31 = pneg %p25
    %p32 = scmp.eq.s32.totalorder %s16, 1
    %p33 = por %p31, %p32
    %p34 = scmp.ne.s32.totalorder %s26, %s29
    %p35 = scmp.eq.s32.totalorder %s16, 0
    %p36 = por %p34, %p35
    %p37 = scmp.ne.s32.totalorder %s26, %s29
    %p38 = scmp.eq.s32.totalorder %s21, 1
    %p39 = por %p37, %p38
    %p40 = scmp.ne.s32.totalorder %s29, %s30
    %p41 = scmp.eq.s32.totalorder %s21, 0
    %p42 = por %p40, %p41
    %p43 = scmp.ne.s32.totalorder %s29, %s30
    %p44 = scmp.eq.s32.totalorder %s22, 1
    %p45 = por %p43, %p44
    %p47 = scmp.ne.s32.totalorder %s30, %s46
    %p48 = scmp.eq.s32.totalorder %s22, 0
    %p49 = por %p47, %p48
    %s50 = ssub.s32 %s16, %s23
    %p51 = scmp.eq.s32.totalorder %s50, 0
    %s53 = sadd.s32 %s52, 1
    %s54 = scalar_select %p51, %s52, %s53
    %p57 = pneg %p51
    %p58 = scmp.eq.s32.totalorder %s16, 1
    %p59 = por %p57, %p58
    %p60 = scmp.ne.s32.totalorder %s52, %s55
    %p61 = scmp.eq.s32.totalorder %s16, 0
    %p62 = por %p60, %p61
    %p63 = scmp.ne.s32.totalorder %s52, %s55
    %p64 = scmp.eq.s32.totalorder %s21, 1
    %p65 = por %p63, %p64
    %p66 = scmp.ne.s32.totalorder %s55, %s56
    %p67 = scmp.eq.s32.totalorder %s21, 0
    %p68 = por %p66, %p67
    %p69 = scmp.ne.s32.totalorder %s55, %s56
    %p70 = scmp.eq.s32.totalorder %s22, 1
    %p71 = por %p69, %p70
    %p73 = scmp.ne.s32.totalorder %s56, %s72
    %p74 = scmp.eq.s32.totalorder %s22, 0
    %p75 = por %p73, %p74
    %s77 = sadd.s32 %s76, 1
    %p80 = scmp.eq.s32.totalorder %s16, 1
    %p81 = scmp.ne.s32.totalorder %s76, %s78
    %p82 = scmp.eq.s32.totalorder %s16, 0
    %p83 = por %p81, %p82
    %p84 = scmp.ne.s32.totalorder %s76, %s78
    %p85 = scmp.eq.s32.totalorder %s21, 1
    %p86 = por %p84, %p85
    %p87 = scmp.ne.s32.totalorder %s78, %s79
    %p88 = scmp.eq.s32.totalorder %s21, 0
    %p89 = por %p87, %p88
    %p90 = scmp.ne.s32.totalorder %s78, %s79
    %p91 = scmp.eq.s32.totalorder %s22, 1
    %p92 = por %p90, %p91
    %p94 = scmp.ne.s32.totalorder %s79, %s93
    %p95 = scmp.eq.s32.totalorder %s22, 0
    %p96 = por %p94, %p95
    %s98 = sadd.s32 %s97, 1
    %p101 = scmp.eq.s32.totalorder %s16, 1
    %p102 = scmp.ne.s32.totalorder %s97, %s99
    %p103 = scmp.eq.s32.totalorder %s16, 0
    %p104 = por %p102, %p103
    %p105 = scmp.ne.s32.totalorder %s97, %s99
    %p106 = scmp.eq.s32.totalorder %s21, 1
    %p107 = por %p105, %p106
    %p108 = scmp.ne.s32.totalorder %s99, %s100
    %p109 = scmp.eq.s32.totalorder %s21, 0
    %p110 = por %p108, %p109
    %p111 = scmp.ne.s32.totalorder %s99, %s100
    %p112 = scmp.eq.s32.totalorder %s22, 1
    %p113 = por %p111, %p112
    %p115 = scmp.ne.s32.totalorder %s100, %s114
    %p116 = scmp.eq.s32.totalorder %s22, 0
    %p117 = por %p115, %p116
    %s119 = sadd.s32 %s118, 1
    %p122 = scmp.eq.s32.totalorder %s16, 1
    %p123 = scmp.ne.s32.totalorder %s118, %s120
    %p124 = scmp.eq.s32.totalorder %s16, 0
    %p125 = por %p123, %p124
    %p126 = scmp.ne.s32.totalorder %s118, %s120
    %p127 = scmp.eq.s32.totalorder %s21, 1
    %p128 = por %p126, %p127
    %p129 = scmp.ne.s32.totalorder %s120, %s121
    %p130 = scmp.eq.s32.totalorder %s21, 0
    %p131 = por %p129, %p130
    %p132 = scmp.ne.s32.totalorder %s120, %s121
    %p133 = scmp.eq.s32.totalorder %s22, 1
    %p134 = por %p132, %p133
    %p136 = scmp.ne.s32.totalorder %s121, %s135
    %p137 = scmp.eq.s32.totalorder %s22, 0
    %p138 = por %p136, %p137
    %s140 = sadd.s32 %s139, 1
    %p143 = scmp.eq.s32.totalorder %s16, 1
    %p144 = scmp.ne.s32.totalorder %s139, %s141
    %p145 = scmp.eq.s32.totalorder %s16, 0
    %p146 = por %p144, %p145
    %p147 = scmp.ne.s32.totalorder %s139, %s141
    %p148 = scmp.eq.s32.totalorder %s21, 1
    %p149 = por %p147, %p148
    %p150 = scmp.ne.s32.totalorder %s141, %s142
    %p151 = scmp.eq.s32.totalorder %s21, 0
    %p152 = por %p150, %p151
    %p153 = scmp.ne.s32.totalorder %s141, %s142
    %p154 = scmp.eq.s32.totalorder %s22, 1
    %p155 = por %p153, %p154
    %p157 = scmp.ne.s32.totalorder %s142, %s156
    %p158 = scmp.eq.s32.totalorder %s22, 0
    %p159 = por %p157, %p158
    %s161 = sadd.s32 %s160, 1
    %p164 = scmp.eq.s32.totalorder %s16, 1
    %p165 = scmp.ne.s32.totalorder %s160, %s162
    %p166 = scmp.eq.s32.totalorder %s16, 0
    %p167 = por %p165, %p166
    %p168 = scmp.ne.s32.totalorder %s160, %s162
    %p169 = scmp.eq.s32.totalorder %s21, 1
    %p170 = por %p168, %p169
    %p171 = scmp.ne.s32.totalorder %s162, %s163
    %p172 = scmp.eq.s32.totalorder %s21, 0
    %p173 = por %p171, %p172
    %p174 = scmp.ne.s32.totalorder %s162, %s163
    %p175 = scmp.eq.s32.totalorder %s22, 1
    %p176 = por %p174, %p175
    %p178 = scmp.ne.s32.totalorder %s163, %s177
    %p179 = scmp.eq.s32.totalorder %s22, 0
    %p180 = por %p178, %p179
    %s182 = sadd.s32 %s181, 1
    %p185 = scmp.eq.s32.totalorder %s16, 1
    %p186 = scmp.ne.s32.totalorder %s181, %s183
    %p187 = scmp.eq.s32.totalorder %s16, 0
    %p188 = por %p186, %p187
    %p189 = scmp.ne.s32.totalorder %s181, %s183
    %p190 = scmp.eq.s32.totalorder %s21, 1
    %p191 = por %p189, %p190
    %p192 = scmp.ne.s32.totalorder %s183, %s184
    %p193 = scmp.eq.s32.totalorder %s21, 0
    %p194 = por %p192, %p193
    %p195 = scmp.ne.s32.totalorder %s183, %s184
    %p196 = scmp.eq.s32.totalorder %s22, 1
    %p197 = por %p195, %p196
    %p199 = scmp.ne.s32.totalorder %s184, %s198
    %p200 = scmp.eq.s32.totalorder %s22, 0
    %p201 = por %p199, %p200
    %s203 = sadd.s32 %s202, 1
    %p206 = scmp.eq.s32.totalorder %s16, 1
    %p207 = scmp.ne.s32.totalorder %s202, %s204
    %p208 = scmp.eq.s32.totalorder %s16, 0
    %p209 = por %p207, %p208
    %p210 = scmp.ne.s32.totalorder %s202, %s204
    %p211 = scmp.eq.s32.totalorder %s21, 1
    %p212 = por %p210, %p211
    %p213 = scmp.ne.s32.totalorder %s204, %s205
    %p214 = scmp.eq.s32.totalorder %s21, 0
    %p215 = por %p213, %p214
    %p216 = scmp.ne.s32.totalorder %s204, %s205
    %p217 = scmp.eq.s32.totalorder %s22, 1
    %p218 = por %p216, %p217
    %p220 = scmp.ne.s32.totalorder %s205, %s219
    %p221 = scmp.eq.s32.totalorder %s22, 0
    %p222 = por %p220, %p221
    %s224 = sadd.s32 %s223, 1
    %p227 = scmp.eq.s32.totalorder %s16, 1
    %p228 = scmp.ne.s32.totalorder %s223, %s225
    %p229 = scmp.eq.s32.totalorder %s16, 0
    %p230 = por %p228, %p229
    %p231 = scmp.ne.s32.totalorder %s223, %s225
    %p232 = scmp.eq.s32.totalorder %s21, 1
    %p233 = por %p231, %p232
    %p234 = scmp.ne.s32.totalorder %s225, %s226
    %p235 = scmp.eq.s32.totalorder %s21, 0
    %p236 = por %p234, %p235
    %p237 = scmp.ne.s32.totalorder %s225, %s226
    %p238 = scmp.eq.s32.totalorder %s22, 1
    %p239 = por %p237, %p238
    %p241 = scmp.ne.s32.totalorder %s226, %s240
    %p242 = scmp.eq.s32.totalorder %s22, 0
    %p243 = por %p241, %p242
    %s244 = ssub.s32 %s16, %s23
    %p245 = scmp.eq.s32.totalorder %s244, 0
    %s247 = sadd.s32 %s246, 1
    %s248 = scalar_select %p245, %s246, %s247
    %p251 = pneg %p245
    %p252 = scmp.eq.s32.totalorder %s16, 1
    %p253 = por %p251, %p252
    %p254 = scmp.ne.s32.totalorder %s246, %s249
    %p255 = scmp.eq.s32.totalorder %s16, 0
    %p256 = por %p254, %p255
    %p257 = scmp.ne.s32.totalorder %s246, %s249
    %p258 = scmp.eq.s32.totalorder %s21, 1
    %p259 = por %p257, %p258
    %p260 = scmp.ne.s32.totalorder %s249, %s250
    %p261 = scmp.eq.s32.totalorder %s21, 0
    %p262 = por %p260, %p261
    %p263 = scmp.ne.s32.totalorder %s249, %s250
    %p264 = scmp.eq.s32.totalorder %s22, 1
    %p265 = por %p263, %p264
    %p267 = scmp.ne.s32.totalorder %s250, %s266
    %p268 = scmp.eq.s32.totalorder %s22, 0
    %p269 = por %p267, %p268
    %p270 = scmp.le.s32.totalorder 1, %s16
    %p271 = scmp.lt.s32.totalorder %s16, 3
    %p272 = pnand %p270, %p271
    %p273 = pneg %p272
    // Predicated region
    $region9: #{prooformer_forward.19} parent=5 // pred_check
      _
    $region10: #{prooformer_forward.19} parent=5 // pred_check_branch
      %275 = sbr.rel (%p272) target = $region12
    $region11: #{prooformer_forward.19} parent=5 // pred_region
      %s276 = ssub.s32 %s16, 1
      // Predicated region
      $region13: #{prooformer_forward.19} parent=11 // pred_check
        %p277 = pneg %p89
      $region14: #{prooformer_forward.19} parent=11 // pred_check_branch
        %279 = sbr.rel (%p277) target = $region16
      $region15: #{prooformer_forward.19} parent=11 // pred_region
        _
      $region16: #{prooformer_forward.19} parent=11 // pred_fallthru
        _
      // Predicated region
      $region17: #{prooformer_forward.19} parent=11 // pred_check
        %p280 = pneg %p110
      $region18: #{prooformer_forward.19} parent=11 // pred_check_branch
        %282 = sbr.rel (%p280) target = $region20
      $region19: #{prooformer_forward.19} parent=11 // pred_region
        _
      $region20: #{prooformer_forward.19} parent=11 // pred_fallthru
        _
      // Predicated region
      $region21: #{prooformer_forward.19} parent=11 // pred_check
        %p283 = pneg %p131
      $region22: #{prooformer_forward.19} parent=11 // pred_check_branch
        %285 = sbr.rel (%p283) target = $region24
      $region23: #{prooformer_forward.19} parent=11 // pred_region
        _
      $region24: #{prooformer_forward.19} parent=11 // pred_fallthru
        _
      // Predicated region
      $region25: #{prooformer_forward.19} parent=11 // pred_check
        %p286 = pneg %p152
      $region26: #{prooformer_forward.19} parent=11 // pred_check_branch
        %288 = sbr.rel (%p286) target = $region28
      $region27: #{prooformer_forward.19} parent=11 // pred_region
        _
      $region28: #{prooformer_forward.19} parent=11 // pred_fallthru
        _
      // Predicated region
      $region29: #{prooformer_forward.19} parent=11 // pred_check
        %p289 = pneg %p173
      $region30: #{prooformer_forward.19} parent=11 // pred_check_branch
        %291 = sbr.rel (%p289) target = $region32
      $region31: #{prooformer_forward.19} parent=11 // pred_region
        _
      $region32: #{prooformer_forward.19} parent=11 // pred_fallthru
        _
      // Predicated region
      $region33: #{prooformer_forward.19} parent=11 // pred_check
        %p292 = pneg %p194
      $region34: #{prooformer_forward.19} parent=11 // pred_check_branch
        %294 = sbr.rel (%p292) target = $region36
      $region35: #{prooformer_forward.19} parent=11 // pred_region
        _
      $region36: #{prooformer_forward.19} parent=11 // pred_fallthru
        _
      // Predicated region
      $region37: #{prooformer_forward.19} parent=11 // pred_check
        %p295 = pneg %p215
      $region38: #{prooformer_forward.19} parent=11 // pred_check_branch
        %297 = sbr.rel (%p295) target = $region40
      $region39: #{prooformer_forward.19} parent=11 // pred_region
        _
      $region40: #{prooformer_forward.19} parent=11 // pred_fallthru
        _
      // Predicated region
      $region41: #{prooformer_forward.19} parent=11 // pred_check
        %p298 = pneg %p236
      $region42: #{prooformer_forward.19} parent=11 // pred_check_branch
        %300 = sbr.rel (%p298) target = $region44
      $region43: #{prooformer_forward.19} parent=11 // pred_region
        _
      $region44: #{prooformer_forward.19} parent=11 // pred_fallthru
        _
    $region12: #{prooformer_forward.19} parent=5 // pred_fallthru
      _
    %p301 = scmp.lt.s32.totalorder %s16, 2
    // Predicated region
    $region45: #{prooformer_forward.19} parent=5 // pred_check
      %p302 = pneg %p301
    $region46: #{prooformer_forward.19} parent=5 // pred_check_branch
      %304 = sbr.rel (%p302) target = $region48
    $region47: #{prooformer_forward.19} parent=5 // pred_region
      // Predicated region
      $region49: #{prooformer_forward.19} parent=47 // pred_check
        %p305 = pneg %p36
      $region50: #{prooformer_forward.19} parent=47 // pred_check_branch
        %307 = sbr.rel (%p305) target = $region52
      $region51: #{prooformer_forward.19} parent=47 // pred_region
        %p308 = scmp.lt.s32.totalorder %s16, 1
        %s309 = scalar_select %p308, %s16, 1
        %s310 = smul.addr %s309, 4
        %s311 = scalar_lea.vmem %s0, %s310
      $region52: #{prooformer_forward.19} parent=47 // pred_fallthru
        _
      // Predicated region
      $region53: #{prooformer_forward.19} parent=47 // pred_check
        %p312 = pneg %p62
      $region54: #{prooformer_forward.19} parent=47 // pred_check_branch
        %314 = sbr.rel (%p312) target = $region56
      $region55: #{prooformer_forward.19} parent=47 // pred_region
        %p315 = scmp.lt.s32.totalorder %s16, 1
        %s316 = scalar_select %p315, %s16, 1
        %s317 = smul.addr %s316, 4
        %s318 = scalar_lea.vmem %s1, %s317
      $region56: #{prooformer_forward.19} parent=47 // pred_fallthru
        _
    $region48: #{prooformer_forward.19} parent=5 // pred_fallthru
      _
    %p319 = scmp.le.s32.totalorder 1, %s16
    %p320 = scmp.lt.s32.totalorder %s16, 3
    %p321 = pnand %p319, %p320
    %p322 = pneg %p321
    // Predicated region
    $region57: #{prooformer_forward.19} parent=5 // pred_check
      _
    $region58: #{prooformer_forward.19} parent=5 // pred_check_branch
      %324 = sbr.rel (%p321) target = $region60
    $region59: #{prooformer_forward.19} parent=5 // pred_region
      %s325 = ssub.s32 %s16, 1
      %p326 = scmp.lt.s32.totalorder %s21, 1
      %s327 = scalar_select %p326, %s21, 1
      %s328 = smul.addr %s327, 4
      %s329 = scalar_lea.vmem %s0, %s328
      %p330 = pneg %p42
      %p331 = pneg %p39
      %p332 = scmp.lt.s32.totalorder %s21, 1
      %s333 = scalar_select %p332, %s21, 1
      %s334 = smul.addr %s333, 4
      %s335 = scalar_lea.vmem %s1, %s334
      %p336 = pneg %p68
      %p337 = pneg %p65
      %p338 = pneg %p89
      %p339 = pneg %p86
      %p340 = pneg %p110
      %p341 = pneg %p107
      %p342 = pneg %p131
      %p343 = pneg %p128
      %p344 = pneg %p152
      %p345 = pneg %p149
      %p346 = pneg %p173
      %p347 = pneg %p170
      %p348 = pneg %p194
      %p349 = pneg %p191
      %p350 = pneg %p215
      %p351 = pneg %p212
      %p352 = pneg %p236
      %p353 = pneg %p233
      %p354 = pneg %p262
      %p355 = pneg %p259
      %p356 = scmp.lt.s32.totalorder %s21, 1
      %s357 = scalar_select %p356, %s21, 1
      %s358 = smul.addr %s357, 4
      %s359 = scalar_lea.vmem %s10, %s358
      %p360 = scmp.lt.s32.totalorder %s21, 1
      %s361 = scalar_select %p360, %s21, 1
      %s362 = smul.addr %s361, 4
      %s363 = scalar_lea.vmem %s0, %s362
      %p364 = scmp.lt.s32.totalorder %s21, 1
      %s365 = scalar_select %p364, %s21, 1
      %s366 = smul.addr %s365, 4
      %s367 = scalar_lea.vmem %s1, %s366
      %p368 = scmp.lt.s32.totalorder %s21, 1
      %s369 = scalar_select %p368, %s21, 1
      %s370 = smul.addr %s369, 4
      %s371 = scalar_lea.vmem %s10, %s370
      %v373 = vld [vmem:[%s363] sm:$0xf]
      %v374 = vld [vmem:[%s367] sm:$0xf]
      %v375 = vld [vmem:[%s2] sm:$0xf]
      %v376 = vld [vmem:[%s2 + $0x4] sm:$0xf]
      %v377 = vld [vmem:[%s2 + $0x8] sm:$0xf]
      %v378 = vld [vmem:[%s2 + $0xc] sm:$0xf]
      %v379 = vld [vmem:[%s3] sm:$0x1]
      %v381 = vlaneseq
      %v382 = vshrl.u32 %v381, 7
      %v383 = vsub.s32 0, %v382
      %v384 = vrot.slane %v379, %v383
      %v390 = vunpack.c.l.b16 %v375
      %v391 = vunpack.c.l.b16 %v376
      %v392 = vunpack.c.l.b16 %v377
      %v393 = vunpack.c.l.b16 %v378
      %v394 = vpack.c.b16 %v391, %v390
      %v395 = vpack.c.b16 %v393, %v392
      %vm398 = vcmask 261120
      %v400 = vsel %vm398, %v373, 0
      %402 = vmatprep.subr.bf16.mxu0 0
      %403 = vmatpush1.bf16.msra.mxu0 0
      %404 = vmatprep.subr.bf16.mxu0 0
      %405 = vmatpush1.bf16.msra.mxu0 0
      %406 = vmatprep.subr.bf16.mxu0 0
      %407 = vmatpush1.bf16.msra.mxu0 0
      %408 = vmatprep.subr.bf16.mxu0 0
      %409 = vmatpush1.bf16.msra.mxu0 0
      %410 = vmatprep.subr.bf16.mxu0 0
      %411 = vmatpush1.bf16.msra.mxu0 0
      %412 = vmatprep.subr.bf16.mxu0 0
      %413 = vmatpush1.bf16.msra.mxu0 0
      %414 = vmatprep.subr.bf16.mxu0 0
      %415 = vmatpush1.bf16.msra.mxu0 %v395
      %416 = vmatprep.subr.bf16.mxu0 0
      %417 = vmatpush1.bf16.msra.mxu0 %v394
      %418 = vmatprep.subr.bf16.mxu0 0
      %419 = vmatpush2.bf16.msra.mxu0 0
      %420 = vmatprep.subr.bf16.mxu0 0
      %421 = vmatpush2.bf16.msra.mxu0 0
      %422 = vmatprep.subr.bf16.mxu0 0
      %423 = vmatpush2.bf16.msra.mxu0 0
      %424 = vmatprep.subr.bf16.mxu0 0
      %425 = vmatpush2.bf16.msra.mxu0 0
      %426 = vmatprep.subr.bf16.mxu0 0
      %427 = vmatpush2.bf16.msra.mxu0 0
      %428 = vmatprep.subr.bf16.mxu0 0
      %429 = vmatpush2.bf16.msra.mxu0 0
      %430 = vmatprep.subr.bf16.mxu0 0
      %431 = vmatpush2.bf16.msra.mxu0 0
      %432 = vmatprep.subr.bf16.mxu0 0
      %433 = vmatpush2.bf16.msra.mxu0 0
      %434 = vmatprep.mubr.bf16.mxu0 0
      %435 = vmatmul.mubr.bf16.gmra.mxu0 %v400
      %v436 = vpop.f32.mrf.mxu0
      %v437 = vadd.f32 %v384, %v436
      %v438 = vpop.f32.mrf.mxu0
      %v439 = vpop.f32.mrf.mxu0
      %v440 = vpop.f32.mrf.mxu0
      %441 = vdwg.mxu0
      %v442 = vld [vmem:[%s4] sm:$0xf]
      %v443 = vld [vmem:[%s4 + $0x4] sm:$0xf]
      %v444 = vld [vmem:[%s4 + $0x8] sm:$0xf]
      %v445 = vld [vmem:[%s4 + $0xc] sm:$0xf]
      %v446 = vld [vmem:[%s5] sm:$0x1]
      %v448 = vlaneseq
      %v449 = vshrl.u32 %v448, 7
      %v450 = vsub.s32 0, %v449
      %v451 = vrot.slane %v446, %v450
      %v457 = vunpack.c.l.b16 %v442
      %v458 = vunpack.c.l.b16 %v443
      %v459 = vunpack.c.l.b16 %v444
      %v460 = vunpack.c.l.b16 %v445
      %v461 = vpack.c.b16 %v458, %v457
      %v462 = vpack.c.b16 %v460, %v459
      %v466 = vsel %vm398, %v374, 0
      %468 = vmatprep.subr.bf16.mxu0 0
      %469 = vmatpush1.bf16.msra.mxu0 0
      %470 = vmatprep.subr.bf16.mxu0 0
      %471 = vmatpush1.bf16.msra.mxu0 0
      %472 = vmatprep.subr.bf16.mxu0 0
      %473 = vmatpush1.bf16.msra.mxu0 0
      %474 = vmatprep.subr.bf16.mxu0 0
      %475 = vmatpush1.bf16.msra.mxu0 0
      %476 = vmatprep.subr.bf16.mxu0 0
      %477 = vmatpush1.bf16.msra.mxu0 0
      %478 = vmatprep.subr.bf16.mxu0 0
      %479 = vmatpush1.bf16.msra.mxu0 0
      %480 = vmatprep.subr.bf16.mxu0 0
      %481 = vmatpush1.bf16.msra.mxu0 %v462
      %482 = vmatprep.subr.bf16.mxu0 0
      %483 = vmatpush1.bf16.msra.mxu0 %v461
      %484 = vmatprep.subr.bf16.mxu0 0
      %485 = vmatpush2.bf16.msra.mxu0 0
      %486 = vmatprep.subr.bf16.mxu0 0
      %487 = vmatpush2.bf16.msra.mxu0 0
      %488 = vmatprep.subr.bf16.mxu0 0
      %489 = vmatpush2.bf16.msra.mxu0 0
      %490 = vmatprep.subr.bf16.mxu0 0
      %491 = vmatpush2.bf16.msra.mxu0 0
      %492 = vmatprep.subr.bf16.mxu0 0
      %493 = vmatpush2.bf16.msra.mxu0 0
      %494 = vmatprep.subr.bf16.mxu0 0
      %495 = vmatpush2.bf16.msra.mxu0 0
      %496 = vmatprep.subr.bf16.mxu0 0
      %497 = vmatpush2.bf16.msra.mxu0 0
      %498 = vmatprep.subr.bf16.mxu0 0
      %499 = vmatpush2.bf16.msra.mxu0 0
      %500 = vmatprep.mubr.bf16.mxu0 0
      %501 = vmatmul.mubr.bf16.gmra.mxu0 %v466
      %v502 = vpop.f32.mrf.mxu0
      %v503 = vadd.f32 %v451, %v502
      %v504 = vpop.f32.mrf.mxu0
      %v505 = vpop.f32.mrf.mxu0
      %v506 = vpop.f32.mrf.mxu0
      %507 = vdwg.mxu0
      %509 = vrot.lane.b32.xlu0 %v437, 124
      %v510 = vpop.permute.xlu0 %509
      %512 = vrot.lane.b32.xlu0 %v437, 120
      %v513 = vpop.permute.xlu0 %512
      %515 = vrot.lane.b32.xlu0 %v437, 116
      %v516 = vpop.permute.xlu0 %515
      %518 = vrot.lane.b32.xlu0 %v437, 112
      %v519 = vpop.permute.xlu0 %518
      %521 = vrot.lane.b32.xlu0 %v437, 108
      %v522 = vpop.permute.xlu0 %521
      %524 = vrot.lane.b32.xlu0 %v437, 104
      %v525 = vpop.permute.xlu0 %524
      %527 = vrot.lane.b32.xlu0 %v437, 100
      %v528 = vpop.permute.xlu0 %527
      %v530 = vcombine.low %v437, %v513
      %v531 = vcombine.high %v437, %v513
      %v533 = vunpack.c.l.s4 1983009808
      %v534 = vunpack.c.0.s8 %v533
      %v535 = vlaneseq
      %v536 = vshrl.u32 %v535, 7
      %v537 = vsub.s32 %v534, %v536
      %v538 = vrot.slane %v530, %v537
      %v540 = vunpack.c.l.s4 1983009808
      %v541 = vunpack.c.0.s8 %v540
      %v542 = vlaneseq
      %v543 = vshrl.u32 %v542, 7
      %v544 = vsub.s32 %v541, %v543
      %v545 = vrot.slane %v531, %v544
      %v546 = vcombine.low %v510, %v516
      %v547 = vcombine.high %v510, %v516
      %v549 = vunpack.c.l.s4 1983009808
      %v550 = vunpack.c.0.s8 %v549
      %v551 = vlaneseq
      %v552 = vshrl.u32 %v551, 7
      %v553 = vsub.s32 %v550, %v552
      %v554 = vrot.slane %v546, %v553
      %v556 = vunpack.c.l.s4 1983009808
      %v557 = vunpack.c.0.s8 %v556
      %v558 = vlaneseq
      %v559 = vshrl.u32 %v558, 7
      %v560 = vsub.s32 %v557, %v559
      %v561 = vrot.slane %v547, %v560
      %v562 = vcombine.low %v519, %v525
      %v563 = vcombine.high %v519, %v525
      %v565 = vunpack.c.l.s4 1983009808
      %v566 = vunpack.c.0.s8 %v565
      %v567 = vlaneseq
      %v568 = vshrl.u32 %v567, 7
      %v569 = vsub.s32 %v566, %v568
      %v570 = vrot.slane %v562, %v569
      %v572 = vunpack.c.l.s4 1983009808
      %v573 = vunpack.c.0.s8 %v572
      %v574 = vlaneseq
      %v575 = vshrl.u32 %v574, 7
      %v576 = vsub.s32 %v573, %v575
      %v577 = vrot.slane %v563, %v576
      %v578 = vcombine.low %v522, %v528
      %v579 = vcombine.high %v522, %v528
      %v581 = vunpack.c.l.s4 1983009808
      %v582 = vunpack.c.0.s8 %v581
      %v583 = vlaneseq
      %v584 = vshrl.u32 %v583, 7
      %v585 = vsub.s32 %v582, %v584
      %v586 = vrot.slane %v578, %v585
      %v588 = vunpack.c.l.s4 1983009808
      %v589 = vunpack.c.0.s8 %v588
      %v590 = vlaneseq
      %v591 = vshrl.u32 %v590, 7
      %v592 = vsub.s32 %v589, %v591
      %v593 = vrot.slane %v579, %v592
      %v594 = vcombine.low %v538, %v554
      %v595 = vcombine.high %v538, %v554
      %v597 = vunpack.c.l.s4 1934713408
      %v598 = vunpack.c.0.s8 %v597
      %v599 = vlaneseq
      %v600 = vshrl.u32 %v599, 7
      %v601 = vsub.s32 %v598, %v600
      %v602 = vrot.slane %v594, %v601
      %v604 = vunpack.c.l.s4 1934713408
      %v605 = vunpack.c.0.s8 %v604
      %v606 = vlaneseq
      %v607 = vshrl.u32 %v606, 7
      %v608 = vsub.s32 %v605, %v607
      %v609 = vrot.slane %v595, %v608
      %v610 = vcombine.low %v545, %v561
      %v611 = vcombine.high %v545, %v561
      %v613 = vunpack.c.l.s4 1934713408
      %v614 = vunpack.c.0.s8 %v613
      %v615 = vlaneseq
      %v616 = vshrl.u32 %v615, 7
      %v617 = vsub.s32 %v614, %v616
      %v618 = vrot.slane %v610, %v617
      %v620 = vunpack.c.l.s4 1934713408
      %v621 = vunpack.c.0.s8 %v620
      %v622 = vlaneseq
      %v623 = vshrl.u32 %v622, 7
      %v624 = vsub.s32 %v621, %v623
      %v625 = vrot.slane %v611, %v624
      %v626 = vcombine.low %v570, %v586
      %v627 = vcombine.high %v570, %v586
      %v629 = vunpack.c.l.s4 1934713408
      %v630 = vunpack.c.0.s8 %v629
      %v631 = vlaneseq
      %v632 = vshrl.u32 %v631, 7
      %v633 = vsub.s32 %v630, %v632
      %v634 = vrot.slane %v626, %v633
      %v636 = vunpack.c.l.s4 1934713408
      %v637 = vunpack.c.0.s8 %v636
      %v638 = vlaneseq
      %v639 = vshrl.u32 %v638, 7
      %v640 = vsub.s32 %v637, %v639
      %v641 = vrot.slane %v627, %v640
      %v642 = vcombine.low %v577, %v593
      %v643 = vcombine.high %v577, %v593
      %v645 = vunpack.c.l.s4 1934713408
      %v646 = vunpack.c.0.s8 %v645
      %v647 = vlaneseq
      %v648 = vshrl.u32 %v647, 7
      %v649 = vsub.s32 %v646, %v648
      %v650 = vrot.slane %v642, %v649
      %v652 = vunpack.c.l.s4 1934713408
      %v653 = vunpack.c.0.s8 %v652
      %v654 = vlaneseq
      %v655 = vshrl.u32 %v654, 7
      %v656 = vsub.s32 %v653, %v655
      %v657 = vrot.slane %v643, %v656
      %v658 = vcombine.low %v602, %v634
      %v659 = vcombine.high %v602, %v634
      %v660 = vcombine.low %v609, %v641
      %v661 = vcombine.high %v609, %v641
      %v662 = vcombine.low %v618, %v650
      %v663 = vcombine.high %v618, %v650
      %v664 = vcombine.low %v625, %v657
      %v665 = vcombine.high %v625, %v657
      %v666 = vcombine.low %v658, %v660
      %v667 = vcombine.high %v658, %v660
      %v669 = vunpack.c.l.s4 1983009808
      %v670 = vunpack.c.0.s8 %v669
      %v671 = vlaneseq
      %v672 = vshrl.u32 %v671, 7
      %v673 = vsub.s32 %v670, %v672
      %v674 = vrot.slane %v666, %v673
      %v676 = vunpack.c.l.s4 1983009808
      %v677 = vunpack.c.0.s8 %v676
      %v678 = vlaneseq
      %v679 = vshrl.u32 %v678, 7
      %v680 = vsub.s32 %v677, %v679
      %v681 = vrot.slane %v667, %v680
      %v682 = vcombine.low %v659, %v661
      %v683 = vcombine.high %v659, %v661
      %v685 = vunpack.c.l.s4 1983009808
      %v686 = vunpack.c.0.s8 %v685
      %v687 = vlaneseq
      %v688 = vshrl.u32 %v687, 7
      %v689 = vsub.s32 %v686, %v688
      %v690 = vrot.slane %v682, %v689
      %v692 = vunpack.c.l.s4 1983009808
      %v693 = vunpack.c.0.s8 %v692
      %v694 = vlaneseq
      %v695 = vshrl.u32 %v694, 7
      %v696 = vsub.s32 %v693, %v695
      %v697 = vrot.slane %v683, %v696
      %v698 = vcombine.low %v662, %v664
      %v699 = vcombine.high %v662, %v664
      %v701 = vunpack.c.l.s4 1983009808
      %v702 = vunpack.c.0.s8 %v701
      %v703 = vlaneseq
      %v704 = vshrl.u32 %v703, 7
      %v705 = vsub.s32 %v702, %v704
      %v706 = vrot.slane %v698, %v705
      %v708 = vunpack.c.l.s4 1983009808
      %v709 = vunpack.c.0.s8 %v708
      %v710 = vlaneseq
      %v711 = vshrl.u32 %v710, 7
      %v712 = vsub.s32 %v709, %v711
      %v713 = vrot.slane %v699, %v712
      %v714 = vcombine.low %v663, %v665
      %v715 = vcombine.high %v663, %v665
      %v717 = vunpack.c.l.s4 1983009808
      %v718 = vunpack.c.0.s8 %v717
      %v719 = vlaneseq
      %v720 = vshrl.u32 %v719, 7
      %v721 = vsub.s32 %v718, %v720
      %v722 = vrot.slane %v714, %v721
      %v724 = vunpack.c.l.s4 1983009808
      %v725 = vunpack.c.0.s8 %v724
      %v726 = vlaneseq
      %v727 = vshrl.u32 %v726, 7
      %v728 = vsub.s32 %v725, %v727
      %v729 = vrot.slane %v715, %v728
      %v730 = vcombine.low %v674, %v690
      %v731 = vcombine.high %v674, %v690
      %v733 = vunpack.c.l.s4 1934713408
      %v734 = vunpack.c.0.s8 %v733
      %v735 = vlaneseq
      %v736 = vshrl.u32 %v735, 7
      %v737 = vsub.s32 %v734, %v736
      %v738 = vrot.slane %v730, %v737
      %v740 = vunpack.c.l.s4 1934713408
      %v741 = vunpack.c.0.s8 %v740
      %v742 = vlaneseq
      %v743 = vshrl.u32 %v742, 7
      %v744 = vsub.s32 %v741, %v743
      %v745 = vrot.slane %v731, %v744
      %v746 = vcombine.low %v681, %v697
      %v747 = vcombine.high %v681, %v697
      %v749 = vunpack.c.l.s4 1934713408
      %v750 = vunpack.c.0.s8 %v749
      %v751 = vlaneseq
      %v752 = vshrl.u32 %v751, 7
      %v753 = vsub.s32 %v750, %v752
      %v754 = vrot.slane %v746, %v753
      %v756 = vunpack.c.l.s4 1934713408
      %v757 = vunpack.c.0.s8 %v756
      %v758 = vlaneseq
      %v759 = vshrl.u32 %v758, 7
      %v760 = vsub.s32 %v757, %v759
      %v761 = vrot.slane %v747, %v760
      %v762 = vcombine.low %v706, %v722
      %v763 = vcombine.high %v706, %v722
      %v765 = vunpack.c.l.s4 1934713408
      %v766 = vunpack.c.0.s8 %v765
      %v767 = vlaneseq
      %v768 = vshrl.u32 %v767, 7
      %v769 = vsub.s32 %v766, %v768
      %v770 = vrot.slane %v762, %v769
      %v772 = vunpack.c.l.s4 1934713408
      %v773 = vunpack.c.0.s8 %v772
      %v774 = vlaneseq
      %v775 = vshrl.u32 %v774, 7
      %v776 = vsub.s32 %v773, %v775
      %v777 = vrot.slane %v763, %v776
      %v778 = vcombine.low %v713, %v729
      %v779 = vcombine.high %v713, %v729
      %v781 = vunpack.c.l.s4 1934713408
      %v782 = vunpack.c.0.s8 %v781
      %v783 = vlaneseq
      %v784 = vshrl.u32 %v783, 7
      %v785 = vsub.s32 %v782, %v784
      %v786 = vrot.slane %v778, %v785
      %v788 = vunpack.c.l.s4 1934713408
      %v789 = vunpack.c.0.s8 %v788
      %v790 = vlaneseq
      %v791 = vshrl.u32 %v790, 7
      %v792 = vsub.s32 %v789, %v791
      %v793 = vrot.slane %v779, %v792
      %v794 = vcombine.low %v738, %v770
      %v795 = vcombine.high %v738, %v770
      %v796 = vcombine.low %v745, %v777
      %v797 = vcombine.high %v745, %v777
      %v798 = vcombine.low %v754, %v786
      %v799 = vcombine.high %v754, %v786
      %v800 = vcombine.low %v761, %v793
      %v801 = vcombine.high %v761, %v793
      %v802 = vpack.c.bf16 %v794, %v794
      %v803 = vpack.c.bf16 %v795, %v795
      %v804 = vpack.c.bf16 %v796, %v796
      %v805 = vpack.c.bf16 %v797, %v797
      %v806 = vpack.c.bf16 %v798, %v798
      %v807 = vpack.c.bf16 %v799, %v799
      %v808 = vpack.c.bf16 %v800, %v800
      %v809 = vpack.c.bf16 %v801, %v801
      %811 = vrot.lane.b32.xlu0 %v503, 124
      %v812 = vpop.permute.xlu0 %811
      %814 = vrot.lane.b32.xlu0 %v503, 120
      %v815 = vpop.permute.xlu0 %814
      %817 = vrot.lane.b32.xlu0 %v503, 116
      %v818 = vpop.permute.xlu0 %817
      %820 = vrot.lane.b32.xlu0 %v503, 112
      %v821 = vpop.permute.xlu0 %820
      %823 = vrot.lane.b32.xlu0 %v503, 108
      %v824 = vpop.permute.xlu0 %823
      %826 = vrot.lane.b32.xlu0 %v503, 104
      %v827 = vpop.permute.xlu0 %826
      %829 = vrot.lane.b32.xlu0 %v503, 100
      %v830 = vpop.permute.xlu0 %829
      %v832 = vcombine.low %v503, %v815
      %v833 = vcombine.high %v503, %v815
      %v835 = vunpack.c.l.s4 1983009808
      %v836 = vunpack.c.0.s8 %v835
      %v837 = vlaneseq
      %v838 = vshrl.u32 %v837, 7
      %v839 = vsub.s32 %v836, %v838
      %v840 = vrot.slane %v832, %v839
      %v842 = vunpack.c.l.s4 1983009808
      %v843 = vunpack.c.0.s8 %v842
      %v844 = vlaneseq
      %v845 = vshrl.u32 %v844, 7
      %v846 = vsub.s32 %v843, %v845
      %v847 = vrot.slane %v833, %v846
      %v848 = vcombine.low %v812, %v818
      %v849 = vcombine.high %v812, %v818
      %v851 = vunpack.c.l.s4 1983009808
      %v852 = vunpack.c.0.s8 %v851
      %v853 = vlaneseq
      %v854 = vshrl.u32 %v853, 7
      %v855 = vsub.s32 %v852, %v854
      %v856 = vrot.slane %v848, %v855
      %v858 = vunpack.c.l.s4 1983009808
      %v859 = vunpack.c.0.s8 %v858
      %v860 = vlaneseq
      %v861 = vshrl.u32 %v860, 7
      %v862 = vsub.s32 %v859, %v861
      %v863 = vrot.slane %v849, %v862
      %v864 = vcombine.low %v821, %v827
      %v865 = vcombine.high %v821, %v827
      %v867 = vunpack.c.l.s4 1983009808
      %v868 = vunpack.c.0.s8 %v867
      %v869 = vlaneseq
      %v870 = vshrl.u32 %v869, 7
      %v871 = vsub.s32 %v868, %v870
      %v872 = vrot.slane %v864, %v871
      %v874 = vunpack.c.l.s4 1983009808
      %v875 = vunpack.c.0.s8 %v874
      %v876 = vlaneseq
      %v877 = vshrl.u32 %v876, 7
      %v878 = vsub.s32 %v875, %v877
      %v879 = vrot.slane %v865, %v878
      %v880 = vcombine.low %v824, %v830
      %v881 = vcombine.high %v824, %v830
      %v883 = vunpack.c.l.s4 1983009808
      %v884 = vunpack.c.0.s8 %v883
      %v885 = vlaneseq
      %v886 = vshrl.u32 %v885, 7
      %v887 = vsub.s32 %v884, %v886
      %v888 = vrot.slane %v880, %v887
      %v890 = vunpack.c.l.s4 1983009808
      %v891 = vunpack.c.0.s8 %v890
      %v892 = vlaneseq
      %v893 = vshrl.u32 %v892, 7
      %v894 = vsub.s32 %v891, %v893
      %v895 = vrot.slane %v881, %v894
      %v896 = vcombine.low %v840, %v856
      %v897 = vcombine.high %v840, %v856
      %v899 = vunpack.c.l.s4 1934713408
      %v900 = vunpack.c.0.s8 %v899
      %v901 = vlaneseq
      %v902 = vshrl.u32 %v901, 7
      %v903 = vsub.s32 %v900, %v902
      %v904 = vrot.slane %v896, %v903
      %v906 = vunpack.c.l.s4 1934713408
      %v907 = vunpack.c.0.s8 %v906
      %v908 = vlaneseq
      %v909 = vshrl.u32 %v908, 7
      %v910 = vsub.s32 %v907, %v909
      %v911 = vrot.slane %v897, %v910
      %v912 = vcombine.low %v847, %v863
      %v913 = vcombine.high %v847, %v863
      %v915 = vunpack.c.l.s4 1934713408
      %v916 = vunpack.c.0.s8 %v915
      %v917 = vlaneseq
      %v918 = vshrl.u32 %v917, 7
      %v919 = vsub.s32 %v916, %v918
      %v920 = vrot.slane %v912, %v919
      %v922 = vunpack.c.l.s4 1934713408
      %v923 = vunpack.c.0.s8 %v922
      %v924 = vlaneseq
      %v925 = vshrl.u32 %v924, 7
      %v926 = vsub.s32 %v923, %v925
      %v927 = vrot.slane %v913, %v926
      %v928 = vcombine.low %v872, %v888
      %v929 = vcombine.high %v872, %v888
      %v931 = vunpack.c.l.s4 1934713408
      %v932 = vunpack.c.0.s8 %v931
      %v933 = vlaneseq
      %v934 = vshrl.u32 %v933, 7
      %v935 = vsub.s32 %v932, %v934
      %v936 = vrot.slane %v928, %v935
      %v938 = vunpack.c.l.s4 1934713408
      %v939 = vunpack.c.0.s8 %v938
      %v940 = vlaneseq
      %v941 = vshrl.u32 %v940, 7
      %v942 = vsub.s32 %v939, %v941
      %v943 = vrot.slane %v929, %v942
      %v944 = vcombine.low %v879, %v895
      %v945 = vcombine.high %v879, %v895
      %v947 = vunpack.c.l.s4 1934713408
      %v948 = vunpack.c.0.s8 %v947
      %v949 = vlaneseq
      %v950 = vshrl.u32 %v949, 7
      %v951 = vsub.s32 %v948, %v950
      %v952 = vrot.slane %v944, %v951
      %v954 = vunpack.c.l.s4 1934713408
      %v955 = vunpack.c.0.s8 %v954
      %v956 = vlaneseq
      %v957 = vshrl.u32 %v956, 7
      %v958 = vsub.s32 %v955, %v957
      %v959 = vrot.slane %v945, %v958
      %v960 = vcombine.low %v904, %v936
      %v961 = vcombine.high %v904, %v936
      %v962 = vcombine.low %v911, %v943
      %v963 = vcombine.high %v911, %v943
      %v964 = vcombine.low %v920, %v952
      %v965 = vcombine.high %v920, %v952
      %v966 = vcombine.low %v927, %v959
      %v967 = vcombine.high %v927, %v959
      %v968 = vcombine.low %v960, %v962
      %v969 = vcombine.high %v960, %v962
      %v971 = vunpack.c.l.s4 1983009808
      %v972 = vunpack.c.0.s8 %v971
      %v973 = vlaneseq
      %v974 = vshrl.u32 %v973, 7
      %v975 = vsub.s32 %v972, %v974
      %v976 = vrot.slane %v968, %v975
      %v978 = vunpack.c.l.s4 1983009808
      %v979 = vunpack.c.0.s8 %v978
      %v980 = vlaneseq
      %v981 = vshrl.u32 %v980, 7
      %v982 = vsub.s32 %v979, %v981
      %v983 = vrot.slane %v969, %v982
      %v984 = vcombine.low %v961, %v963
      %v985 = vcombine.high %v961, %v963
      %v987 = vunpack.c.l.s4 1983009808
      %v988 = vunpack.c.0.s8 %v987
      %v989 = vlaneseq
      %v990 = vshrl.u32 %v989, 7
      %v991 = vsub.s32 %v988, %v990
      %v992 = vrot.slane %v984, %v991
      %v994 = vunpack.c.l.s4 1983009808
      %v995 = vunpack.c.0.s8 %v994
      %v996 = vlaneseq
      %v997 = vshrl.u32 %v996, 7
      %v998 = vsub.s32 %v995, %v997
      %v999 = vrot.slane %v985, %v998
      %v1000 = vcombine.low %v964, %v966
      %v1001 = vcombine.high %v964, %v966
      %v1003 = vunpack.c.l.s4 1983009808
      %v1004 = vunpack.c.0.s8 %v1003
      %v1005 = vlaneseq
      %v1006 = vshrl.u32 %v1005, 7
      %v1007 = vsub.s32 %v1004, %v1006
      %v1008 = vrot.slane %v1000, %v1007
      %v1010 = vunpack.c.l.s4 1983009808
      %v1011 = vunpack.c.0.s8 %v1010
      %v1012 = vlaneseq
      %v1013 = vshrl.u32 %v1012, 7
      %v1014 = vsub.s32 %v1011, %v1013
      %v1015 = vrot.slane %v1001, %v1014
      %v1016 = vcombine.low %v965, %v967
      %v1017 = vcombine.high %v965, %v967
      %v1019 = vunpack.c.l.s4 1983009808
      %v1020 = vunpack.c.0.s8 %v1019
      %v1021 = vlaneseq
      %v1022 = vshrl.u32 %v1021, 7
      %v1023 = vsub.s32 %v1020, %v1022
      %v1024 = vrot.slane %v1016, %v1023
      %v1026 = vunpack.c.l.s4 1983009808
      %v1027 = vunpack.c.0.s8 %v1026
      %v1028 = vlaneseq
      %v1029 = vshrl.u32 %v1028, 7
      %v1030 = vsub.s32 %v1027, %v1029
      %v1031 = vrot.slane %v1017, %v1030
      %v1032 = vcombine.low %v976, %v992
      %v1033 = vcombine.high %v976, %v992
      %v1035 = vunpack.c.l.s4 1934713408
      %v1036 = vunpack.c.0.s8 %v1035
      %v1037 = vlaneseq
      %v1038 = vshrl.u32 %v1037, 7
      %v1039 = vsub.s32 %v1036, %v1038
      %v1040 = vrot.slane %v1032, %v1039
      %v1042 = vunpack.c.l.s4 1934713408
      %v1043 = vunpack.c.0.s8 %v1042
      %v1044 = vlaneseq
      %v1045 = vshrl.u32 %v1044, 7
      %v1046 = vsub.s32 %v1043, %v1045
      %v1047 = vrot.slane %v1033, %v1046
      %v1048 = vcombine.low %v983, %v999
      %v1049 = vcombine.high %v983, %v999
      %v1051 = vunpack.c.l.s4 1934713408
      %v1052 = vunpack.c.0.s8 %v1051
      %v1053 = vlaneseq
      %v1054 = vshrl.u32 %v1053, 7
      %v1055 = vsub.s32 %v1052, %v1054
      %v1056 = vrot.slane %v1048, %v1055
      %v1058 = vunpack.c.l.s4 1934713408
      %v1059 = vunpack.c.0.s8 %v1058
      %v1060 = vlaneseq
      %v1061 = vshrl.u32 %v1060, 7
      %v1062 = vsub.s32 %v1059, %v1061
      %v1063 = vrot.slane %v1049, %v1062
      %v1064 = vcombine.low %v1008, %v1024
      %v1065 = vcombine.high %v1008, %v1024
      %v1067 = vunpack.c.l.s4 1934713408
      %v1068 = vunpack.c.0.s8 %v1067
      %v1069 = vlaneseq
      %v1070 = vshrl.u32 %v1069, 7
      %v1071 = vsub.s32 %v1068, %v1070
      %v1072 = vrot.slane %v1064, %v1071
      %v1074 = vunpack.c.l.s4 1934713408
      %v1075 = vunpack.c.0.s8 %v1074
      %v1076 = vlaneseq
      %v1077 = vshrl.u32 %v1076, 7
      %v1078 = vsub.s32 %v1075, %v1077
      %v1079 = vrot.slane %v1065, %v1078
      %v1080 = vcombine.low %v1015, %v1031
      %v1081 = vcombine.high %v1015, %v1031
      %v1083 = vunpack.c.l.s4 1934713408
      %v1084 = vunpack.c.0.s8 %v1083
      %v1085 = vlaneseq
      %v1086 = vshrl.u32 %v1085, 7
      %v1087 = vsub.s32 %v1084, %v1086
      %v1088 = vrot.slane %v1080, %v1087
      %v1090 = vunpack.c.l.s4 1934713408
      %v1091 = vunpack.c.0.s8 %v1090
      %v1092 = vlaneseq
      %v1093 = vshrl.u32 %v1092, 7
      %v1094 = vsub.s32 %v1091, %v1093
      %v1095 = vrot.slane %v1081, %v1094
      %v1096 = vcombine.low %v1040, %v1072
      %v1097 = vcombine.high %v1040, %v1072
      %v1098 = vcombine.low %v1047, %v1079
      %v1099 = vcombine.high %v1047, %v1079
      %v1100 = vcombine.low %v1056, %v1088
      %v1101 = vcombine.high %v1056, %v1088
      %v1102 = vcombine.low %v1063, %v1095
      %v1103 = vcombine.high %v1063, %v1095
      %v1104 = vpack.c.bf16 %v1096, %v1096
      %v1105 = vpack.c.bf16 %v1097, %v1097
      %v1106 = vpack.c.bf16 %v1098, %v1098
      %v1107 = vpack.c.bf16 %v1099, %v1099
      %v1108 = vpack.c.bf16 %v1100, %v1100
      %v1109 = vpack.c.bf16 %v1101, %v1101
      %v1110 = vpack.c.bf16 %v1102, %v1102
      %v1111 = vpack.c.bf16 %v1103, %v1103
      %1112 = vrot.lane.b32.xlu0 %v503, 96
      %v1113 = vpop.permute.xlu0 %1112
      %1114 = vrot.lane.b32.xlu0 %v812, 96
      %v1115 = vpop.permute.xlu0 %1114
      %1116 = vrot.lane.b32.xlu0 %v815, 96
      %v1117 = vpop.permute.xlu0 %1116
      %1118 = vrot.lane.b32.xlu0 %v818, 96
      %v1119 = vpop.permute.xlu0 %1118
      %1120 = vrot.lane.b32.xlu0 %v821, 96
      %v1121 = vpop.permute.xlu0 %1120
      %1122 = vrot.lane.b32.xlu0 %v824, 96
      %v1123 = vpop.permute.xlu0 %1122
      %1124 = vrot.lane.b32.xlu0 %v827, 96
      %v1125 = vpop.permute.xlu0 %1124
      %1126 = vrot.lane.b32.xlu0 %v830, 96
      %v1127 = vpop.permute.xlu0 %1126
      %v1136 = vcombine.low %v1113, %v1117
      %v1137 = vcombine.high %v1113, %v1117
      %v1139 = vunpack.c.l.s4 1983009808
      %v1140 = vunpack.c.0.s8 %v1139
      %v1141 = vlaneseq
      %v1142 = vshrl.u32 %v1141, 7
      %v1143 = vsub.s32 %v1140, %v1142
      %v1144 = vrot.slane %v1136, %v1143
      %v1146 = vunpack.c.l.s4 1983009808
      %v1147 = vunpack.c.0.s8 %v1146
      %v1148 = vlaneseq
      %v1149 = vshrl.u32 %v1148, 7
      %v1150 = vsub.s32 %v1147, %v1149
      %v1151 = vrot.slane %v1137, %v1150
      %v1152 = vcombine.low %v1115, %v1119
      %v1153 = vcombine.high %v1115, %v1119
      %v1155 = vunpack.c.l.s4 1983009808
      %v1156 = vunpack.c.0.s8 %v1155
      %v1157 = vlaneseq
      %v1158 = vshrl.u32 %v1157, 7
      %v1159 = vsub.s32 %v1156, %v1158
      %v1160 = vrot.slane %v1152, %v1159
      %v1162 = vunpack.c.l.s4 1983009808
      %v1163 = vunpack.c.0.s8 %v1162
      %v1164 = vlaneseq
      %v1165 = vshrl.u32 %v1164, 7
      %v1166 = vsub.s32 %v1163, %v1165
      %v1167 = vrot.slane %v1153, %v1166
      %v1168 = vcombine.low %v1121, %v1125
      %v1169 = vcombine.high %v1121, %v1125
      %v1171 = vunpack.c.l.s4 1983009808
      %v1172 = vunpack.c.0.s8 %v1171
      %v1173 = vlaneseq
      %v1174 = vshrl.u32 %v1173, 7
      %v1175 = vsub.s32 %v1172, %v1174
      %v1176 = vrot.slane %v1168, %v1175
      %v1178 = vunpack.c.l.s4 1983009808
      %v1179 = vunpack.c.0.s8 %v1178
      %v1180 = vlaneseq
      %v1181 = vshrl.u32 %v1180, 7
      %v1182 = vsub.s32 %v1179, %v1181
      %v1183 = vrot.slane %v1169, %v1182
      %v1184 = vcombine.low %v1123, %v1127
      %v1185 = vcombine.high %v1123, %v1127
      %v1187 = vunpack.c.l.s4 1983009808
      %v1188 = vunpack.c.0.s8 %v1187
      %v1189 = vlaneseq
      %v1190 = vshrl.u32 %v1189, 7
      %v1191 = vsub.s32 %v1188, %v1190
      %v1192 = vrot.slane %v1184, %v1191
      %v1194 = vunpack.c.l.s4 1983009808
      %v1195 = vunpack.c.0.s8 %v1194
      %v1196 = vlaneseq
      %v1197 = vshrl.u32 %v1196, 7
      %v1198 = vsub.s32 %v1195, %v1197
      %v1199 = vrot.slane %v1185, %v1198
      %v1200 = vcombine.low %v1144, %v1160
      %v1201 = vcombine.high %v1144, %v1160
      %v1203 = vunpack.c.l.s4 1934713408
      %v1204 = vunpack.c.0.s8 %v1203
      %v1205 = vlaneseq
      %v1206 = vshrl.u32 %v1205, 7
      %v1207 = vsub.s32 %v1204, %v1206
      %v1208 = vrot.slane %v1200, %v1207
      %v1210 = vunpack.c.l.s4 1934713408
      %v1211 = vunpack.c.0.s8 %v1210
      %v1212 = vlaneseq
      %v1213 = vshrl.u32 %v1212, 7
      %v1214 = vsub.s32 %v1211, %v1213
      %v1215 = vrot.slane %v1201, %v1214
      %v1216 = vcombine.low %v1151, %v1167
      %v1217 = vcombine.high %v1151, %v1167
      %v1219 = vunpack.c.l.s4 1934713408
      %v1220 = vunpack.c.0.s8 %v1219
      %v1221 = vlaneseq
      %v1222 = vshrl.u32 %v1221, 7
      %v1223 = vsub.s32 %v1220, %v1222
      %v1224 = vrot.slane %v1216, %v1223
      %v1226 = vunpack.c.l.s4 1934713408
      %v1227 = vunpack.c.0.s8 %v1226
      %v1228 = vlaneseq
      %v1229 = vshrl.u32 %v1228, 7
      %v1230 = vsub.s32 %v1227, %v1229
      %v1231 = vrot.slane %v1217, %v1230
      %v1232 = vcombine.low %v1176, %v1192
      %v1233 = vcombine.high %v1176, %v1192
      %v1235 = vunpack.c.l.s4 1934713408
      %v1236 = vunpack.c.0.s8 %v1235
      %v1237 = vlaneseq
      %v1238 = vshrl.u32 %v1237, 7
      %v1239 = vsub.s32 %v1236, %v1238
      %v1240 = vrot.slane %v1232, %v1239
      %v1242 = vunpack.c.l.s4 1934713408
      %v1243 = vunpack.c.0.s8 %v1242
      %v1244 = vlaneseq
      %v1245 = vshrl.u32 %v1244, 7
      %v1246 = vsub.s32 %v1243, %v1245
      %v1247 = vrot.slane %v1233, %v1246
      %v1248 = vcombine.low %v1183, %v1199
      %v1249 = vcombine.high %v1183, %v1199
      %v1251 = vunpack.c.l.s4 1934713408
      %v1252 = vunpack.c.0.s8 %v1251
      %v1253 = vlaneseq
      %v1254 = vshrl.u32 %v1253, 7
      %v1255 = vsub.s32 %v1252, %v1254
      %v1256 = vrot.slane %v1248, %v1255
      %v1258 = vunpack.c.l.s4 1934713408
      %v1259 = vunpack.c.0.s8 %v1258
      %v1260 = vlaneseq
      %v1261 = vshrl.u32 %v1260, 7
      %v1262 = vsub.s32 %v1259, %v1261
      %v1263 = vrot.slane %v1249, %v1262
      %v1264 = vcombine.low %v1208, %v1240
      %v1265 = vcombine.high %v1208, %v1240
      %v1266 = vcombine.low %v1215, %v1247
      %v1267 = vcombine.high %v1215, %v1247
      %v1268 = vcombine.low %v1224, %v1256
      %v1269 = vcombine.high %v1224, %v1256
      %v1270 = vcombine.low %v1231, %v1263
      %v1271 = vcombine.high %v1231, %v1263
      %v1272 = vcombine.low %v1264, %v1266
      %v1273 = vcombine.high %v1264, %v1266
      %v1275 = vunpack.c.l.s4 1983009808
      %v1276 = vunpack.c.0.s8 %v1275
      %v1277 = vlaneseq
      %v1278 = vshrl.u32 %v1277, 7
      %v1279 = vsub.s32 %v1276, %v1278
      %v1280 = vrot.slane %v1272, %v1279
      %v1282 = vunpack.c.l.s4 1983009808
      %v1283 = vunpack.c.0.s8 %v1282
      %v1284 = vlaneseq
      %v1285 = vshrl.u32 %v1284, 7
      %v1286 = vsub.s32 %v1283, %v1285
      %v1287 = vrot.slane %v1273, %v1286
      %v1288 = vcombine.low %v1265, %v1267
      %v1289 = vcombine.high %v1265, %v1267
      %v1291 = vunpack.c.l.s4 1983009808
      %v1292 = vunpack.c.0.s8 %v1291
      %v1293 = vlaneseq
      %v1294 = vshrl.u32 %v1293, 7
      %v1295 = vsub.s32 %v1292, %v1294
      %v1296 = vrot.slane %v1288, %v1295
      %v1298 = vunpack.c.l.s4 1983009808
      %v1299 = vunpack.c.0.s8 %v1298
      %v1300 = vlaneseq
      %v1301 = vshrl.u32 %v1300, 7
      %v1302 = vsub.s32 %v1299, %v1301
      %v1303 = vrot.slane %v1289, %v1302
      %v1304 = vcombine.low %v1268, %v1270
      %v1305 = vcombine.high %v1268, %v1270
      %v1307 = vunpack.c.l.s4 1983009808
      %v1308 = vunpack.c.0.s8 %v1307
      %v1309 = vlaneseq
      %v1310 = vshrl.u32 %v1309, 7
      %v1311 = vsub.s32 %v1308, %v1310
      %v1312 = vrot.slane %v1304, %v1311
      %v1314 = vunpack.c.l.s4 1983009808
      %v1315 = vunpack.c.0.s8 %v1314
      %v1316 = vlaneseq
      %v1317 = vshrl.u32 %v1316, 7
      %v1318 = vsub.s32 %v1315, %v1317
      %v1319 = vrot.slane %v1305, %v1318
      %v1320 = vcombine.low %v1269, %v1271
      %v1321 = vcombine.high %v1269, %v1271
      %v1323 = vunpack.c.l.s4 1983009808
      %v1324 = vunpack.c.0.s8 %v1323
      %v1325 = vlaneseq
      %v1326 = vshrl.u32 %v1325, 7
      %v1327 = vsub.s32 %v1324, %v1326
      %v1328 = vrot.slane %v1320, %v1327
      %v1330 = vunpack.c.l.s4 1983009808
      %v1331 = vunpack.c.0.s8 %v1330
      %v1332 = vlaneseq
      %v1333 = vshrl.u32 %v1332, 7
      %v1334 = vsub.s32 %v1331, %v1333
      %v1335 = vrot.slane %v1321, %v1334
      %v1336 = vcombine.low %v1280, %v1296
      %v1337 = vcombine.high %v1280, %v1296
      %v1339 = vunpack.c.l.s4 1934713408
      %v1340 = vunpack.c.0.s8 %v1339
      %v1341 = vlaneseq
      %v1342 = vshrl.u32 %v1341, 7
      %v1343 = vsub.s32 %v1340, %v1342
      %v1344 = vrot.slane %v1336, %v1343
      %v1346 = vunpack.c.l.s4 1934713408
      %v1347 = vunpack.c.0.s8 %v1346
      %v1348 = vlaneseq
      %v1349 = vshrl.u32 %v1348, 7
      %v1350 = vsub.s32 %v1347, %v1349
      %v1351 = vrot.slane %v1337, %v1350
      %v1352 = vcombine.low %v1287, %v1303
      %v1353 = vcombine.high %v1287, %v1303
      %v1355 = vunpack.c.l.s4 1934713408
      %v1356 = vunpack.c.0.s8 %v1355
      %v1357 = vlaneseq
      %v1358 = vshrl.u32 %v1357, 7
      %v1359 = vsub.s32 %v1356, %v1358
      %v1360 = vrot.slane %v1352, %v1359
      %v1362 = vunpack.c.l.s4 1934713408
      %v1363 = vunpack.c.0.s8 %v1362
      %v1364 = vlaneseq
      %v1365 = vshrl.u32 %v1364, 7
      %v1366 = vsub.s32 %v1363, %v1365
      %v1367 = vrot.slane %v1353, %v1366
      %v1368 = vcombine.low %v1312, %v1328
      %v1369 = vcombine.high %v1312, %v1328
      %v1371 = vunpack.c.l.s4 1934713408
      %v1372 = vunpack.c.0.s8 %v1371
      %v1373 = vlaneseq
      %v1374 = vshrl.u32 %v1373, 7
      %v1375 = vsub.s32 %v1372, %v1374
      %v1376 = vrot.slane %v1368, %v1375
      %v1378 = vunpack.c.l.s4 1934713408
      %v1379 = vunpack.c.0.s8 %v1378
      %v1380 = vlaneseq
      %v1381 = vshrl.u32 %v1380, 7
      %v1382 = vsub.s32 %v1379, %v1381
      %v1383 = vrot.slane %v1369, %v1382
      %v1384 = vcombine.low %v1319, %v1335
      %v1385 = vcombine.high %v1319, %v1335
      %v1387 = vunpack.c.l.s4 1934713408
      %v1388 = vunpack.c.0.s8 %v1387
      %v1389 = vlaneseq
      %v1390 = vshrl.u32 %v1389, 7
      %v1391 = vsub.s32 %v1388, %v1390
      %v1392 = vrot.slane %v1384, %v1391
      %v1394 = vunpack.c.l.s4 1934713408
      %v1395 = vunpack.c.0.s8 %v1394
      %v1396 = vlaneseq
      %v1397 = vshrl.u32 %v1396, 7
      %v1398 = vsub.s32 %v1395, %v1397
      %v1399 = vrot.slane %v1385, %v1398
      %v1400 = vcombine.low %v1344, %v1376
      %v1401 = vcombine.high %v1344, %v1376
      %v1402 = vcombine.low %v1351, %v1383
      %v1403 = vcombine.high %v1351, %v1383
      %v1404 = vcombine.low %v1360, %v1392
      %v1405 = vcombine.high %v1360, %v1392
      %v1406 = vcombine.low %v1367, %v1399
      %v1407 = vcombine.high %v1367, %v1399
      %v1408 = vpack.c.bf16 %v1400, %v1400
      %v1409 = vpack.c.bf16 %v1401, %v1401
      %v1410 = vpack.c.bf16 %v1402, %v1402
      %v1411 = vpack.c.bf16 %v1403, %v1403
      %v1412 = vpack.c.bf16 %v1404, %v1404
      %v1413 = vpack.c.bf16 %v1405, %v1405
      %v1414 = vpack.c.bf16 %v1406, %v1406
      %v1415 = vpack.c.bf16 %v1407, %v1407
      %vm1416 = vcmask 31744
      %v1418 = vsel %vm1416, %v802, 0
      %v1421 = vsel %vm1416, %v1104, 0
      %1423 = vmatprep.subr.bf16.mxu0 0
      %1424 = vmatpush1.bf16.xpose.msra.mxu0 0
      %1425 = vmatprep.subr.bf16.mxu0 0
      %1426 = vmatpush1.bf16.xpose.msra.mxu0 0
      %1427 = vmatprep.subr.bf16.mxu0 0
      %1428 = vmatpush1.bf16.xpose.msra.mxu0 0
      %1429 = vmatprep.subr.bf16.mxu0 0
      %1430 = vmatpush1.bf16.xpose.msra.mxu0 0
      %1431 = vmatprep.subr.bf16.mxu0 0
      %1432 = vmatpush1.bf16.xpose.msra.mxu0 0
      %1433 = vmatprep.subr.bf16.mxu0 0
      %1434 = vmatpush1.bf16.xpose.msra.mxu0 0
      %1435 = vmatprep.subr.bf16.mxu0 0
      %1436 = vmatpush1.bf16.xpose.msra.mxu0 0
      %1437 = vmatprep.subr.bf16.mxu0 0
      %1438 = vmatpush1.bf16.xpose.msra.mxu0 %v1421
      %1439 = vmatprep.subr.bf16.mxu0 0
      %1440 = vmatpush2.bf16.xpose.msra.mxu0 0
      %1441 = vmatprep.subr.bf16.mxu0 0
      %1442 = vmatpush2.bf16.xpose.msra.mxu0 0
      %1443 = vmatprep.subr.bf16.mxu0 0
      %1444 = vmatpush2.bf16.xpose.msra.mxu0 0
      %1445 = vmatprep.subr.bf16.mxu0 0
      %1446 = vmatpush2.bf16.xpose.msra.mxu0 0
      %1447 = vmatprep.subr.bf16.mxu0 0
      %1448 = vmatpush2.bf16.xpose.msra.mxu0 0
      %1449 = vmatprep.subr.bf16.mxu0 0
      %1450 = vmatpush2.bf16.xpose.msra.mxu0 0
      %1451 = vmatprep.subr.bf16.mxu0 0
      %1452 = vmatpush2.bf16.xpose.msra.mxu0 0
      %1453 = vmatprep.subr.bf16.mxu0 0
      %1454 = vmatpush2.bf16.xpose.msra.mxu0 0
      %1455 = vmatprep.mubr.bf16.mxu0 0
      %1456 = vmatmul.mubr.bf16.gmra.mxu0 %v1418
      %v1457 = vpop.f32.mrf.mxu0
      %v1458 = vadd.f32 0.0, %v1457
      %v1459 = vpop.f32.mrf.mxu0
      %v1460 = vpop.f32.mrf.mxu0
      %v1461 = vpop.f32.mrf.mxu0
      %1462 = vdwg.mxu0
      %v1464 = vsel %vm1416, %v803, 0
      %v1467 = vsel %vm1416, %v1105, 0
      %1469 = vmatprep.subr.bf16.mxu0 0
      %1470 = vmatpush1.bf16.xpose.msra.mxu0 0
      %1471 = vmatprep.subr.bf16.mxu0 0
      %1472 = vmatpush1.bf16.xpose.msra.mxu0 0
      %1473 = vmatprep.subr.bf16.mxu0 0
      %1474 = vmatpush1.bf16.xpose.msra.mxu0 0
      %1475 = vmatprep.subr.bf16.mxu0 0
      %1476 = vmatpush1.bf16.xpose.msra.mxu0 0
      %1477 = vmatprep.subr.bf16.mxu0 0
      %1478 = vmatpush1.bf16.xpose.msra.mxu0 0
      %1479 = vmatprep.subr.bf16.mxu0 0
      %1480 = vmatpush1.bf16.xpose.msra.mxu0 0
      %1481 = vmatprep.subr.bf16.mxu0 0
      %1482 = vmatpush1.bf16.xpose.msra.mxu0 0
      %1483 = vmatprep.subr.bf16.mxu0 0
      %1484 = vmatpush1.bf16.xpose.msra.mxu0 %v1467
      %1485 = vmatprep.subr.bf16.mxu0 0
      %1486 = vmatpush2.bf16.xpose.msra.mxu0 0
      %1487 = vmatprep.subr.bf16.mxu0 0
      %1488 = vmatpush2.bf16.xpose.msra.mxu0 0
      %1489 = vmatprep.subr.bf16.mxu0 0
      %1490 = vmatpush2.bf16.xpose.msra.mxu0 0
      %1491 = vmatprep.subr.bf16.mxu0 0
      %1492 = vmatpush2.bf16.xpose.msra.mxu0 0
      %1493 = vmatprep.subr.bf16.mxu0 0
      %1494 = vmatpush2.bf16.xpose.msra.mxu0 0
      %1495 = vmatprep.subr.bf16.mxu0 0
      %1496 = vmatpush2.bf16.xpose.msra.mxu0 0
      %1497 = vmatprep.subr.bf16.mxu0 0
      %1498 = vmatpush2.bf16.xpose.msra.mxu0 0
      %1499 = vmatprep.subr.bf16.mxu0 0
      %1500 = vmatpush2.bf16.xpose.msra.mxu0 0
      %1501 = vmatprep.mubr.bf16.mxu0 0
      %1502 = vmatmul.mubr.bf16.gmra.mxu0 %v1464
      %v1503 = vpop.f32.mrf.mxu0
      %v1504 = vadd.f32 0.0, %v1503
      %v1505 = vpop.f32.mrf.mxu0
      %v1506 = vpop.f32.mrf.mxu0
      %v1507 = vpop.f32.mrf.mxu0
      %1508 = vdwg.mxu0
      %v1510 = vsel %vm1416, %v804, 0
      %v1513 = vsel %vm1416, %v1106, 0
      %1515 = vmatprep.subr.bf16.mxu0 0
      %1516 = vmatpush1.bf16.xpose.msra.mxu0 0
      %1517 = vmatprep.subr.bf16.mxu0 0
      %1518 = vmatpush1.bf16.xpose.msra.mxu0 0
      %1519 = vmatprep.subr.bf16.mxu0 0
      %1520 = vmatpush1.bf16.xpose.msra.mxu0 0
      %1521 = vmatprep.subr.bf16.mxu0 0
      %1522 = vmatpush1.bf16.xpose.msra.mxu0 0
      %1523 = vmatprep.subr.bf16.mxu0 0
      %1524 = vmatpush1.bf16.xpose.msra.mxu0 0
      %1525 = vmatprep.subr.bf16.mxu0 0
      %1526 = vmatpush1.bf16.xpose.msra.mxu0 0
      %1527 = vmatprep.subr.bf16.mxu0 0
      %1528 = vmatpush1.bf16.xpose.msra.mxu0 0
      %1529 = vmatprep.subr.bf16.mxu0 0
      %1530 = vmatpush1.bf16.xpose.msra.mxu0 %v1513
      %1531 = vmatprep.subr.bf16.mxu0 0
      %1532 = vmatpush2.bf16.xpose.msra.mxu0 0
      %1533 = vmatprep.subr.bf16.mxu0 0
      %1534 = vmatpush2.bf16.xpose.msra.mxu0 0
      %1535 = vmatprep.subr.bf16.mxu0 0
      %1536 = vmatpush2.bf16.xpose.msra.mxu0 0
      %1537 = vmatprep.subr.bf16.mxu0 0
      %1538 = vmatpush2.bf16.xpose.msra.mxu0 0
      %1539 = vmatprep.subr.bf16.mxu0 0
      %1540 = vmatpush2.bf16.xpose.msra.mxu0 0
      %1541 = vmatprep.subr.bf16.mxu0 0
      %1542 = vmatpush2.bf16.xpose.msra.mxu0 0
      %1543 = vmatprep.subr.bf16.mxu0 0
      %1544 = vmatpush2.bf16.xpose.msra.mxu0 0
      %1545 = vmatprep.subr.bf16.mxu0 0
      %1546 = vmatpush2.bf16.xpose.msra.mxu0 0
      %1547 = vmatprep.mubr.bf16.mxu0 0
      %1548 = vmatmul.mubr.bf16.gmra.mxu0 %v1510
      %v1549 = vpop.f32.mrf.mxu0
      %v1550 = vadd.f32 0.0, %v1549
      %v1551 = vpop.f32.mrf.mxu0
      %v1552 = vpop.f32.mrf.mxu0
      %v1553 = vpop.f32.mrf.mxu0
      %1554 = vdwg.mxu0
      %v1556 = vsel %vm1416, %v805, 0
      %v1559 = vsel %vm1416, %v1107, 0
      %1561 = vmatprep.subr.bf16.mxu0 0
      %1562 = vmatpush1.bf16.xpose.msra.mxu0 0
      %1563 = vmatprep.subr.bf16.mxu0 0
      %1564 = vmatpush1.bf16.xpose.msra.mxu0 0
      %1565 = vmatprep.subr.bf16.mxu0 0
      %1566 = vmatpush1.bf16.xpose.msra.mxu0 0
      %1567 = vmatprep.subr.bf16.mxu0 0
      %1568 = vmatpush1.bf16.xpose.msra.mxu0 0
      %1569 = vmatprep.subr.bf16.mxu0 0
      %1570 = vmatpush1.bf16.xpose.msra.mxu0 0
      %1571 = vmatprep.subr.bf16.mxu0 0
      %1572 = vmatpush1.bf16.xpose.msra.mxu0 0
      %1573 = vmatprep.subr.bf16.mxu0 0
      %1574 = vmatpush1.bf16.xpose.msra.mxu0 0
      %1575 = vmatprep.subr.bf16.mxu0 0
      %1576 = vmatpush1.bf16.xpose.msra.mxu0 %v1559
      %1577 = vmatprep.subr.bf16.mxu0 0
      %1578 = vmatpush2.bf16.xpose.msra.mxu0 0
      %1579 = vmatprep.subr.bf16.mxu0 0
      %1580 = vmatpush2.bf16.xpose.msra.mxu0 0
      %1581 = vmatprep.subr.bf16.mxu0 0
      %1582 = vmatpush2.bf16.xpose.msra.mxu0 0
      %1583 = vmatprep.subr.bf16.mxu0 0
      %1584 = vmatpush2.bf16.xpose.msra.mxu0 0
      %1585 = vmatprep.subr.bf16.mxu0 0
      %1586 = vmatpush2.bf16.xpose.msra.mxu0 0
      %1587 = vmatprep.subr.bf16.mxu0 0
      %1588 = vmatpush2.bf16.xpose.msra.mxu0 0
      %1589 = vmatprep.subr.bf16.mxu0 0
      %1590 = vmatpush2.bf16.xpose.msra.mxu0 0
      %1591 = vmatprep.subr.bf16.mxu0 0
      %1592 = vmatpush2.bf16.xpose.msra.mxu0 0
      %1593 = vmatprep.mubr.bf16.mxu0 0
      %1594 = vmatmul.mubr.bf16.gmra.mxu0 %v1556
      %v1595 = vpop.f32.mrf.mxu0
      %v1596 = vadd.f32 0.0, %v1595
      %v1597 = vpop.f32.mrf.mxu0
      %v1598 = vpop.f32.mrf.mxu0
      %v1599 = vpop.f32.mrf.mxu0
      %1600 = vdwg.mxu0
      %v1602 = vsel %vm1416, %v806, 0
      %v1605 = vsel %vm1416, %v1108, 0
      %1607 = vmatprep.subr.bf16.mxu0 0
      %1608 = vmatpush1.bf16.xpose.msra.mxu0 0
      %1609 = vmatprep.subr.bf16.mxu0 0
      %1610 = vmatpush1.bf16.xpose.msra.mxu0 0
      %1611 = vmatprep.subr.bf16.mxu0 0
      %1612 = vmatpush1.bf16.xpose.msra.mxu0 0
      %1613 = vmatprep.subr.bf16.mxu0 0
      %1614 = vmatpush1.bf16.xpose.msra.mxu0 0
      %1615 = vmatprep.subr.bf16.mxu0 0
      %1616 = vmatpush1.bf16.xpose.msra.mxu0 0
      %1617 = vmatprep.subr.bf16.mxu0 0
      %1618 = vmatpush1.bf16.xpose.msra.mxu0 0
      %1619 = vmatprep.subr.bf16.mxu0 0
      %1620 = vmatpush1.bf16.xpose.msra.mxu0 0
      %1621 = vmatprep.subr.bf16.mxu0 0
      %1622 = vmatpush1.bf16.xpose.msra.mxu0 %v1605
      %1623 = vmatprep.subr.bf16.mxu0 0
      %1624 = vmatpush2.bf16.xpose.msra.mxu0 0
      %1625 = vmatprep.subr.bf16.mxu0 0
      %1626 = vmatpush2.bf16.xpose.msra.mxu0 0
      %1627 = vmatprep.subr.bf16.mxu0 0
      %1628 = vmatpush2.bf16.xpose.msra.mxu0 0
      %1629 = vmatprep.subr.bf16.mxu0 0
      %1630 = vmatpush2.bf16.xpose.msra.mxu0 0
      %1631 = vmatprep.subr.bf16.mxu0 0
      %1632 = vmatpush2.bf16.xpose.msra.mxu0 0
      %1633 = vmatprep.subr.bf16.mxu0 0
      %1634 = vmatpush2.bf16.xpose.msra.mxu0 0
      %1635 = vmatprep.subr.bf16.mxu0 0
      %1636 = vmatpush2.bf16.xpose.msra.mxu0 0
      %1637 = vmatprep.subr.bf16.mxu0 0
      %1638 = vmatpush2.bf16.xpose.msra.mxu0 0
      %1639 = vmatprep.mubr.bf16.mxu0 0
      %1640 = vmatmul.mubr.bf16.gmra.mxu0 %v1602
      %v1641 = vpop.f32.mrf.mxu0
      %v1642 = vadd.f32 0.0, %v1641
      %v1643 = vpop.f32.mrf.mxu0
      %v1644 = vpop.f32.mrf.mxu0
      %v1645 = vpop.f32.mrf.mxu0
      %1646 = vdwg.mxu0
      %v1648 = vsel %vm1416, %v807, 0
      %v1651 = vsel %vm1416, %v1109, 0
      %1653 = vmatprep.subr.bf16.mxu0 0
      %1654 = vmatpush1.bf16.xpose.msra.mxu0 0
      %1655 = vmatprep.subr.bf16.mxu0 0
      %1656 = vmatpush1.bf16.xpose.msra.mxu0 0
      %1657 = vmatprep.subr.bf16.mxu0 0
      %1658 = vmatpush1.bf16.xpose.msra.mxu0 0
      %1659 = vmatprep.subr.bf16.mxu0 0
      %1660 = vmatpush1.bf16.xpose.msra.mxu0 0
      %1661 = vmatprep.subr.bf16.mxu0 0
      %1662 = vmatpush1.bf16.xpose.msra.mxu0 0
      %1663 = vmatprep.subr.bf16.mxu0 0
      %1664 = vmatpush1.bf16.xpose.msra.mxu0 0
      %1665 = vmatprep.subr.bf16.mxu0 0
      %1666 = vmatpush1.bf16.xpose.msra.mxu0 0
      %1667 = vmatprep.subr.bf16.mxu0 0
      %1668 = vmatpush1.bf16.xpose.msra.mxu0 %v1651
      %1669 = vmatprep.subr.bf16.mxu0 0
      %1670 = vmatpush2.bf16.xpose.msra.mxu0 0
      %1671 = vmatprep.subr.bf16.mxu0 0
      %1672 = vmatpush2.bf16.xpose.msra.mxu0 0
      %1673 = vmatprep.subr.bf16.mxu0 0
      %1674 = vmatpush2.bf16.xpose.msra.mxu0 0
      %1675 = vmatprep.subr.bf16.mxu0 0
      %1676 = vmatpush2.bf16.xpose.msra.mxu0 0
      %1677 = vmatprep.subr.bf16.mxu0 0
      %1678 = vmatpush2.bf16.xpose.msra.mxu0 0
      %1679 = vmatprep.subr.bf16.mxu0 0
      %1680 = vmatpush2.bf16.xpose.msra.mxu0 0
      %1681 = vmatprep.subr.bf16.mxu0 0
      %1682 = vmatpush2.bf16.xpose.msra.mxu0 0
      %1683 = vmatprep.subr.bf16.mxu0 0
      %1684 = vmatpush2.bf16.xpose.msra.mxu0 0
      %1685 = vmatprep.mubr.bf16.mxu0 0
      %1686 = vmatmul.mubr.bf16.gmra.mxu0 %v1648
      %v1687 = vpop.f32.mrf.mxu0
      %v1688 = vadd.f32 0.0, %v1687
      %v1689 = vpop.f32.mrf.mxu0
      %v1690 = vpop.f32.mrf.mxu0
      %v1691 = vpop.f32.mrf.mxu0
      %1692 = vdwg.mxu0
      %v1694 = vsel %vm1416, %v808, 0
      %v1697 = vsel %vm1416, %v1110, 0
      %1699 = vmatprep.subr.bf16.mxu0 0
      %1700 = vmatpush1.bf16.xpose.msra.mxu0 0
      %1701 = vmatprep.subr.bf16.mxu0 0
      %1702 = vmatpush1.bf16.xpose.msra.mxu0 0
      %1703 = vmatprep.subr.bf16.mxu0 0
      %1704 = vmatpush1.bf16.xpose.msra.mxu0 0
      %1705 = vmatprep.subr.bf16.mxu0 0
      %1706 = vmatpush1.bf16.xpose.msra.mxu0 0
      %1707 = vmatprep.subr.bf16.mxu0 0
      %1708 = vmatpush1.bf16.xpose.msra.mxu0 0
      %1709 = vmatprep.subr.bf16.mxu0 0
      %1710 = vmatpush1.bf16.xpose.msra.mxu0 0
      %1711 = vmatprep.subr.bf16.mxu0 0
      %1712 = vmatpush1.bf16.xpose.msra.mxu0 0
      %1713 = vmatprep.subr.bf16.mxu0 0
      %1714 = vmatpush1.bf16.xpose.msra.mxu0 %v1697
      %1715 = vmatprep.subr.bf16.mxu0 0
      %1716 = vmatpush2.bf16.xpose.msra.mxu0 0
      %1717 = vmatprep.subr.bf16.mxu0 0
      %1718 = vmatpush2.bf16.xpose.msra.mxu0 0
      %1719 = vmatprep.subr.bf16.mxu0 0
      %1720 = vmatpush2.bf16.xpose.msra.mxu0 0
      %1721 = vmatprep.subr.bf16.mxu0 0
      %1722 = vmatpush2.bf16.xpose.msra.mxu0 0
      %1723 = vmatprep.subr.bf16.mxu0 0
      %1724 = vmatpush2.bf16.xpose.msra.mxu0 0
      %1725 = vmatprep.subr.bf16.mxu0 0
      %1726 = vmatpush2.bf16.xpose.msra.mxu0 0
      %1727 = vmatprep.subr.bf16.mxu0 0
      %1728 = vmatpush2.bf16.xpose.msra.mxu0 0
      %1729 = vmatprep.subr.bf16.mxu0 0
      %1730 = vmatpush2.bf16.xpose.msra.mxu0 0
      %1731 = vmatprep.mubr.bf16.mxu0 0
      %1732 = vmatmul.mubr.bf16.gmra.mxu0 %v1694
      %v1733 = vpop.f32.mrf.mxu0
      %v1734 = vadd.f32 0.0, %v1733
      %v1735 = vpop.f32.mrf.mxu0
      %v1736 = vpop.f32.mrf.mxu0
      %v1737 = vpop.f32.mrf.mxu0
      %1738 = vdwg.mxu0
      %v1740 = vsel %vm1416, %v809, 0
      %v1743 = vsel %vm1416, %v1111, 0
      %1745 = vmatprep.subr.bf16.mxu0 0
      %1746 = vmatpush1.bf16.xpose.msra.mxu0 0
      %1747 = vmatprep.subr.bf16.mxu0 0
      %1748 = vmatpush1.bf16.xpose.msra.mxu0 0
      %1749 = vmatprep.subr.bf16.mxu0 0
      %1750 = vmatpush1.bf16.xpose.msra.mxu0 0
      %1751 = vmatprep.subr.bf16.mxu0 0
      %1752 = vmatpush1.bf16.xpose.msra.mxu0 0
      %1753 = vmatprep.subr.bf16.mxu0 0
      %1754 = vmatpush1.bf16.xpose.msra.mxu0 0
      %1755 = vmatprep.subr.bf16.mxu0 0
      %1756 = vmatpush1.bf16.xpose.msra.mxu0 0
      %1757 = vmatprep.subr.bf16.mxu0 0
      %1758 = vmatpush1.bf16.xpose.msra.mxu0 0
      %1759 = vmatprep.subr.bf16.mxu0 0
      %1760 = vmatpush1.bf16.xpose.msra.mxu0 %v1743
      %1761 = vmatprep.subr.bf16.mxu0 0
      %1762 = vmatpush2.bf16.xpose.msra.mxu0 0
      %1763 = vmatprep.subr.bf16.mxu0 0
      %1764 = vmatpush2.bf16.xpose.msra.mxu0 0
      %1765 = vmatprep.subr.bf16.mxu0 0
      %1766 = vmatpush2.bf16.xpose.msra.mxu0 0
      %1767 = vmatprep.subr.bf16.mxu0 0
      %1768 = vmatpush2.bf16.xpose.msra.mxu0 0
      %1769 = vmatprep.subr.bf16.mxu0 0
      %1770 = vmatpush2.bf16.xpose.msra.mxu0 0
      %1771 = vmatprep.subr.bf16.mxu0 0
      %1772 = vmatpush2.bf16.xpose.msra.mxu0 0
      %1773 = vmatprep.subr.bf16.mxu0 0
      %1774 = vmatpush2.bf16.xpose.msra.mxu0 0
      %1775 = vmatprep.subr.bf16.mxu0 0
      %1776 = vmatpush2.bf16.xpose.msra.mxu0 0
      %1777 = vmatprep.mubr.bf16.mxu0 0
      %1778 = vmatmul.mubr.bf16.gmra.mxu0 %v1740
      %v1779 = vpop.f32.mrf.mxu0
      %v1780 = vadd.f32 0.0, %v1779
      %v1781 = vpop.f32.mrf.mxu0
      %v1782 = vpop.f32.mrf.mxu0
      %v1783 = vpop.f32.mrf.mxu0
      %1784 = vdwg.mxu0
      %vm1785 = vcmask 64512
      %v1786 = vsel %vm1785, %v1458, -inf
      %1787 = vmax.xlane.f32.xlu0 %v1786
      %v1788 = vpop.xlane.xlu0 %1787
      %v1789 = vsel %vm1785, %v1504, -inf
      %1790 = vmax.xlane.f32.xlu0 %v1789
      %v1791 = vpop.xlane.xlu0 %1790
      %v1792 = vsel %vm1785, %v1550, -inf
      %1793 = vmax.xlane.f32.xlu0 %v1792
      %v1794 = vpop.xlane.xlu0 %1793
      %v1795 = vsel %vm1785, %v1596, -inf
      %1796 = vmax.xlane.f32.xlu0 %v1795
      %v1797 = vpop.xlane.xlu0 %1796
      %v1798 = vsel %vm1785, %v1642, -inf
      %1799 = vmax.xlane.f32.xlu0 %v1798
      %v1800 = vpop.xlane.xlu0 %1799
      %v1801 = vsel %vm1785, %v1688, -inf
      %1802 = vmax.xlane.f32.xlu0 %v1801
      %v1803 = vpop.xlane.xlu0 %1802
      %v1804 = vsel %vm1785, %v1734, -inf
      %1805 = vmax.xlane.f32.xlu0 %v1804
      %v1806 = vpop.xlane.xlu0 %1805
      %v1807 = vsel %vm1785, %v1780, -inf
      %1808 = vmax.xlane.f32.xlu0 %v1807
      %v1809 = vpop.xlane.xlu0 %1808
      %v1810 = vsub.f32 %v1458, %v1788
      %v1811 = vsub.f32 %v1504, %v1791
      %v1812 = vsub.f32 %v1550, %v1794
      %v1813 = vsub.f32 %v1596, %v1797
      %v1814 = vsub.f32 %v1642, %v1800
      %v1815 = vsub.f32 %v1688, %v1803
      %v1816 = vsub.f32 %v1734, %v1806
      %v1817 = vsub.f32 %v1780, %v1809
      %v1818 = vmul.f32 %v1810, 1.442695
      %v1819 = vpow.pop %v1818
      %v1820 = vmul.f32 %v1811, 1.442695
      %v1821 = vpow.pop %v1820
      %v1822 = vmul.f32 %v1812, 1.442695
      %v1823 = vpow.pop %v1822
      %v1824 = vmul.f32 %v1813, 1.442695
      %v1825 = vpow.pop %v1824
      %v1826 = vmul.f32 %v1814, 1.442695
      %v1827 = vpow.pop %v1826
      %v1828 = vmul.f32 %v1815, 1.442695
      %v1829 = vpow.pop %v1828
      %v1830 = vmul.f32 %v1816, 1.442695
      %v1831 = vpow.pop %v1830
      %v1832 = vmul.f32 %v1817, 1.442695
      %v1833 = vpow.pop %v1832
      %v1834 = vsel %vm1785, %v1819, 0.0
      %1835 = vadd.xlane.f32.xlu0 %v1834
      %v1836 = vpop.xlane.xlu0 %1835
      %v1837 = vsel %vm1785, %v1821, 0.0
      %1838 = vadd.xlane.f32.xlu0 %v1837
      %v1839 = vpop.xlane.xlu0 %1838
      %v1840 = vsel %vm1785, %v1823, 0.0
      %1841 = vadd.xlane.f32.xlu0 %v1840
      %v1842 = vpop.xlane.xlu0 %1841
      %v1843 = vsel %vm1785, %v1825, 0.0
      %1844 = vadd.xlane.f32.xlu0 %v1843
      %v1845 = vpop.xlane.xlu0 %1844
      %v1846 = vsel %vm1785, %v1827, 0.0
      %1847 = vadd.xlane.f32.xlu0 %v1846
      %v1848 = vpop.xlane.xlu0 %1847
      %v1849 = vsel %vm1785, %v1829, 0.0
      %1850 = vadd.xlane.f32.xlu0 %v1849
      %v1851 = vpop.xlane.xlu0 %1850
      %v1852 = vsel %vm1785, %v1831, 0.0
      %1853 = vadd.xlane.f32.xlu0 %v1852
      %v1854 = vpop.xlane.xlu0 %1853
      %v1855 = vsel %vm1785, %v1833, 0.0
      %1856 = vadd.xlane.f32.xlu0 %v1855
      %v1857 = vpop.xlane.xlu0 %1856
      %v1858 = vrcp.pop %v1836
      %v1859 = vrcp.pop %v1839
      %v1860 = vrcp.pop %v1842
      %v1861 = vrcp.pop %v1845
      %v1862 = vrcp.pop %v1848
      %v1863 = vrcp.pop %v1851
      %v1864 = vrcp.pop %v1854
      %v1865 = vrcp.pop %v1857
      %v1866 = vmul.f32 %v1819, %v1858
      %v1867 = vmul.f32 %v1821, %v1859
      %v1868 = vmul.f32 %v1823, %v1860
      %v1869 = vmul.f32 %v1825, %v1861
      %v1870 = vmul.f32 %v1827, %v1862
      %v1871 = vmul.f32 %v1829, %v1863
      %v1872 = vmul.f32 %v1831, %v1864
      %v1873 = vmul.f32 %v1833, %v1865
      %v1874 = vpack.c.bf16 %v1866, %v1866
      %v1875 = vpack.c.bf16 %v1867, %v1867
      %v1876 = vpack.c.bf16 %v1868, %v1868
      %v1877 = vpack.c.bf16 %v1869, %v1869
      %v1878 = vpack.c.bf16 %v1870, %v1870
      %v1879 = vpack.c.bf16 %v1871, %v1871
      %v1880 = vpack.c.bf16 %v1872, %v1872
      %v1881 = vpack.c.bf16 %v1873, %v1873
      %v1883 = vsel %vm1785, %v1874, 0
      %vm1885 = vcmask 1043456
      %v1887 = vsel %vm1885, %v1408, 0
      %1889 = vmatprep.subr.bf16.mxu0 0
      %1890 = vmatpush1.bf16.msra.mxu0 0
      %1891 = vmatprep.subr.bf16.mxu0 0
      %1892 = vmatpush1.bf16.msra.mxu0 0
      %1893 = vmatprep.subr.bf16.mxu0 0
      %1894 = vmatpush1.bf16.msra.mxu0 0
      %1895 = vmatprep.subr.bf16.mxu0 0
      %1896 = vmatpush1.bf16.msra.mxu0 0
      %1897 = vmatprep.subr.bf16.mxu0 0
      %1898 = vmatpush1.bf16.msra.mxu0 0
      %1899 = vmatprep.subr.bf16.mxu0 0
      %1900 = vmatpush1.bf16.msra.mxu0 0
      %1901 = vmatprep.subr.bf16.mxu0 0
      %1902 = vmatpush1.bf16.msra.mxu0 0
      %1903 = vmatprep.subr.bf16.mxu0 0
      %1904 = vmatpush1.bf16.msra.mxu0 %v1887
      %1905 = vmatprep.subr.bf16.mxu0 0
      %1906 = vmatpush2.bf16.msra.mxu0 0
      %1907 = vmatprep.subr.bf16.mxu0 0
      %1908 = vmatpush2.bf16.msra.mxu0 0
      %1909 = vmatprep.subr.bf16.mxu0 0
      %1910 = vmatpush2.bf16.msra.mxu0 0
      %1911 = vmatprep.subr.bf16.mxu0 0
      %1912 = vmatpush2.bf16.msra.mxu0 0
      %1913 = vmatprep.subr.bf16.mxu0 0
      %1914 = vmatpush2.bf16.msra.mxu0 0
      %1915 = vmatprep.subr.bf16.mxu0 0
      %1916 = vmatpush2.bf16.msra.mxu0 0
      %1917 = vmatprep.subr.bf16.mxu0 0
      %1918 = vmatpush2.bf16.msra.mxu0 0
      %1919 = vmatprep.subr.bf16.mxu0 0
      %1920 = vmatpush2.bf16.msra.mxu0 0
      %1921 = vmatprep.mubr.bf16.mxu0 0
      %1922 = vmatmul.mubr.bf16.gmra.mxu0 %v1883
      %v1923 = vpop.f32.mrf.mxu0
      %v1924 = vadd.f32 0.0, %v1923
      %v1925 = vpop.f32.mrf.mxu0
      %v1926 = vpop.f32.mrf.mxu0
      %v1927 = vpop.f32.mrf.mxu0
      %1928 = vdwg.mxu0
      %v1930 = vsel %vm1785, %v1875, 0
      %v1933 = vsel %vm1885, %v1409, 0
      %1935 = vmatprep.subr.bf16.mxu0 0
      %1936 = vmatpush1.bf16.msra.mxu0 0
      %1937 = vmatprep.subr.bf16.mxu0 0
      %1938 = vmatpush1.bf16.msra.mxu0 0
      %1939 = vmatprep.subr.bf16.mxu0 0
      %1940 = vmatpush1.bf16.msra.mxu0 0
      %1941 = vmatprep.subr.bf16.mxu0 0
      %1942 = vmatpush1.bf16.msra.mxu0 0
      %1943 = vmatprep.subr.bf16.mxu0 0
      %1944 = vmatpush1.bf16.msra.mxu0 0
      %1945 = vmatprep.subr.bf16.mxu0 0
      %1946 = vmatpush1.bf16.msra.mxu0 0
      %1947 = vmatprep.subr.bf16.mxu0 0
      %1948 = vmatpush1.bf16.msra.mxu0 0
      %1949 = vmatprep.subr.bf16.mxu0 0
      %1950 = vmatpush1.bf16.msra.mxu0 %v1933
      %1951 = vmatprep.subr.bf16.mxu0 0
      %1952 = vmatpush2.bf16.msra.mxu0 0
      %1953 = vmatprep.subr.bf16.mxu0 0
      %1954 = vmatpush2.bf16.msra.mxu0 0
      %1955 = vmatprep.subr.bf16.mxu0 0
      %1956 = vmatpush2.bf16.msra.mxu0 0
      %1957 = vmatprep.subr.bf16.mxu0 0
      %1958 = vmatpush2.bf16.msra.mxu0 0
      %1959 = vmatprep.subr.bf16.mxu0 0
      %1960 = vmatpush2.bf16.msra.mxu0 0
      %1961 = vmatprep.subr.bf16.mxu0 0
      %1962 = vmatpush2.bf16.msra.mxu0 0
      %1963 = vmatprep.subr.bf16.mxu0 0
      %1964 = vmatpush2.bf16.msra.mxu0 0
      %1965 = vmatprep.subr.bf16.mxu0 0
      %1966 = vmatpush2.bf16.msra.mxu0 0
      %1967 = vmatprep.mubr.bf16.mxu0 0
      %1968 = vmatmul.mubr.bf16.gmra.mxu0 %v1930
      %v1969 = vpop.f32.mrf.mxu0
      %v1970 = vadd.f32 0.0, %v1969
      %v1971 = vpop.f32.mrf.mxu0
      %v1972 = vpop.f32.mrf.mxu0
      %v1973 = vpop.f32.mrf.mxu0
      %1974 = vdwg.mxu0
      %v1976 = vsel %vm1785, %v1876, 0
      %v1979 = vsel %vm1885, %v1410, 0
      %1981 = vmatprep.subr.bf16.mxu0 0
      %1982 = vmatpush1.bf16.msra.mxu0 0
      %1983 = vmatprep.subr.bf16.mxu0 0
      %1984 = vmatpush1.bf16.msra.mxu0 0
      %1985 = vmatprep.subr.bf16.mxu0 0
      %1986 = vmatpush1.bf16.msra.mxu0 0
      %1987 = vmatprep.subr.bf16.mxu0 0
      %1988 = vmatpush1.bf16.msra.mxu0 0
      %1989 = vmatprep.subr.bf16.mxu0 0
      %1990 = vmatpush1.bf16.msra.mxu0 0
      %1991 = vmatprep.subr.bf16.mxu0 0
      %1992 = vmatpush1.bf16.msra.mxu0 0
      %1993 = vmatprep.subr.bf16.mxu0 0
      %1994 = vmatpush1.bf16.msra.mxu0 0
      %1995 = vmatprep.subr.bf16.mxu0 0
      %1996 = vmatpush1.bf16.msra.mxu0 %v1979
      %1997 = vmatprep.subr.bf16.mxu0 0
      %1998 = vmatpush2.bf16.msra.mxu0 0
      %1999 = vmatprep.subr.bf16.mxu0 0
      %2000 = vmatpush2.bf16.msra.mxu0 0
      %2001 = vmatprep.subr.bf16.mxu0 0
      %2002 = vmatpush2.bf16.msra.mxu0 0
      %2003 = vmatprep.subr.bf16.mxu0 0
      %2004 = vmatpush2.bf16.msra.mxu0 0
      %2005 = vmatprep.subr.bf16.mxu0 0
      %2006 = vmatpush2.bf16.msra.mxu0 0
      %2007 = vmatprep.subr.bf16.mxu0 0
      %2008 = vmatpush2.bf16.msra.mxu0 0
      %2009 = vmatprep.subr.bf16.mxu0 0
      %2010 = vmatpush2.bf16.msra.mxu0 0
      %2011 = vmatprep.subr.bf16.mxu0 0
      %2012 = vmatpush2.bf16.msra.mxu0 0
      %2013 = vmatprep.mubr.bf16.mxu0 0
      %2014 = vmatmul.mubr.bf16.gmra.mxu0 %v1976
      %v2015 = vpop.f32.mrf.mxu0
      %v2016 = vadd.f32 0.0, %v2015
      %v2017 = vpop.f32.mrf.mxu0
      %v2018 = vpop.f32.mrf.mxu0
      %v2019 = vpop.f32.mrf.mxu0
      %2020 = vdwg.mxu0
      %v2022 = vsel %vm1785, %v1877, 0
      %v2025 = vsel %vm1885, %v1411, 0
      %2027 = vmatprep.subr.bf16.mxu0 0
      %2028 = vmatpush1.bf16.msra.mxu0 0
      %2029 = vmatprep.subr.bf16.mxu0 0
      %2030 = vmatpush1.bf16.msra.mxu0 0
      %2031 = vmatprep.subr.bf16.mxu0 0
      %2032 = vmatpush1.bf16.msra.mxu0 0
      %2033 = vmatprep.subr.bf16.mxu0 0
      %2034 = vmatpush1.bf16.msra.mxu0 0
      %2035 = vmatprep.subr.bf16.mxu0 0
      %2036 = vmatpush1.bf16.msra.mxu0 0
      %2037 = vmatprep.subr.bf16.mxu0 0
      %2038 = vmatpush1.bf16.msra.mxu0 0
      %2039 = vmatprep.subr.bf16.mxu0 0
      %2040 = vmatpush1.bf16.msra.mxu0 0
      %2041 = vmatprep.subr.bf16.mxu0 0
      %2042 = vmatpush1.bf16.msra.mxu0 %v2025
      %2043 = vmatprep.subr.bf16.mxu0 0
      %2044 = vmatpush2.bf16.msra.mxu0 0
      %2045 = vmatprep.subr.bf16.mxu0 0
      %2046 = vmatpush2.bf16.msra.mxu0 0
      %2047 = vmatprep.subr.bf16.mxu0 0
      %2048 = vmatpush2.bf16.msra.mxu0 0
      %2049 = vmatprep.subr.bf16.mxu0 0
      %2050 = vmatpush2.bf16.msra.mxu0 0
      %2051 = vmatprep.subr.bf16.mxu0 0
      %2052 = vmatpush2.bf16.msra.mxu0 0
      %2053 = vmatprep.subr.bf16.mxu0 0
      %2054 = vmatpush2.bf16.msra.mxu0 0
      %2055 = vmatprep.subr.bf16.mxu0 0
      %2056 = vmatpush2.bf16.msra.mxu0 0
      %2057 = vmatprep.subr.bf16.mxu0 0
      %2058 = vmatpush2.bf16.msra.mxu0 0
      %2059 = vmatprep.mubr.bf16.mxu0 0
      %2060 = vmatmul.mubr.bf16.gmra.mxu0 %v2022
      %v2061 = vpop.f32.mrf.mxu0
      %v2062 = vadd.f32 0.0, %v2061
      %v2063 = vpop.f32.mrf.mxu0
      %v2064 = vpop.f32.mrf.mxu0
      %v2065 = vpop.f32.mrf.mxu0
      %2066 = vdwg.mxu0
      %v2068 = vsel %vm1785, %v1878, 0
      %v2071 = vsel %vm1885, %v1412, 0
      %2073 = vmatprep.subr.bf16.mxu0 0
      %2074 = vmatpush1.bf16.msra.mxu0 0
      %2075 = vmatprep.subr.bf16.mxu0 0
      %2076 = vmatpush1.bf16.msra.mxu0 0
      %2077 = vmatprep.subr.bf16.mxu0 0
      %2078 = vmatpush1.bf16.msra.mxu0 0
      %2079 = vmatprep.subr.bf16.mxu0 0
      %2080 = vmatpush1.bf16.msra.mxu0 0
      %2081 = vmatprep.subr.bf16.mxu0 0
      %2082 = vmatpush1.bf16.msra.mxu0 0
      %2083 = vmatprep.subr.bf16.mxu0 0
      %2084 = vmatpush1.bf16.msra.mxu0 0
      %2085 = vmatprep.subr.bf16.mxu0 0
      %2086 = vmatpush1.bf16.msra.mxu0 0
      %2087 = vmatprep.subr.bf16.mxu0 0
      %2088 = vmatpush1.bf16.msra.mxu0 %v2071
      %2089 = vmatprep.subr.bf16.mxu0 0
      %2090 = vmatpush2.bf16.msra.mxu0 0
      %2091 = vmatprep.subr.bf16.mxu0 0
      %2092 = vmatpush2.bf16.msra.mxu0 0
      %2093 = vmatprep.subr.bf16.mxu0 0
      %2094 = vmatpush2.bf16.msra.mxu0 0
      %2095 = vmatprep.subr.bf16.mxu0 0
      %2096 = vmatpush2.bf16.msra.mxu0 0
      %2097 = vmatprep.subr.bf16.mxu0 0
      %2098 = vmatpush2.bf16.msra.mxu0 0
      %2099 = vmatprep.subr.bf16.mxu0 0
      %2100 = vmatpush2.bf16.msra.mxu0 0
      %2101 = vmatprep.subr.bf16.mxu0 0
      %2102 = vmatpush2.bf16.msra.mxu0 0
      %2103 = vmatprep.subr.bf16.mxu0 0
      %2104 = vmatpush2.bf16.msra.mxu0 0
      %2105 = vmatprep.mubr.bf16.mxu0 0
      %2106 = vmatmul.mubr.bf16.gmra.mxu0 %v2068
      %v2107 = vpop.f32.mrf.mxu0
      %v2108 = vadd.f32 0.0, %v2107
      %v2109 = vpop.f32.mrf.mxu0
      %v2110 = vpop.f32.mrf.mxu0
      %v2111 = vpop.f32.mrf.mxu0
      %2112 = vdwg.mxu0
      %v2114 = vsel %vm1785, %v1879, 0
      %v2117 = vsel %vm1885, %v1413, 0
      %2119 = vmatprep.subr.bf16.mxu0 0
      %2120 = vmatpush1.bf16.msra.mxu0 0
      %2121 = vmatprep.subr.bf16.mxu0 0
      %2122 = vmatpush1.bf16.msra.mxu0 0
      %2123 = vmatprep.subr.bf16.mxu0 0
      %2124 = vmatpush1.bf16.msra.mxu0 0
      %2125 = vmatprep.subr.bf16.mxu0 0
      %2126 = vmatpush1.bf16.msra.mxu0 0
      %2127 = vmatprep.subr.bf16.mxu0 0
      %2128 = vmatpush1.bf16.msra.mxu0 0
      %2129 = vmatprep.subr.bf16.mxu0 0
      %2130 = vmatpush1.bf16.msra.mxu0 0
      %2131 = vmatprep.subr.bf16.mxu0 0
      %2132 = vmatpush1.bf16.msra.mxu0 0
      %2133 = vmatprep.subr.bf16.mxu0 0
      %2134 = vmatpush1.bf16.msra.mxu0 %v2117
      %2135 = vmatprep.subr.bf16.mxu0 0
      %2136 = vmatpush2.bf16.msra.mxu0 0
      %2137 = vmatprep.subr.bf16.mxu0 0
      %2138 = vmatpush2.bf16.msra.mxu0 0
      %2139 = vmatprep.subr.bf16.mxu0 0
      %2140 = vmatpush2.bf16.msra.mxu0 0
      %2141 = vmatprep.subr.bf16.mxu0 0
      %2142 = vmatpush2.bf16.msra.mxu0 0
      %2143 = vmatprep.subr.bf16.mxu0 0
      %2144 = vmatpush2.bf16.msra.mxu0 0
      %2145 = vmatprep.subr.bf16.mxu0 0
      %2146 = vmatpush2.bf16.msra.mxu0 0
      %2147 = vmatprep.subr.bf16.mxu0 0
      %2148 = vmatpush2.bf16.msra.mxu0 0
      %2149 = vmatprep.subr.bf16.mxu0 0
      %2150 = vmatpush2.bf16.msra.mxu0 0
      %2151 = vmatprep.mubr.bf16.mxu0 0
      %2152 = vmatmul.mubr.bf16.gmra.mxu0 %v2114
      %v2153 = vpop.f32.mrf.mxu0
      %v2154 = vadd.f32 0.0, %v2153
      %v2155 = vpop.f32.mrf.mxu0
      %v2156 = vpop.f32.mrf.mxu0
      %v2157 = vpop.f32.mrf.mxu0
      %2158 = vdwg.mxu0
      %v2160 = vsel %vm1785, %v1880, 0
      %v2163 = vsel %vm1885, %v1414, 0
      %2165 = vmatprep.subr.bf16.mxu0 0
      %2166 = vmatpush1.bf16.msra.mxu0 0
      %2167 = vmatprep.subr.bf16.mxu0 0
      %2168 = vmatpush1.bf16.msra.mxu0 0
      %2169 = vmatprep.subr.bf16.mxu0 0
      %2170 = vmatpush1.bf16.msra.mxu0 0
      %2171 = vmatprep.subr.bf16.mxu0 0
      %2172 = vmatpush1.bf16.msra.mxu0 0
      %2173 = vmatprep.subr.bf16.mxu0 0
      %2174 = vmatpush1.bf16.msra.mxu0 0
      %2175 = vmatprep.subr.bf16.mxu0 0
      %2176 = vmatpush1.bf16.msra.mxu0 0
      %2177 = vmatprep.subr.bf16.mxu0 0
      %2178 = vmatpush1.bf16.msra.mxu0 0
      %2179 = vmatprep.subr.bf16.mxu0 0
      %2180 = vmatpush1.bf16.msra.mxu0 %v2163
      %2181 = vmatprep.subr.bf16.mxu0 0
      %2182 = vmatpush2.bf16.msra.mxu0 0
      %2183 = vmatprep.subr.bf16.mxu0 0
      %2184 = vmatpush2.bf16.msra.mxu0 0
      %2185 = vmatprep.subr.bf16.mxu0 0
      %2186 = vmatpush2.bf16.msra.mxu0 0
      %2187 = vmatprep.subr.bf16.mxu0 0
      %2188 = vmatpush2.bf16.msra.mxu0 0
      %2189 = vmatprep.subr.bf16.mxu0 0
      %2190 = vmatpush2.bf16.msra.mxu0 0
      %2191 = vmatprep.subr.bf16.mxu0 0
      %2192 = vmatpush2.bf16.msra.mxu0 0
      %2193 = vmatprep.subr.bf16.mxu0 0
      %2194 = vmatpush2.bf16.msra.mxu0 0
      %2195 = vmatprep.subr.bf16.mxu0 0
      %2196 = vmatpush2.bf16.msra.mxu0 0
      %2197 = vmatprep.mubr.bf16.mxu0 0
      %2198 = vmatmul.mubr.bf16.gmra.mxu0 %v2160
      %v2199 = vpop.f32.mrf.mxu0
      %v2200 = vadd.f32 0.0, %v2199
      %v2201 = vpop.f32.mrf.mxu0
      %v2202 = vpop.f32.mrf.mxu0
      %v2203 = vpop.f32.mrf.mxu0
      %2204 = vdwg.mxu0
      %v2206 = vsel %vm1785, %v1881, 0
      %v2209 = vsel %vm1885, %v1415, 0
      %2211 = vmatprep.subr.bf16.mxu0 0
      %2212 = vmatpush1.bf16.msra.mxu0 0
      %2213 = vmatprep.subr.bf16.mxu0 0
      %2214 = vmatpush1.bf16.msra.mxu0 0
      %2215 = vmatprep.subr.bf16.mxu0 0
      %2216 = vmatpush1.bf16.msra.mxu0 0
      %2217 = vmatprep.subr.bf16.mxu0 0
      %2218 = vmatpush1.bf16.msra.mxu0 0
      %2219 = vmatprep.subr.bf16.mxu0 0
      %2220 = vmatpush1.bf16.msra.mxu0 0
      %2221 = vmatprep.subr.bf16.mxu0 0
      %2222 = vmatpush1.bf16.msra.mxu0 0
      %2223 = vmatprep.subr.bf16.mxu0 0
      %2224 = vmatpush1.bf16.msra.mxu0 0
      %2225 = vmatprep.subr.bf16.mxu0 0
      %2226 = vmatpush1.bf16.msra.mxu0 %v2209
      %2227 = vmatprep.subr.bf16.mxu0 0
      %2228 = vmatpush2.bf16.msra.mxu0 0
      %2229 = vmatprep.subr.bf16.mxu0 0
      %2230 = vmatpush2.bf16.msra.mxu0 0
      %2231 = vmatprep.subr.bf16.mxu0 0
      %2232 = vmatpush2.bf16.msra.mxu0 0
      %2233 = vmatprep.subr.bf16.mxu0 0
      %2234 = vmatpush2.bf16.msra.mxu0 0
      %2235 = vmatprep.subr.bf16.mxu0 0
      %2236 = vmatpush2.bf16.msra.mxu0 0
      %2237 = vmatprep.subr.bf16.mxu0 0
      %2238 = vmatpush2.bf16.msra.mxu0 0
      %2239 = vmatprep.subr.bf16.mxu0 0
      %2240 = vmatpush2.bf16.msra.mxu0 0
      %2241 = vmatprep.subr.bf16.mxu0 0
      %2242 = vmatpush2.bf16.msra.mxu0 0
      %2243 = vmatprep.mubr.bf16.mxu0 0
      %2244 = vmatmul.mubr.bf16.gmra.mxu0 %v2206
      %v2245 = vpop.f32.mrf.mxu0
      %v2246 = vadd.f32 0.0, %v2245
      %v2247 = vpop.f32.mrf.mxu0
      %v2248 = vpop.f32.mrf.mxu0
      %v2249 = vpop.f32.mrf.mxu0
      %2250 = vdwg.mxu0
      %v2251 = vcombine.low %v1924, %v2016
      %v2252 = vcombine.high %v1924, %v2016
      %v2254 = vunpack.c.l.s4 1983009808
      %v2255 = vunpack.c.0.s8 %v2254
      %v2256 = vlaneseq
      %v2257 = vshrl.u32 %v2256, 7
      %v2258 = vsub.s32 %v2255, %v2257
      %v2259 = vrot.slane %v2251, %v2258
      %v2261 = vunpack.c.l.s4 1983009808
      %v2262 = vunpack.c.0.s8 %v2261
      %v2263 = vlaneseq
      %v2264 = vshrl.u32 %v2263, 7
      %v2265 = vsub.s32 %v2262, %v2264
      %v2266 = vrot.slane %v2252, %v2265
      %v2267 = vcombine.low %v1970, %v2062
      %v2268 = vcombine.high %v1970, %v2062
      %v2270 = vunpack.c.l.s4 1983009808
      %v2271 = vunpack.c.0.s8 %v2270
      %v2272 = vlaneseq
      %v2273 = vshrl.u32 %v2272, 7
      %v2274 = vsub.s32 %v2271, %v2273
      %v2275 = vrot.slane %v2267, %v2274
      %v2277 = vunpack.c.l.s4 1983009808
      %v2278 = vunpack.c.0.s8 %v2277
      %v2279 = vlaneseq
      %v2280 = vshrl.u32 %v2279, 7
      %v2281 = vsub.s32 %v2278, %v2280
      %v2282 = vrot.slane %v2268, %v2281
      %v2283 = vcombine.low %v2108, %v2200
      %v2284 = vcombine.high %v2108, %v2200
      %v2286 = vunpack.c.l.s4 1983009808
      %v2287 = vunpack.c.0.s8 %v2286
      %v2288 = vlaneseq
      %v2289 = vshrl.u32 %v2288, 7
      %v2290 = vsub.s32 %v2287, %v2289
      %v2291 = vrot.slane %v2283, %v2290
      %v2293 = vunpack.c.l.s4 1983009808
      %v2294 = vunpack.c.0.s8 %v2293
      %v2295 = vlaneseq
      %v2296 = vshrl.u32 %v2295, 7
      %v2297 = vsub.s32 %v2294, %v2296
      %v2298 = vrot.slane %v2284, %v2297
      %v2299 = vcombine.low %v2154, %v2246
      %v2300 = vcombine.high %v2154, %v2246
      %v2302 = vunpack.c.l.s4 1983009808
      %v2303 = vunpack.c.0.s8 %v2302
      %v2304 = vlaneseq
      %v2305 = vshrl.u32 %v2304, 7
      %v2306 = vsub.s32 %v2303, %v2305
      %v2307 = vrot.slane %v2299, %v2306
      %v2309 = vunpack.c.l.s4 1983009808
      %v2310 = vunpack.c.0.s8 %v2309
      %v2311 = vlaneseq
      %v2312 = vshrl.u32 %v2311, 7
      %v2313 = vsub.s32 %v2310, %v2312
      %v2314 = vrot.slane %v2300, %v2313
      %v2315 = vcombine.low %v2259, %v2275
      %v2316 = vcombine.high %v2259, %v2275
      %v2318 = vunpack.c.l.s4 1934713408
      %v2319 = vunpack.c.0.s8 %v2318
      %v2320 = vlaneseq
      %v2321 = vshrl.u32 %v2320, 7
      %v2322 = vsub.s32 %v2319, %v2321
      %v2323 = vrot.slane %v2315, %v2322
      %v2325 = vunpack.c.l.s4 1934713408
      %v2326 = vunpack.c.0.s8 %v2325
      %v2327 = vlaneseq
      %v2328 = vshrl.u32 %v2327, 7
      %v2329 = vsub.s32 %v2326, %v2328
      %v2330 = vrot.slane %v2316, %v2329
      %v2331 = vcombine.low %v2266, %v2282
      %v2332 = vcombine.high %v2266, %v2282
      %v2334 = vunpack.c.l.s4 1934713408
      %v2335 = vunpack.c.0.s8 %v2334
      %v2336 = vlaneseq
      %v2337 = vshrl.u32 %v2336, 7
      %v2338 = vsub.s32 %v2335, %v2337
      %v2339 = vrot.slane %v2331, %v2338
      %v2341 = vunpack.c.l.s4 1934713408
      %v2342 = vunpack.c.0.s8 %v2341
      %v2343 = vlaneseq
      %v2344 = vshrl.u32 %v2343, 7
      %v2345 = vsub.s32 %v2342, %v2344
      %v2346 = vrot.slane %v2332, %v2345
      %v2347 = vcombine.low %v2291, %v2307
      %v2348 = vcombine.high %v2291, %v2307
      %v2350 = vunpack.c.l.s4 1934713408
      %v2351 = vunpack.c.0.s8 %v2350
      %v2352 = vlaneseq
      %v2353 = vshrl.u32 %v2352, 7
      %v2354 = vsub.s32 %v2351, %v2353
      %v2355 = vrot.slane %v2347, %v2354
      %v2357 = vunpack.c.l.s4 1934713408
      %v2358 = vunpack.c.0.s8 %v2357
      %v2359 = vlaneseq
      %v2360 = vshrl.u32 %v2359, 7
      %v2361 = vsub.s32 %v2358, %v2360
      %v2362 = vrot.slane %v2348, %v2361
      %v2363 = vcombine.low %v2298, %v2314
      %v2364 = vcombine.high %v2298, %v2314
      %v2366 = vunpack.c.l.s4 1934713408
      %v2367 = vunpack.c.0.s8 %v2366
      %v2368 = vlaneseq
      %v2369 = vshrl.u32 %v2368, 7
      %v2370 = vsub.s32 %v2367, %v2369
      %v2371 = vrot.slane %v2363, %v2370
      %v2373 = vunpack.c.l.s4 1934713408
      %v2374 = vunpack.c.0.s8 %v2373
      %v2375 = vlaneseq
      %v2376 = vshrl.u32 %v2375, 7
      %v2377 = vsub.s32 %v2374, %v2376
      %v2378 = vrot.slane %v2364, %v2377
      %v2379 = vcombine.low %v2323, %v2355
      %v2380 = vcombine.high %v2323, %v2355
      %v2381 = vcombine.low %v2330, %v2362
      %v2382 = vcombine.high %v2330, %v2362
      %v2383 = vcombine.low %v2339, %v2371
      %v2384 = vcombine.high %v2339, %v2371
      %v2385 = vcombine.low %v2346, %v2378
      %v2386 = vcombine.high %v2346, %v2378
      %v2387 = vcombine.low %v2379, %v2381
      %v2388 = vcombine.high %v2379, %v2381
      %v2390 = vunpack.c.l.s4 1983009808
      %v2391 = vunpack.c.0.s8 %v2390
      %v2392 = vlaneseq
      %v2393 = vshrl.u32 %v2392, 7
      %v2394 = vsub.s32 %v2391, %v2393
      %v2395 = vrot.slane %v2387, %v2394
      %v2397 = vunpack.c.l.s4 1983009808
      %v2398 = vunpack.c.0.s8 %v2397
      %v2399 = vlaneseq
      %v2400 = vshrl.u32 %v2399, 7
      %v2401 = vsub.s32 %v2398, %v2400
      %v2402 = vrot.slane %v2388, %v2401
      %v2403 = vcombine.low %v2380, %v2382
      %v2404 = vcombine.high %v2380, %v2382
      %v2406 = vunpack.c.l.s4 1983009808
      %v2407 = vunpack.c.0.s8 %v2406
      %v2408 = vlaneseq
      %v2409 = vshrl.u32 %v2408, 7
      %v2410 = vsub.s32 %v2407, %v2409
      %v2411 = vrot.slane %v2403, %v2410
      %v2413 = vunpack.c.l.s4 1983009808
      %v2414 = vunpack.c.0.s8 %v2413
      %v2415 = vlaneseq
      %v2416 = vshrl.u32 %v2415, 7
      %v2417 = vsub.s32 %v2414, %v2416
      %v2418 = vrot.slane %v2404, %v2417
      %v2419 = vcombine.low %v2383, %v2385
      %v2420 = vcombine.high %v2383, %v2385
      %v2422 = vunpack.c.l.s4 1983009808
      %v2423 = vunpack.c.0.s8 %v2422
      %v2424 = vlaneseq
      %v2425 = vshrl.u32 %v2424, 7
      %v2426 = vsub.s32 %v2423, %v2425
      %v2427 = vrot.slane %v2419, %v2426
      %v2429 = vunpack.c.l.s4 1983009808
      %v2430 = vunpack.c.0.s8 %v2429
      %v2431 = vlaneseq
      %v2432 = vshrl.u32 %v2431, 7
      %v2433 = vsub.s32 %v2430, %v2432
      %v2434 = vrot.slane %v2420, %v2433
      %v2435 = vcombine.low %v2384, %v2386
      %v2436 = vcombine.high %v2384, %v2386
      %v2438 = vunpack.c.l.s4 1983009808
      %v2439 = vunpack.c.0.s8 %v2438
      %v2440 = vlaneseq
      %v2441 = vshrl.u32 %v2440, 7
      %v2442 = vsub.s32 %v2439, %v2441
      %v2443 = vrot.slane %v2435, %v2442
      %v2445 = vunpack.c.l.s4 1983009808
      %v2446 = vunpack.c.0.s8 %v2445
      %v2447 = vlaneseq
      %v2448 = vshrl.u32 %v2447, 7
      %v2449 = vsub.s32 %v2446, %v2448
      %v2450 = vrot.slane %v2436, %v2449
      %v2451 = vcombine.low %v2395, %v2411
      %v2452 = vcombine.high %v2395, %v2411
      %v2454 = vunpack.c.l.s4 1934713408
      %v2455 = vunpack.c.0.s8 %v2454
      %v2456 = vlaneseq
      %v2457 = vshrl.u32 %v2456, 7
      %v2458 = vsub.s32 %v2455, %v2457
      %v2459 = vrot.slane %v2451, %v2458
      %v2461 = vunpack.c.l.s4 1934713408
      %v2462 = vunpack.c.0.s8 %v2461
      %v2463 = vlaneseq
      %v2464 = vshrl.u32 %v2463, 7
      %v2465 = vsub.s32 %v2462, %v2464
      %v2466 = vrot.slane %v2452, %v2465
      %v2467 = vcombine.low %v2402, %v2418
      %v2468 = vcombine.high %v2402, %v2418
      %v2470 = vunpack.c.l.s4 1934713408
      %v2471 = vunpack.c.0.s8 %v2470
      %v2472 = vlaneseq
      %v2473 = vshrl.u32 %v2472, 7
      %v2474 = vsub.s32 %v2471, %v2473
      %v2475 = vrot.slane %v2467, %v2474
      %v2477 = vunpack.c.l.s4 1934713408
      %v2478 = vunpack.c.0.s8 %v2477
      %v2479 = vlaneseq
      %v2480 = vshrl.u32 %v2479, 7
      %v2481 = vsub.s32 %v2478, %v2480
      %v2482 = vrot.slane %v2468, %v2481
      %v2483 = vcombine.low %v2427, %v2443
      %v2484 = vcombine.high %v2427, %v2443
      %v2486 = vunpack.c.l.s4 1934713408
      %v2487 = vunpack.c.0.s8 %v2486
      %v2488 = vlaneseq
      %v2489 = vshrl.u32 %v2488, 7
      %v2490 = vsub.s32 %v2487, %v2489
      %v2491 = vrot.slane %v2483, %v2490
      %v2493 = vunpack.c.l.s4 1934713408
      %v2494 = vunpack.c.0.s8 %v2493
      %v2495 = vlaneseq
      %v2496 = vshrl.u32 %v2495, 7
      %v2497 = vsub.s32 %v2494, %v2496
      %v2498 = vrot.slane %v2484, %v2497
      %v2499 = vcombine.low %v2434, %v2450
      %v2500 = vcombine.high %v2434, %v2450
      %v2502 = vunpack.c.l.s4 1934713408
      %v2503 = vunpack.c.0.s8 %v2502
      %v2504 = vlaneseq
      %v2505 = vshrl.u32 %v2504, 7
      %v2506 = vsub.s32 %v2503, %v2505
      %v2507 = vrot.slane %v2499, %v2506
      %v2509 = vunpack.c.l.s4 1934713408
      %v2510 = vunpack.c.0.s8 %v2509
      %v2511 = vlaneseq
      %v2512 = vshrl.u32 %v2511, 7
      %v2513 = vsub.s32 %v2510, %v2512
      %v2514 = vrot.slane %v2500, %v2513
      %v2515 = vcombine.low %v2459, %v2491
      %v2516 = vcombine.high %v2459, %v2491
      %v2517 = vcombine.low %v2466, %v2498
      %v2518 = vcombine.high %v2466, %v2498
      %v2519 = vcombine.low %v2475, %v2507
      %v2520 = vcombine.high %v2475, %v2507
      %v2521 = vcombine.low %v2482, %v2514
      %v2522 = vcombine.high %v2482, %v2514
      %2524 = vrot.lane.b32.xlu0 %v2516, 4
      %v2525 = vpop.permute.xlu0 %2524
      %2528 = vrot.lane.b32.xlu0 %v2517, 8
      %v2529 = vpop.permute.xlu0 %2528
      %2532 = vrot.lane.b32.xlu0 %v2518, 12
      %v2533 = vpop.permute.xlu0 %2532
      %2536 = vrot.lane.b32.xlu0 %v2519, 16
      %v2537 = vpop.permute.xlu0 %2536
      %2540 = vrot.lane.b32.xlu0 %v2520, 20
      %v2541 = vpop.permute.xlu0 %2540
      %2544 = vrot.lane.b32.xlu0 %v2521, 24
      %v2545 = vpop.permute.xlu0 %2544
      %2548 = vrot.lane.b32.xlu0 %v2522, 28
      %v2549 = vpop.permute.xlu0 %2548
      %v2551 = vsel %vm1416, %v2515, %v2525
      %v2552 = vsel %vm1785, %v2551, %v2529
      %vm2553 = vcmask 97280
      %v2554 = vsel %vm2553, %v2552, %v2533
      %vm2555 = vcmask 130048
      %v2556 = vsel %vm2555, %v2554, %v2537
      %vm2557 = vcmask 162816
      %v2558 = vsel %vm2557, %v2556, %v2541
      %vm2559 = vcmask 195584
      %v2560 = vsel %vm2559, %v2558, %v2545
      %vm2561 = vcmask 228352
      %v2562 = vsel %vm2561, %v2560, %v2549
      %v2563 = vpack.c.bf16 %v2562, %v2562
      %v2564 = vld [vmem:[%s6] sm:$0xf]
      %v2565 = vld [vmem:[%s6 + $0x4] sm:$0xf]
      %v2566 = vld [vmem:[%s6 + $0x8] sm:$0xf]
      %v2567 = vld [vmem:[%s6 + $0xc] sm:$0xf]
      %v2568 = vld [vmem:[%s7] sm:$0x1]
      %v2570 = vlaneseq
      %v2571 = vshrl.u32 %v2570, 7
      %v2572 = vsub.s32 0, %v2571
      %v2573 = vrot.slane %v2568, %v2572
      %v2579 = vunpack.c.l.b16 %v2564
      %v2580 = vunpack.c.l.b16 %v2565
      %v2581 = vunpack.c.l.b16 %v2566
      %v2582 = vunpack.c.l.b16 %v2567
      %v2583 = vpack.c.b16 %v2580, %v2579
      %v2584 = vpack.c.b16 %v2582, %v2581
      %v2588 = vsel %vm398, %v2563, 0
      %2590 = vmatprep.subr.bf16.mxu0 0
      %2591 = vmatpush1.bf16.msra.mxu0 0
      %2592 = vmatprep.subr.bf16.mxu0 0
      %2593 = vmatpush1.bf16.msra.mxu0 0
      %2594 = vmatprep.subr.bf16.mxu0 0
      %2595 = vmatpush1.bf16.msra.mxu0 0
      %2596 = vmatprep.subr.bf16.mxu0 0
      %2597 = vmatpush1.bf16.msra.mxu0 0
      %2598 = vmatprep.subr.bf16.mxu0 0
      %2599 = vmatpush1.bf16.msra.mxu0 0
      %2600 = vmatprep.subr.bf16.mxu0 0
      %2601 = vmatpush1.bf16.msra.mxu0 0
      %2602 = vmatprep.subr.bf16.mxu0 0
      %2603 = vmatpush1.bf16.msra.mxu0 %v2584
      %2604 = vmatprep.subr.bf16.mxu0 0
      %2605 = vmatpush1.bf16.msra.mxu0 %v2583
      %2606 = vmatprep.subr.bf16.mxu0 0
      %2607 = vmatpush2.bf16.msra.mxu0 0
      %2608 = vmatprep.subr.bf16.mxu0 0
      %2609 = vmatpush2.bf16.msra.mxu0 0
      %2610 = vmatprep.subr.bf16.mxu0 0
      %2611 = vmatpush2.bf16.msra.mxu0 0
      %2612 = vmatprep.subr.bf16.mxu0 0
      %2613 = vmatpush2.bf16.msra.mxu0 0
      %2614 = vmatprep.subr.bf16.mxu0 0
      %2615 = vmatpush2.bf16.msra.mxu0 0
      %2616 = vmatprep.subr.bf16.mxu0 0
      %2617 = vmatpush2.bf16.msra.mxu0 0
      %2618 = vmatprep.subr.bf16.mxu0 0
      %2619 = vmatpush2.bf16.msra.mxu0 0
      %2620 = vmatprep.subr.bf16.mxu0 0
      %2621 = vmatpush2.bf16.msra.mxu0 0
      %2622 = vmatprep.mubr.bf16.mxu0 0
      %2623 = vmatmul.mubr.bf16.gmra.mxu0 %v2588
      %v2624 = vpop.f32.mrf.mxu0
      %v2625 = vadd.f32 %v2573, %v2624
      %v2626 = vpop.f32.mrf.mxu0
      %v2627 = vpop.f32.mrf.mxu0
      %v2628 = vpop.f32.mrf.mxu0
      %2629 = vdwg.mxu0
      %v2630 = vunpack.c.l.bf16 %v373
      %v2631 = vadd.f32 %v2630, %v2625
      %v2632 = vld [vmem:[%s8] sm:$0x1]
      %v2633 = vld [vmem:[%s9] sm:$0x1]
      %v2634 = vsel %vm398, %v2631, 0.0
      %2635 = vadd.xlane.f32.xlu0 %v2634
      %v2636 = vpop.xlane.xlu0 %2635
      %v2637 = vrcp.pop 32.0
      %v2638 = vmul.f32 %v2636, %v2637
      %v2639 = vsub.f32 %v2631, %v2638
      %v2640 = vmul.f32 %v2639, %v2639
      %v2641 = vsel %vm398, %v2640, 0.0
      %2642 = vadd.xlane.f32.xlu0 %v2641
      %v2643 = vpop.xlane.xlu0 %2642
      %v2644 = vmul.f32 %v2643, %v2637
      %v2645 = vadd.f32 %v2644, 1e-05
      %v2646 = vrsqrt.pop %v2645
      %v2647 = vmul.f32 %v2639, %v2646
      %v2649 = vlaneseq
      %v2650 = vshrl.u32 %v2649, 7
      %v2651 = vsub.s32 0, %v2650
      %v2652 = vrot.slane %v2632, %v2651
      %v2654 = vmul.f32 %v2647, %v2652
      %v2656 = vlaneseq
      %v2657 = vshrl.u32 %v2656, 7
      %v2658 = vsub.s32 0, %v2657
      %v2659 = vrot.slane %v2633, %v2658
      %v2661 = vadd.f32 %v2654, %v2659
      %v2662 = vpack.c.bf16 %v2661, %v2661
      %vm2663 = vcmask 257024
      %2664 = vst.msk [vmem:[%s371] sm:$0xf] %vm2663, %v2662
      %p2665 = scmp.lt.s32.totalorder %s21, 1
      %s2666 = scalar_select %p2665, %s21, 1
      %s2667 = smul.addr %s2666, 4
      %s2668 = scalar_lea.vmem %s10, %s2667
      // Predicated region
      $region61: #{prooformer_forward.19} parent=59 // pred_check
        %p2669 = pneg %p259
      $region62: #{prooformer_forward.19} parent=59 // pred_check_branch
        %2671 = sbr.rel (%p2669) target = $region64
      $region63: #{prooformer_forward.19} parent=59 // pred_region
        _
      $region64: #{prooformer_forward.19} parent=59 // pred_fallthru
        _
    $region60: #{prooformer_forward.19} parent=5 // pred_fallthru
      _
    %p2672 = scmp.le.s32.totalorder 2, %s16
    // Predicated region
    $region65: #{prooformer_forward.19} parent=5 // pred_check
      %p2673 = pneg %p2672
    $region66: #{prooformer_forward.19} parent=5 // pred_check_branch
      %2675 = sbr.rel (%p2673) target = $region68
    $region67: #{prooformer_forward.19} parent=5 // pred_region
      %s2676 = ssub.s32 %s16, 2
      // Predicated region
      $region69: #{prooformer_forward.19} parent=67 // pred_check
        %p2677 = pneg %p265
      $region70: #{prooformer_forward.19} parent=67 // pred_check_branch
        %2679 = sbr.rel (%p2677) target = $region72
      $region71: #{prooformer_forward.19} parent=67 // pred_region
        %p2680 = scmp.lt.s32.totalorder %s22, 1
        %s2681 = scalar_select %p2680, %s22, 1
        %s2682 = smul.addr %s2681, 4
        %s2683 = scalar_lea.vmem %s10, %s2682
      $region72: #{prooformer_forward.19} parent=67 // pred_fallthru
        _
    $region68: #{prooformer_forward.19} parent=5 // pred_fallthru
      _
  $region6: #{prooformer_forward.19} parent=0 // loop_footer
    %s20 = sadd.s32 1, %s16
  $region7: #{prooformer_forward.19} parent=0 // loop_footer_branch
    %15 = sbr.rel target = $region3
  $region8: #{prooformer_forward.19} parent=0 // loop_exit
    _

</llo_original>
